<compile_context>
chip_gen: v7x
topology: tpu7x:2x2x1
jax: 0.10.0
libtpu: 0.0.40
codegen_flags: <defaults>
</compile_context>

<pallas_src>
import functools

import jax
import jax.numpy as jnp
from jax.experimental import pallas as pl
from jax.experimental.pallas import tpu as pltpu


def _pick_batch_tile(B, max_bt=8):
    bt = B if B <= max_bt else max_bt
    while B % bt:
        bt -= 1
    return bt


# ---------------------------------------------------------------------------
# Fused InceptionModule kernel
# ---------------------------------------------------------------------------

def _inception_module_kernel(x_ref, wb_ref, wc_ref, wm_ref, scale_ref, shift_ref,
                             out_ref, *, L, K, nf, use_bottleneck):
    """One whole InceptionModule per grid step.

    x_ref       : (Bt, L, Cin)    raw module input
    wb_ref      : (Cin, nf)       bottleneck 1x1 weight (ignored if not use_bottleneck)
    wc_ref      : (K, Cc, 3*nf)   three branch convs folded into one centered,
                                  zero-padded weight (Cc = nf if bottleneck else Cin)
    wm_ref      : (Cin, nf)       1x1 conv after the maxpool branch
    scale/shift : (1, 4*nf)       inference BatchNorm folded to per-channel affine
    out_ref     : (Bt, L, 4*nf)   lane-dense output slab
    """
    Bt, _, Cin = x_ref.shape
    pad = (K - 1) // 2
    Lp = L + 2 * pad

    x = x_ref[...]                                   # (Bt, L, Cin)
    x2 = x.reshape(Bt * L, Cin)

    # ---- bottleneck (plain 1x1 conv, no BN / act) ----
    if use_bottleneck:
        xb = jnp.dot(x2, wb_ref[...], preferred_element_type=jnp.float32)   # (Bt*L, nf)
        Cc = nf
    else:
        xb = x2.astype(jnp.float32)
        Cc = Cin

    # ---- zero-pad every batch element in time and flatten (batch, time) so one
    #      tap loop serves all batch elements; windows never cross a batch
    #      boundary because each element carries its own (K-1)//2 padding. ----
    zpad = jnp.zeros((pad, Cc), jnp.float32)
    pieces = []
    for b in range(Bt):
        pieces += [zpad, xb[b * L:(b + 1) * L, :], zpad]
    xf = jnp.concatenate(pieces, axis=0)             # (Bt*Lp, Cc)

    # ---- three branch convs as one accumulated contraction with N = 3*nf ----
    M = Bt * Lp - (K - 1)                            # rows whose K-window is in bounds
    acc = jnp.zeros((M, 3 * nf), jnp.float32)
    for k in range(K):                               # static tap loop -> MXU matmuls
        acc = acc + jnp.dot(xf[k:k + M, :], wc_ref[k],
                            preferred_element_type=jnp.float32)
    # valid output rows of batch element b live at [b*Lp, b*Lp + L)
    branch = jnp.concatenate([acc[b * Lp:b * Lp + L, :] for b in range(Bt)],
                             axis=0)                 # (Bt*L, 3*nf)

    # ---- maxpool(3, stride=1, pad=1) + 1x1 conv on the raw input ----
    neg = jnp.full((Bt, 1, Cin), jnp.finfo(x.dtype).min, x.dtype)
    xp = jnp.concatenate([neg, x, neg], axis=1)      # (Bt, L+2, Cin)
    m = jnp.maximum(jnp.maximum(xp[:, 0:L, :], xp[:, 1:L + 1, :]), xp[:, 2:L + 2, :])
    mp = jnp.dot(m.reshape(Bt * L, Cin), wm_ref[...],
                 preferred_element_type=jnp.float32)  # (Bt*L, nf)

    # ---- concat -> BN affine -> ReLU -> single unmasked 128-lane store ----
    y = jnp.concatenate([branch, mp], axis=-1)       # (Bt*L, 4*nf)
    y = y * scale_ref[...] + shift_ref[...]
    y = jnp.maximum(y, 0.0)
    out_ref[...] = y.reshape(Bt, L, 4 * nf)


def inception_module(x, p, *, nf):
    B, L, Cin = x.shape
    wc = p['conv_w_comb']                            # (K, Cc, 3*nf)
    K, Cc, _ = wc.shape
    use_bneck = p['bottleneck_w'] is not None
    wb = p['bottleneck_w'] if use_bneck else jnp.zeros((Cin, nf), jnp.float32)
    wm = p['maxconv_w']                              # (Cin, nf)
    scale = p['bn_scale'].reshape(1, 4 * nf)
    shift = p['bn_shift'].reshape(1, 4 * nf)

    Bt = _pick_batch_tile(B)
    kern = functools.partial(_inception_module_kernel, L=L, K=K, nf=nf,
                             use_bottleneck=use_bneck)
    return pl.pallas_call(
        kern,
        out_shape=jax.ShapeDtypeStruct((B, L, 4 * nf), jnp.float32),
        grid=(B // Bt,),
        in_specs=[
            pl.BlockSpec((Bt, L, Cin), lambda b: (b, 0, 0)),
            pl.BlockSpec((Cin, nf), lambda b: (0, 0)),
            pl.BlockSpec((K, Cc, 3 * nf), lambda b: (0, 0, 0)),
            pl.BlockSpec((Cin, nf), lambda b: (0, 0)),
            pl.BlockSpec((1, 4 * nf), lambda b: (0, 0)),
            pl.BlockSpec((1, 4 * nf), lambda b: (0, 0)),
        ],
        out_specs=pl.BlockSpec((Bt, L, 4 * nf), lambda b: (b, 0, 0)),
        compiler_params=pltpu.CompilerParams(dimension_semantics=("parallel",)),
    )(x, wb, wc, wm, scale, shift)


# ---------------------------------------------------------------------------
# Fused residual shortcut (+ optional 1x1 conv) + BN + add + ReLU
# ---------------------------------------------------------------------------

def _shortcut_conv_add_relu_kernel(x_ref, res_ref, w_ref, scale_ref, shift_ref, out_ref):
    Bt, L, Cr = res_ref.shape
    Cout = w_ref.shape[1]
    r = jnp.dot(res_ref[...].reshape(Bt * L, Cr), w_ref[...],
                preferred_element_type=jnp.float32).reshape(Bt, L, Cout)
    s = r * scale_ref[...] + shift_ref[...]
    out_ref[...] = jnp.maximum(x_ref[...] + s, 0.0)


def _shortcut_bn_add_relu_kernel(x_ref, res_ref, scale_ref, shift_ref, out_ref):
    s = res_ref[...] * scale_ref[...] + shift_ref[...]
    out_ref[...] = jnp.maximum(x_ref[...] + s, 0.0)


def shortcut_add_relu(x, res, sc):
    B, L, C = x.shape
    _, _, Cr = res.shape
    scale = sc['scale'].reshape(1, C)
    shift = sc['shift'].reshape(1, C)
    Bt = _pick_batch_tile(B)
    cp = pltpu.CompilerParams(dimension_semantics=("parallel",))
    if sc['w'] is not None:                           # 1x1 conv + BN shortcut
        return pl.pallas_call(
            _shortcut_conv_add_relu_kernel,
            out_shape=jax.ShapeDtypeStruct((B, L, C), jnp.float32),
            grid=(B // Bt,),
            in_specs=[
                pl.BlockSpec((Bt, L, C), lambda b: (b, 0, 0)),
                pl.BlockSpec((Bt, L, Cr), lambda b: (b, 0, 0)),
                pl.BlockSpec((Cr, C), lambda b: (0, 0)),
                pl.BlockSpec((1, C), lambda b: (0, 0)),
                pl.BlockSpec((1, C), lambda b: (0, 0)),
            ],
            out_specs=pl.BlockSpec((Bt, L, C), lambda b: (b, 0, 0)),
            compiler_params=cp,
        )(x, res, sc['w'], scale, shift)
    return pl.pallas_call(                            # plain BN shortcut
        _shortcut_bn_add_relu_kernel,
        out_shape=jax.ShapeDtypeStruct((B, L, C), jnp.float32),
        grid=(B // Bt,),
        in_specs=[
            pl.BlockSpec((Bt, L, C), lambda b: (b, 0, 0)),
            pl.BlockSpec((Bt, L, Cr), lambda b: (b, 0, 0)),
            pl.BlockSpec((1, C), lambda b: (0, 0)),
            pl.BlockSpec((1, C), lambda b: (0, 0)),
        ],
        out_specs=pl.BlockSpec((Bt, L, C), lambda b: (b, 0, 0)),
        compiler_params=cp,
    )(x, res, scale, shift)


# ---------------------------------------------------------------------------
# GAP + Linear head (whole batch in one grid step)
# ---------------------------------------------------------------------------

def _gap_fc_kernel(x_ref, w_ref, b_ref, out_ref, *, L):
    xm = jnp.sum(x_ref[...], axis=1) * (1.0 / L)      # (B, C)
    out_ref[...] = jnp.dot(xm, w_ref[...], preferred_element_type=jnp.float32) + b_ref[...]


def gap_fc(x, w, b):
    B, L, C = x.shape
    Cout = w.shape[1]
    return pl.pallas_call(
        functools.partial(_gap_fc_kernel, L=L),
        out_shape=jax.ShapeDtypeStruct((B, Cout), jnp.float32),
    )(x, w, b.reshape(1, Cout))


# ---------------------------------------------------------------------------
# Parameter construction (deterministic, synthetic; no strings in the pytree)
# ---------------------------------------------------------------------------

def _bn_params(key, C, eps=1e-5):
    k1, k2, k3, k4 = jax.random.split(key, 4)
    gamma = 1.0 + 0.1 * jax.random.normal(k1, (C,), jnp.float32)
    beta = 0.1 * jax.random.normal(k2, (C,), jnp.float32)
    mean = 0.1 * jax.random.normal(k3, (C,), jnp.float32)
    var = 1.0 + 0.2 * jax.random.uniform(k4, (C,), jnp.float32)
    scale = gamma * jax.lax.rsqrt(var + eps)
    shift = beta - mean * scale
    return scale, shift


def init_inception_module(key, ni, nf, ks=40):
    ks_list = [ks // (2 ** i) for i in range(3)]
    ks_list = [k if k % 2 != 0 else k - 1 for k in ks_list]     # -> [39, 19, 9]
    use_bottleneck = ni > 1
    conv_in = nf if use_bottleneck else ni
    K = max(ks_list)
    keys = jax.random.split(key, 6)
    # Fold the three branch conv weights into one centered, zero-padded
    # (K, conv_in, 3*nf) tensor so the kernel runs a single tap loop with N=3*nf.
    wc = jnp.zeros((K, conv_in, 3 * nf), jnp.float32)
    for i, k in enumerate(ks_list):
        w = jax.random.normal(keys[1 + i], (k, conv_in, nf), jnp.float32) / jnp.sqrt(float(k * conv_in))
        off = (K - k) // 2                           # center smaller kernels ('same' pad)
        wc = wc.at[off:off + k, :, i * nf:(i + 1) * nf].set(w)
    p = {
        'bottleneck_w': (jax.random.normal(keys[0], (ni, nf), jnp.float32)
                         / jnp.sqrt(float(ni))) if use_bottleneck else None,
        'conv_w_comb': wc,
        'maxconv_w': jax.random.normal(keys[4], (ni, nf), jnp.float32) / jnp.sqrt(float(ni)),
    }
    p['bn_scale'], p['bn_shift'] = _bn_params(keys[5], 4 * nf)
    return p


def init_inception_block(key, ni, nf, depth=6, residual=True):
    keys = jax.random.split(key, depth + 1)
    modules = [init_inception_module(keys[d], ni if d == 0 else nf * 4, nf)
               for d in range(depth)]
    shortcuts = []
    if residual:
        sckeys = jax.random.split(keys[depth], max(1, depth // 3))
        for d in range(depth):
            if d % 3 == 2:
                n_in = ni if d == 2 else nf * 4
                n_out = nf * 4
                skey = sckeys[d // 3]
                if n_in == n_out:                     # BN1d shortcut
                    s, sh = _bn_params(skey, n_out)
                    shortcuts.append({'w': None, 'scale': s, 'shift': sh})
                else:                                 # ConvBlock(1x1, act=None) shortcut
                    k1, k2 = jax.random.split(skey)
                    s, sh = _bn_params(k2, n_out)
                    w = jax.random.normal(k1, (n_in, n_out), jnp.float32) / jnp.sqrt(float(n_in))
                    shortcuts.append({'w': w, 'scale': s, 'shift': sh})
    return {'modules': modules, 'shortcuts': shortcuts}


def init_inceptiontime(key, c_in, c_out, nf=32, depth=6, residual=True):
    k1, k2, k3 = jax.random.split(key, 3)
    return {
        'block': init_inception_block(k1, c_in, nf, depth, residual),
        'fc_w': jax.random.normal(k2, (nf * 4, c_out), jnp.float32) / jnp.sqrt(float(nf * 4)),
        'fc_b': 0.1 * jax.random.normal(k3, (c_out,), jnp.float32),
    }


# ---------------------------------------------------------------------------
# Forward pass (mirrors InceptionModule / InceptionBlock / InceptionTime)
# ---------------------------------------------------------------------------

def inception_block_fwd(x, bp, *, nf, depth=6, residual=True):
    res = x
    si = 0
    for d in range(depth):
        x = inception_module(x, bp['modules'][d], nf=nf)
        if residual and d % 3 == 2:
            x = shortcut_add_relu(x, res, bp['shortcuts'][si])
            si += 1
            res = x
    return x


def inceptiontime_fwd(params, x, *, nf=32, depth=6, residual=True):
    x = inception_block_fwd(x, params['block'], nf=nf, depth=depth, residual=residual)
    return gap_fc(x, params['fc_w'], params['fc_b'])


# ---------------------------------------------------------------------------
# Demo
# ---------------------------------------------------------------------------

if __name__ == "__main__":
    B, c_in, L, c_out, nf = 2, 4, 16, 5, 32     # PyTorch input would be (B, c_in, L)
    key = jax.random.PRNGKey(0)
    pkey, xkey = jax.random.split(key)
    params = init_inceptiontime(pkey, c_in, c_out, nf=nf)
    x = jax.random.normal(xkey, (B, L, c_in), jnp.float32)   # (B, L, C) layout

    fwd = jax.jit(functools.partial(inceptiontime_fwd, nf=nf))
    out = fwd(params, x)
    jax.block_until_ready(out)

    assert out.shape == (B, c_out), out.shape
    assert bool(jnp.all(jnp.isfinite(out)))
    print("KERNEL_OK")
</pallas_src>

<mosaic_0001>
module attributes {stable_mosaic.version = 11 : i64} {
  func.func @_inception_module_kernel(%arg0: i32, %arg1: memref<2x16x128xf32, #tpu.memory_space<vmem>>, %arg2: memref<128x32xf32, #tpu.memory_space<vmem>>, %arg3: memref<39x32x96xf32, #tpu.memory_space<vmem>>, %arg4: memref<128x32xf32, #tpu.memory_space<vmem>>, %arg5: memref<1x128xf32, #tpu.memory_space<vmem>>, %arg6: memref<1x128xf32, #tpu.memory_space<vmem>>, %arg7: memref<2x16x128xf32, #tpu.memory_space<vmem>>) attributes {dimension_semantics = [#tpu.dimension_semantics<parallel>], iteration_bounds = array<i64: 1>, scalar_prefetch = 0 : i64, scratch_operands = 0 : i64, tpu.core_type = #tpu.core_type<tc>, window_params = [{transform_indices = @transform_0, window_bounds = array<i64: 2, 16, 128>}, {pipeline_mode = #tpu.pipeline_mode<synchronous>, transform_indices = @transform_1, window_bounds = array<i64: 128, 32>}, {pipeline_mode = #tpu.pipeline_mode<synchronous>, transform_indices = @transform_2, window_bounds = array<i64: 39, 32, 96>}, {pipeline_mode = #tpu.pipeline_mode<synchronous>, transform_indices = @transform_3, window_bounds = array<i64: 128, 32>}, {pipeline_mode = #tpu.pipeline_mode<synchronous>, transform_indices = @transform_4, window_bounds = array<i64: 1, 128>}, {pipeline_mode = #tpu.pipeline_mode<synchronous>, transform_indices = @transform_5, window_bounds = array<i64: 1, 128>}, {transform_indices = @transform_6, window_bounds = array<i64: 2, 16, 128>}]} {
    %c0 = arith.constant 0 : index
    %c0_0 = arith.constant 0 : index
    %c0_1 = arith.constant 0 : index
    %0 = vector.load %arg1[%c0, %c0_0, %c0_1] : memref<2x16x128xf32, #tpu.memory_space<vmem>>, vector<2x16x128xf32>
    %1 = vector.shape_cast %0 : vector<2x16x128xf32> to vector<32x128xf32>
    %c0_2 = arith.constant 0 : index
    %c0_3 = arith.constant 0 : index
    %2 = vector.load %arg2[%c0_2, %c0_3] : memref<128x32xf32, #tpu.memory_space<vmem>>, vector<128x32xf32>
    %cst = arith.constant dense<0.000000e+00> : vector<32x32xf32>
    %3 = tpu.matmul %1, %2, %cst {dimension_numbers = #tpu.dot_dimension_numbers<[1], [0], [0], [1], [0, 0, 1, 1], [], []>} : vector<32x128xf32>, vector<128x32xf32>, vector<32x32xf32> -> vector<32x32xf32>
    %cst_4 = arith.constant 0.000000e+00 : f32
    %4 = vector.broadcast %cst_4 : f32 to vector<19x32xf32>
    %5 = vector.extract_strided_slice %3 {offsets = [0, 0], sizes = [16, 32], strides = [1, 1]} : vector<32x32xf32> to vector<16x32xf32>
    %6 = vector.extract_strided_slice %3 {offsets = [16, 0], sizes = [16, 32], strides = [1, 1]} : vector<32x32xf32> to vector<16x32xf32>
    %7 = tpu.concatenate %4, %5, %4, %4, %6, %4 in 0 : vector<19x32xf32>, vector<16x32xf32>, vector<19x32xf32>, vector<19x32xf32>, vector<16x32xf32>, vector<19x32xf32> -> vector<108x32xf32>
    %cst_5 = arith.constant 0.000000e+00 : f32
    %8 = vector.broadcast %cst_5 : f32 to vector<70x96xf32>
    %9 = vector.extract_strided_slice %7 {offsets = [0, 0], sizes = [70, 32], strides = [1, 1]} : vector<108x32xf32> to vector<70x32xf32>
    %c0_6 = arith.constant 0 : index
    %c0_7 = arith.constant 0 : index
    %c0_8 = arith.constant 0 : index
    %10 = vector.load %arg3[%c0_6, %c0_7, %c0_8] : memref<39x32x96xf32, #tpu.memory_space<vmem>>, vector<1x32x96xf32>
    %11 = vector.shape_cast %10 : vector<1x32x96xf32> to vector<32x96xf32>
    %cst_9 = arith.constant dense<0.000000e+00> : vector<70x96xf32>
    %12 = tpu.matmul %9, %11, %cst_9 {dimension_numbers = #tpu.dot_dimension_numbers<[1], [0], [0], [1], [0, 0, 1, 1], [], []>} : vector<70x32xf32>, vector<32x96xf32>, vector<70x96xf32> -> vector<70x96xf32>
    %13 = arith.addf %8, %12 : vector<70x96xf32>
    %14 = vector.extract_strided_slice %7 {offsets = [1, 0], sizes = [70, 32], strides = [1, 1]} : vector<108x32xf32> to vector<70x32xf32>
    %c1 = arith.constant 1 : index
    %c0_10 = arith.constant 0 : index
    %c0_11 = arith.constant 0 : index
    %15 = vector.load %arg3[%c1, %c0_10, %c0_11] : memref<39x32x96xf32, #tpu.memory_space<vmem>>, vector<1x32x96xf32>
    %16 = vector.shape_cast %15 : vector<1x32x96xf32> to vector<32x96xf32>
    %cst_12 = arith.constant dense<0.000000e+00> : vector<70x96xf32>
    %17 = tpu.matmul %14, %16, %cst_12 {dimension_numbers = #tpu.dot_dimension_numbers<[1], [0], [0], [1], [0, 0, 1, 1], [], []>} : vector<70x32xf32>, vector<32x96xf32>, vector<70x96xf32> -> vector<70x96xf32>
    %18 = arith.addf %13, %17 : vector<70x96xf32>
    %19 = vector.extract_strided_slice %7 {offsets = [2, 0], sizes = [70, 32], strides = [1, 1]} : vector<108x32xf32> to vector<70x32xf32>
    %c2 = arith.constant 2 : index
    %c0_13 = arith.constant 0 : index
    %c0_14 = arith.constant 0 : index
    %20 = vector.load %arg3[%c2, %c0_13, %c0_14] : memref<39x32x96xf32, #tpu.memory_space<vmem>>, vector<1x32x96xf32>
    %21 = vector.shape_cast %20 : vector<1x32x96xf32> to vector<32x96xf32>
    %cst_15 = arith.constant dense<0.000000e+00> : vector<70x96xf32>
    %22 = tpu.matmul %19, %21, %cst_15 {dimension_numbers = #tpu.dot_dimension_numbers<[1], [0], [0], [1], [0, 0, 1, 1], [], []>} : vector<70x32xf32>, vector<32x96xf32>, vector<70x96xf32> -> vector<70x96xf32>
    %23 = arith.addf %18, %22 : vector<70x96xf32>
    %24 = vector.extract_strided_slice %7 {offsets = [3, 0], sizes = [70, 32], strides = [1, 1]} : vector<108x32xf32> to vector<70x32xf32>
    %c3 = arith.constant 3 : index
    %c0_16 = arith.constant 0 : index
    %c0_17 = arith.constant 0 : index
    %25 = vector.load %arg3[%c3, %c0_16, %c0_17] : memref<39x32x96xf32, #tpu.memory_space<vmem>>, vector<1x32x96xf32>
    %26 = vector.shape_cast %25 : vector<1x32x96xf32> to vector<32x96xf32>
    %cst_18 = arith.constant dense<0.000000e+00> : vector<70x96xf32>
    %27 = tpu.matmul %24, %26, %cst_18 {dimension_numbers = #tpu.dot_dimension_numbers<[1], [0], [0], [1], [0, 0, 1, 1], [], []>} : vector<70x32xf32>, vector<32x96xf32>, vector<70x96xf32> -> vector<70x96xf32>
    %28 = arith.addf %23, %27 : vector<70x96xf32>
    %29 = vector.extract_strided_slice %7 {offsets = [4, 0], sizes = [70, 32], strides = [1, 1]} : vector<108x32xf32> to vector<70x32xf32>
    %c4 = arith.constant 4 : index
    %c0_19 = arith.constant 0 : index
    %c0_20 = arith.constant 0 : index
    %30 = vector.load %arg3[%c4, %c0_19, %c0_20] : memref<39x32x96xf32, #tpu.memory_space<vmem>>, vector<1x32x96xf32>
    %31 = vector.shape_cast %30 : vector<1x32x96xf32> to vector<32x96xf32>
    %cst_21 = arith.constant dense<0.000000e+00> : vector<70x96xf32>
    %32 = tpu.matmul %29, %31, %cst_21 {dimension_numbers = #tpu.dot_dimension_numbers<[1], [0], [0], [1], [0, 0, 1, 1], [], []>} : vector<70x32xf32>, vector<32x96xf32>, vector<70x96xf32> -> vector<70x96xf32>
    %33 = arith.addf %28, %32 : vector<70x96xf32>
    %34 = vector.extract_strided_slice %7 {offsets = [5, 0], sizes = [70, 32], strides = [1, 1]} : vector<108x32xf32> to vector<70x32xf32>
    %c5 = arith.constant 5 : index
    %c0_22 = arith.constant 0 : index
    %c0_23 = arith.constant 0 : index
    %35 = vector.load %arg3[%c5, %c0_22, %c0_23] : memref<39x32x96xf32, #tpu.memory_space<vmem>>, vector<1x32x96xf32>
    %36 = vector.shape_cast %35 : vector<1x32x96xf32> to vector<32x96xf32>
    %cst_24 = arith.constant dense<0.000000e+00> : vector<70x96xf32>
    %37 = tpu.matmul %34, %36, %cst_24 {dimension_numbers = #tpu.dot_dimension_numbers<[1], [0], [0], [1], [0, 0, 1, 1], [], []>} : vector<70x32xf32>, vector<32x96xf32>, vector<70x96xf32> -> vector<70x96xf32>
    %38 = arith.addf %33, %37 : vector<70x96xf32>
    %39 = vector.extract_strided_slice %7 {offsets = [6, 0], sizes = [70, 32], strides = [1, 1]} : vector<108x32xf32> to vector<70x32xf32>
    %c6 = arith.constant 6 : index
    %c0_25 = arith.constant 0 : index
    %c0_26 = arith.constant 0 : index
    %40 = vector.load %arg3[%c6, %c0_25, %c0_26] : memref<39x32x96xf32, #tpu.memory_space<vmem>>, vector<1x32x96xf32>
    %41 = vector.shape_cast %40 : vector<1x32x96xf32> to vector<32x96xf32>
    %cst_27 = arith.constant dense<0.000000e+00> : vector<70x96xf32>
    %42 = tpu.matmul %39, %41, %cst_27 {dimension_numbers = #tpu.dot_dimension_numbers<[1], [0], [0], [1], [0, 0, 1, 1], [], []>} : vector<70x32xf32>, vector<32x96xf32>, vector<70x96xf32> -> vector<70x96xf32>
    %43 = arith.addf %38, %42 : vector<70x96xf32>
    %44 = vector.extract_strided_slice %7 {offsets = [7, 0], sizes = [70, 32], strides = [1, 1]} : vector<108x32xf32> to vector<70x32xf32>
    %c7 = arith.constant 7 : index
    %c0_28 = arith.constant 0 : index
    %c0_29 = arith.constant 0 : index
    %45 = vector.load %arg3[%c7, %c0_28, %c0_29] : memref<39x32x96xf32, #tpu.memory_space<vmem>>, vector<1x32x96xf32>
    %46 = vector.shape_cast %45 : vector<1x32x96xf32> to vector<32x96xf32>
    %cst_30 = arith.constant dense<0.000000e+00> : vector<70x96xf32>
    %47 = tpu.matmul %44, %46, %cst_30 {dimension_numbers = #tpu.dot_dimension_numbers<[1], [0], [0], [1], [0, 0, 1, 1], [], []>} : vector<70x32xf32>, vector<32x96xf32>, vector<70x96xf32> -> vector<70x96xf32>
    %48 = arith.addf %43, %47 : vector<70x96xf32>
    %49 = vector.extract_strided_slice %7 {offsets = [8, 0], sizes = [70, 32], strides = [1, 1]} : vector<108x32xf32> to vector<70x32xf32>
    %c8 = arith.constant 8 : index
    %c0_31 = arith.constant 0 : index
    %c0_32 = arith.constant 0 : index
    %50 = vector.load %arg3[%c8, %c0_31, %c0_32] : memref<39x32x96xf32, #tpu.memory_space<vmem>>, vector<1x32x96xf32>
    %51 = vector.shape_cast %50 : vector<1x32x96xf32> to vector<32x96xf32>
    %cst_33 = arith.constant dense<0.000000e+00> : vector<70x96xf32>
    %52 = tpu.matmul %49, %51, %cst_33 {dimension_numbers = #tpu.dot_dimension_numbers<[1], [0], [0], [1], [0, 0, 1, 1], [], []>} : vector<70x32xf32>, vector<32x96xf32>, vector<70x96xf32> -> vector<70x96xf32>
    %53 = arith.addf %48, %52 : vector<70x96xf32>
    %54 = vector.extract_strided_slice %7 {offsets = [9, 0], sizes = [70, 32], strides = [1, 1]} : vector<108x32xf32> to vector<70x32xf32>
    %c9 = arith.constant 9 : index
    %c0_34 = arith.constant 0 : index
    %c0_35 = arith.constant 0 : index
    %55 = vector.load %arg3[%c9, %c0_34, %c0_35] : memref<39x32x96xf32, #tpu.memory_space<vmem>>, vector<1x32x96xf32>
    %56 = vector.shape_cast %55 : vector<1x32x96xf32> to vector<32x96xf32>
    %cst_36 = arith.constant dense<0.000000e+00> : vector<70x96xf32>
    %57 = tpu.matmul %54, %56, %cst_36 {dimension_numbers = #tpu.dot_dimension_numbers<[1], [0], [0], [1], [0, 0, 1, 1], [], []>} : vector<70x32xf32>, vector<32x96xf32>, vector<70x96xf32> -> vector<70x96xf32>
    %58 = arith.addf %53, %57 : vector<70x96xf32>
    %59 = vector.extract_strided_slice %7 {offsets = [10, 0], sizes = [70, 32], strides = [1, 1]} : vector<108x32xf32> to vector<70x32xf32>
    %c10 = arith.constant 10 : index
    %c0_37 = arith.constant 0 : index
    %c0_38 = arith.constant 0 : index
    %60 = vector.load %arg3[%c10, %c0_37, %c0_38] : memref<39x32x96xf32, #tpu.memory_space<vmem>>, vector<1x32x96xf32>
    %61 = vector.shape_cast %60 : vector<1x32x96xf32> to vector<32x96xf32>
    %cst_39 = arith.constant dense<0.000000e+00> : vector<70x96xf32>
    %62 = tpu.matmul %59, %61, %cst_39 {dimension_numbers = #tpu.dot_dimension_numbers<[1], [0], [0], [1], [0, 0, 1, 1], [], []>} : vector<70x32xf32>, vector<32x96xf32>, vector<70x96xf32> -> vector<70x96xf32>
    %63 = arith.addf %58, %62 : vector<70x96xf32>
    %64 = vector.extract_strided_slice %7 {offsets = [11, 0], sizes = [70, 32], strides = [1, 1]} : vector<108x32xf32> to vector<70x32xf32>
    %c11 = arith.constant 11 : index
    %c0_40 = arith.constant 0 : index
    %c0_41 = arith.constant 0 : index
    %65 = vector.load %arg3[%c11, %c0_40, %c0_41] : memref<39x32x96xf32, #tpu.memory_space<vmem>>, vector<1x32x96xf32>
    %66 = vector.shape_cast %65 : vector<1x32x96xf32> to vector<32x96xf32>
    %cst_42 = arith.constant dense<0.000000e+00> : vector<70x96xf32>
    %67 = tpu.matmul %64, %66, %cst_42 {dimension_numbers = #tpu.dot_dimension_numbers<[1], [0], [0], [1], [0, 0, 1, 1], [], []>} : vector<70x32xf32>, vector<32x96xf32>, vector<70x96xf32> -> vector<70x96xf32>
    %68 = arith.addf %63, %67 : vector<70x96xf32>
    %69 = vector.extract_strided_slice %7 {offsets = [12, 0], sizes = [70, 32], strides = [1, 1]} : vector<108x32xf32> to vector<70x32xf32>
    %c12 = arith.constant 12 : index
    %c0_43 = arith.constant 0 : index
    %c0_44 = arith.constant 0 : index
    %70 = vector.load %arg3[%c12, %c0_43, %c0_44] : memref<39x32x96xf32, #tpu.memory_space<vmem>>, vector<1x32x96xf32>
    %71 = vector.shape_cast %70 : vector<1x32x96xf32> to vector<32x96xf32>
    %cst_45 = arith.constant dense<0.000000e+00> : vector<70x96xf32>
    %72 = tpu.matmul %69, %71, %cst_45 {dimension_numbers = #tpu.dot_dimension_numbers<[1], [0], [0], [1], [0, 0, 1, 1], [], []>} : vector<70x32xf32>, vector<32x96xf32>, vector<70x96xf32> -> vector<70x96xf32>
    %73 = arith.addf %68, %72 : vector<70x96xf32>
    %74 = vector.extract_strided_slice %7 {offsets = [13, 0], sizes = [70, 32], strides = [1, 1]} : vector<108x32xf32> to vector<70x32xf32>
    %c13 = arith.constant 13 : index
    %c0_46 = arith.constant 0 : index
    %c0_47 = arith.constant 0 : index
    %75 = vector.load %arg3[%c13, %c0_46, %c0_47] : memref<39x32x96xf32, #tpu.memory_space<vmem>>, vector<1x32x96xf32>
    %76 = vector.shape_cast %75 : vector<1x32x96xf32> to vector<32x96xf32>
    %cst_48 = arith.constant dense<0.000000e+00> : vector<70x96xf32>
    %77 = tpu.matmul %74, %76, %cst_48 {dimension_numbers = #tpu.dot_dimension_numbers<[1], [0], [0], [1], [0, 0, 1, 1], [], []>} : vector<70x32xf32>, vector<32x96xf32>, vector<70x96xf32> -> vector<70x96xf32>
    %78 = arith.addf %73, %77 : vector<70x96xf32>
    %79 = vector.extract_strided_slice %7 {offsets = [14, 0], sizes = [70, 32], strides = [1, 1]} : vector<108x32xf32> to vector<70x32xf32>
    %c14 = arith.constant 14 : index
    %c0_49 = arith.constant 0 : index
    %c0_50 = arith.constant 0 : index
    %80 = vector.load %arg3[%c14, %c0_49, %c0_50] : memref<39x32x96xf32, #tpu.memory_space<vmem>>, vector<1x32x96xf32>
    %81 = vector.shape_cast %80 : vector<1x32x96xf32> to vector<32x96xf32>
    %cst_51 = arith.constant dense<0.000000e+00> : vector<70x96xf32>
    %82 = tpu.matmul %79, %81, %cst_51 {dimension_numbers = #tpu.dot_dimension_numbers<[1], [0], [0], [1], [0, 0, 1, 1], [], []>} : vector<70x32xf32>, vector<32x96xf32>, vector<70x96xf32> -> vector<70x96xf32>
    %83 = arith.addf %78, %82 : vector<70x96xf32>
    %84 = vector.extract_strided_slice %7 {offsets = [15, 0], sizes = [70, 32], strides = [1, 1]} : vector<108x32xf32> to vector<70x32xf32>
    %c15 = arith.constant 15 : index
    %c0_52 = arith.constant 0 : index
    %c0_53 = arith.constant 0 : index
    %85 = vector.load %arg3[%c15, %c0_52, %c0_53] : memref<39x32x96xf32, #tpu.memory_space<vmem>>, vector<1x32x96xf32>
    %86 = vector.shape_cast %85 : vector<1x32x96xf32> to vector<32x96xf32>
    %cst_54 = arith.constant dense<0.000000e+00> : vector<70x96xf32>
    %87 = tpu.matmul %84, %86, %cst_54 {dimension_numbers = #tpu.dot_dimension_numbers<[1], [0], [0], [1], [0, 0, 1, 1], [], []>} : vector<70x32xf32>, vector<32x96xf32>, vector<70x96xf32> -> vector<70x96xf32>
    %88 = arith.addf %83, %87 : vector<70x96xf32>
    %89 = vector.extract_strided_slice %7 {offsets = [16, 0], sizes = [70, 32], strides = [1, 1]} : vector<108x32xf32> to vector<70x32xf32>
    %c16 = arith.constant 16 : index
    %c0_55 = arith.constant 0 : index
    %c0_56 = arith.constant 0 : index
    %90 = vector.load %arg3[%c16, %c0_55, %c0_56] : memref<39x32x96xf32, #tpu.memory_space<vmem>>, vector<1x32x96xf32>
    %91 = vector.shape_cast %90 : vector<1x32x96xf32> to vector<32x96xf32>
    %cst_57 = arith.constant dense<0.000000e+00> : vector<70x96xf32>
    %92 = tpu.matmul %89, %91, %cst_57 {dimension_numbers = #tpu.dot_dimension_numbers<[1], [0], [0], [1], [0, 0, 1, 1], [], []>} : vector<70x32xf32>, vector<32x96xf32>, vector<70x96xf32> -> vector<70x96xf32>
    %93 = arith.addf %88, %92 : vector<70x96xf32>
    %94 = vector.extract_strided_slice %7 {offsets = [17, 0], sizes = [70, 32], strides = [1, 1]} : vector<108x32xf32> to vector<70x32xf32>
    %c17 = arith.constant 17 : index
    %c0_58 = arith.constant 0 : index
    %c0_59 = arith.constant 0 : index
    %95 = vector.load %arg3[%c17, %c0_58, %c0_59] : memref<39x32x96xf32, #tpu.memory_space<vmem>>, vector<1x32x96xf32>
    %96 = vector.shape_cast %95 : vector<1x32x96xf32> to vector<32x96xf32>
    %cst_60 = arith.constant dense<0.000000e+00> : vector<70x96xf32>
    %97 = tpu.matmul %94, %96, %cst_60 {dimension_numbers = #tpu.dot_dimension_numbers<[1], [0], [0], [1], [0, 0, 1, 1], [], []>} : vector<70x32xf32>, vector<32x96xf32>, vector<70x96xf32> -> vector<70x96xf32>
    %98 = arith.addf %93, %97 : vector<70x96xf32>
    %99 = vector.extract_strided_slice %7 {offsets = [18, 0], sizes = [70, 32], strides = [1, 1]} : vector<108x32xf32> to vector<70x32xf32>
    %c18 = arith.constant 18 : index
    %c0_61 = arith.constant 0 : index
    %c0_62 = arith.constant 0 : index
    %100 = vector.load %arg3[%c18, %c0_61, %c0_62] : memref<39x32x96xf32, #tpu.memory_space<vmem>>, vector<1x32x96xf32>
    %101 = vector.shape_cast %100 : vector<1x32x96xf32> to vector<32x96xf32>
    %cst_63 = arith.constant dense<0.000000e+00> : vector<70x96xf32>
    %102 = tpu.matmul %99, %101, %cst_63 {dimension_numbers = #tpu.dot_dimension_numbers<[1], [0], [0], [1], [0, 0, 1, 1], [], []>} : vector<70x32xf32>, vector<32x96xf32>, vector<70x96xf32> -> vector<70x96xf32>
    %103 = arith.addf %98, %102 : vector<70x96xf32>
    %104 = vector.extract_strided_slice %7 {offsets = [19, 0], sizes = [70, 32], strides = [1, 1]} : vector<108x32xf32> to vector<70x32xf32>
    %c19 = arith.constant 19 : index
    %c0_64 = arith.constant 0 : index
    %c0_65 = arith.constant 0 : index
    %105 = vector.load %arg3[%c19, %c0_64, %c0_65] : memref<39x32x96xf32, #tpu.memory_space<vmem>>, vector<1x32x96xf32>
    %106 = vector.shape_cast %105 : vector<1x32x96xf32> to vector<32x96xf32>
    %cst_66 = arith.constant dense<0.000000e+00> : vector<70x96xf32>
    %107 = tpu.matmul %104, %106, %cst_66 {dimension_numbers = #tpu.dot_dimension_numbers<[1], [0], [0], [1], [0, 0, 1, 1], [], []>} : vector<70x32xf32>, vector<32x96xf32>, vector<70x96xf32> -> vector<70x96xf32>
    %108 = arith.addf %103, %107 : vector<70x96xf32>
    %109 = vector.extract_strided_slice %7 {offsets = [20, 0], sizes = [70, 32], strides = [1, 1]} : vector<108x32xf32> to vector<70x32xf32>
    %c20 = arith.constant 20 : index
    %c0_67 = arith.constant 0 : index
    %c0_68 = arith.constant 0 : index
    %110 = vector.load %arg3[%c20, %c0_67, %c0_68] : memref<39x32x96xf32, #tpu.memory_space<vmem>>, vector<1x32x96xf32>
    %111 = vector.shape_cast %110 : vector<1x32x96xf32> to vector<32x96xf32>
    %cst_69 = arith.constant dense<0.000000e+00> : vector<70x96xf32>
    %112 = tpu.matmul %109, %111, %cst_69 {dimension_numbers = #tpu.dot_dimension_numbers<[1], [0], [0], [1], [0, 0, 1, 1], [], []>} : vector<70x32xf32>, vector<32x96xf32>, vector<70x96xf32> -> vector<70x96xf32>
    %113 = arith.addf %108, %112 : vector<70x96xf32>
    %114 = vector.extract_strided_slice %7 {offsets = [21, 0], sizes = [70, 32], strides = [1, 1]} : vector<108x32xf32> to vector<70x32xf32>
    %c21 = arith.constant 21 : index
    %c0_70 = arith.constant 0 : index
    %c0_71 = arith.constant 0 : index
    %115 = vector.load %arg3[%c21, %c0_70, %c0_71] : memref<39x32x96xf32, #tpu.memory_space<vmem>>, vector<1x32x96xf32>
    %116 = vector.shape_cast %115 : vector<1x32x96xf32> to vector<32x96xf32>
    %cst_72 = arith.constant dense<0.000000e+00> : vector<70x96xf32>
    %117 = tpu.matmul %114, %116, %cst_72 {dimension_numbers = #tpu.dot_dimension_numbers<[1], [0], [0], [1], [0, 0, 1, 1], [], []>} : vector<70x32xf32>, vector<32x96xf32>, vector<70x96xf32> -> vector<70x96xf32>
    %118 = arith.addf %113, %117 : vector<70x96xf32>
    %119 = vector.extract_strided_slice %7 {offsets = [22, 0], sizes = [70, 32], strides = [1, 1]} : vector<108x32xf32> to vector<70x32xf32>
    %c22 = arith.constant 22 : index
    %c0_73 = arith.constant 0 : index
    %c0_74 = arith.constant 0 : index
    %120 = vector.load %arg3[%c22, %c0_73, %c0_74] : memref<39x32x96xf32, #tpu.memory_space<vmem>>, vector<1x32x96xf32>
    %121 = vector.shape_cast %120 : vector<1x32x96xf32> to vector<32x96xf32>
    %cst_75 = arith.constant dense<0.000000e+00> : vector<70x96xf32>
    %122 = tpu.matmul %119, %121, %cst_75 {dimension_numbers = #tpu.dot_dimension_numbers<[1], [0], [0], [1], [0, 0, 1, 1], [], []>} : vector<70x32xf32>, vector<32x96xf32>, vector<70x96xf32> -> vector<70x96xf32>
    %123 = arith.addf %118, %122 : vector<70x96xf32>
    %124 = vector.extract_strided_slice %7 {offsets = [23, 0], sizes = [70, 32], strides = [1, 1]} : vector<108x32xf32> to vector<70x32xf32>
    %c23 = arith.constant 23 : index
    %c0_76 = arith.constant 0 : index
    %c0_77 = arith.constant 0 : index
    %125 = vector.load %arg3[%c23, %c0_76, %c0_77] : memref<39x32x96xf32, #tpu.memory_space<vmem>>, vector<1x32x96xf32>
    %126 = vector.shape_cast %125 : vector<1x32x96xf32> to vector<32x96xf32>
    %cst_78 = arith.constant dense<0.000000e+00> : vector<70x96xf32>
    %127 = tpu.matmul %124, %126, %cst_78 {dimension_numbers = #tpu.dot_dimension_numbers<[1], [0], [0], [1], [0, 0, 1, 1], [], []>} : vector<70x32xf32>, vector<32x96xf32>, vector<70x96xf32> -> vector<70x96xf32>
    %128 = arith.addf %123, %127 : vector<70x96xf32>
    %129 = vector.extract_strided_slice %7 {offsets = [24, 0], sizes = [70, 32], strides = [1, 1]} : vector<108x32xf32> to vector<70x32xf32>
    %c24 = arith.constant 24 : index
    %c0_79 = arith.constant 0 : index
    %c0_80 = arith.constant 0 : index
    %130 = vector.load %arg3[%c24, %c0_79, %c0_80] : memref<39x32x96xf32, #tpu.memory_space<vmem>>, vector<1x32x96xf32>
    %131 = vector.shape_cast %130 : vector<1x32x96xf32> to vector<32x96xf32>
    %cst_81 = arith.constant dense<0.000000e+00> : vector<70x96xf32>
    %132 = tpu.matmul %129, %131, %cst_81 {dimension_numbers = #tpu.dot_dimension_numbers<[1], [0], [0], [1], [0, 0, 1, 1], [], []>} : vector<70x32xf32>, vector<32x96xf32>, vector<70x96xf32> -> vector<70x96xf32>
    %133 = arith.addf %128, %132 : vector<70x96xf32>
    %134 = vector.extract_strided_slice %7 {offsets = [25, 0], sizes = [70, 32], strides = [1, 1]} : vector<108x32xf32> to vector<70x32xf32>
    %c25 = arith.constant 25 : index
    %c0_82 = arith.constant 0 : index
    %c0_83 = arith.constant 0 : index
    %135 = vector.load %arg3[%c25, %c0_82, %c0_83] : memref<39x32x96xf32, #tpu.memory_space<vmem>>, vector<1x32x96xf32>
    %136 = vector.shape_cast %135 : vector<1x32x96xf32> to vector<32x96xf32>
    %cst_84 = arith.constant dense<0.000000e+00> : vector<70x96xf32>
    %137 = tpu.matmul %134, %136, %cst_84 {dimension_numbers = #tpu.dot_dimension_numbers<[1], [0], [0], [1], [0, 0, 1, 1], [], []>} : vector<70x32xf32>, vector<32x96xf32>, vector<70x96xf32> -> vector<70x96xf32>
    %138 = arith.addf %133, %137 : vector<70x96xf32>
    %139 = vector.extract_strided_slice %7 {offsets = [26, 0], sizes = [70, 32], strides = [1, 1]} : vector<108x32xf32> to vector<70x32xf32>
    %c26 = arith.constant 26 : index
    %c0_85 = arith.constant 0 : index
    %c0_86 = arith.constant 0 : index
    %140 = vector.load %arg3[%c26, %c0_85, %c0_86] : memref<39x32x96xf32, #tpu.memory_space<vmem>>, vector<1x32x96xf32>
    %141 = vector.shape_cast %140 : vector<1x32x96xf32> to vector<32x96xf32>
    %cst_87 = arith.constant dense<0.000000e+00> : vector<70x96xf32>
    %142 = tpu.matmul %139, %141, %cst_87 {dimension_numbers = #tpu.dot_dimension_numbers<[1], [0], [0], [1], [0, 0, 1, 1], [], []>} : vector<70x32xf32>, vector<32x96xf32>, vector<70x96xf32> -> vector<70x96xf32>
    %143 = arith.addf %138, %142 : vector<70x96xf32>
    %144 = vector.extract_strided_slice %7 {offsets = [27, 0], sizes = [70, 32], strides = [1, 1]} : vector<108x32xf32> to vector<70x32xf32>
    %c27 = arith.constant 27 : index
    %c0_88 = arith.constant 0 : index
    %c0_89 = arith.constant 0 : index
    %145 = vector.load %arg3[%c27, %c0_88, %c0_89] : memref<39x32x96xf32, #tpu.memory_space<vmem>>, vector<1x32x96xf32>
    %146 = vector.shape_cast %145 : vector<1x32x96xf32> to vector<32x96xf32>
    %cst_90 = arith.constant dense<0.000000e+00> : vector<70x96xf32>
    %147 = tpu.matmul %144, %146, %cst_90 {dimension_numbers = #tpu.dot_dimension_numbers<[1], [0], [0], [1], [0, 0, 1, 1], [], []>} : vector<70x32xf32>, vector<32x96xf32>, vector<70x96xf32> -> vector<70x96xf32>
    %148 = arith.addf %143, %147 : vector<70x96xf32>
    %149 = vector.extract_strided_slice %7 {offsets = [28, 0], sizes = [70, 32], strides = [1, 1]} : vector<108x32xf32> to vector<70x32xf32>
    %c28 = arith.constant 28 : index
    %c0_91 = arith.constant 0 : index
    %c0_92 = arith.constant 0 : index
    %150 = vector.load %arg3[%c28, %c0_91, %c0_92] : memref<39x32x96xf32, #tpu.memory_space<vmem>>, vector<1x32x96xf32>
    %151 = vector.shape_cast %150 : vector<1x32x96xf32> to vector<32x96xf32>
    %cst_93 = arith.constant dense<0.000000e+00> : vector<70x96xf32>
    %152 = tpu.matmul %149, %151, %cst_93 {dimension_numbers = #tpu.dot_dimension_numbers<[1], [0], [0], [1], [0, 0, 1, 1], [], []>} : vector<70x32xf32>, vector<32x96xf32>, vector<70x96xf32> -> vector<70x96xf32>
    %153 = arith.addf %148, %152 : vector<70x96xf32>
    %154 = vector.extract_strided_slice %7 {offsets = [29, 0], sizes = [70, 32], strides = [1, 1]} : vector<108x32xf32> to vector<70x32xf32>
    %c29 = arith.constant 29 : index
    %c0_94 = arith.constant 0 : index
    %c0_95 = arith.constant 0 : index
    %155 = vector.load %arg3[%c29, %c0_94, %c0_95] : memref<39x32x96xf32, #tpu.memory_space<vmem>>, vector<1x32x96xf32>
    %156 = vector.shape_cast %155 : vector<1x32x96xf32> to vector<32x96xf32>
    %cst_96 = arith.constant dense<0.000000e+00> : vector<70x96xf32>
    %157 = tpu.matmul %154, %156, %cst_96 {dimension_numbers = #tpu.dot_dimension_numbers<[1], [0], [0], [1], [0, 0, 1, 1], [], []>} : vector<70x32xf32>, vector<32x96xf32>, vector<70x96xf32> -> vector<70x96xf32>
    %158 = arith.addf %153, %157 : vector<70x96xf32>
    %159 = vector.extract_strided_slice %7 {offsets = [30, 0], sizes = [70, 32], strides = [1, 1]} : vector<108x32xf32> to vector<70x32xf32>
    %c30 = arith.constant 30 : index
    %c0_97 = arith.constant 0 : index
    %c0_98 = arith.constant 0 : index
    %160 = vector.load %arg3[%c30, %c0_97, %c0_98] : memref<39x32x96xf32, #tpu.memory_space<vmem>>, vector<1x32x96xf32>
    %161 = vector.shape_cast %160 : vector<1x32x96xf32> to vector<32x96xf32>
    %cst_99 = arith.constant dense<0.000000e+00> : vector<70x96xf32>
    %162 = tpu.matmul %159, %161, %cst_99 {dimension_numbers = #tpu.dot_dimension_numbers<[1], [0], [0], [1], [0, 0, 1, 1], [], []>} : vector<70x32xf32>, vector<32x96xf32>, vector<70x96xf32> -> vector<70x96xf32>
    %163 = arith.addf %158, %162 : vector<70x96xf32>
    %164 = vector.extract_strided_slice %7 {offsets = [31, 0], sizes = [70, 32], strides = [1, 1]} : vector<108x32xf32> to vector<70x32xf32>
    %c31 = arith.constant 31 : index
    %c0_100 = arith.constant 0 : index
    %c0_101 = arith.constant 0 : index
    %165 = vector.load %arg3[%c31, %c0_100, %c0_101] : memref<39x32x96xf32, #tpu.memory_space<vmem>>, vector<1x32x96xf32>
    %166 = vector.shape_cast %165 : vector<1x32x96xf32> to vector<32x96xf32>
    %cst_102 = arith.constant dense<0.000000e+00> : vector<70x96xf32>
    %167 = tpu.matmul %164, %166, %cst_102 {dimension_numbers = #tpu.dot_dimension_numbers<[1], [0], [0], [1], [0, 0, 1, 1], [], []>} : vector<70x32xf32>, vector<32x96xf32>, vector<70x96xf32> -> vector<70x96xf32>
    %168 = arith.addf %163, %167 : vector<70x96xf32>
    %169 = vector.extract_strided_slice %7 {offsets = [32, 0], sizes = [70, 32], strides = [1, 1]} : vector<108x32xf32> to vector<70x32xf32>
    %c32 = arith.constant 32 : index
    %c0_103 = arith.constant 0 : index
    %c0_104 = arith.constant 0 : index
    %170 = vector.load %arg3[%c32, %c0_103, %c0_104] : memref<39x32x96xf32, #tpu.memory_space<vmem>>, vector<1x32x96xf32>
    %171 = vector.shape_cast %170 : vector<1x32x96xf32> to vector<32x96xf32>
    %cst_105 = arith.constant dense<0.000000e+00> : vector<70x96xf32>
    %172 = tpu.matmul %169, %171, %cst_105 {dimension_numbers = #tpu.dot_dimension_numbers<[1], [0], [0], [1], [0, 0, 1, 1], [], []>} : vector<70x32xf32>, vector<32x96xf32>, vector<70x96xf32> -> vector<70x96xf32>
    %173 = arith.addf %168, %172 : vector<70x96xf32>
    %174 = vector.extract_strided_slice %7 {offsets = [33, 0], sizes = [70, 32], strides = [1, 1]} : vector<108x32xf32> to vector<70x32xf32>
    %c33 = arith.constant 33 : index
    %c0_106 = arith.constant 0 : index
    %c0_107 = arith.constant 0 : index
    %175 = vector.load %arg3[%c33, %c0_106, %c0_107] : memref<39x32x96xf32, #tpu.memory_space<vmem>>, vector<1x32x96xf32>
    %176 = vector.shape_cast %175 : vector<1x32x96xf32> to vector<32x96xf32>
    %cst_108 = arith.constant dense<0.000000e+00> : vector<70x96xf32>
    %177 = tpu.matmul %174, %176, %cst_108 {dimension_numbers = #tpu.dot_dimension_numbers<[1], [0], [0], [1], [0, 0, 1, 1], [], []>} : vector<70x32xf32>, vector<32x96xf32>, vector<70x96xf32> -> vector<70x96xf32>
    %178 = arith.addf %173, %177 : vector<70x96xf32>
    %179 = vector.extract_strided_slice %7 {offsets = [34, 0], sizes = [70, 32], strides = [1, 1]} : vector<108x32xf32> to vector<70x32xf32>
    %c34 = arith.constant 34 : index
    %c0_109 = arith.constant 0 : index
    %c0_110 = arith.constant 0 : index
    %180 = vector.load %arg3[%c34, %c0_109, %c0_110] : memref<39x32x96xf32, #tpu.memory_space<vmem>>, vector<1x32x96xf32>
    %181 = vector.shape_cast %180 : vector<1x32x96xf32> to vector<32x96xf32>
    %cst_111 = arith.constant dense<0.000000e+00> : vector<70x96xf32>
    %182 = tpu.matmul %179, %181, %cst_111 {dimension_numbers = #tpu.dot_dimension_numbers<[1], [0], [0], [1], [0, 0, 1, 1], [], []>} : vector<70x32xf32>, vector<32x96xf32>, vector<70x96xf32> -> vector<70x96xf32>
    %183 = arith.addf %178, %182 : vector<70x96xf32>
    %184 = vector.extract_strided_slice %7 {offsets = [35, 0], sizes = [70, 32], strides = [1, 1]} : vector<108x32xf32> to vector<70x32xf32>
    %c35 = arith.constant 35 : index
    %c0_112 = arith.constant 0 : index
    %c0_113 = arith.constant 0 : index
    %185 = vector.load %arg3[%c35, %c0_112, %c0_113] : memref<39x32x96xf32, #tpu.memory_space<vmem>>, vector<1x32x96xf32>
    %186 = vector.shape_cast %185 : vector<1x32x96xf32> to vector<32x96xf32>
    %cst_114 = arith.constant dense<0.000000e+00> : vector<70x96xf32>
    %187 = tpu.matmul %184, %186, %cst_114 {dimension_numbers = #tpu.dot_dimension_numbers<[1], [0], [0], [1], [0, 0, 1, 1], [], []>} : vector<70x32xf32>, vector<32x96xf32>, vector<70x96xf32> -> vector<70x96xf32>
    %188 = arith.addf %183, %187 : vector<70x96xf32>
    %189 = vector.extract_strided_slice %7 {offsets = [36, 0], sizes = [70, 32], strides = [1, 1]} : vector<108x32xf32> to vector<70x32xf32>
    %c36 = arith.constant 36 : index
    %c0_115 = arith.constant 0 : index
    %c0_116 = arith.constant 0 : index
    %190 = vector.load %arg3[%c36, %c0_115, %c0_116] : memref<39x32x96xf32, #tpu.memory_space<vmem>>, vector<1x32x96xf32>
    %191 = vector.shape_cast %190 : vector<1x32x96xf32> to vector<32x96xf32>
    %cst_117 = arith.constant dense<0.000000e+00> : vector<70x96xf32>
    %192 = tpu.matmul %189, %191, %cst_117 {dimension_numbers = #tpu.dot_dimension_numbers<[1], [0], [0], [1], [0, 0, 1, 1], [], []>} : vector<70x32xf32>, vector<32x96xf32>, vector<70x96xf32> -> vector<70x96xf32>
    %193 = arith.addf %188, %192 : vector<70x96xf32>
    %194 = vector.extract_strided_slice %7 {offsets = [37, 0], sizes = [70, 32], strides = [1, 1]} : vector<108x32xf32> to vector<70x32xf32>
    %c37 = arith.constant 37 : index
    %c0_118 = arith.constant 0 : index
    %c0_119 = arith.constant 0 : index
    %195 = vector.load %arg3[%c37, %c0_118, %c0_119] : memref<39x32x96xf32, #tpu.memory_space<vmem>>, vector<1x32x96xf32>
    %196 = vector.shape_cast %195 : vector<1x32x96xf32> to vector<32x96xf32>
    %cst_120 = arith.constant dense<0.000000e+00> : vector<70x96xf32>
    %197 = tpu.matmul %194, %196, %cst_120 {dimension_numbers = #tpu.dot_dimension_numbers<[1], [0], [0], [1], [0, 0, 1, 1], [], []>} : vector<70x32xf32>, vector<32x96xf32>, vector<70x96xf32> -> vector<70x96xf32>
    %198 = arith.addf %193, %197 : vector<70x96xf32>
    %199 = vector.extract_strided_slice %7 {offsets = [38, 0], sizes = [70, 32], strides = [1, 1]} : vector<108x32xf32> to vector<70x32xf32>
    %c38 = arith.constant 38 : index
    %c0_121 = arith.constant 0 : index
    %c0_122 = arith.constant 0 : index
    %200 = vector.load %arg3[%c38, %c0_121, %c0_122] : memref<39x32x96xf32, #tpu.memory_space<vmem>>, vector<1x32x96xf32>
    %201 = vector.shape_cast %200 : vector<1x32x96xf32> to vector<32x96xf32>
    %cst_123 = arith.constant dense<0.000000e+00> : vector<70x96xf32>
    %202 = tpu.matmul %199, %201, %cst_123 {dimension_numbers = #tpu.dot_dimension_numbers<[1], [0], [0], [1], [0, 0, 1, 1], [], []>} : vector<70x32xf32>, vector<32x96xf32>, vector<70x96xf32> -> vector<70x96xf32>
    %203 = arith.addf %198, %202 : vector<70x96xf32>
    %204 = vector.extract_strided_slice %203 {offsets = [0, 0], sizes = [16, 96], strides = [1, 1]} : vector<70x96xf32> to vector<16x96xf32>
    %205 = vector.extract_strided_slice %203 {offsets = [54, 0], sizes = [16, 96], strides = [1, 1]} : vector<70x96xf32> to vector<16x96xf32>
    %206 = tpu.concatenate %204, %205 in 0 : vector<16x96xf32>, vector<16x96xf32> -> vector<32x96xf32>
    %cst_124 = arith.constant -3.40282347E+38 : f32
    %207 = vector.broadcast %cst_124 : f32 to vector<2x1x128xf32>
    %208 = tpu.concatenate %207, %0, %207 in 1 : vector<2x1x128xf32>, vector<2x16x128xf32>, vector<2x1x128xf32> -> vector<2x18x128xf32>
    %209 = vector.extract_strided_slice %208 {offsets = [0, 0, 0], sizes = [2, 16, 128], strides = [1, 1, 1]} : vector<2x18x128xf32> to vector<2x16x128xf32>
    %210 = vector.extract_strided_slice %208 {offsets = [0, 1, 0], sizes = [2, 16, 128], strides = [1, 1, 1]} : vector<2x18x128xf32> to vector<2x16x128xf32>
    %211 = arith.maximumf %209, %210 : vector<2x16x128xf32>
    %212 = vector.extract_strided_slice %208 {offsets = [0, 2, 0], sizes = [2, 16, 128], strides = [1, 1, 1]} : vector<2x18x128xf32> to vector<2x16x128xf32>
    %213 = arith.maximumf %211, %212 : vector<2x16x128xf32>
    %214 = vector.shape_cast %213 : vector<2x16x128xf32> to vector<32x128xf32>
    %c0_125 = arith.constant 0 : index
    %c0_126 = arith.constant 0 : index
    %215 = vector.load %arg4[%c0_125, %c0_126] : memref<128x32xf32, #tpu.memory_space<vmem>>, vector<128x32xf32>
    %cst_127 = arith.constant dense<0.000000e+00> : vector<32x32xf32>
    %216 = tpu.matmul %214, %215, %cst_127 {dimension_numbers = #tpu.dot_dimension_numbers<[1], [0], [0], [1], [0, 0, 1, 1], [], []>} : vector<32x128xf32>, vector<128x32xf32>, vector<32x32xf32> -> vector<32x32xf32>
    %217 = tpu.concatenate %206, %216 in 1 : vector<32x96xf32>, vector<32x32xf32> -> vector<32x128xf32>
    %c0_128 = arith.constant 0 : index
    %c0_129 = arith.constant 0 : index
    %218 = vector.load %arg5[%c0_128, %c0_129] : memref<1x128xf32, #tpu.memory_space<vmem>>, vector<1x128xf32>
    %219 = vector.broadcast %218 : vector<1x128xf32> to vector<32x128xf32>
    %220 = arith.mulf %217, %219 : vector<32x128xf32>
    %c0_130 = arith.constant 0 : index
    %c0_131 = arith.constant 0 : index
    %221 = vector.load %arg6[%c0_130, %c0_131] : memref<1x128xf32, #tpu.memory_space<vmem>>, vector<1x128xf32>
    %222 = vector.broadcast %221 : vector<1x128xf32> to vector<32x128xf32>
    %223 = arith.addf %220, %222 : vector<32x128xf32>
    %cst_132 = arith.constant 0.000000e+00 : f32
    %224 = vector.broadcast %cst_132 : f32 to vector<32x128xf32>
    %225 = arith.maximumf %223, %224 : vector<32x128xf32>
    %226 = vector.shape_cast %225 : vector<32x128xf32> to vector<2x16x128xf32>
    %c0_133 = arith.constant 0 : index
    %c0_134 = arith.constant 0 : index
    %c0_135 = arith.constant 0 : index
    %227 = vector.load %arg7[%c0_133, %c0_134, %c0_135] : memref<2x16x128xf32, #tpu.memory_space<vmem>>, vector<2x16x128xf32>
    tpu.vector_store %arg7[%c0_133, %c0_134, %c0_135], %226 {strides = array<i32>} : memref<2x16x128xf32, #tpu.memory_space<vmem>>, vector<2x16x128xf32>,
    return
  }
  func.func @transform_0(%arg0: i32) -> (i32, i32, i32) {
    %c0_i32 = arith.constant 0 : i32
    %c0_i32_0 = arith.constant 0 : i32
    %c0_i32_1 = arith.constant 0 : i32
    return %arg0, %c0_i32, %c0_i32_0 : i32, i32, i32
  }
  func.func @transform_1(%arg0: i32) -> (i32, i32) {
    %c0_i32 = arith.constant 0 : i32
    %c0_i32_0 = arith.constant 0 : i32
    %c0_i32_1 = arith.constant 0 : i32
    return %c0_i32, %c0_i32_0 : i32, i32
  }
  func.func @transform_2(%arg0: i32) -> (i32, i32, i32) {
    %c0_i32 = arith.constant 0 : i32
    %c0_i32_0 = arith.constant 0 : i32
    %c0_i32_1 = arith.constant 0 : i32
    %c0_i32_2 = arith.constant 0 : i32
    return %c0_i32, %c0_i32_0, %c0_i32_1 : i32, i32, i32
  }
  func.func @transform_3(%arg0: i32) -> (i32, i32) {
    %c0_i32 = arith.constant 0 : i32
    %c0_i32_0 = arith.constant 0 : i32
    %c0_i32_1 = arith.constant 0 : i32
    return %c0_i32, %c0_i32_0 : i32, i32
  }
  func.func @transform_4(%arg0: i32) -> (i32, i32) {
    %c0_i32 = arith.constant 0 : i32
    %c0_i32_0 = arith.constant 0 : i32
    %c0_i32_1 = arith.constant 0 : i32
    return %c0_i32, %c0_i32_0 : i32, i32
  }
  func.func @transform_5(%arg0: i32) -> (i32, i32) {
    %c0_i32 = arith.constant 0 : i32
    %c0_i32_0 = arith.constant 0 : i32
    %c0_i32_1 = arith.constant 0 : i32
    return %c0_i32, %c0_i32_0 : i32, i32
  }
  func.func @transform_6(%arg0: i32) -> (i32, i32, i32) {
    %c0_i32 = arith.constant 0 : i32
    %c0_i32_0 = arith.constant 0 : i32
    %c0_i32_1 = arith.constant 0 : i32
    return %arg0, %c0_i32, %c0_i32_0 : i32, i32, i32
  }
}

module attributes {stable_mosaic.version = 11 : i64} {
  func.func @_inception_module_kernel(%arg0: i32, %arg1: memref<2x16x4xf32, #tpu.memory_space<vmem>>, %arg2: memref<4x32xf32, #tpu.memory_space<vmem>>, %arg3: memref<39x32x96xf32, #tpu.memory_space<vmem>>, %arg4: memref<4x32xf32, #tpu.memory_space<vmem>>, %arg5: memref<1x128xf32, #tpu.memory_space<vmem>>, %arg6: memref<1x128xf32, #tpu.memory_space<vmem>>, %arg7: memref<2x16x128xf32, #tpu.memory_space<vmem>>) attributes {dimension_semantics = [#tpu.dimension_semantics<parallel>], iteration_bounds = array<i64: 1>, scalar_prefetch = 0 : i64, scratch_operands = 0 : i64, tpu.core_type = #tpu.core_type<tc>, window_params = [{transform_indices = @transform_0, window_bounds = array<i64: 2, 16, 4>}, {pipeline_mode = #tpu.pipeline_mode<synchronous>, transform_indices = @transform_1, window_bounds = array<i64: 4, 32>}, {pipeline_mode = #tpu.pipeline_mode<synchronous>, transform_indices = @transform_2, window_bounds = array<i64: 39, 32, 96>}, {pipeline_mode = #tpu.pipeline_mode<synchronous>, transform_indices = @transform_3, window_bounds = array<i64: 4, 32>}, {pipeline_mode = #tpu.pipeline_mode<synchronous>, transform_indices = @transform_4, window_bounds = array<i64: 1, 128>}, {pipeline_mode = #tpu.pipeline_mode<synchronous>, transform_indices = @transform_5, window_bounds = array<i64: 1, 128>}, {transform_indices = @transform_6, window_bounds = array<i64: 2, 16, 128>}]} {
    %c0 = arith.constant 0 : index
    %c0_0 = arith.constant 0 : index
    %c0_1 = arith.constant 0 : index
    %0 = vector.load %arg1[%c0, %c0_0, %c0_1] : memref<2x16x4xf32, #tpu.memory_space<vmem>>, vector<2x16x4xf32>
    %1 = vector.shape_cast %0 : vector<2x16x4xf32> to vector<32x4xf32>
    %c0_2 = arith.constant 0 : index
    %c0_3 = arith.constant 0 : index
    %2 = vector.load %arg2[%c0_2, %c0_3] : memref<4x32xf32, #tpu.memory_space<vmem>>, vector<4x32xf32>
    %cst = arith.constant dense<0.000000e+00> : vector<32x32xf32>
    %3 = tpu.matmul %1, %2, %cst {dimension_numbers = #tpu.dot_dimension_numbers<[1], [0], [0], [1], [0, 0, 1, 1], [], []>} : vector<32x4xf32>, vector<4x32xf32>, vector<32x32xf32> -> vector<32x32xf32>
    %cst_4 = arith.constant 0.000000e+00 : f32
    %4 = vector.broadcast %cst_4 : f32 to vector<19x32xf32>
    %5 = vector.extract_strided_slice %3 {offsets = [0, 0], sizes = [16, 32], strides = [1, 1]} : vector<32x32xf32> to vector<16x32xf32>
    %6 = vector.extract_strided_slice %3 {offsets = [16, 0], sizes = [16, 32], strides = [1, 1]} : vector<32x32xf32> to vector<16x32xf32>
    %7 = tpu.concatenate %4, %5, %4, %4, %6, %4 in 0 : vector<19x32xf32>, vector<16x32xf32>, vector<19x32xf32>, vector<19x32xf32>, vector<16x32xf32>, vector<19x32xf32> -> vector<108x32xf32>
    %cst_5 = arith.constant 0.000000e+00 : f32
    %8 = vector.broadcast %cst_5 : f32 to vector<70x96xf32>
    %9 = vector.extract_strided_slice %7 {offsets = [0, 0], sizes = [70, 32], strides = [1, 1]} : vector<108x32xf32> to vector<70x32xf32>
    %c0_6 = arith.constant 0 : index
    %c0_7 = arith.constant 0 : index
    %c0_8 = arith.constant 0 : index
    %10 = vector.load %arg3[%c0_6, %c0_7, %c0_8] : memref<39x32x96xf32, #tpu.memory_space<vmem>>, vector<1x32x96xf32>
    %11 = vector.shape_cast %10 : vector<1x32x96xf32> to vector<32x96xf32>
    %cst_9 = arith.constant dense<0.000000e+00> : vector<70x96xf32>
    %12 = tpu.matmul %9, %11, %cst_9 {dimension_numbers = #tpu.dot_dimension_numbers<[1], [0], [0], [1], [0, 0, 1, 1], [], []>} : vector<70x32xf32>, vector<32x96xf32>, vector<70x96xf32> -> vector<70x96xf32>
    %13 = arith.addf %8, %12 : vector<70x96xf32>
    %14 = vector.extract_strided_slice %7 {offsets = [1, 0], sizes = [70, 32], strides = [1, 1]} : vector<108x32xf32> to vector<70x32xf32>
    %c1 = arith.constant 1 : index
    %c0_10 = arith.constant 0 : index
    %c0_11 = arith.constant 0 : index
    %15 = vector.load %arg3[%c1, %c0_10, %c0_11] : memref<39x32x96xf32, #tpu.memory_space<vmem>>, vector<1x32x96xf32>
    %16 = vector.shape_cast %15 : vector<1x32x96xf32> to vector<32x96xf32>
    %cst_12 = arith.constant dense<0.000000e+00> : vector<70x96xf32>
    %17 = tpu.matmul %14, %16, %cst_12 {dimension_numbers = #tpu.dot_dimension_numbers<[1], [0], [0], [1], [0, 0, 1, 1], [], []>} : vector<70x32xf32>, vector<32x96xf32>, vector<70x96xf32> -> vector<70x96xf32>
    %18 = arith.addf %13, %17 : vector<70x96xf32>
    %19 = vector.extract_strided_slice %7 {offsets = [2, 0], sizes = [70, 32], strides = [1, 1]} : vector<108x32xf32> to vector<70x32xf32>
    %c2 = arith.constant 2 : index
    %c0_13 = arith.constant 0 : index
    %c0_14 = arith.constant 0 : index
    %20 = vector.load %arg3[%c2, %c0_13, %c0_14] : memref<39x32x96xf32, #tpu.memory_space<vmem>>, vector<1x32x96xf32>
    %21 = vector.shape_cast %20 : vector<1x32x96xf32> to vector<32x96xf32>
    %cst_15 = arith.constant dense<0.000000e+00> : vector<70x96xf32>
    %22 = tpu.matmul %19, %21, %cst_15 {dimension_numbers = #tpu.dot_dimension_numbers<[1], [0], [0], [1], [0, 0, 1, 1], [], []>} : vector<70x32xf32>, vector<32x96xf32>, vector<70x96xf32> -> vector<70x96xf32>
    %23 = arith.addf %18, %22 : vector<70x96xf32>
    %24 = vector.extract_strided_slice %7 {offsets = [3, 0], sizes = [70, 32], strides = [1, 1]} : vector<108x32xf32> to vector<70x32xf32>
    %c3 = arith.constant 3 : index
    %c0_16 = arith.constant 0 : index
    %c0_17 = arith.constant 0 : index
    %25 = vector.load %arg3[%c3, %c0_16, %c0_17] : memref<39x32x96xf32, #tpu.memory_space<vmem>>, vector<1x32x96xf32>
    %26 = vector.shape_cast %25 : vector<1x32x96xf32> to vector<32x96xf32>
    %cst_18 = arith.constant dense<0.000000e+00> : vector<70x96xf32>
    %27 = tpu.matmul %24, %26, %cst_18 {dimension_numbers = #tpu.dot_dimension_numbers<[1], [0], [0], [1], [0, 0, 1, 1], [], []>} : vector<70x32xf32>, vector<32x96xf32>, vector<70x96xf32> -> vector<70x96xf32>
    %28 = arith.addf %23, %27 : vector<70x96xf32>
    %29 = vector.extract_strided_slice %7 {offsets = [4, 0], sizes = [70, 32], strides = [1, 1]} : vector<108x32xf32> to vector<70x32xf32>
    %c4 = arith.constant 4 : index
    %c0_19 = arith.constant 0 : index
    %c0_20 = arith.constant 0 : index
    %30 = vector.load %arg3[%c4, %c0_19, %c0_20] : memref<39x32x96xf32, #tpu.memory_space<vmem>>, vector<1x32x96xf32>
    %31 = vector.shape_cast %30 : vector<1x32x96xf32> to vector<32x96xf32>
    %cst_21 = arith.constant dense<0.000000e+00> : vector<70x96xf32>
    %32 = tpu.matmul %29, %31, %cst_21 {dimension_numbers = #tpu.dot_dimension_numbers<[1], [0], [0], [1], [0, 0, 1, 1], [], []>} : vector<70x32xf32>, vector<32x96xf32>, vector<70x96xf32> -> vector<70x96xf32>
    %33 = arith.addf %28, %32 : vector<70x96xf32>
    %34 = vector.extract_strided_slice %7 {offsets = [5, 0], sizes = [70, 32], strides = [1, 1]} : vector<108x32xf32> to vector<70x32xf32>
    %c5 = arith.constant 5 : index
    %c0_22 = arith.constant 0 : index
    %c0_23 = arith.constant 0 : index
    %35 = vector.load %arg3[%c5, %c0_22, %c0_23] : memref<39x32x96xf32, #tpu.memory_space<vmem>>, vector<1x32x96xf32>
    %36 = vector.shape_cast %35 : vector<1x32x96xf32> to vector<32x96xf32>
    %cst_24 = arith.constant dense<0.000000e+00> : vector<70x96xf32>
    %37 = tpu.matmul %34, %36, %cst_24 {dimension_numbers = #tpu.dot_dimension_numbers<[1], [0], [0], [1], [0, 0, 1, 1], [], []>} : vector<70x32xf32>, vector<32x96xf32>, vector<70x96xf32> -> vector<70x96xf32>
    %38 = arith.addf %33, %37 : vector<70x96xf32>
    %39 = vector.extract_strided_slice %7 {offsets = [6, 0], sizes = [70, 32], strides = [1, 1]} : vector<108x32xf32> to vector<70x32xf32>
    %c6 = arith.constant 6 : index
    %c0_25 = arith.constant 0 : index
    %c0_26 = arith.constant 0 : index
    %40 = vector.load %arg3[%c6, %c0_25, %c0_26] : memref<39x32x96xf32, #tpu.memory_space<vmem>>, vector<1x32x96xf32>
    %41 = vector.shape_cast %40 : vector<1x32x96xf32> to vector<32x96xf32>
    %cst_27 = arith.constant dense<0.000000e+00> : vector<70x96xf32>
    %42 = tpu.matmul %39, %41, %cst_27 {dimension_numbers = #tpu.dot_dimension_numbers<[1], [0], [0], [1], [0, 0, 1, 1], [], []>} : vector<70x32xf32>, vector<32x96xf32>, vector<70x96xf32> -> vector<70x96xf32>
    %43 = arith.addf %38, %42 : vector<70x96xf32>
    %44 = vector.extract_strided_slice %7 {offsets = [7, 0], sizes = [70, 32], strides = [1, 1]} : vector<108x32xf32> to vector<70x32xf32>
    %c7 = arith.constant 7 : index
    %c0_28 = arith.constant 0 : index
    %c0_29 = arith.constant 0 : index
    %45 = vector.load %arg3[%c7, %c0_28, %c0_29] : memref<39x32x96xf32, #tpu.memory_space<vmem>>, vector<1x32x96xf32>
    %46 = vector.shape_cast %45 : vector<1x32x96xf32> to vector<32x96xf32>
    %cst_30 = arith.constant dense<0.000000e+00> : vector<70x96xf32>
    %47 = tpu.matmul %44, %46, %cst_30 {dimension_numbers = #tpu.dot_dimension_numbers<[1], [0], [0], [1], [0, 0, 1, 1], [], []>} : vector<70x32xf32>, vector<32x96xf32>, vector<70x96xf32> -> vector<70x96xf32>
    %48 = arith.addf %43, %47 : vector<70x96xf32>
    %49 = vector.extract_strided_slice %7 {offsets = [8, 0], sizes = [70, 32], strides = [1, 1]} : vector<108x32xf32> to vector<70x32xf32>
    %c8 = arith.constant 8 : index
    %c0_31 = arith.constant 0 : index
    %c0_32 = arith.constant 0 : index
    %50 = vector.load %arg3[%c8, %c0_31, %c0_32] : memref<39x32x96xf32, #tpu.memory_space<vmem>>, vector<1x32x96xf32>
    %51 = vector.shape_cast %50 : vector<1x32x96xf32> to vector<32x96xf32>
    %cst_33 = arith.constant dense<0.000000e+00> : vector<70x96xf32>
    %52 = tpu.matmul %49, %51, %cst_33 {dimension_numbers = #tpu.dot_dimension_numbers<[1], [0], [0], [1], [0, 0, 1, 1], [], []>} : vector<70x32xf32>, vector<32x96xf32>, vector<70x96xf32> -> vector<70x96xf32>
    %53 = arith.addf %48, %52 : vector<70x96xf32>
    %54 = vector.extract_strided_slice %7 {offsets = [9, 0], sizes = [70, 32], strides = [1, 1]} : vector<108x32xf32> to vector<70x32xf32>
    %c9 = arith.constant 9 : index
    %c0_34 = arith.constant 0 : index
    %c0_35 = arith.constant 0 : index
    %55 = vector.load %arg3[%c9, %c0_34, %c0_35] : memref<39x32x96xf32, #tpu.memory_space<vmem>>, vector<1x32x96xf32>
    %56 = vector.shape_cast %55 : vector<1x32x96xf32> to vector<32x96xf32>
    %cst_36 = arith.constant dense<0.000000e+00> : vector<70x96xf32>
    %57 = tpu.matmul %54, %56, %cst_36 {dimension_numbers = #tpu.dot_dimension_numbers<[1], [0], [0], [1], [0, 0, 1, 1], [], []>} : vector<70x32xf32>, vector<32x96xf32>, vector<70x96xf32> -> vector<70x96xf32>
    %58 = arith.addf %53, %57 : vector<70x96xf32>
    %59 = vector.extract_strided_slice %7 {offsets = [10, 0], sizes = [70, 32], strides = [1, 1]} : vector<108x32xf32> to vector<70x32xf32>
    %c10 = arith.constant 10 : index
    %c0_37 = arith.constant 0 : index
    %c0_38 = arith.constant 0 : index
    %60 = vector.load %arg3[%c10, %c0_37, %c0_38] : memref<39x32x96xf32, #tpu.memory_space<vmem>>, vector<1x32x96xf32>
    %61 = vector.shape_cast %60 : vector<1x32x96xf32> to vector<32x96xf32>
    %cst_39 = arith.constant dense<0.000000e+00> : vector<70x96xf32>
    %62 = tpu.matmul %59, %61, %cst_39 {dimension_numbers = #tpu.dot_dimension_numbers<[1], [0], [0], [1], [0, 0, 1, 1], [], []>} : vector<70x32xf32>, vector<32x96xf32>, vector<70x96xf32> -> vector<70x96xf32>
    %63 = arith.addf %58, %62 : vector<70x96xf32>
    %64 = vector.extract_strided_slice %7 {offsets = [11, 0], sizes = [70, 32], strides = [1, 1]} : vector<108x32xf32> to vector<70x32xf32>
    %c11 = arith.constant 11 : index
    %c0_40 = arith.constant 0 : index
    %c0_41 = arith.constant 0 : index
    %65 = vector.load %arg3[%c11, %c0_40, %c0_41] : memref<39x32x96xf32, #tpu.memory_space<vmem>>, vector<1x32x96xf32>
    %66 = vector.shape_cast %65 : vector<1x32x96xf32> to vector<32x96xf32>
    %cst_42 = arith.constant dense<0.000000e+00> : vector<70x96xf32>
    %67 = tpu.matmul %64, %66, %cst_42 {dimension_numbers = #tpu.dot_dimension_numbers<[1], [0], [0], [1], [0, 0, 1, 1], [], []>} : vector<70x32xf32>, vector<32x96xf32>, vector<70x96xf32> -> vector<70x96xf32>
    %68 = arith.addf %63, %67 : vector<70x96xf32>
    %69 = vector.extract_strided_slice %7 {offsets = [12, 0], sizes = [70, 32], strides = [1, 1]} : vector<108x32xf32> to vector<70x32xf32>
    %c12 = arith.constant 12 : index
    %c0_43 = arith.constant 0 : index
    %c0_44 = arith.constant 0 : index
    %70 = vector.load %arg3[%c12, %c0_43, %c0_44] : memref<39x32x96xf32, #tpu.memory_space<vmem>>, vector<1x32x96xf32>
    %71 = vector.shape_cast %70 : vector<1x32x96xf32> to vector<32x96xf32>
    %cst_45 = arith.constant dense<0.000000e+00> : vector<70x96xf32>
    %72 = tpu.matmul %69, %71, %cst_45 {dimension_numbers = #tpu.dot_dimension_numbers<[1], [0], [0], [1], [0, 0, 1, 1], [], []>} : vector<70x32xf32>, vector<32x96xf32>, vector<70x96xf32> -> vector<70x96xf32>
    %73 = arith.addf %68, %72 : vector<70x96xf32>
    %74 = vector.extract_strided_slice %7 {offsets = [13, 0], sizes = [70, 32], strides = [1, 1]} : vector<108x32xf32> to vector<70x32xf32>
    %c13 = arith.constant 13 : index
    %c0_46 = arith.constant 0 : index
    %c0_47 = arith.constant 0 : index
    %75 = vector.load %arg3[%c13, %c0_46, %c0_47] : memref<39x32x96xf32, #tpu.memory_space<vmem>>, vector<1x32x96xf32>
    %76 = vector.shape_cast %75 : vector<1x32x96xf32> to vector<32x96xf32>
    %cst_48 = arith.constant dense<0.000000e+00> : vector<70x96xf32>
    %77 = tpu.matmul %74, %76, %cst_48 {dimension_numbers = #tpu.dot_dimension_numbers<[1], [0], [0], [1], [0, 0, 1, 1], [], []>} : vector<70x32xf32>, vector<32x96xf32>, vector<70x96xf32> -> vector<70x96xf32>
    %78 = arith.addf %73, %77 : vector<70x96xf32>
    %79 = vector.extract_strided_slice %7 {offsets = [14, 0], sizes = [70, 32], strides = [1, 1]} : vector<108x32xf32> to vector<70x32xf32>
    %c14 = arith.constant 14 : index
    %c0_49 = arith.constant 0 : index
    %c0_50 = arith.constant 0 : index
    %80 = vector.load %arg3[%c14, %c0_49, %c0_50] : memref<39x32x96xf32, #tpu.memory_space<vmem>>, vector<1x32x96xf32>
    %81 = vector.shape_cast %80 : vector<1x32x96xf32> to vector<32x96xf32>
    %cst_51 = arith.constant dense<0.000000e+00> : vector<70x96xf32>
    %82 = tpu.matmul %79, %81, %cst_51 {dimension_numbers = #tpu.dot_dimension_numbers<[1], [0], [0], [1], [0, 0, 1, 1], [], []>} : vector<70x32xf32>, vector<32x96xf32>, vector<70x96xf32> -> vector<70x96xf32>
    %83 = arith.addf %78, %82 : vector<70x96xf32>
    %84 = vector.extract_strided_slice %7 {offsets = [15, 0], sizes = [70, 32], strides = [1, 1]} : vector<108x32xf32> to vector<70x32xf32>
    %c15 = arith.constant 15 : index
    %c0_52 = arith.constant 0 : index
    %c0_53 = arith.constant 0 : index
    %85 = vector.load %arg3[%c15, %c0_52, %c0_53] : memref<39x32x96xf32, #tpu.memory_space<vmem>>, vector<1x32x96xf32>
    %86 = vector.shape_cast %85 : vector<1x32x96xf32> to vector<32x96xf32>
    %cst_54 = arith.constant dense<0.000000e+00> : vector<70x96xf32>
    %87 = tpu.matmul %84, %86, %cst_54 {dimension_numbers = #tpu.dot_dimension_numbers<[1], [0], [0], [1], [0, 0, 1, 1], [], []>} : vector<70x32xf32>, vector<32x96xf32>, vector<70x96xf32> -> vector<70x96xf32>
    %88 = arith.addf %83, %87 : vector<70x96xf32>
    %89 = vector.extract_strided_slice %7 {offsets = [16, 0], sizes = [70, 32], strides = [1, 1]} : vector<108x32xf32> to vector<70x32xf32>
    %c16 = arith.constant 16 : index
    %c0_55 = arith.constant 0 : index
    %c0_56 = arith.constant 0 : index
    %90 = vector.load %arg3[%c16, %c0_55, %c0_56] : memref<39x32x96xf32, #tpu.memory_space<vmem>>, vector<1x32x96xf32>
    %91 = vector.shape_cast %90 : vector<1x32x96xf32> to vector<32x96xf32>
    %cst_57 = arith.constant dense<0.000000e+00> : vector<70x96xf32>
    %92 = tpu.matmul %89, %91, %cst_57 {dimension_numbers = #tpu.dot_dimension_numbers<[1], [0], [0], [1], [0, 0, 1, 1], [], []>} : vector<70x32xf32>, vector<32x96xf32>, vector<70x96xf32> -> vector<70x96xf32>
    %93 = arith.addf %88, %92 : vector<70x96xf32>
    %94 = vector.extract_strided_slice %7 {offsets = [17, 0], sizes = [70, 32], strides = [1, 1]} : vector<108x32xf32> to vector<70x32xf32>
    %c17 = arith.constant 17 : index
    %c0_58 = arith.constant 0 : index
    %c0_59 = arith.constant 0 : index
    %95 = vector.load %arg3[%c17, %c0_58, %c0_59] : memref<39x32x96xf32, #tpu.memory_space<vmem>>, vector<1x32x96xf32>
    %96 = vector.shape_cast %95 : vector<1x32x96xf32> to vector<32x96xf32>
    %cst_60 = arith.constant dense<0.000000e+00> : vector<70x96xf32>
    %97 = tpu.matmul %94, %96, %cst_60 {dimension_numbers = #tpu.dot_dimension_numbers<[1], [0], [0], [1], [0, 0, 1, 1], [], []>} : vector<70x32xf32>, vector<32x96xf32>, vector<70x96xf32> -> vector<70x96xf32>
    %98 = arith.addf %93, %97 : vector<70x96xf32>
    %99 = vector.extract_strided_slice %7 {offsets = [18, 0], sizes = [70, 32], strides = [1, 1]} : vector<108x32xf32> to vector<70x32xf32>
    %c18 = arith.constant 18 : index
    %c0_61 = arith.constant 0 : index
    %c0_62 = arith.constant 0 : index
    %100 = vector.load %arg3[%c18, %c0_61, %c0_62] : memref<39x32x96xf32, #tpu.memory_space<vmem>>, vector<1x32x96xf32>
    %101 = vector.shape_cast %100 : vector<1x32x96xf32> to vector<32x96xf32>
    %cst_63 = arith.constant dense<0.000000e+00> : vector<70x96xf32>
    %102 = tpu.matmul %99, %101, %cst_63 {dimension_numbers = #tpu.dot_dimension_numbers<[1], [0], [0], [1], [0, 0, 1, 1], [], []>} : vector<70x32xf32>, vector<32x96xf32>, vector<70x96xf32> -> vector<70x96xf32>
    %103 = arith.addf %98, %102 : vector<70x96xf32>
    %104 = vector.extract_strided_slice %7 {offsets = [19, 0], sizes = [70, 32], strides = [1, 1]} : vector<108x32xf32> to vector<70x32xf32>
    %c19 = arith.constant 19 : index
    %c0_64 = arith.constant 0 : index
    %c0_65 = arith.constant 0 : index
    %105 = vector.load %arg3[%c19, %c0_64, %c0_65] : memref<39x32x96xf32, #tpu.memory_space<vmem>>, vector<1x32x96xf32>
    %106 = vector.shape_cast %105 : vector<1x32x96xf32> to vector<32x96xf32>
    %cst_66 = arith.constant dense<0.000000e+00> : vector<70x96xf32>
    %107 = tpu.matmul %104, %106, %cst_66 {dimension_numbers = #tpu.dot_dimension_numbers<[1], [0], [0], [1], [0, 0, 1, 1], [], []>} : vector<70x32xf32>, vector<32x96xf32>, vector<70x96xf32> -> vector<70x96xf32>
    %108 = arith.addf %103, %107 : vector<70x96xf32>
    %109 = vector.extract_strided_slice %7 {offsets = [20, 0], sizes = [70, 32], strides = [1, 1]} : vector<108x32xf32> to vector<70x32xf32>
    %c20 = arith.constant 20 : index
    %c0_67 = arith.constant 0 : index
    %c0_68 = arith.constant 0 : index
    %110 = vector.load %arg3[%c20, %c0_67, %c0_68] : memref<39x32x96xf32, #tpu.memory_space<vmem>>, vector<1x32x96xf32>
    %111 = vector.shape_cast %110 : vector<1x32x96xf32> to vector<32x96xf32>
    %cst_69 = arith.constant dense<0.000000e+00> : vector<70x96xf32>
    %112 = tpu.matmul %109, %111, %cst_69 {dimension_numbers = #tpu.dot_dimension_numbers<[1], [0], [0], [1], [0, 0, 1, 1], [], []>} : vector<70x32xf32>, vector<32x96xf32>, vector<70x96xf32> -> vector<70x96xf32>
    %113 = arith.addf %108, %112 : vector<70x96xf32>
    %114 = vector.extract_strided_slice %7 {offsets = [21, 0], sizes = [70, 32], strides = [1, 1]} : vector<108x32xf32> to vector<70x32xf32>
    %c21 = arith.constant 21 : index
    %c0_70 = arith.constant 0 : index
    %c0_71 = arith.constant 0 : index
    %115 = vector.load %arg3[%c21, %c0_70, %c0_71] : memref<39x32x96xf32, #tpu.memory_space<vmem>>, vector<1x32x96xf32>
    %116 = vector.shape_cast %115 : vector<1x32x96xf32> to vector<32x96xf32>
    %cst_72 = arith.constant dense<0.000000e+00> : vector<70x96xf32>
    %117 = tpu.matmul %114, %116, %cst_72 {dimension_numbers = #tpu.dot_dimension_numbers<[1], [0], [0], [1], [0, 0, 1, 1], [], []>} : vector<70x32xf32>, vector<32x96xf32>, vector<70x96xf32> -> vector<70x96xf32>
    %118 = arith.addf %113, %117 : vector<70x96xf32>
    %119 = vector.extract_strided_slice %7 {offsets = [22, 0], sizes = [70, 32], strides = [1, 1]} : vector<108x32xf32> to vector<70x32xf32>
    %c22 = arith.constant 22 : index
    %c0_73 = arith.constant 0 : index
    %c0_74 = arith.constant 0 : index
    %120 = vector.load %arg3[%c22, %c0_73, %c0_74] : memref<39x32x96xf32, #tpu.memory_space<vmem>>, vector<1x32x96xf32>
    %121 = vector.shape_cast %120 : vector<1x32x96xf32> to vector<32x96xf32>
    %cst_75 = arith.constant dense<0.000000e+00> : vector<70x96xf32>
    %122 = tpu.matmul %119, %121, %cst_75 {dimension_numbers = #tpu.dot_dimension_numbers<[1], [0], [0], [1], [0, 0, 1, 1], [], []>} : vector<70x32xf32>, vector<32x96xf32>, vector<70x96xf32> -> vector<70x96xf32>
    %123 = arith.addf %118, %122 : vector<70x96xf32>
    %124 = vector.extract_strided_slice %7 {offsets = [23, 0], sizes = [70, 32], strides = [1, 1]} : vector<108x32xf32> to vector<70x32xf32>
    %c23 = arith.constant 23 : index
    %c0_76 = arith.constant 0 : index
    %c0_77 = arith.constant 0 : index
    %125 = vector.load %arg3[%c23, %c0_76, %c0_77] : memref<39x32x96xf32, #tpu.memory_space<vmem>>, vector<1x32x96xf32>
    %126 = vector.shape_cast %125 : vector<1x32x96xf32> to vector<32x96xf32>
    %cst_78 = arith.constant dense<0.000000e+00> : vector<70x96xf32>
    %127 = tpu.matmul %124, %126, %cst_78 {dimension_numbers = #tpu.dot_dimension_numbers<[1], [0], [0], [1], [0, 0, 1, 1], [], []>} : vector<70x32xf32>, vector<32x96xf32>, vector<70x96xf32> -> vector<70x96xf32>
    %128 = arith.addf %123, %127 : vector<70x96xf32>
    %129 = vector.extract_strided_slice %7 {offsets = [24, 0], sizes = [70, 32], strides = [1, 1]} : vector<108x32xf32> to vector<70x32xf32>
    %c24 = arith.constant 24 : index
    %c0_79 = arith.constant 0 : index
    %c0_80 = arith.constant 0 : index
    %130 = vector.load %arg3[%c24, %c0_79, %c0_80] : memref<39x32x96xf32, #tpu.memory_space<vmem>>, vector<1x32x96xf32>
    %131 = vector.shape_cast %130 : vector<1x32x96xf32> to vector<32x96xf32>
    %cst_81 = arith.constant dense<0.000000e+00> : vector<70x96xf32>
    %132 = tpu.matmul %129, %131, %cst_81 {dimension_numbers = #tpu.dot_dimension_numbers<[1], [0], [0], [1], [0, 0, 1, 1], [], []>} : vector<70x32xf32>, vector<32x96xf32>, vector<70x96xf32> -> vector<70x96xf32>
    %133 = arith.addf %128, %132 : vector<70x96xf32>
    %134 = vector.extract_strided_slice %7 {offsets = [25, 0], sizes = [70, 32], strides = [1, 1]} : vector<108x32xf32> to vector<70x32xf32>
    %c25 = arith.constant 25 : index
    %c0_82 = arith.constant 0 : index
    %c0_83 = arith.constant 0 : index
    %135 = vector.load %arg3[%c25, %c0_82, %c0_83] : memref<39x32x96xf32, #tpu.memory_space<vmem>>, vector<1x32x96xf32>
    %136 = vector.shape_cast %135 : vector<1x32x96xf32> to vector<32x96xf32>
    %cst_84 = arith.constant dense<0.000000e+00> : vector<70x96xf32>
    %137 = tpu.matmul %134, %136, %cst_84 {dimension_numbers = #tpu.dot_dimension_numbers<[1], [0], [0], [1], [0, 0, 1, 1], [], []>} : vector<70x32xf32>, vector<32x96xf32>, vector<70x96xf32> -> vector<70x96xf32>
    %138 = arith.addf %133, %137 : vector<70x96xf32>
    %139 = vector.extract_strided_slice %7 {offsets = [26, 0], sizes = [70, 32], strides = [1, 1]} : vector<108x32xf32> to vector<70x32xf32>
    %c26 = arith.constant 26 : index
    %c0_85 = arith.constant 0 : index
    %c0_86 = arith.constant 0 : index
    %140 = vector.load %arg3[%c26, %c0_85, %c0_86] : memref<39x32x96xf32, #tpu.memory_space<vmem>>, vector<1x32x96xf32>
    %141 = vector.shape_cast %140 : vector<1x32x96xf32> to vector<32x96xf32>
    %cst_87 = arith.constant dense<0.000000e+00> : vector<70x96xf32>
    %142 = tpu.matmul %139, %141, %cst_87 {dimension_numbers = #tpu.dot_dimension_numbers<[1], [0], [0], [1], [0, 0, 1, 1], [], []>} : vector<70x32xf32>, vector<32x96xf32>, vector<70x96xf32> -> vector<70x96xf32>
    %143 = arith.addf %138, %142 : vector<70x96xf32>
    %144 = vector.extract_strided_slice %7 {offsets = [27, 0], sizes = [70, 32], strides = [1, 1]} : vector<108x32xf32> to vector<70x32xf32>
    %c27 = arith.constant 27 : index
    %c0_88 = arith.constant 0 : index
    %c0_89 = arith.constant 0 : index
    %145 = vector.load %arg3[%c27, %c0_88, %c0_89] : memref<39x32x96xf32, #tpu.memory_space<vmem>>, vector<1x32x96xf32>
    %146 = vector.shape_cast %145 : vector<1x32x96xf32> to vector<32x96xf32>
    %cst_90 = arith.constant dense<0.000000e+00> : vector<70x96xf32>
    %147 = tpu.matmul %144, %146, %cst_90 {dimension_numbers = #tpu.dot_dimension_numbers<[1], [0], [0], [1], [0, 0, 1, 1], [], []>} : vector<70x32xf32>, vector<32x96xf32>, vector<70x96xf32> -> vector<70x96xf32>
    %148 = arith.addf %143, %147 : vector<70x96xf32>
    %149 = vector.extract_strided_slice %7 {offsets = [28, 0], sizes = [70, 32], strides = [1, 1]} : vector<108x32xf32> to vector<70x32xf32>
    %c28 = arith.constant 28 : index
    %c0_91 = arith.constant 0 : index
    %c0_92 = arith.constant 0 : index
    %150 = vector.load %arg3[%c28, %c0_91, %c0_92] : memref<39x32x96xf32, #tpu.memory_space<vmem>>, vector<1x32x96xf32>
    %151 = vector.shape_cast %150 : vector<1x32x96xf32> to vector<32x96xf32>
    %cst_93 = arith.constant dense<0.000000e+00> : vector<70x96xf32>
    %152 = tpu.matmul %149, %151, %cst_93 {dimension_numbers = #tpu.dot_dimension_numbers<[1], [0], [0], [1], [0, 0, 1, 1], [], []>} : vector<70x32xf32>, vector<32x96xf32>, vector<70x96xf32> -> vector<70x96xf32>
    %153 = arith.addf %148, %152 : vector<70x96xf32>
    %154 = vector.extract_strided_slice %7 {offsets = [29, 0], sizes = [70, 32], strides = [1, 1]} : vector<108x32xf32> to vector<70x32xf32>
    %c29 = arith.constant 29 : index
    %c0_94 = arith.constant 0 : index
    %c0_95 = arith.constant 0 : index
    %155 = vector.load %arg3[%c29, %c0_94, %c0_95] : memref<39x32x96xf32, #tpu.memory_space<vmem>>, vector<1x32x96xf32>
    %156 = vector.shape_cast %155 : vector<1x32x96xf32> to vector<32x96xf32>
    %cst_96 = arith.constant dense<0.000000e+00> : vector<70x96xf32>
    %157 = tpu.matmul %154, %156, %cst_96 {dimension_numbers = #tpu.dot_dimension_numbers<[1], [0], [0], [1], [0, 0, 1, 1], [], []>} : vector<70x32xf32>, vector<32x96xf32>, vector<70x96xf32> -> vector<70x96xf32>
    %158 = arith.addf %153, %157 : vector<70x96xf32>
    %159 = vector.extract_strided_slice %7 {offsets = [30, 0], sizes = [70, 32], strides = [1, 1]} : vector<108x32xf32> to vector<70x32xf32>
    %c30 = arith.constant 30 : index
    %c0_97 = arith.constant 0 : index
    %c0_98 = arith.constant 0 : index
    %160 = vector.load %arg3[%c30, %c0_97, %c0_98] : memref<39x32x96xf32, #tpu.memory_space<vmem>>, vector<1x32x96xf32>
    %161 = vector.shape_cast %160 : vector<1x32x96xf32> to vector<32x96xf32>
    %cst_99 = arith.constant dense<0.000000e+00> : vector<70x96xf32>
    %162 = tpu.matmul %159, %161, %cst_99 {dimension_numbers = #tpu.dot_dimension_numbers<[1], [0], [0], [1], [0, 0, 1, 1], [], []>} : vector<70x32xf32>, vector<32x96xf32>, vector<70x96xf32> -> vector<70x96xf32>
    %163 = arith.addf %158, %162 : vector<70x96xf32>
    %164 = vector.extract_strided_slice %7 {offsets = [31, 0], sizes = [70, 32], strides = [1, 1]} : vector<108x32xf32> to vector<70x32xf32>
    %c31 = arith.constant 31 : index
    %c0_100 = arith.constant 0 : index
    %c0_101 = arith.constant 0 : index
    %165 = vector.load %arg3[%c31, %c0_100, %c0_101] : memref<39x32x96xf32, #tpu.memory_space<vmem>>, vector<1x32x96xf32>
    %166 = vector.shape_cast %165 : vector<1x32x96xf32> to vector<32x96xf32>
    %cst_102 = arith.constant dense<0.000000e+00> : vector<70x96xf32>
    %167 = tpu.matmul %164, %166, %cst_102 {dimension_numbers = #tpu.dot_dimension_numbers<[1], [0], [0], [1], [0, 0, 1, 1], [], []>} : vector<70x32xf32>, vector<32x96xf32>, vector<70x96xf32> -> vector<70x96xf32>
    %168 = arith.addf %163, %167 : vector<70x96xf32>
    %169 = vector.extract_strided_slice %7 {offsets = [32, 0], sizes = [70, 32], strides = [1, 1]} : vector<108x32xf32> to vector<70x32xf32>
    %c32 = arith.constant 32 : index
    %c0_103 = arith.constant 0 : index
    %c0_104 = arith.constant 0 : index
    %170 = vector.load %arg3[%c32, %c0_103, %c0_104] : memref<39x32x96xf32, #tpu.memory_space<vmem>>, vector<1x32x96xf32>
    %171 = vector.shape_cast %170 : vector<1x32x96xf32> to vector<32x96xf32>
    %cst_105 = arith.constant dense<0.000000e+00> : vector<70x96xf32>
    %172 = tpu.matmul %169, %171, %cst_105 {dimension_numbers = #tpu.dot_dimension_numbers<[1], [0], [0], [1], [0, 0, 1, 1], [], []>} : vector<70x32xf32>, vector<32x96xf32>, vector<70x96xf32> -> vector<70x96xf32>
    %173 = arith.addf %168, %172 : vector<70x96xf32>
    %174 = vector.extract_strided_slice %7 {offsets = [33, 0], sizes = [70, 32], strides = [1, 1]} : vector<108x32xf32> to vector<70x32xf32>
    %c33 = arith.constant 33 : index
    %c0_106 = arith.constant 0 : index
    %c0_107 = arith.constant 0 : index
    %175 = vector.load %arg3[%c33, %c0_106, %c0_107] : memref<39x32x96xf32, #tpu.memory_space<vmem>>, vector<1x32x96xf32>
    %176 = vector.shape_cast %175 : vector<1x32x96xf32> to vector<32x96xf32>
    %cst_108 = arith.constant dense<0.000000e+00> : vector<70x96xf32>
    %177 = tpu.matmul %174, %176, %cst_108 {dimension_numbers = #tpu.dot_dimension_numbers<[1], [0], [0], [1], [0, 0, 1, 1], [], []>} : vector<70x32xf32>, vector<32x96xf32>, vector<70x96xf32> -> vector<70x96xf32>
    %178 = arith.addf %173, %177 : vector<70x96xf32>
    %179 = vector.extract_strided_slice %7 {offsets = [34, 0], sizes = [70, 32], strides = [1, 1]} : vector<108x32xf32> to vector<70x32xf32>
    %c34 = arith.constant 34 : index
    %c0_109 = arith.constant 0 : index
    %c0_110 = arith.constant 0 : index
    %180 = vector.load %arg3[%c34, %c0_109, %c0_110] : memref<39x32x96xf32, #tpu.memory_space<vmem>>, vector<1x32x96xf32>
    %181 = vector.shape_cast %180 : vector<1x32x96xf32> to vector<32x96xf32>
    %cst_111 = arith.constant dense<0.000000e+00> : vector<70x96xf32>
    %182 = tpu.matmul %179, %181, %cst_111 {dimension_numbers = #tpu.dot_dimension_numbers<[1], [0], [0], [1], [0, 0, 1, 1], [], []>} : vector<70x32xf32>, vector<32x96xf32>, vector<70x96xf32> -> vector<70x96xf32>
    %183 = arith.addf %178, %182 : vector<70x96xf32>
    %184 = vector.extract_strided_slice %7 {offsets = [35, 0], sizes = [70, 32], strides = [1, 1]} : vector<108x32xf32> to vector<70x32xf32>
    %c35 = arith.constant 35 : index
    %c0_112 = arith.constant 0 : index
    %c0_113 = arith.constant 0 : index
    %185 = vector.load %arg3[%c35, %c0_112, %c0_113] : memref<39x32x96xf32, #tpu.memory_space<vmem>>, vector<1x32x96xf32>
    %186 = vector.shape_cast %185 : vector<1x32x96xf32> to vector<32x96xf32>
    %cst_114 = arith.constant dense<0.000000e+00> : vector<70x96xf32>
    %187 = tpu.matmul %184, %186, %cst_114 {dimension_numbers = #tpu.dot_dimension_numbers<[1], [0], [0], [1], [0, 0, 1, 1], [], []>} : vector<70x32xf32>, vector<32x96xf32>, vector<70x96xf32> -> vector<70x96xf32>
    %188 = arith.addf %183, %187 : vector<70x96xf32>
    %189 = vector.extract_strided_slice %7 {offsets = [36, 0], sizes = [70, 32], strides = [1, 1]} : vector<108x32xf32> to vector<70x32xf32>
    %c36 = arith.constant 36 : index
    %c0_115 = arith.constant 0 : index
    %c0_116 = arith.constant 0 : index
    %190 = vector.load %arg3[%c36, %c0_115, %c0_116] : memref<39x32x96xf32, #tpu.memory_space<vmem>>, vector<1x32x96xf32>
    %191 = vector.shape_cast %190 : vector<1x32x96xf32> to vector<32x96xf32>
    %cst_117 = arith.constant dense<0.000000e+00> : vector<70x96xf32>
    %192 = tpu.matmul %189, %191, %cst_117 {dimension_numbers = #tpu.dot_dimension_numbers<[1], [0], [0], [1], [0, 0, 1, 1], [], []>} : vector<70x32xf32>, vector<32x96xf32>, vector<70x96xf32> -> vector<70x96xf32>
    %193 = arith.addf %188, %192 : vector<70x96xf32>
    %194 = vector.extract_strided_slice %7 {offsets = [37, 0], sizes = [70, 32], strides = [1, 1]} : vector<108x32xf32> to vector<70x32xf32>
    %c37 = arith.constant 37 : index
    %c0_118 = arith.constant 0 : index
    %c0_119 = arith.constant 0 : index
    %195 = vector.load %arg3[%c37, %c0_118, %c0_119] : memref<39x32x96xf32, #tpu.memory_space<vmem>>, vector<1x32x96xf32>
    %196 = vector.shape_cast %195 : vector<1x32x96xf32> to vector<32x96xf32>
    %cst_120 = arith.constant dense<0.000000e+00> : vector<70x96xf32>
    %197 = tpu.matmul %194, %196, %cst_120 {dimension_numbers = #tpu.dot_dimension_numbers<[1], [0], [0], [1], [0, 0, 1, 1], [], []>} : vector<70x32xf32>, vector<32x96xf32>, vector<70x96xf32> -> vector<70x96xf32>
    %198 = arith.addf %193, %197 : vector<70x96xf32>
    %199 = vector.extract_strided_slice %7 {offsets = [38, 0], sizes = [70, 32], strides = [1, 1]} : vector<108x32xf32> to vector<70x32xf32>
    %c38 = arith.constant 38 : index
    %c0_121 = arith.constant 0 : index
    %c0_122 = arith.constant 0 : index
    %200 = vector.load %arg3[%c38, %c0_121, %c0_122] : memref<39x32x96xf32, #tpu.memory_space<vmem>>, vector<1x32x96xf32>
    %201 = vector.shape_cast %200 : vector<1x32x96xf32> to vector<32x96xf32>
    %cst_123 = arith.constant dense<0.000000e+00> : vector<70x96xf32>
    %202 = tpu.matmul %199, %201, %cst_123 {dimension_numbers = #tpu.dot_dimension_numbers<[1], [0], [0], [1], [0, 0, 1, 1], [], []>} : vector<70x32xf32>, vector<32x96xf32>, vector<70x96xf32> -> vector<70x96xf32>
    %203 = arith.addf %198, %202 : vector<70x96xf32>
    %204 = vector.extract_strided_slice %203 {offsets = [0, 0], sizes = [16, 96], strides = [1, 1]} : vector<70x96xf32> to vector<16x96xf32>
    %205 = vector.extract_strided_slice %203 {offsets = [54, 0], sizes = [16, 96], strides = [1, 1]} : vector<70x96xf32> to vector<16x96xf32>
    %206 = tpu.concatenate %204, %205 in 0 : vector<16x96xf32>, vector<16x96xf32> -> vector<32x96xf32>
    %cst_124 = arith.constant -3.40282347E+38 : f32
    %207 = vector.broadcast %cst_124 : f32 to vector<2x1x4xf32>
    %208 = tpu.concatenate %207, %0, %207 in 1 : vector<2x1x4xf32>, vector<2x16x4xf32>, vector<2x1x4xf32> -> vector<2x18x4xf32>
    %209 = vector.extract_strided_slice %208 {offsets = [0, 0, 0], sizes = [2, 16, 4], strides = [1, 1, 1]} : vector<2x18x4xf32> to vector<2x16x4xf32>
    %210 = vector.extract_strided_slice %208 {offsets = [0, 1, 0], sizes = [2, 16, 4], strides = [1, 1, 1]} : vector<2x18x4xf32> to vector<2x16x4xf32>
    %211 = arith.maximumf %209, %210 : vector<2x16x4xf32>
    %212 = vector.extract_strided_slice %208 {offsets = [0, 2, 0], sizes = [2, 16, 4], strides = [1, 1, 1]} : vector<2x18x4xf32> to vector<2x16x4xf32>
    %213 = arith.maximumf %211, %212 : vector<2x16x4xf32>
    %214 = vector.shape_cast %213 : vector<2x16x4xf32> to vector<32x4xf32>
    %c0_125 = arith.constant 0 : index
    %c0_126 = arith.constant 0 : index
    %215 = vector.load %arg4[%c0_125, %c0_126] : memref<4x32xf32, #tpu.memory_space<vmem>>, vector<4x32xf32>
    %cst_127 = arith.constant dense<0.000000e+00> : vector<32x32xf32>
    %216 = tpu.matmul %214, %215, %cst_127 {dimension_numbers = #tpu.dot_dimension_numbers<[1], [0], [0], [1], [0, 0, 1, 1], [], []>} : vector<32x4xf32>, vector<4x32xf32>, vector<32x32xf32> -> vector<32x32xf32>
    %217 = tpu.concatenate %206, %216 in 1 : vector<32x96xf32>, vector<32x32xf32> -> vector<32x128xf32>
    %c0_128 = arith.constant 0 : index
    %c0_129 = arith.constant 0 : index
    %218 = vector.load %arg5[%c0_128, %c0_129] : memref<1x128xf32, #tpu.memory_space<vmem>>, vector<1x128xf32>
    %219 = vector.broadcast %218 : vector<1x128xf32> to vector<32x128xf32>
    %220 = arith.mulf %217, %219 : vector<32x128xf32>
    %c0_130 = arith.constant 0 : index
    %c0_131 = arith.constant 0 : index
    %221 = vector.load %arg6[%c0_130, %c0_131] : memref<1x128xf32, #tpu.memory_space<vmem>>, vector<1x128xf32>
    %222 = vector.broadcast %221 : vector<1x128xf32> to vector<32x128xf32>
    %223 = arith.addf %220, %222 : vector<32x128xf32>
    %cst_132 = arith.constant 0.000000e+00 : f32
    %224 = vector.broadcast %cst_132 : f32 to vector<32x128xf32>
    %225 = arith.maximumf %223, %224 : vector<32x128xf32>
    %226 = vector.shape_cast %225 : vector<32x128xf32> to vector<2x16x128xf32>
    %c0_133 = arith.constant 0 : index
    %c0_134 = arith.constant 0 : index
    %c0_135 = arith.constant 0 : index
    %227 = vector.load %arg7[%c0_133, %c0_134, %c0_135] : memref<2x16x128xf32, #tpu.memory_space<vmem>>, vector<2x16x128xf32>
    tpu.vector_store %arg7[%c0_133, %c0_134, %c0_135], %226 {strides = array<i32>} : memref<2x16x128xf32, #tpu.memory_space<vmem>>, vector<2x16x128xf32>,
    return
  }
  func.func @transform_0(%arg0: i32) -> (i32, i32, i32) {
    %c0_i32 = arith.constant 0 : i32
    %c0_i32_0 = arith.constant 0 : i32
    %c0_i32_1 = arith.constant 0 : i32
    return %arg0, %c0_i32, %c0_i32_0 : i32, i32, i32
  }
  func.func @transform_1(%arg0: i32) -> (i32, i32) {
    %c0_i32 = arith.constant 0 : i32
    %c0_i32_0 = arith.constant 0 : i32
    %c0_i32_1 = arith.constant 0 : i32
    return %c0_i32, %c0_i32_0 : i32, i32
  }
  func.func @transform_2(%arg0: i32) -> (i32, i32, i32) {
    %c0_i32 = arith.constant 0 : i32
    %c0_i32_0 = arith.constant 0 : i32
    %c0_i32_1 = arith.constant 0 : i32
    %c0_i32_2 = arith.constant 0 : i32
    return %c0_i32, %c0_i32_0, %c0_i32_1 : i32, i32, i32
  }
  func.func @transform_3(%arg0: i32) -> (i32, i32) {
    %c0_i32 = arith.constant 0 : i32
    %c0_i32_0 = arith.constant 0 : i32
    %c0_i32_1 = arith.constant 0 : i32
    return %c0_i32, %c0_i32_0 : i32, i32
  }
  func.func @transform_4(%arg0: i32) -> (i32, i32) {
    %c0_i32 = arith.constant 0 : i32
    %c0_i32_0 = arith.constant 0 : i32
    %c0_i32_1 = arith.constant 0 : i32
    return %c0_i32, %c0_i32_0 : i32, i32
  }
  func.func @transform_5(%arg0: i32) -> (i32, i32) {
    %c0_i32 = arith.constant 0 : i32
    %c0_i32_0 = arith.constant 0 : i32
    %c0_i32_1 = arith.constant 0 : i32
    return %c0_i32, %c0_i32_0 : i32, i32
  }
  func.func @transform_6(%arg0: i32) -> (i32, i32, i32) {
    %c0_i32 = arith.constant 0 : i32
    %c0_i32_0 = arith.constant 0 : i32
    %c0_i32_1 = arith.constant 0 : i32
    return %arg0, %c0_i32, %c0_i32_0 : i32, i32, i32
  }
}

module attributes {stable_mosaic.version = 11 : i64} {
  func.func @_shortcut_bn_add_relu_kernel(%arg0: i32, %arg1: memref<2x16x128xf32, #tpu.memory_space<vmem>>, %arg2: memref<2x16x128xf32, #tpu.memory_space<vmem>>, %arg3: memref<1x128xf32, #tpu.memory_space<vmem>>, %arg4: memref<1x128xf32, #tpu.memory_space<vmem>>, %arg5: memref<2x16x128xf32, #tpu.memory_space<vmem>>) attributes {dimension_semantics = [#tpu.dimension_semantics<parallel>], iteration_bounds = array<i64: 1>, scalar_prefetch = 0 : i64, scratch_operands = 0 : i64, tpu.core_type = #tpu.core_type<tc>, window_params = [{transform_indices = @transform_0, window_bounds = array<i64: 2, 16, 128>}, {transform_indices = @transform_1, window_bounds = array<i64: 2, 16, 128>}, {pipeline_mode = #tpu.pipeline_mode<synchronous>, transform_indices = @transform_2, window_bounds = array<i64: 1, 128>}, {pipeline_mode = #tpu.pipeline_mode<synchronous>, transform_indices = @transform_3, window_bounds = array<i64: 1, 128>}, {transform_indices = @transform_4, window_bounds = array<i64: 2, 16, 128>}]} {
    %c0 = arith.constant 0 : index
    %c0_0 = arith.constant 0 : index
    %c0_1 = arith.constant 0 : index
    %0 = vector.load %arg2[%c0, %c0_0, %c0_1] : memref<2x16x128xf32, #tpu.memory_space<vmem>>, vector<2x16x128xf32>
    %c0_2 = arith.constant 0 : index
    %c0_3 = arith.constant 0 : index
    %1 = vector.load %arg3[%c0_2, %c0_3] : memref<1x128xf32, #tpu.memory_space<vmem>>, vector<1x128xf32>
    %2 = vector.shape_cast %1 : vector<1x128xf32> to vector<1x1x128xf32>
    %3 = vector.broadcast %2 : vector<1x1x128xf32> to vector<2x16x128xf32>
    %4 = arith.mulf %0, %3 : vector<2x16x128xf32>
    %c0_4 = arith.constant 0 : index
    %c0_5 = arith.constant 0 : index
    %5 = vector.load %arg4[%c0_4, %c0_5] : memref<1x128xf32, #tpu.memory_space<vmem>>, vector<1x128xf32>
    %6 = vector.shape_cast %5 : vector<1x128xf32> to vector<1x1x128xf32>
    %7 = vector.broadcast %6 : vector<1x1x128xf32> to vector<2x16x128xf32>
    %8 = arith.addf %4, %7 : vector<2x16x128xf32>
    %c0_6 = arith.constant 0 : index
    %c0_7 = arith.constant 0 : index
    %c0_8 = arith.constant 0 : index
    %9 = vector.load %arg1[%c0_6, %c0_7, %c0_8] : memref<2x16x128xf32, #tpu.memory_space<vmem>>, vector<2x16x128xf32>
    %10 = arith.addf %9, %8 : vector<2x16x128xf32>
    %cst = arith.constant 0.000000e+00 : f32
    %11 = vector.broadcast %cst : f32 to vector<2x16x128xf32>
    %12 = arith.maximumf %10, %11 : vector<2x16x128xf32>
    %c0_9 = arith.constant 0 : index
    %c0_10 = arith.constant 0 : index
    %c0_11 = arith.constant 0 : index
    %13 = vector.load %arg5[%c0_9, %c0_10, %c0_11] : memref<2x16x128xf32, #tpu.memory_space<vmem>>, vector<2x16x128xf32>
    tpu.vector_store %arg5[%c0_9, %c0_10, %c0_11], %12 {strides = array<i32>} : memref<2x16x128xf32, #tpu.memory_space<vmem>>, vector<2x16x128xf32>,
    return
  }
  func.func @transform_0(%arg0: i32) -> (i32, i32, i32) {
    %c0_i32 = arith.constant 0 : i32
    %c0_i32_0 = arith.constant 0 : i32
    %c0_i32_1 = arith.constant 0 : i32
    return %arg0, %c0_i32, %c0_i32_0 : i32, i32, i32
  }
  func.func @transform_1(%arg0: i32) -> (i32, i32, i32) {
    %c0_i32 = arith.constant 0 : i32
    %c0_i32_0 = arith.constant 0 : i32
    %c0_i32_1 = arith.constant 0 : i32
    return %arg0, %c0_i32, %c0_i32_0 : i32, i32, i32
  }
  func.func @transform_2(%arg0: i32) -> (i32, i32) {
    %c0_i32 = arith.constant 0 : i32
    %c0_i32_0 = arith.constant 0 : i32
    %c0_i32_1 = arith.constant 0 : i32
    return %c0_i32, %c0_i32_0 : i32, i32
  }
  func.func @transform_3(%arg0: i32) -> (i32, i32) {
    %c0_i32 = arith.constant 0 : i32
    %c0_i32_0 = arith.constant 0 : i32
    %c0_i32_1 = arith.constant 0 : i32
    return %c0_i32, %c0_i32_0 : i32, i32
  }
  func.func @transform_4(%arg0: i32) -> (i32, i32, i32) {
    %c0_i32 = arith.constant 0 : i32
    %c0_i32_0 = arith.constant 0 : i32
    %c0_i32_1 = arith.constant 0 : i32
    return %arg0, %c0_i32, %c0_i32_0 : i32, i32, i32
  }
}

module attributes {stable_mosaic.version = 11 : i64} {
  func.func @_shortcut_conv_add_relu_kernel(%arg0: i32, %arg1: memref<2x16x128xf32, #tpu.memory_space<vmem>>, %arg2: memref<2x16x4xf32, #tpu.memory_space<vmem>>, %arg3: memref<4x128xf32, #tpu.memory_space<vmem>>, %arg4: memref<1x128xf32, #tpu.memory_space<vmem>>, %arg5: memref<1x128xf32, #tpu.memory_space<vmem>>, %arg6: memref<2x16x128xf32, #tpu.memory_space<vmem>>) attributes {dimension_semantics = [#tpu.dimension_semantics<parallel>], iteration_bounds = array<i64: 1>, scalar_prefetch = 0 : i64, scratch_operands = 0 : i64, tpu.core_type = #tpu.core_type<tc>, window_params = [{transform_indices = @transform_0, window_bounds = array<i64: 2, 16, 128>}, {transform_indices = @transform_1, window_bounds = array<i64: 2, 16, 4>}, {pipeline_mode = #tpu.pipeline_mode<synchronous>, transform_indices = @transform_2, window_bounds = array<i64: 4, 128>}, {pipeline_mode = #tpu.pipeline_mode<synchronous>, transform_indices = @transform_3, window_bounds = array<i64: 1, 128>}, {pipeline_mode = #tpu.pipeline_mode<synchronous>, transform_indices = @transform_4, window_bounds = array<i64: 1, 128>}, {transform_indices = @transform_5, window_bounds = array<i64: 2, 16, 128>}]} {
    %c0 = arith.constant 0 : index
    %c0_0 = arith.constant 0 : index
    %c0_1 = arith.constant 0 : index
    %0 = vector.load %arg2[%c0, %c0_0, %c0_1] : memref<2x16x4xf32, #tpu.memory_space<vmem>>, vector<2x16x4xf32>
    %1 = vector.shape_cast %0 : vector<2x16x4xf32> to vector<32x4xf32>
    %c0_2 = arith.constant 0 : index
    %c0_3 = arith.constant 0 : index
    %2 = vector.load %arg3[%c0_2, %c0_3] : memref<4x128xf32, #tpu.memory_space<vmem>>, vector<4x128xf32>
    %cst = arith.constant dense<0.000000e+00> : vector<32x128xf32>
    %3 = tpu.matmul %1, %2, %cst {dimension_numbers = #tpu.dot_dimension_numbers<[1], [0], [0], [1], [0, 0, 1, 1], [], []>} : vector<32x4xf32>, vector<4x128xf32>, vector<32x128xf32> -> vector<32x128xf32>
    %4 = vector.shape_cast %3 : vector<32x128xf32> to vector<2x16x128xf32>
    %c0_4 = arith.constant 0 : index
    %c0_5 = arith.constant 0 : index
    %5 = vector.load %arg4[%c0_4, %c0_5] : memref<1x128xf32, #tpu.memory_space<vmem>>, vector<1x128xf32>
    %6 = vector.shape_cast %5 : vector<1x128xf32> to vector<1x1x128xf32>
    %7 = vector.broadcast %6 : vector<1x1x128xf32> to vector<2x16x128xf32>
    %8 = arith.mulf %4, %7 : vector<2x16x128xf32>
    %c0_6 = arith.constant 0 : index
    %c0_7 = arith.constant 0 : index
    %9 = vector.load %arg5[%c0_6, %c0_7] : memref<1x128xf32, #tpu.memory_space<vmem>>, vector<1x128xf32>
    %10 = vector.shape_cast %9 : vector<1x128xf32> to vector<1x1x128xf32>
    %11 = vector.broadcast %10 : vector<1x1x128xf32> to vector<2x16x128xf32>
    %12 = arith.addf %8, %11 : vector<2x16x128xf32>
    %c0_8 = arith.constant 0 : index
    %c0_9 = arith.constant 0 : index
    %c0_10 = arith.constant 0 : index
    %13 = vector.load %arg1[%c0_8, %c0_9, %c0_10] : memref<2x16x128xf32, #tpu.memory_space<vmem>>, vector<2x16x128xf32>
    %14 = arith.addf %13, %12 : vector<2x16x128xf32>
    %cst_11 = arith.constant 0.000000e+00 : f32
    %15 = vector.broadcast %cst_11 : f32 to vector<2x16x128xf32>
    %16 = arith.maximumf %14, %15 : vector<2x16x128xf32>
    %c0_12 = arith.constant 0 : index
    %c0_13 = arith.constant 0 : index
    %c0_14 = arith.constant 0 : index
    %17 = vector.load %arg6[%c0_12, %c0_13, %c0_14] : memref<2x16x128xf32, #tpu.memory_space<vmem>>, vector<2x16x128xf32>
    tpu.vector_store %arg6[%c0_12, %c0_13, %c0_14], %16 {strides = array<i32>} : memref<2x16x128xf32, #tpu.memory_space<vmem>>, vector<2x16x128xf32>,
    return
  }
  func.func @transform_0(%arg0: i32) -> (i32, i32, i32) {
    %c0_i32 = arith.constant 0 : i32
    %c0_i32_0 = arith.constant 0 : i32
    %c0_i32_1 = arith.constant 0 : i32
    return %arg0, %c0_i32, %c0_i32_0 : i32, i32, i32
  }
  func.func @transform_1(%arg0: i32) -> (i32, i32, i32) {
    %c0_i32 = arith.constant 0 : i32
    %c0_i32_0 = arith.constant 0 : i32
    %c0_i32_1 = arith.constant 0 : i32
    return %arg0, %c0_i32, %c0_i32_0 : i32, i32, i32
  }
  func.func @transform_2(%arg0: i32) -> (i32, i32) {
    %c0_i32 = arith.constant 0 : i32
    %c0_i32_0 = arith.constant 0 : i32
    %c0_i32_1 = arith.constant 0 : i32
    return %c0_i32, %c0_i32_0 : i32, i32
  }
  func.func @transform_3(%arg0: i32) -> (i32, i32) {
    %c0_i32 = arith.constant 0 : i32
    %c0_i32_0 = arith.constant 0 : i32
    %c0_i32_1 = arith.constant 0 : i32
    return %c0_i32, %c0_i32_0 : i32, i32
  }
  func.func @transform_4(%arg0: i32) -> (i32, i32) {
    %c0_i32 = arith.constant 0 : i32
    %c0_i32_0 = arith.constant 0 : i32
    %c0_i32_1 = arith.constant 0 : i32
    return %c0_i32, %c0_i32_0 : i32, i32
  }
  func.func @transform_5(%arg0: i32) -> (i32, i32, i32) {
    %c0_i32 = arith.constant 0 : i32
    %c0_i32_0 = arith.constant 0 : i32
    %c0_i32_1 = arith.constant 0 : i32
    return %arg0, %c0_i32, %c0_i32_0 : i32, i32, i32
  }
}

module attributes {stable_mosaic.version = 11 : i64} {
  func.func @_gap_fc_kernel(%arg0: memref<2x16x128xf32, #tpu.memory_space<vmem>>, %arg1: memref<128x5xf32, #tpu.memory_space<vmem>>, %arg2: memref<1x5xf32, #tpu.memory_space<vmem>>, %arg3: memref<2x5xf32, #tpu.memory_space<vmem>>) attributes {dimension_semantics = [], scalar_prefetch = 0 : i64, scratch_operands = 0 : i64, tpu.core_type = #tpu.core_type<tc>} {
    %c0 = arith.constant 0 : index
    %c0_0 = arith.constant 0 : index
    %c0_1 = arith.constant 0 : index
    %0 = vector.load %arg0[%c0, %c0_0, %c0_1] : memref<2x16x128xf32, #tpu.memory_space<vmem>>, vector<2x16x128xf32>
    %cst = arith.constant dense<0.000000e+00> : vector<2x128xf32>
    %1 = vector.multi_reduction <add>, %0, %cst [1] : vector<2x16x128xf32> to vector<2x128xf32>
    %cst_2 = arith.constant 6.250000e-02 : f32
    %2 = vector.broadcast %cst_2 : f32 to vector<2x128xf32>
    %3 = arith.mulf %1, %2 : vector<2x128xf32>
    %c0_3 = arith.constant 0 : index
    %c0_4 = arith.constant 0 : index
    %4 = vector.load %arg1[%c0_3, %c0_4] : memref<128x5xf32, #tpu.memory_space<vmem>>, vector<128x5xf32>
    %cst_5 = arith.constant dense<0.000000e+00> : vector<2x5xf32>
    %5 = tpu.matmul %3, %4, %cst_5 {dimension_numbers = #tpu.dot_dimension_numbers<[1], [0], [0], [1], [0, 0, 1, 1], [], []>} : vector<2x128xf32>, vector<128x5xf32>, vector<2x5xf32> -> vector<2x5xf32>
    %c0_6 = arith.constant 0 : index
    %c0_7 = arith.constant 0 : index
    %6 = vector.load %arg2[%c0_6, %c0_7] : memref<1x5xf32, #tpu.memory_space<vmem>>, vector<1x5xf32>
    %7 = vector.broadcast %6 : vector<1x5xf32> to vector<2x5xf32>
    %8 = arith.addf %5, %7 : vector<2x5xf32>
    %c0_8 = arith.constant 0 : index
    %c0_9 = arith.constant 0 : index
    %9 = vector.load %arg3[%c0_8, %c0_9] : memref<2x5xf32, #tpu.memory_space<vmem>>, vector<2x5xf32>
    tpu.vector_store %arg3[%c0_8, %c0_9], %8 {strides = array<i32>} : memref<2x5xf32, #tpu.memory_space<vmem>>, vector<2x5xf32>,
    return
  }
}

</mosaic_0001>

<llo_original>
// kernel: inceptiontime_fwd.16
$region0: #{inceptiontime_fwd.16}
  #allocation0 [shape = 'u32[]', space=smem, size = 0x4, offset = 0x4, fixed_abs, tag = 'smem constant byte address 0x4 - core index']
  #allocation1 [shape = 'u32[144,128]{1,0:T(1,128)}', space=vmem, size = 0x12000, scoped, tag = 'internal scratch']
  %s0 = inlined_call_operand.vmem [shape: f32[2,16,128], index: 0, kind: input, shape index: {}]
  %s1 = inlined_call_operand.vmem [shape: f32[2,16,128], index: 1, kind: input, shape index: {}]
  %s2 = inlined_call_operand.vmem [shape: f32[1,128], index: 2, kind: input, shape index: {}]
  %s3 = inlined_call_operand.vmem [shape: f32[1,128], index: 3, kind: input, shape index: {}]
  %s4 = inlined_call_operand.vmem [shape: f32[2,16,128], index: 4, kind: output, shape index: {}]
  %s5 = sld [smem:[#allocation0]]
  $region26: #{inceptiontime_fwd.16} parent=0
    _
  %s7 = ssub.s32 1, %s5
  %s8 = scalar_select 0, %s7, %s5
  // Predicated region
  $region2: #{inceptiontime_fwd.16} parent=0 // pred_check
    _
  $region3: #{inceptiontime_fwd.16} parent=0 // pred_check_branch
    %10 = sbr.rel (0) target = $region5
  $region4: #{inceptiontime_fwd.16} parent=0 // pred_region
    _
  $region5: #{inceptiontime_fwd.16} parent=0 // pred_fallthru
    _
  // Predicated region
  $region6: #{inceptiontime_fwd.16} parent=0 // pred_check
    _
  $region7: #{inceptiontime_fwd.16} parent=0 // pred_check_branch
    %12 = sbr.rel (0) target = $region9
  $region8: #{inceptiontime_fwd.16} parent=0 // pred_region
    _
  $region9: #{inceptiontime_fwd.16} parent=0 // pred_fallthru
    _
  // Predicated region
  $region10: #{inceptiontime_fwd.16} parent=0 // pred_check
    _
  $region11: #{inceptiontime_fwd.16} parent=0 // pred_check_branch
    %14 = sbr.rel (0) target = $region13
  $region12: #{inceptiontime_fwd.16} parent=0 // pred_region
    _
  $region13: #{inceptiontime_fwd.16} parent=0 // pred_fallthru
    _
  // Predicated region
  $region14: #{inceptiontime_fwd.16} parent=0 // pred_check
    _
  $region15: #{inceptiontime_fwd.16} parent=0 // pred_check_branch
    %16 = sbr.rel (0) target = $region17
  $region16: #{inceptiontime_fwd.16} parent=0 // pred_region
    _
  $region17: #{inceptiontime_fwd.16} parent=0 // pred_fallthru
    _
  %v17 = vld [vmem:[%s1] sm:$0xff]
  %v18 = vld [vmem:[%s1 + $0x8] sm:$0xff]
  %v19 = vld [vmem:[%s1 + $0x10] sm:$0xff]
  %v20 = vld [vmem:[%s1 + $0x18] sm:$0xff]
  %v21 = vld [vmem:[%s2] sm:$0x1]
  %v23 = vlaneseq
  %v24 = vshrl.u32 %v23, 7
  %v25 = vsub.s32 0, %v24
  %v26 = vrot.slane %v21, %v25
  %v28 = vmul.f32 %v17, %v26
  %v29 = vmul.f32 %v18, %v26
  %v30 = vmul.f32 %v19, %v26
  %v31 = vmul.f32 %v20, %v26
  %v32 = vld [vmem:[%s3] sm:$0x1]
  %v34 = vlaneseq
  %v35 = vshrl.u32 %v34, 7
  %v36 = vsub.s32 0, %v35
  %v37 = vrot.slane %v32, %v36
  %v39 = vadd.f32 %v28, %v37
  %v40 = vadd.f32 %v29, %v37
  %v41 = vadd.f32 %v30, %v37
  %v42 = vadd.f32 %v31, %v37
  %v43 = vld [vmem:[%s0] sm:$0xff]
  %v44 = vld [vmem:[%s0 + $0x8] sm:$0xff]
  %v45 = vld [vmem:[%s0 + $0x10] sm:$0xff]
  %v46 = vld [vmem:[%s0 + $0x18] sm:$0xff]
  %v47 = vadd.f32 %v43, %v39
  %v48 = vadd.f32 %v44, %v40
  %v49 = vadd.f32 %v45, %v41
  %v50 = vadd.f32 %v46, %v42
  %v51 = vmax.f32 %v47, 0.0
  %v52 = vmax.f32 %v48, 0.0
  %v53 = vmax.f32 %v49, 0.0
  %v54 = vmax.f32 %v50, 0.0
  %55 = vst [vmem:[%s4] sm:$0xff] %v51
  %56 = vst [vmem:[%s4 + $0x8] sm:$0xff] %v52
  %57 = vst [vmem:[%s4 + $0x10] sm:$0xff] %v53
  %58 = vst [vmem:[%s4 + $0x18] sm:$0xff] %v54
  // Predicated region
  $region18: #{inceptiontime_fwd.16} parent=0 // pred_check
    _
  $region19: #{inceptiontime_fwd.16} parent=0 // pred_check_branch
    %60 = sbr.rel (0) target = $region21
  $region20: #{inceptiontime_fwd.16} parent=0 // pred_region
    _
  $region21: #{inceptiontime_fwd.16} parent=0 // pred_fallthru
    _
  // Predicated region
  $region22: #{inceptiontime_fwd.16} parent=0 // pred_check
    _
  $region23: #{inceptiontime_fwd.16} parent=0 // pred_check_branch
    %62 = sbr.rel (0) target = $region25
  $region24: #{inceptiontime_fwd.16} parent=0 // pred_region
    _
  $region25: #{inceptiontime_fwd.16} parent=0 // pred_fallthru
    _

// kernel: inceptiontime_fwd.12
$region0: #{inceptiontime_fwd.12}
  #allocation0 [shape = 'u32[]', space=smem, size = 0x4, offset = 0x4, fixed_abs, tag = 'smem constant byte address 0x4 - core index']
  #allocation1 [shape = 'u32[144,128]{1,0:T(1,128)}', space=vmem, size = 0x12000, scoped, tag = 'internal scratch']
  %s0 = inlined_call_operand.vmem [shape: f32[2,16,128], index: 0, kind: input, shape index: {}]
  %s1 = inlined_call_operand.vmem [shape: f32[2,16,4], index: 1, kind: input, shape index: {}]
  %s2 = inlined_call_operand.vmem [shape: f32[4,128], index: 2, kind: input, shape index: {}]
  %s3 = inlined_call_operand.vmem [shape: f32[1,128], index: 3, kind: input, shape index: {}]
  %s4 = inlined_call_operand.vmem [shape: f32[1,128], index: 4, kind: input, shape index: {}]
  %s5 = inlined_call_operand.vmem [shape: f32[2,16,128], index: 5, kind: output, shape index: {}]
  %s6 = sld [smem:[#allocation0]]
  $region30: #{inceptiontime_fwd.12} parent=0
    _
  %s8 = ssub.s32 1, %s6
  %s9 = scalar_select 0, %s8, %s6
  // Predicated region
  $region2: #{inceptiontime_fwd.12} parent=0 // pred_check
    _
  $region3: #{inceptiontime_fwd.12} parent=0 // pred_check_branch
    %11 = sbr.rel (0) target = $region5
  $region4: #{inceptiontime_fwd.12} parent=0 // pred_region
    _
  $region5: #{inceptiontime_fwd.12} parent=0 // pred_fallthru
    _
  // Predicated region
  $region6: #{inceptiontime_fwd.12} parent=0 // pred_check
    _
  $region7: #{inceptiontime_fwd.12} parent=0 // pred_check_branch
    %13 = sbr.rel (0) target = $region9
  $region8: #{inceptiontime_fwd.12} parent=0 // pred_region
    _
  $region9: #{inceptiontime_fwd.12} parent=0 // pred_fallthru
    _
  // Predicated region
  $region10: #{inceptiontime_fwd.12} parent=0 // pred_check
    _
  $region11: #{inceptiontime_fwd.12} parent=0 // pred_check_branch
    %15 = sbr.rel (0) target = $region13
  $region12: #{inceptiontime_fwd.12} parent=0 // pred_region
    _
  $region13: #{inceptiontime_fwd.12} parent=0 // pred_fallthru
    _
  // Predicated region
  $region14: #{inceptiontime_fwd.12} parent=0 // pred_check
    _
  $region15: #{inceptiontime_fwd.12} parent=0 // pred_check_branch
    %17 = sbr.rel (0) target = $region17
  $region16: #{inceptiontime_fwd.12} parent=0 // pred_region
    _
  $region17: #{inceptiontime_fwd.12} parent=0 // pred_fallthru
    _
  // Predicated region
  $region18: #{inceptiontime_fwd.12} parent=0 // pred_check
    _
  $region19: #{inceptiontime_fwd.12} parent=0 // pred_check_branch
    %19 = sbr.rel (0) target = $region21
  $region20: #{inceptiontime_fwd.12} parent=0 // pred_region
    _
  $region21: #{inceptiontime_fwd.12} parent=0 // pred_fallthru
    _
  %v20 = vld [vmem:[%s1] sm:$0xff]
  %v21 = vld [vmem:[%s1 + $0x8] sm:$0xff]
  %v22 = vld [vmem:[%s1 + $0x10] sm:$0xff]
  %v23 = vld [vmem:[%s1 + $0x18] sm:$0xff]
  %v24 = vld [vmem:[%s2] sm:$0xf]
  %vm25 = vcmask 31744
  %v27 = vsel %vm25, %v20, 0
  %v30 = vsel %vm25, %v21, 0
  %v33 = vsel %vm25, %v22, 0
  %v36 = vsel %vm25, %v23, 0
  %vm38 = vcmask 1043456
  %v40 = vsel %vm38, %v24, 0
  %42 = vmatprep.subr.mxu0 0.0
  %43 = vmatpush1.msra.mxu0 %v40
  %44 = vmatprep.subr.mxu0 0.0
  %45 = vmatpush1.msra.mxu0 0.0
  %46 = vmatprep.subr.mxu0 0.0
  %47 = vmatpush1.msra.mxu0 0.0
  %48 = vmatprep.subr.mxu0 0.0
  %49 = vmatpush1.msra.mxu0 0.0
  %50 = vmatprep.subr.mxu0 0.0
  %51 = vmatpush1.msra.mxu0 0.0
  %52 = vmatprep.subr.mxu0 0.0
  %53 = vmatpush1.msra.mxu0 0.0
  %54 = vmatprep.subr.mxu0 0.0
  %55 = vmatpush1.msra.mxu0 0.0
  %56 = vmatprep.subr.mxu0 0.0
  %57 = vmatpush1.msra.mxu0 0.0
  %58 = vmatprep.subr.mxu0 0.0
  %59 = vmatpush1.msra.mxu0 0.0
  %60 = vmatprep.subr.mxu0 0.0
  %61 = vmatpush1.msra.mxu0 0.0
  %62 = vmatprep.subr.mxu0 0.0
  %63 = vmatpush1.msra.mxu0 0.0
  %64 = vmatprep.subr.mxu0 0.0
  %65 = vmatpush1.msra.mxu0 0.0
  %66 = vmatprep.subr.mxu0 0.0
  %67 = vmatpush1.msra.mxu0 0.0
  %68 = vmatprep.subr.mxu0 0.0
  %69 = vmatpush1.msra.mxu0 0.0
  %70 = vmatprep.subr.mxu0 0.0
  %71 = vmatpush1.msra.mxu0 0.0
  %72 = vmatprep.subr.mxu0 0.0
  %73 = vmatpush1.msra.mxu0 0.0
  %74 = vmatprep.subr.mxu0 0.0
  %75 = vmatpush1.msra.mxu0 0.0
  %76 = vmatprep.subr.mxu0 0.0
  %77 = vmatpush1.msra.mxu0 0.0
  %78 = vmatprep.subr.mxu0 0.0
  %79 = vmatpush1.msra.mxu0 0.0
  %80 = vmatprep.subr.mxu0 0.0
  %81 = vmatpush1.msra.mxu0 0.0
  %82 = vmatprep.subr.mxu0 0.0
  %83 = vmatpush1.msra.mxu0 0.0
  %84 = vmatprep.subr.mxu0 0.0
  %85 = vmatpush1.msra.mxu0 0.0
  %86 = vmatprep.subr.mxu0 0.0
  %87 = vmatpush1.msra.mxu0 0.0
  %88 = vmatprep.subr.mxu0 0.0
  %89 = vmatpush1.msra.mxu0 0.0
  %90 = vmatprep.subr.mxu0 0.0
  %91 = vmatpush1.msra.mxu0 0.0
  %92 = vmatprep.subr.mxu0 0.0
  %93 = vmatpush1.msra.mxu0 0.0
  %94 = vmatprep.subr.mxu0 0.0
  %95 = vmatpush1.msra.mxu0 0.0
  %96 = vmatprep.subr.mxu0 0.0
  %97 = vmatpush1.msra.mxu0 0.0
  %98 = vmatprep.subr.mxu0 0.0
  %99 = vmatpush1.msra.mxu0 0.0
  %100 = vmatprep.subr.mxu0 0.0
  %101 = vmatpush1.msra.mxu0 0.0
  %102 = vmatprep.subr.mxu0 0.0
  %103 = vmatpush1.msra.mxu0 0.0
  %104 = vmatprep.subr.mxu0 0.0
  %105 = vmatpush1.msra.mxu0 0.0
  %106 = vmatprep.mubr.f32.mxu0 0.0
  %107 = vmatmul.mubr.f32.gmra.mrb[0].mxu0 %v27
  %v108 = vpop.f32.mrb[0].mxu0
  %v109 = vadd.f32 0.0, %v108
  %v110 = vpop.f32.mrb[0].mxu0
  %111 = vmatprep.mubr.f32.mxu0 0.0
  %112 = vmatmul.mubr.f32.gmra.mrb[0].mxu0 %v30
  %v113 = vpop.f32.mrb[0].mxu0
  %v114 = vadd.f32 0.0, %v113
  %v115 = vpop.f32.mrb[0].mxu0
  %116 = vmatprep.mubr.f32.mxu0 0.0
  %117 = vmatmul.mubr.f32.gmra.mrb[0].mxu0 %v33
  %v118 = vpop.f32.mrb[0].mxu0
  %v119 = vadd.f32 0.0, %v118
  %v120 = vpop.f32.mrb[0].mxu0
  %121 = vmatprep.mubr.f32.mxu0 0.0
  %122 = vmatmul.mubr.f32.gmra.mrb[0].mxu0 %v36
  %v123 = vpop.f32.mrb[0].mxu0
  %v124 = vadd.f32 0.0, %v123
  %v125 = vpop.f32.mrb[0].mxu0
  %126 = vdwg.mxu0
  %v127 = vld [vmem:[%s3] sm:$0x1]
  %v129 = vlaneseq
  %v130 = vshrl.u32 %v129, 7
  %v131 = vsub.s32 0, %v130
  %v132 = vrot.slane %v127, %v131
  %v134 = vmul.f32 %v109, %v132
  %v135 = vmul.f32 %v114, %v132
  %v136 = vmul.f32 %v119, %v132
  %v137 = vmul.f32 %v124, %v132
  %v138 = vld [vmem:[%s4] sm:$0x1]
  %v140 = vlaneseq
  %v141 = vshrl.u32 %v140, 7
  %v142 = vsub.s32 0, %v141
  %v143 = vrot.slane %v138, %v142
  %v145 = vadd.f32 %v134, %v143
  %v146 = vadd.f32 %v135, %v143
  %v147 = vadd.f32 %v136, %v143
  %v148 = vadd.f32 %v137, %v143
  %v149 = vld [vmem:[%s0] sm:$0xff]
  %v150 = vld [vmem:[%s0 + $0x8] sm:$0xff]
  %v151 = vld [vmem:[%s0 + $0x10] sm:$0xff]
  %v152 = vld [vmem:[%s0 + $0x18] sm:$0xff]
  %v153 = vadd.f32 %v149, %v145
  %v154 = vadd.f32 %v150, %v146
  %v155 = vadd.f32 %v151, %v147
  %v156 = vadd.f32 %v152, %v148
  %v157 = vmax.f32 %v153, 0.0
  %v158 = vmax.f32 %v154, 0.0
  %v159 = vmax.f32 %v155, 0.0
  %v160 = vmax.f32 %v156, 0.0
  %161 = vst [vmem:[%s5] sm:$0xff] %v157
  %162 = vst [vmem:[%s5 + $0x8] sm:$0xff] %v158
  %163 = vst [vmem:[%s5 + $0x10] sm:$0xff] %v159
  %164 = vst [vmem:[%s5 + $0x18] sm:$0xff] %v160
  // Predicated region
  $region22: #{inceptiontime_fwd.12} parent=0 // pred_check
    _
  $region23: #{inceptiontime_fwd.12} parent=0 // pred_check_branch
    %166 = sbr.rel (0) target = $region25
  $region24: #{inceptiontime_fwd.12} parent=0 // pred_region
    _
  $region25: #{inceptiontime_fwd.12} parent=0 // pred_fallthru
    _
  // Predicated region
  $region26: #{inceptiontime_fwd.12} parent=0 // pred_check
    _
  $region27: #{inceptiontime_fwd.12} parent=0 // pred_check_branch
    %168 = sbr.rel (0) target = $region29
  $region28: #{inceptiontime_fwd.12} parent=0 // pred_region
    _
  $region29: #{inceptiontime_fwd.12} parent=0 // pred_fallthru
    _

// kernel: inceptiontime_fwd.17
$region0: #{inceptiontime_fwd.17}
  #allocation0 [shape = 'u32[]', space=smem, size = 0x4, offset = 0x4, fixed_abs, tag = 'smem constant byte address 0x4 - core index']
  #allocation1 [shape = 'u32[144,128]{1,0:T(1,128)}', space=vmem, size = 0x12000, scoped, tag = 'internal scratch']
  %s0 = inlined_call_operand.vmem [shape: f32[2,16,128], index: 0, kind: input, shape index: {}]
  %s1 = inlined_call_operand.vmem [shape: f32[128,5], index: 1, kind: input, shape index: {}]
  %s2 = inlined_call_operand.vmem [shape: f32[1,5], index: 2, kind: input, shape index: {}]
  %s3 = inlined_call_operand.hbm [shape: f32[2,5], index: 3, kind: output, shape index: {}]
  %s4 = sld [smem:[#allocation0]]
  $region22: #{inceptiontime_fwd.17} parent=0
    _
  %s6 = ssub.s32 1, %s4
  %s7 = scalar_select 0, %s6, %s4
  $region1: #{inceptiontime_fwd.17} parent=0
    #allocation2 [shape = 'u8[1024]{0}', space=vmem, size = 0x400, scoped, tag = 'output window, operand 0, single buffered']
    #allocation3 [shape = 's32[1]{0}', space=sflag, size = 0x4, scoped, tag = 'scoped memory for inceptiontime_fwd.17']
    %8 = vsyncpa [#allocation3], 0
    // Predicated region
    $region2: #{inceptiontime_fwd.17} parent=1 // pred_check
      _
    $region3: #{inceptiontime_fwd.17} parent=1 // pred_check_branch
      %10 = sbr.rel (0) target = $region5
    $region4: #{inceptiontime_fwd.17} parent=1 // pred_region
      _
    $region5: #{inceptiontime_fwd.17} parent=1 // pred_fallthru
      _
    // Predicated region
    $region6: #{inceptiontime_fwd.17} parent=1 // pred_check
      _
    $region7: #{inceptiontime_fwd.17} parent=1 // pred_check_branch
      %12 = sbr.rel (0) target = $region9
    $region8: #{inceptiontime_fwd.17} parent=1 // pred_region
      _
    $region9: #{inceptiontime_fwd.17} parent=1 // pred_fallthru
      _
    // Predicated region
    $region10: #{inceptiontime_fwd.17} parent=1 // pred_check
      _
    $region11: #{inceptiontime_fwd.17} parent=1 // pred_check_branch
      %14 = sbr.rel (0) target = $region13
    $region12: #{inceptiontime_fwd.17} parent=1 // pred_region
      _
    $region13: #{inceptiontime_fwd.17} parent=1 // pred_fallthru
      _
    %v15 = vld [vmem:[%s0] sm:$0xff]
    %v16 = vld [vmem:[%s0 + $0x8] sm:$0xff]
    %v17 = vld [vmem:[%s0 + $0x10] sm:$0xff]
    %v18 = vld [vmem:[%s0 + $0x18] sm:$0xff]
    %v19 = vadd.f32 %v15, %v16
    %v20 = vrot.slane %v19, 4
    %v21 = vadd.f32 %v19, %v20
    %v22 = vrot.slane %v21, 2
    %v23 = vadd.f32 %v21, %v22
    %v24 = vrot.slane %v23, 1
    %v25 = vadd.f32 %v23, %v24
    %v26 = vadd.f32 %v17, %v18
    %v27 = vrot.slane %v26, 4
    %v28 = vadd.f32 %v26, %v27
    %v29 = vrot.slane %v28, 2
    %v30 = vadd.f32 %v28, %v29
    %v31 = vrot.slane %v30, 1
    %v32 = vadd.f32 %v30, %v31
    %v33 = vmul.f32 %v25, 0.0625
    %v34 = vmul.f32 %v32, 0.0625
    %v35 = vld [vmem:[%s1] sm:$0xff]
    %v36 = vld [vmem:[%s1 + $0x8] sm:$0xff]
    %v37 = vld [vmem:[%s1 + $0x10] sm:$0xff]
    %v38 = vld [vmem:[%s1 + $0x18] sm:$0xff]
    %v39 = vld [vmem:[%s1 + $0x20] sm:$0xff]
    %v40 = vld [vmem:[%s1 + $0x28] sm:$0xff]
    %v41 = vld [vmem:[%s1 + $0x30] sm:$0xff]
    %v42 = vld [vmem:[%s1 + $0x38] sm:$0xff]
    %v43 = vld [vmem:[%s1 + $0x40] sm:$0xff]
    %v44 = vld [vmem:[%s1 + $0x48] sm:$0xff]
    %v45 = vld [vmem:[%s1 + $0x50] sm:$0xff]
    %v46 = vld [vmem:[%s1 + $0x58] sm:$0xff]
    %v47 = vld [vmem:[%s1 + $0x60] sm:$0xff]
    %v48 = vld [vmem:[%s1 + $0x68] sm:$0xff]
    %v49 = vld [vmem:[%s1 + $0x70] sm:$0xff]
    %v50 = vld [vmem:[%s1 + $0x78] sm:$0xff]
    %v51 = vld [vmem:[%s2] sm:$0x1]
    %v53 = vlaneseq
    %v54 = vshrl.u32 %v53, 7
    %v55 = vsub.s32 0, %v54
    %v56 = vrot.slane %v51, %v55
    %vm60 = vcmask 1041409
    %v61 = vsel %vm60, %v34, %v33
    %63 = vmatprep.subr.mxu0 0.0
    %64 = vmatpush1.msra.mxu0 %v35
    %65 = vmatprep.subr.mxu0 0.0
    %66 = vmatpush1.msra.mxu0 %v36
    %67 = vmatprep.subr.mxu0 0.0
    %68 = vmatpush1.msra.mxu0 %v37
    %69 = vmatprep.subr.mxu0 0.0
    %70 = vmatpush1.msra.mxu0 %v38
    %71 = vmatprep.subr.mxu0 0.0
    %72 = vmatpush1.msra.mxu0 %v39
    %73 = vmatprep.subr.mxu0 0.0
    %74 = vmatpush1.msra.mxu0 %v40
    %75 = vmatprep.subr.mxu0 0.0
    %76 = vmatpush1.msra.mxu0 %v41
    %77 = vmatprep.subr.mxu0 0.0
    %78 = vmatpush1.msra.mxu0 %v42
    %79 = vmatprep.subr.mxu0 0.0
    %80 = vmatpush1.msra.mxu0 %v43
    %81 = vmatprep.subr.mxu0 0.0
    %82 = vmatpush1.msra.mxu0 %v44
    %83 = vmatprep.subr.mxu0 0.0
    %84 = vmatpush1.msra.mxu0 %v45
    %85 = vmatprep.subr.mxu0 0.0
    %86 = vmatpush1.msra.mxu0 %v46
    %87 = vmatprep.subr.mxu0 0.0
    %88 = vmatpush1.msra.mxu0 %v47
    %89 = vmatprep.subr.mxu0 0.0
    %90 = vmatpush1.msra.mxu0 %v48
    %91 = vmatprep.subr.mxu0 0.0
    %92 = vmatpush1.msra.mxu0 %v49
    %93 = vmatprep.subr.mxu0 0.0
    %94 = vmatpush1.msra.mxu0 %v50
    %95 = vmatprep.subr.mxu0 0.0
    %96 = vmatpush1.msra.mxu0 0.0
    %97 = vmatprep.subr.mxu0 0.0
    %98 = vmatpush1.msra.mxu0 0.0
    %99 = vmatprep.subr.mxu0 0.0
    %100 = vmatpush1.msra.mxu0 0.0
    %101 = vmatprep.subr.mxu0 0.0
    %102 = vmatpush1.msra.mxu0 0.0
    %103 = vmatprep.subr.mxu0 0.0
    %104 = vmatpush1.msra.mxu0 0.0
    %105 = vmatprep.subr.mxu0 0.0
    %106 = vmatpush1.msra.mxu0 0.0
    %107 = vmatprep.subr.mxu0 0.0
    %108 = vmatpush1.msra.mxu0 0.0
    %109 = vmatprep.subr.mxu0 0.0
    %110 = vmatpush1.msra.mxu0 0.0
    %111 = vmatprep.subr.mxu0 0.0
    %112 = vmatpush1.msra.mxu0 0.0
    %113 = vmatprep.subr.mxu0 0.0
    %114 = vmatpush1.msra.mxu0 0.0
    %115 = vmatprep.subr.mxu0 0.0
    %116 = vmatpush1.msra.mxu0 0.0
    %117 = vmatprep.subr.mxu0 0.0
    %118 = vmatpush1.msra.mxu0 0.0
    %119 = vmatprep.subr.mxu0 0.0
    %120 = vmatpush1.msra.mxu0 0.0
    %121 = vmatprep.subr.mxu0 0.0
    %122 = vmatpush1.msra.mxu0 0.0
    %123 = vmatprep.subr.mxu0 0.0
    %124 = vmatpush1.msra.mxu0 0.0
    %125 = vmatprep.subr.mxu0 0.0
    %126 = vmatpush1.msra.mxu0 0.0
    %127 = vmatprep.mubr.f32.mxu0 0.0
    %128 = vmatmul.mubr.f32.gmra.mrb[0].mxu0 %v61
    %v129 = vpop.f32.mrb[0].mxu0
    %v130 = vadd.f32 %v56, %v129
    %v131 = vpop.f32.mrb[0].mxu0
    %132 = vdwg.mxu0
    %vm133 = vcmask 33792
    %134 = vst.msk [vmem:[#allocation2] sm:$0x3] %vm133, %v130
    // Predicated region
    $region14: #{inceptiontime_fwd.17} parent=1 // pred_check
      _
    $region15: #{inceptiontime_fwd.17} parent=1 // pred_check_branch
      %136 = sbr.rel (0) target = $region17
    $region16: #{inceptiontime_fwd.17} parent=1 // pred_region
      %s138 = ssub.s32 32, 32
      %139 = vsyncadd [#allocation3], %s138
      %s141 = sshll.u32 [#allocation2], 4
      %s142 = int_to_ptr.vmem [resolvable:$true] %s141
      %144 = dma.vmem_to_hbm [thread:$0]  %s142, 32, %s3, [#allocation3]
    $region17: #{inceptiontime_fwd.17} parent=1 // pred_fallthru
      _
    // Predicated region
    $region18: #{inceptiontime_fwd.17} parent=1 // pred_check
      _
    $region19: #{inceptiontime_fwd.17} parent=1 // pred_check_branch
      %146 = sbr.rel (0) target = $region21
    $region20: #{inceptiontime_fwd.17} parent=1 // pred_region
      %147 = dma.done [#allocation3], 32
    $region21: #{inceptiontime_fwd.17} parent=1 // pred_fallthru
      _
    %148 = vsyncpa [#allocation3], 1

// kernel: inceptiontime_fwd.10
$region0: #{inceptiontime_fwd.10}
  #allocation0 [shape = 'u32[]', space=smem, size = 0x4, offset = 0x4, fixed_abs, tag = 'smem constant byte address 0x4 - core index']
  #allocation1 [shape = 'u32[144,128]{1,0:T(1,128)}', space=vmem, size = 0x12000, scoped, tag = 'internal scratch']
  %s0 = inlined_call_operand.vmem [shape: f32[2,16,128], index: 0, kind: input, shape index: {}]
  %s1 = inlined_call_operand.vmem [shape: f32[128,32], index: 1, kind: input, shape index: {}]
  %s2 = inlined_call_operand.vmem [shape: f32[39,32,96], index: 2, kind: input, shape index: {}]
  %s3 = inlined_call_operand.vmem [shape: f32[128,32], index: 3, kind: input, shape index: {}]
  %s4 = inlined_call_operand.vmem [shape: f32[1,128], index: 4, kind: input, shape index: {}]
  %s5 = inlined_call_operand.vmem [shape: f32[1,128], index: 5, kind: input, shape index: {}]
  %s6 = inlined_call_operand.vmem [shape: f32[2,16,128], index: 6, kind: output, shape index: {}]
  %s7 = sld [smem:[#allocation0]]
  $region34: #{inceptiontime_fwd.10} parent=0
    _
  %s9 = ssub.s32 1, %s7
  %s10 = scalar_select 0, %s9, %s7
  // Predicated region
  $region2: #{inceptiontime_fwd.10} parent=0 // pred_check
    _
  $region3: #{inceptiontime_fwd.10} parent=0 // pred_check_branch
    %12 = sbr.rel (0) target = $region5
  $region4: #{inceptiontime_fwd.10} parent=0 // pred_region
    _
  $region5: #{inceptiontime_fwd.10} parent=0 // pred_fallthru
    _
  // Predicated region
  $region6: #{inceptiontime_fwd.10} parent=0 // pred_check
    _
  $region7: #{inceptiontime_fwd.10} parent=0 // pred_check_branch
    %14 = sbr.rel (0) target = $region9
  $region8: #{inceptiontime_fwd.10} parent=0 // pred_region
    _
  $region9: #{inceptiontime_fwd.10} parent=0 // pred_fallthru
    _
  // Predicated region
  $region10: #{inceptiontime_fwd.10} parent=0 // pred_check
    _
  $region11: #{inceptiontime_fwd.10} parent=0 // pred_check_branch
    %16 = sbr.rel (0) target = $region13
  $region12: #{inceptiontime_fwd.10} parent=0 // pred_region
    _
  $region13: #{inceptiontime_fwd.10} parent=0 // pred_fallthru
    _
  // Predicated region
  $region14: #{inceptiontime_fwd.10} parent=0 // pred_check
    _
  $region15: #{inceptiontime_fwd.10} parent=0 // pred_check_branch
    %18 = sbr.rel (0) target = $region17
  $region16: #{inceptiontime_fwd.10} parent=0 // pred_region
    _
  $region17: #{inceptiontime_fwd.10} parent=0 // pred_fallthru
    _
  // Predicated region
  $region18: #{inceptiontime_fwd.10} parent=0 // pred_check
    _
  $region19: #{inceptiontime_fwd.10} parent=0 // pred_check_branch
    %20 = sbr.rel (0) target = $region21
  $region20: #{inceptiontime_fwd.10} parent=0 // pred_region
    _
  $region21: #{inceptiontime_fwd.10} parent=0 // pred_fallthru
    _
  // Predicated region
  $region22: #{inceptiontime_fwd.10} parent=0 // pred_check
    _
  $region23: #{inceptiontime_fwd.10} parent=0 // pred_check_branch
    %22 = sbr.rel (0) target = $region25
  $region24: #{inceptiontime_fwd.10} parent=0 // pred_region
    _
  $region25: #{inceptiontime_fwd.10} parent=0 // pred_fallthru
    _
  %v23 = vld [vmem:[%s0] sm:$0xff]
  %v24 = vld [vmem:[%s0 + $0x8] sm:$0xff]
  %v25 = vld [vmem:[%s0 + $0x10] sm:$0xff]
  %v26 = vld [vmem:[%s0 + $0x18] sm:$0xff]
  %v27 = vld [vmem:[%s1] sm:$0xff]
  %v28 = vld [vmem:[%s1 + $0x8] sm:$0xff]
  %v29 = vld [vmem:[%s1 + $0x10] sm:$0xff]
  %v30 = vld [vmem:[%s1 + $0x18] sm:$0xff]
  %v31 = vld [vmem:[%s1 + $0x20] sm:$0xff]
  %v32 = vld [vmem:[%s1 + $0x28] sm:$0xff]
  %v33 = vld [vmem:[%s1 + $0x30] sm:$0xff]
  %v34 = vld [vmem:[%s1 + $0x38] sm:$0xff]
  %v35 = vld [vmem:[%s1 + $0x40] sm:$0xff]
  %v36 = vld [vmem:[%s1 + $0x48] sm:$0xff]
  %v37 = vld [vmem:[%s1 + $0x50] sm:$0xff]
  %v38 = vld [vmem:[%s1 + $0x58] sm:$0xff]
  %v39 = vld [vmem:[%s1 + $0x60] sm:$0xff]
  %v40 = vld [vmem:[%s1 + $0x68] sm:$0xff]
  %v41 = vld [vmem:[%s1 + $0x70] sm:$0xff]
  %v42 = vld [vmem:[%s1 + $0x78] sm:$0xff]
  %43 = vmatprep.subr.mxu0 0.0
  %44 = vmatpush1.msra.mxu0 %v27
  %45 = vmatprep.subr.mxu0 0.0
  %46 = vmatpush1.msra.mxu0 %v28
  %47 = vmatprep.subr.mxu0 0.0
  %48 = vmatpush1.msra.mxu0 %v29
  %49 = vmatprep.subr.mxu0 0.0
  %50 = vmatpush1.msra.mxu0 %v30
  %51 = vmatprep.subr.mxu0 0.0
  %52 = vmatpush1.msra.mxu0 %v31
  %53 = vmatprep.subr.mxu0 0.0
  %54 = vmatpush1.msra.mxu0 %v32
  %55 = vmatprep.subr.mxu0 0.0
  %56 = vmatpush1.msra.mxu0 %v33
  %57 = vmatprep.subr.mxu0 0.0
  %58 = vmatpush1.msra.mxu0 %v34
  %59 = vmatprep.subr.mxu0 0.0
  %60 = vmatpush1.msra.mxu0 %v35
  %61 = vmatprep.subr.mxu0 0.0
  %62 = vmatpush1.msra.mxu0 %v36
  %63 = vmatprep.subr.mxu0 0.0
  %64 = vmatpush1.msra.mxu0 %v37
  %65 = vmatprep.subr.mxu0 0.0
  %66 = vmatpush1.msra.mxu0 %v38
  %67 = vmatprep.subr.mxu0 0.0
  %68 = vmatpush1.msra.mxu0 %v39
  %69 = vmatprep.subr.mxu0 0.0
  %70 = vmatpush1.msra.mxu0 %v40
  %71 = vmatprep.subr.mxu0 0.0
  %72 = vmatpush1.msra.mxu0 %v41
  %73 = vmatprep.subr.mxu0 0.0
  %74 = vmatpush1.msra.mxu0 %v42
  %75 = vmatprep.subr.mxu0 0.0
  %76 = vmatpush1.msra.mxu0 0.0
  %77 = vmatprep.subr.mxu0 0.0
  %78 = vmatpush1.msra.mxu0 0.0
  %79 = vmatprep.subr.mxu0 0.0
  %80 = vmatpush1.msra.mxu0 0.0
  %81 = vmatprep.subr.mxu0 0.0
  %82 = vmatpush1.msra.mxu0 0.0
  %83 = vmatprep.subr.mxu0 0.0
  %84 = vmatpush1.msra.mxu0 0.0
  %85 = vmatprep.subr.mxu0 0.0
  %86 = vmatpush1.msra.mxu0 0.0
  %87 = vmatprep.subr.mxu0 0.0
  %88 = vmatpush1.msra.mxu0 0.0
  %89 = vmatprep.subr.mxu0 0.0
  %90 = vmatpush1.msra.mxu0 0.0
  %91 = vmatprep.subr.mxu0 0.0
  %92 = vmatpush1.msra.mxu0 0.0
  %93 = vmatprep.subr.mxu0 0.0
  %94 = vmatpush1.msra.mxu0 0.0
  %95 = vmatprep.subr.mxu0 0.0
  %96 = vmatpush1.msra.mxu0 0.0
  %97 = vmatprep.subr.mxu0 0.0
  %98 = vmatpush1.msra.mxu0 0.0
  %99 = vmatprep.subr.mxu0 0.0
  %100 = vmatpush1.msra.mxu0 0.0
  %101 = vmatprep.subr.mxu0 0.0
  %102 = vmatpush1.msra.mxu0 0.0
  %103 = vmatprep.subr.mxu0 0.0
  %104 = vmatpush1.msra.mxu0 0.0
  %105 = vmatprep.subr.mxu0 0.0
  %106 = vmatpush1.msra.mxu0 0.0
  %107 = vmatprep.mubr.f32.mxu0 0.0
  %108 = vmatmul.mubr.f32.gmra.mrb[0].mxu0 %v23
  %v109 = vpop.f32.mrb[0].mxu0
  %v110 = vadd.f32 0.0, %v109
  %v111 = vpop.f32.mrb[0].mxu0
  %112 = vmatprep.mubr.f32.mxu0 0.0
  %113 = vmatmul.mubr.f32.gmra.mrb[0].mxu0 %v24
  %v114 = vpop.f32.mrb[0].mxu0
  %v115 = vadd.f32 0.0, %v114
  %v116 = vpop.f32.mrb[0].mxu0
  %117 = vmatprep.mubr.f32.mxu0 0.0
  %118 = vmatmul.mubr.f32.gmra.mrb[0].mxu0 %v25
  %v119 = vpop.f32.mrb[0].mxu0
  %v120 = vadd.f32 0.0, %v119
  %v121 = vpop.f32.mrb[0].mxu0
  %122 = vmatprep.mubr.f32.mxu0 0.0
  %123 = vmatmul.mubr.f32.gmra.mrb[0].mxu0 %v26
  %v124 = vpop.f32.mrb[0].mxu0
  %v125 = vadd.f32 0.0, %v124
  %v126 = vpop.f32.mrb[0].mxu0
  %127 = vdwg.mxu0
  %vm130 = vcmask 1042432
  %v131 = vrot.slane %v110, 5
  %v132 = vrot.slane %v115, 5
  %v133 = vsel %vm130, %v131, %v132
  %vm138 = vcmask 1040384
  %v139 = vrot.slane %v120, 7
  %v140 = vrot.slane %v125, 7
  %v141 = vsel %vm138, %v139, %v140
  %v144 = vsel %vm130, 0.0, %v131
  %v145 = vsel %vm130, %v132, 0.0
  %v146 = vsel %vm138, 0.0, %v139
  %v147 = vsel %vm138, %v140, 0.0
  %v148 = vld [vmem:[%s2] sm:$0xff]
  %v149 = vld [vmem:[%s2 + $0x8] sm:$0xff]
  %v150 = vld [vmem:[%s2 + $0x10] sm:$0xff]
  %v151 = vld [vmem:[%s2 + $0x18] sm:$0xff]
  %s152 = scalar_lea.vmem %s2, 32
  %v153 = vld [vmem:[%s152] sm:$0xff]
  %v154 = vld [vmem:[%s152 + $0x8] sm:$0xff]
  %v155 = vld [vmem:[%s152 + $0x10] sm:$0xff]
  %v156 = vld [vmem:[%s152 + $0x18] sm:$0xff]
  %vm160 = vcmask 1046528
  %v161 = vrot.slane 0.0, 1
  %v162 = vsel %vm160, %v161, %v161
  %v163 = vrot.slane %v144, 1
  %v164 = vsel %vm160, %v161, %v163
  %v165 = vrot.slane %v133, 1
  %v166 = vsel %vm160, %v163, %v165
  %v167 = vrot.slane %v145, 1
  %v168 = vsel %vm160, %v165, %v167
  %v169 = vsel %vm160, %v167, %v161
  %vm170 = vcmask 261120
  %v171 = vsel %vm170, %v162, 0
  %v173 = vsel %vm170, %v164, 0
  %v175 = vsel %vm170, %v166, 0
  %v177 = vsel %vm170, %v168, 0
  %v179 = vsel %vm170, %v169, 0
  %v181 = vsel %vm170, %v161, 0
  %183 = vmatprep.subr.mxu0 0.0
  %184 = vmatpush1.msra.mxu0 %v153
  %185 = vmatprep.subr.mxu0 0.0
  %186 = vmatpush1.msra.mxu0 %v154
  %187 = vmatprep.subr.mxu0 0.0
  %188 = vmatpush1.msra.mxu0 %v155
  %189 = vmatprep.subr.mxu0 0.0
  %190 = vmatpush1.msra.mxu0 %v156
  %191 = vmatprep.subr.mxu0 0.0
  %192 = vmatpush1.msra.mxu0 0.0
  %193 = vmatprep.subr.mxu0 0.0
  %194 = vmatpush1.msra.mxu0 0.0
  %195 = vmatprep.subr.mxu0 0.0
  %196 = vmatpush1.msra.mxu0 0.0
  %197 = vmatprep.subr.mxu0 0.0
  %198 = vmatpush1.msra.mxu0 0.0
  %199 = vmatprep.subr.mxu0 0.0
  %200 = vmatpush1.msra.mxu0 0.0
  %201 = vmatprep.subr.mxu0 0.0
  %202 = vmatpush1.msra.mxu0 0.0
  %203 = vmatprep.subr.mxu0 0.0
  %204 = vmatpush1.msra.mxu0 0.0
  %205 = vmatprep.subr.mxu0 0.0
  %206 = vmatpush1.msra.mxu0 0.0
  %207 = vmatprep.subr.mxu0 0.0
  %208 = vmatpush1.msra.mxu0 0.0
  %209 = vmatprep.subr.mxu0 0.0
  %210 = vmatpush1.msra.mxu0 0.0
  %211 = vmatprep.subr.mxu0 0.0
  %212 = vmatpush1.msra.mxu0 0.0
  %213 = vmatprep.subr.mxu0 0.0
  %214 = vmatpush1.msra.mxu0 0.0
  %215 = vmatprep.subr.mxu0 0.0
  %216 = vmatpush1.msra.mxu0 0.0
  %217 = vmatprep.subr.mxu0 0.0
  %218 = vmatpush1.msra.mxu0 0.0
  %219 = vmatprep.subr.mxu0 0.0
  %220 = vmatpush1.msra.mxu0 0.0
  %221 = vmatprep.subr.mxu0 0.0
  %222 = vmatpush1.msra.mxu0 0.0
  %223 = vmatprep.subr.mxu0 0.0
  %224 = vmatpush1.msra.mxu0 0.0
  %225 = vmatprep.subr.mxu0 0.0
  %226 = vmatpush1.msra.mxu0 0.0
  %227 = vmatprep.subr.mxu0 0.0
  %228 = vmatpush1.msra.mxu0 0.0
  %229 = vmatprep.subr.mxu0 0.0
  %230 = vmatpush1.msra.mxu0 0.0
  %231 = vmatprep.subr.mxu0 0.0
  %232 = vmatpush1.msra.mxu0 0.0
  %233 = vmatprep.subr.mxu0 0.0
  %234 = vmatpush1.msra.mxu0 0.0
  %235 = vmatprep.subr.mxu0 0.0
  %236 = vmatpush1.msra.mxu0 0.0
  %237 = vmatprep.subr.mxu0 0.0
  %238 = vmatpush1.msra.mxu0 0.0
  %239 = vmatprep.subr.mxu0 0.0
  %240 = vmatpush1.msra.mxu0 0.0
  %241 = vmatprep.subr.mxu0 0.0
  %242 = vmatpush1.msra.mxu0 0.0
  %243 = vmatprep.subr.mxu0 0.0
  %244 = vmatpush1.msra.mxu0 0.0
  %245 = vmatprep.subr.mxu0 0.0
  %246 = vmatpush1.msra.mxu0 0.0
  %247 = vmatprep.mubr.f32.mxu0 0.0
  %248 = vmatmul.mubr.f32.gmra.mrb[0].mxu0 %v171
  %v249 = vpop.f32.mrb[0].mxu0
  %v250 = vadd.f32 0.0, %v249
  %v251 = vpop.f32.mrb[0].mxu0
  %252 = vmatprep.mubr.f32.mxu0 0.0
  %253 = vmatmul.mubr.f32.gmra.mrb[0].mxu0 %v173
  %v254 = vpop.f32.mrb[0].mxu0
  %v255 = vadd.f32 0.0, %v254
  %v256 = vpop.f32.mrb[0].mxu0
  %257 = vmatprep.mubr.f32.mxu0 0.0
  %258 = vmatmul.mubr.f32.gmra.mrb[0].mxu0 %v175
  %v259 = vpop.f32.mrb[0].mxu0
  %v260 = vpop.f32.mrb[0].mxu0
  %261 = vmatprep.mubr.f32.mxu0 0.0
  %262 = vmatmul.mubr.f32.gmra.mrb[0].mxu0 %v177
  %v263 = vpop.f32.mrb[0].mxu0
  %v264 = vpop.f32.mrb[0].mxu0
  %265 = vmatprep.mubr.f32.mxu0 0.0
  %266 = vmatmul.mubr.f32.gmra.mrb[0].mxu0 %v179
  %v267 = vpop.f32.mrb[0].mxu0
  %v268 = vpop.f32.mrb[0].mxu0
  %269 = vmatprep.mubr.f32.mxu0 0.0
  %270 = vmatmul.mubr.f32.gmra.mrb[0].mxu0 %v171
  %v271 = vpop.f32.mrb[0].mxu0
  %v272 = vpop.f32.mrb[0].mxu0
  %273 = vmatprep.mubr.f32.mxu0 0.0
  %274 = vmatmul.mubr.f32.gmra.mrb[0].mxu0 %v171
  %v275 = vpop.f32.mrb[0].mxu0
  %v276 = vadd.f32 0.0, %v275
  %v277 = vpop.f32.mrb[0].mxu0
  %278 = vmatprep.mubr.f32.mxu0 0.0
  %279 = vmatmul.mubr.f32.gmra.mrb[0].mxu0 %v171
  %v280 = vpop.f32.mrb[0].mxu0
  %v281 = vadd.f32 0.0, %v280
  %v282 = vpop.f32.mrb[0].mxu0
  %283 = vmatprep.mubr.f32.mxu0 0.0
  %284 = vmatmul.mubr.f32.gmra.mrb[0].mxu0 %v181
  %v285 = vpop.f32.mrb[0].mxu0
  %v286 = vadd.f32 0.0, %v285
  %v287 = vpop.f32.mrb[0].mxu0
  %288 = vdwg.mxu0
  %v289 = vsel %vm170, 0.0, 0
  %v291 = vsel %vm170, %v144, 0
  %v293 = vsel %vm170, %v133, 0
  %v295 = vsel %vm170, %v145, 0
  %297 = vmatprep.subr.mxu0 0.0
  %298 = vmatpush1.msra.mxu0 %v148
  %299 = vmatprep.subr.mxu0 0.0
  %300 = vmatpush1.msra.mxu0 %v149
  %301 = vmatprep.subr.mxu0 0.0
  %302 = vmatpush1.msra.mxu0 %v150
  %303 = vmatprep.subr.mxu0 0.0
  %304 = vmatpush1.msra.mxu0 %v151
  %305 = vmatprep.subr.mxu0 0.0
  %306 = vmatpush1.msra.mxu0 0.0
  %307 = vmatprep.subr.mxu0 0.0
  %308 = vmatpush1.msra.mxu0 0.0
  %309 = vmatprep.subr.mxu0 0.0
  %310 = vmatpush1.msra.mxu0 0.0
  %311 = vmatprep.subr.mxu0 0.0
  %312 = vmatpush1.msra.mxu0 0.0
  %313 = vmatprep.subr.mxu0 0.0
  %314 = vmatpush1.msra.mxu0 0.0
  %315 = vmatprep.subr.mxu0 0.0
  %316 = vmatpush1.msra.mxu0 0.0
  %317 = vmatprep.subr.mxu0 0.0
  %318 = vmatpush1.msra.mxu0 0.0
  %319 = vmatprep.subr.mxu0 0.0
  %320 = vmatpush1.msra.mxu0 0.0
  %321 = vmatprep.subr.mxu0 0.0
  %322 = vmatpush1.msra.mxu0 0.0
  %323 = vmatprep.subr.mxu0 0.0
  %324 = vmatpush1.msra.mxu0 0.0
  %325 = vmatprep.subr.mxu0 0.0
  %326 = vmatpush1.msra.mxu0 0.0
  %327 = vmatprep.subr.mxu0 0.0
  %328 = vmatpush1.msra.mxu0 0.0
  %329 = vmatprep.subr.mxu0 0.0
  %330 = vmatpush1.msra.mxu0 0.0
  %331 = vmatprep.subr.mxu0 0.0
  %332 = vmatpush1.msra.mxu0 0.0
  %333 = vmatprep.subr.mxu0 0.0
  %334 = vmatpush1.msra.mxu0 0.0
  %335 = vmatprep.subr.mxu0 0.0
  %336 = vmatpush1.msra.mxu0 0.0
  %337 = vmatprep.subr.mxu0 0.0
  %338 = vmatpush1.msra.mxu0 0.0
  %339 = vmatprep.subr.mxu0 0.0
  %340 = vmatpush1.msra.mxu0 0.0
  %341 = vmatprep.subr.mxu0 0.0
  %342 = vmatpush1.msra.mxu0 0.0
  %343 = vmatprep.subr.mxu0 0.0
  %344 = vmatpush1.msra.mxu0 0.0
  %345 = vmatprep.subr.mxu0 0.0
  %346 = vmatpush1.msra.mxu0 0.0
  %347 = vmatprep.subr.mxu0 0.0
  %348 = vmatpush1.msra.mxu0 0.0
  %349 = vmatprep.subr.mxu0 0.0
  %350 = vmatpush1.msra.mxu0 0.0
  %351 = vmatprep.subr.mxu0 0.0
  %352 = vmatpush1.msra.mxu0 0.0
  %353 = vmatprep.subr.mxu0 0.0
  %354 = vmatpush1.msra.mxu0 0.0
  %355 = vmatprep.subr.mxu0 0.0
  %356 = vmatpush1.msra.mxu0 0.0
  %357 = vmatprep.subr.mxu0 0.0
  %358 = vmatpush1.msra.mxu0 0.0
  %359 = vmatprep.subr.mxu0 0.0
  %360 = vmatpush1.msra.mxu0 0.0
  %361 = vmatprep.mubr.f32.mxu0 0.0
  %362 = vmatmul.mubr.f32.gmra.mrb[0].mxu0 %v289
  %v363 = vpop.f32.mrb[0].mxu0
  %v364 = vadd.f32 %v250, %v363
  %v365 = vpop.f32.mrb[0].mxu0
  %366 = vmatprep.mubr.f32.mxu0 0.0
  %367 = vmatmul.mubr.f32.gmra.mrb[0].mxu0 %v289
  %v368 = vpop.f32.mrb[0].mxu0
  %v369 = vadd.f32 %v255, %v368
  %v370 = vpop.f32.mrb[0].mxu0
  %371 = vmatprep.mubr.f32.mxu0 0.0
  %372 = vmatmul.mubr.f32.gmra.mrb[0].mxu0 %v291
  %v373 = vpop.f32.mrb[0].mxu0
  %v374 = vpop.f32.mrb[0].mxu0
  %375 = vmatprep.mubr.f32.mxu0 0.0
  %376 = vmatmul.mubr.f32.gmra.mrb[0].mxu0 %v293
  %v377 = vpop.f32.mrb[0].mxu0
  %v378 = vpop.f32.mrb[0].mxu0
  %379 = vmatprep.mubr.f32.mxu0 0.0
  %380 = vmatmul.mubr.f32.gmra.mrb[0].mxu0 %v295
  %v381 = vpop.f32.mrb[0].mxu0
  %v382 = vpop.f32.mrb[0].mxu0
  %383 = vmatprep.mubr.f32.mxu0 0.0
  %384 = vmatmul.mubr.f32.gmra.mrb[0].mxu0 %v289
  %v385 = vpop.f32.mrb[0].mxu0
  %v386 = vpop.f32.mrb[0].mxu0
  %387 = vmatprep.mubr.f32.mxu0 0.0
  %388 = vmatmul.mubr.f32.gmra.mrb[0].mxu0 %v289
  %v389 = vpop.f32.mrb[0].mxu0
  %v390 = vadd.f32 %v276, %v389
  %v391 = vpop.f32.mrb[0].mxu0
  %392 = vmatprep.mubr.f32.mxu0 0.0
  %393 = vmatmul.mubr.f32.gmra.mrb[0].mxu0 %v289
  %v394 = vpop.f32.mrb[0].mxu0
  %v395 = vadd.f32 %v281, %v394
  %v396 = vpop.f32.mrb[0].mxu0
  %397 = vmatprep.mubr.f32.mxu0 0.0
  %398 = vmatmul.mubr.f32.gmra.mrb[0].mxu0 %v289
  %v399 = vpop.f32.mrb[0].mxu0
  %v400 = vadd.f32 %v286, %v399
  %v401 = vpop.f32.mrb[0].mxu0
  %402 = vdwg.mxu0
  %s403 = scalar_lea.vmem %s2, 64
  %v404 = vld [vmem:[%s403] sm:$0xff]
  %v405 = vld [vmem:[%s403 + $0x8] sm:$0xff]
  %v406 = vld [vmem:[%s403 + $0x10] sm:$0xff]
  %v407 = vld [vmem:[%s403 + $0x18] sm:$0xff]
  %vm408 = vcmask 1045504
  %v409 = vrot.slane 0.0, 2
  %v410 = vsel %vm408, %v409, %v409
  %v411 = vrot.slane %v144, 2
  %v412 = vsel %vm408, %v409, %v411
  %v413 = vrot.slane %v133, 2
  %v414 = vsel %vm408, %v411, %v413
  %v415 = vrot.slane %v145, 2
  %v416 = vsel %vm408, %v413, %v415
  %v417 = vsel %vm408, %v415, %v409
  %v418 = vsel %vm170, %v410, 0
  %v420 = vsel %vm170, %v412, 0
  %v422 = vsel %vm170, %v414, 0
  %v424 = vsel %vm170, %v416, 0
  %v426 = vsel %vm170, %v417, 0
  %v428 = vsel %vm170, %v409, 0
  %430 = vmatprep.subr.mxu0 0.0
  %431 = vmatpush1.msra.mxu0 %v404
  %432 = vmatprep.subr.mxu0 0.0
  %433 = vmatpush1.msra.mxu0 %v405
  %434 = vmatprep.subr.mxu0 0.0
  %435 = vmatpush1.msra.mxu0 %v406
  %436 = vmatprep.subr.mxu0 0.0
  %437 = vmatpush1.msra.mxu0 %v407
  %438 = vmatprep.subr.mxu0 0.0
  %439 = vmatpush1.msra.mxu0 0.0
  %440 = vmatprep.subr.mxu0 0.0
  %441 = vmatpush1.msra.mxu0 0.0
  %442 = vmatprep.subr.mxu0 0.0
  %443 = vmatpush1.msra.mxu0 0.0
  %444 = vmatprep.subr.mxu0 0.0
  %445 = vmatpush1.msra.mxu0 0.0
  %446 = vmatprep.subr.mxu0 0.0
  %447 = vmatpush1.msra.mxu0 0.0
  %448 = vmatprep.subr.mxu0 0.0
  %449 = vmatpush1.msra.mxu0 0.0
  %450 = vmatprep.subr.mxu0 0.0
  %451 = vmatpush1.msra.mxu0 0.0
  %452 = vmatprep.subr.mxu0 0.0
  %453 = vmatpush1.msra.mxu0 0.0
  %454 = vmatprep.subr.mxu0 0.0
  %455 = vmatpush1.msra.mxu0 0.0
  %456 = vmatprep.subr.mxu0 0.0
  %457 = vmatpush1.msra.mxu0 0.0
  %458 = vmatprep.subr.mxu0 0.0
  %459 = vmatpush1.msra.mxu0 0.0
  %460 = vmatprep.subr.mxu0 0.0
  %461 = vmatpush1.msra.mxu0 0.0
  %462 = vmatprep.subr.mxu0 0.0
  %463 = vmatpush1.msra.mxu0 0.0
  %464 = vmatprep.subr.mxu0 0.0
  %465 = vmatpush1.msra.mxu0 0.0
  %466 = vmatprep.subr.mxu0 0.0
  %467 = vmatpush1.msra.mxu0 0.0
  %468 = vmatprep.subr.mxu0 0.0
  %469 = vmatpush1.msra.mxu0 0.0
  %470 = vmatprep.subr.mxu0 0.0
  %471 = vmatpush1.msra.mxu0 0.0
  %472 = vmatprep.subr.mxu0 0.0
  %473 = vmatpush1.msra.mxu0 0.0
  %474 = vmatprep.subr.mxu0 0.0
  %475 = vmatpush1.msra.mxu0 0.0
  %476 = vmatprep.subr.mxu0 0.0
  %477 = vmatpush1.msra.mxu0 0.0
  %478 = vmatprep.subr.mxu0 0.0
  %479 = vmatpush1.msra.mxu0 0.0
  %480 = vmatprep.subr.mxu0 0.0
  %481 = vmatpush1.msra.mxu0 0.0
  %482 = vmatprep.subr.mxu0 0.0
  %483 = vmatpush1.msra.mxu0 0.0
  %484 = vmatprep.subr.mxu0 0.0
  %485 = vmatpush1.msra.mxu0 0.0
  %486 = vmatprep.subr.mxu0 0.0
  %487 = vmatpush1.msra.mxu0 0.0
  %488 = vmatprep.subr.mxu0 0.0
  %489 = vmatpush1.msra.mxu0 0.0
  %490 = vmatprep.subr.mxu0 0.0
  %491 = vmatpush1.msra.mxu0 0.0
  %492 = vmatprep.subr.mxu0 0.0
  %493 = vmatpush1.msra.mxu0 0.0
  %494 = vmatprep.mubr.f32.mxu0 0.0
  %495 = vmatmul.mubr.f32.gmra.mrb[0].mxu0 %v418
  %v496 = vpop.f32.mrb[0].mxu0
  %v497 = vadd.f32 0.0, %v496
  %v498 = vpop.f32.mrb[0].mxu0
  %499 = vmatprep.mubr.f32.mxu0 0.0
  %500 = vmatmul.mubr.f32.gmra.mrb[0].mxu0 %v420
  %v501 = vpop.f32.mrb[0].mxu0
  %v502 = vadd.f32 0.0, %v501
  %v503 = vpop.f32.mrb[0].mxu0
  %504 = vmatprep.mubr.f32.mxu0 0.0
  %505 = vmatmul.mubr.f32.gmra.mrb[0].mxu0 %v422
  %v506 = vpop.f32.mrb[0].mxu0
  %v507 = vpop.f32.mrb[0].mxu0
  %508 = vmatprep.mubr.f32.mxu0 0.0
  %509 = vmatmul.mubr.f32.gmra.mrb[0].mxu0 %v424
  %v510 = vpop.f32.mrb[0].mxu0
  %v511 = vpop.f32.mrb[0].mxu0
  %512 = vmatprep.mubr.f32.mxu0 0.0
  %513 = vmatmul.mubr.f32.gmra.mrb[0].mxu0 %v426
  %v514 = vpop.f32.mrb[0].mxu0
  %v515 = vpop.f32.mrb[0].mxu0
  %516 = vmatprep.mubr.f32.mxu0 0.0
  %517 = vmatmul.mubr.f32.gmra.mrb[0].mxu0 %v418
  %v518 = vpop.f32.mrb[0].mxu0
  %v519 = vpop.f32.mrb[0].mxu0
  %520 = vmatprep.mubr.f32.mxu0 0.0
  %521 = vmatmul.mubr.f32.gmra.mrb[0].mxu0 %v418
  %v522 = vpop.f32.mrb[0].mxu0
  %v523 = vadd.f32 0.0, %v522
  %v524 = vpop.f32.mrb[0].mxu0
  %525 = vmatprep.mubr.f32.mxu0 0.0
  %526 = vmatmul.mubr.f32.gmra.mrb[0].mxu0 %v418
  %v527 = vpop.f32.mrb[0].mxu0
  %v528 = vadd.f32 0.0, %v527
  %v529 = vpop.f32.mrb[0].mxu0
  %530 = vmatprep.mubr.f32.mxu0 0.0
  %531 = vmatmul.mubr.f32.gmra.mrb[0].mxu0 %v428
  %v532 = vpop.f32.mrb[0].mxu0
  %v533 = vadd.f32 0.0, %v532
  %v534 = vpop.f32.mrb[0].mxu0
  %535 = vdwg.mxu0
  %v536 = vadd.f32 %v364, %v497
  %v537 = vadd.f32 %v369, %v502
  %v538 = vadd.f32 %v390, %v523
  %v539 = vadd.f32 %v395, %v528
  %v540 = vadd.f32 %v400, %v533
  %s541 = scalar_lea.vmem %s2, 96
  %v542 = vld [vmem:[%s541] sm:$0xff]
  %v543 = vld [vmem:[%s541 + $0x8] sm:$0xff]
  %v544 = vld [vmem:[%s541 + $0x10] sm:$0xff]
  %v545 = vld [vmem:[%s541 + $0x18] sm:$0xff]
  %vm547 = vcmask 1044480
  %v548 = vrot.slane 0.0, 3
  %v549 = vsel %vm547, %v548, %v548
  %v550 = vrot.slane %v144, 3
  %v551 = vsel %vm547, %v548, %v550
  %v552 = vrot.slane %v133, 3
  %v553 = vsel %vm547, %v550, %v552
  %v554 = vrot.slane %v145, 3
  %v555 = vsel %vm547, %v552, %v554
  %v556 = vsel %vm547, %v554, %v548
  %v557 = vrot.slane %v146, 3
  %v558 = vsel %vm547, %v548, %v557
  %v559 = vsel %vm170, %v549, 0
  %v561 = vsel %vm170, %v551, 0
  %v563 = vsel %vm170, %v553, 0
  %v565 = vsel %vm170, %v555, 0
  %v567 = vsel %vm170, %v556, 0
  %v569 = vsel %vm170, %v558, 0
  %571 = vmatprep.subr.mxu0 0.0
  %572 = vmatpush1.msra.mxu0 %v542
  %573 = vmatprep.subr.mxu0 0.0
  %574 = vmatpush1.msra.mxu0 %v543
  %575 = vmatprep.subr.mxu0 0.0
  %576 = vmatpush1.msra.mxu0 %v544
  %577 = vmatprep.subr.mxu0 0.0
  %578 = vmatpush1.msra.mxu0 %v545
  %579 = vmatprep.subr.mxu0 0.0
  %580 = vmatpush1.msra.mxu0 0.0
  %581 = vmatprep.subr.mxu0 0.0
  %582 = vmatpush1.msra.mxu0 0.0
  %583 = vmatprep.subr.mxu0 0.0
  %584 = vmatpush1.msra.mxu0 0.0
  %585 = vmatprep.subr.mxu0 0.0
  %586 = vmatpush1.msra.mxu0 0.0
  %587 = vmatprep.subr.mxu0 0.0
  %588 = vmatpush1.msra.mxu0 0.0
  %589 = vmatprep.subr.mxu0 0.0
  %590 = vmatpush1.msra.mxu0 0.0
  %591 = vmatprep.subr.mxu0 0.0
  %592 = vmatpush1.msra.mxu0 0.0
  %593 = vmatprep.subr.mxu0 0.0
  %594 = vmatpush1.msra.mxu0 0.0
  %595 = vmatprep.subr.mxu0 0.0
  %596 = vmatpush1.msra.mxu0 0.0
  %597 = vmatprep.subr.mxu0 0.0
  %598 = vmatpush1.msra.mxu0 0.0
  %599 = vmatprep.subr.mxu0 0.0
  %600 = vmatpush1.msra.mxu0 0.0
  %601 = vmatprep.subr.mxu0 0.0
  %602 = vmatpush1.msra.mxu0 0.0
  %603 = vmatprep.subr.mxu0 0.0
  %604 = vmatpush1.msra.mxu0 0.0
  %605 = vmatprep.subr.mxu0 0.0
  %606 = vmatpush1.msra.mxu0 0.0
  %607 = vmatprep.subr.mxu0 0.0
  %608 = vmatpush1.msra.mxu0 0.0
  %609 = vmatprep.subr.mxu0 0.0
  %610 = vmatpush1.msra.mxu0 0.0
  %611 = vmatprep.subr.mxu0 0.0
  %612 = vmatpush1.msra.mxu0 0.0
  %613 = vmatprep.subr.mxu0 0.0
  %614 = vmatpush1.msra.mxu0 0.0
  %615 = vmatprep.subr.mxu0 0.0
  %616 = vmatpush1.msra.mxu0 0.0
  %617 = vmatprep.subr.mxu0 0.0
  %618 = vmatpush1.msra.mxu0 0.0
  %619 = vmatprep.subr.mxu0 0.0
  %620 = vmatpush1.msra.mxu0 0.0
  %621 = vmatprep.subr.mxu0 0.0
  %622 = vmatpush1.msra.mxu0 0.0
  %623 = vmatprep.subr.mxu0 0.0
  %624 = vmatpush1.msra.mxu0 0.0
  %625 = vmatprep.subr.mxu0 0.0
  %626 = vmatpush1.msra.mxu0 0.0
  %627 = vmatprep.subr.mxu0 0.0
  %628 = vmatpush1.msra.mxu0 0.0
  %629 = vmatprep.subr.mxu0 0.0
  %630 = vmatpush1.msra.mxu0 0.0
  %631 = vmatprep.subr.mxu0 0.0
  %632 = vmatpush1.msra.mxu0 0.0
  %633 = vmatprep.subr.mxu0 0.0
  %634 = vmatpush1.msra.mxu0 0.0
  %635 = vmatprep.mubr.f32.mxu0 0.0
  %636 = vmatmul.mubr.f32.gmra.mrb[0].mxu0 %v559
  %v637 = vpop.f32.mrb[0].mxu0
  %v638 = vadd.f32 0.0, %v637
  %v639 = vpop.f32.mrb[0].mxu0
  %640 = vmatprep.mubr.f32.mxu0 0.0
  %641 = vmatmul.mubr.f32.gmra.mrb[0].mxu0 %v561
  %v642 = vpop.f32.mrb[0].mxu0
  %v643 = vadd.f32 0.0, %v642
  %v644 = vpop.f32.mrb[0].mxu0
  %645 = vmatprep.mubr.f32.mxu0 0.0
  %646 = vmatmul.mubr.f32.gmra.mrb[0].mxu0 %v563
  %v647 = vpop.f32.mrb[0].mxu0
  %v648 = vpop.f32.mrb[0].mxu0
  %649 = vmatprep.mubr.f32.mxu0 0.0
  %650 = vmatmul.mubr.f32.gmra.mrb[0].mxu0 %v565
  %v651 = vpop.f32.mrb[0].mxu0
  %v652 = vpop.f32.mrb[0].mxu0
  %653 = vmatprep.mubr.f32.mxu0 0.0
  %654 = vmatmul.mubr.f32.gmra.mrb[0].mxu0 %v567
  %v655 = vpop.f32.mrb[0].mxu0
  %v656 = vpop.f32.mrb[0].mxu0
  %657 = vmatprep.mubr.f32.mxu0 0.0
  %658 = vmatmul.mubr.f32.gmra.mrb[0].mxu0 %v559
  %v659 = vpop.f32.mrb[0].mxu0
  %v660 = vpop.f32.mrb[0].mxu0
  %661 = vmatprep.mubr.f32.mxu0 0.0
  %662 = vmatmul.mubr.f32.gmra.mrb[0].mxu0 %v559
  %v663 = vpop.f32.mrb[0].mxu0
  %v664 = vadd.f32 0.0, %v663
  %v665 = vpop.f32.mrb[0].mxu0
  %666 = vmatprep.mubr.f32.mxu0 0.0
  %667 = vmatmul.mubr.f32.gmra.mrb[0].mxu0 %v559
  %v668 = vpop.f32.mrb[0].mxu0
  %v669 = vadd.f32 0.0, %v668
  %v670 = vpop.f32.mrb[0].mxu0
  %671 = vmatprep.mubr.f32.mxu0 0.0
  %672 = vmatmul.mubr.f32.gmra.mrb[0].mxu0 %v569
  %v673 = vpop.f32.mrb[0].mxu0
  %v674 = vadd.f32 0.0, %v673
  %v675 = vpop.f32.mrb[0].mxu0
  %676 = vdwg.mxu0
  %v677 = vadd.f32 %v536, %v638
  %v678 = vadd.f32 %v537, %v643
  %v679 = vadd.f32 %v538, %v664
  %v680 = vadd.f32 %v539, %v669
  %v681 = vadd.f32 %v540, %v674
  %s682 = scalar_lea.vmem %s2, 128
  %v683 = vld [vmem:[%s682] sm:$0xff]
  %v684 = vld [vmem:[%s682 + $0x8] sm:$0xff]
  %v685 = vld [vmem:[%s682 + $0x10] sm:$0xff]
  %v686 = vld [vmem:[%s682 + $0x18] sm:$0xff]
  %vm687 = vcmask 1043456
  %v688 = vrot.slane 0.0, 4
  %v689 = vsel %vm687, %v688, %v688
  %v690 = vrot.slane %v144, 4
  %v691 = vsel %vm687, %v688, %v690
  %v692 = vrot.slane %v133, 4
  %v693 = vsel %vm687, %v690, %v692
  %v694 = vrot.slane %v145, 4
  %v695 = vsel %vm687, %v692, %v694
  %v696 = vsel %vm687, %v694, %v688
  %v697 = vrot.slane %v146, 4
  %v698 = vsel %vm687, %v688, %v697
  %v699 = vsel %vm170, %v689, 0
  %v701 = vsel %vm170, %v691, 0
  %v703 = vsel %vm170, %v693, 0
  %v705 = vsel %vm170, %v695, 0
  %v707 = vsel %vm170, %v696, 0
  %v709 = vsel %vm170, %v698, 0
  %711 = vmatprep.subr.mxu0 0.0
  %712 = vmatpush1.msra.mxu0 %v683
  %713 = vmatprep.subr.mxu0 0.0
  %714 = vmatpush1.msra.mxu0 %v684
  %715 = vmatprep.subr.mxu0 0.0
  %716 = vmatpush1.msra.mxu0 %v685
  %717 = vmatprep.subr.mxu0 0.0
  %718 = vmatpush1.msra.mxu0 %v686
  %719 = vmatprep.subr.mxu0 0.0
  %720 = vmatpush1.msra.mxu0 0.0
  %721 = vmatprep.subr.mxu0 0.0
  %722 = vmatpush1.msra.mxu0 0.0
  %723 = vmatprep.subr.mxu0 0.0
  %724 = vmatpush1.msra.mxu0 0.0
  %725 = vmatprep.subr.mxu0 0.0
  %726 = vmatpush1.msra.mxu0 0.0
  %727 = vmatprep.subr.mxu0 0.0
  %728 = vmatpush1.msra.mxu0 0.0
  %729 = vmatprep.subr.mxu0 0.0
  %730 = vmatpush1.msra.mxu0 0.0
  %731 = vmatprep.subr.mxu0 0.0
  %732 = vmatpush1.msra.mxu0 0.0
  %733 = vmatprep.subr.mxu0 0.0
  %734 = vmatpush1.msra.mxu0 0.0
  %735 = vmatprep.subr.mxu0 0.0
  %736 = vmatpush1.msra.mxu0 0.0
  %737 = vmatprep.subr.mxu0 0.0
  %738 = vmatpush1.msra.mxu0 0.0
  %739 = vmatprep.subr.mxu0 0.0
  %740 = vmatpush1.msra.mxu0 0.0
  %741 = vmatprep.subr.mxu0 0.0
  %742 = vmatpush1.msra.mxu0 0.0
  %743 = vmatprep.subr.mxu0 0.0
  %744 = vmatpush1.msra.mxu0 0.0
  %745 = vmatprep.subr.mxu0 0.0
  %746 = vmatpush1.msra.mxu0 0.0
  %747 = vmatprep.subr.mxu0 0.0
  %748 = vmatpush1.msra.mxu0 0.0
  %749 = vmatprep.subr.mxu0 0.0
  %750 = vmatpush1.msra.mxu0 0.0
  %751 = vmatprep.subr.mxu0 0.0
  %752 = vmatpush1.msra.mxu0 0.0
  %753 = vmatprep.subr.mxu0 0.0
  %754 = vmatpush1.msra.mxu0 0.0
  %755 = vmatprep.subr.mxu0 0.0
  %756 = vmatpush1.msra.mxu0 0.0
  %757 = vmatprep.subr.mxu0 0.0
  %758 = vmatpush1.msra.mxu0 0.0
  %759 = vmatprep.subr.mxu0 0.0
  %760 = vmatpush1.msra.mxu0 0.0
  %761 = vmatprep.subr.mxu0 0.0
  %762 = vmatpush1.msra.mxu0 0.0
  %763 = vmatprep.subr.mxu0 0.0
  %764 = vmatpush1.msra.mxu0 0.0
  %765 = vmatprep.subr.mxu0 0.0
  %766 = vmatpush1.msra.mxu0 0.0
  %767 = vmatprep.subr.mxu0 0.0
  %768 = vmatpush1.msra.mxu0 0.0
  %769 = vmatprep.subr.mxu0 0.0
  %770 = vmatpush1.msra.mxu0 0.0
  %771 = vmatprep.subr.mxu0 0.0
  %772 = vmatpush1.msra.mxu0 0.0
  %773 = vmatprep.subr.mxu0 0.0
  %774 = vmatpush1.msra.mxu0 0.0
  %775 = vmatprep.mubr.f32.mxu0 0.0
  %776 = vmatmul.mubr.f32.gmra.mrb[0].mxu0 %v699
  %v777 = vpop.f32.mrb[0].mxu0
  %v778 = vadd.f32 0.0, %v777
  %v779 = vpop.f32.mrb[0].mxu0
  %780 = vmatprep.mubr.f32.mxu0 0.0
  %781 = vmatmul.mubr.f32.gmra.mrb[0].mxu0 %v701
  %v782 = vpop.f32.mrb[0].mxu0
  %v783 = vadd.f32 0.0, %v782
  %v784 = vpop.f32.mrb[0].mxu0
  %785 = vmatprep.mubr.f32.mxu0 0.0
  %786 = vmatmul.mubr.f32.gmra.mrb[0].mxu0 %v703
  %v787 = vpop.f32.mrb[0].mxu0
  %v788 = vpop.f32.mrb[0].mxu0
  %789 = vmatprep.mubr.f32.mxu0 0.0
  %790 = vmatmul.mubr.f32.gmra.mrb[0].mxu0 %v705
  %v791 = vpop.f32.mrb[0].mxu0
  %v792 = vpop.f32.mrb[0].mxu0
  %793 = vmatprep.mubr.f32.mxu0 0.0
  %794 = vmatmul.mubr.f32.gmra.mrb[0].mxu0 %v707
  %v795 = vpop.f32.mrb[0].mxu0
  %v796 = vpop.f32.mrb[0].mxu0
  %797 = vmatprep.mubr.f32.mxu0 0.0
  %798 = vmatmul.mubr.f32.gmra.mrb[0].mxu0 %v699
  %v799 = vpop.f32.mrb[0].mxu0
  %v800 = vpop.f32.mrb[0].mxu0
  %801 = vmatprep.mubr.f32.mxu0 0.0
  %802 = vmatmul.mubr.f32.gmra.mrb[0].mxu0 %v699
  %v803 = vpop.f32.mrb[0].mxu0
  %v804 = vadd.f32 0.0, %v803
  %v805 = vpop.f32.mrb[0].mxu0
  %806 = vmatprep.mubr.f32.mxu0 0.0
  %807 = vmatmul.mubr.f32.gmra.mrb[0].mxu0 %v699
  %v808 = vpop.f32.mrb[0].mxu0
  %v809 = vadd.f32 0.0, %v808
  %v810 = vpop.f32.mrb[0].mxu0
  %811 = vmatprep.mubr.f32.mxu0 0.0
  %812 = vmatmul.mubr.f32.gmra.mrb[0].mxu0 %v709
  %v813 = vpop.f32.mrb[0].mxu0
  %v814 = vadd.f32 0.0, %v813
  %v815 = vpop.f32.mrb[0].mxu0
  %816 = vdwg.mxu0
  %v817 = vadd.f32 %v677, %v778
  %v818 = vadd.f32 %v678, %v783
  %v819 = vadd.f32 %v679, %v804
  %v820 = vadd.f32 %v680, %v809
  %v821 = vadd.f32 %v681, %v814
  %s822 = scalar_lea.vmem %s2, 160
  %v823 = vld [vmem:[%s822] sm:$0xff]
  %v824 = vld [vmem:[%s822 + $0x8] sm:$0xff]
  %v825 = vld [vmem:[%s822 + $0x10] sm:$0xff]
  %v826 = vld [vmem:[%s822 + $0x18] sm:$0xff]
  %v827 = vrot.slane 0.0, 5
  %v828 = vsel %vm130, %v827, %v827
  %v829 = vrot.slane %v144, 5
  %v830 = vsel %vm130, %v827, %v829
  %v831 = vrot.slane %v133, 5
  %v832 = vsel %vm130, %v829, %v831
  %v833 = vrot.slane %v145, 5
  %v834 = vsel %vm130, %v831, %v833
  %v835 = vsel %vm130, %v833, %v827
  %v836 = vrot.slane %v146, 5
  %v837 = vsel %vm130, %v827, %v836
  %v838 = vsel %vm170, %v828, 0
  %v840 = vsel %vm170, %v830, 0
  %v842 = vsel %vm170, %v832, 0
  %v844 = vsel %vm170, %v834, 0
  %v846 = vsel %vm170, %v835, 0
  %v848 = vsel %vm170, %v837, 0
  %850 = vmatprep.subr.mxu0 0.0
  %851 = vmatpush1.msra.mxu0 %v823
  %852 = vmatprep.subr.mxu0 0.0
  %853 = vmatpush1.msra.mxu0 %v824
  %854 = vmatprep.subr.mxu0 0.0
  %855 = vmatpush1.msra.mxu0 %v825
  %856 = vmatprep.subr.mxu0 0.0
  %857 = vmatpush1.msra.mxu0 %v826
  %858 = vmatprep.subr.mxu0 0.0
  %859 = vmatpush1.msra.mxu0 0.0
  %860 = vmatprep.subr.mxu0 0.0
  %861 = vmatpush1.msra.mxu0 0.0
  %862 = vmatprep.subr.mxu0 0.0
  %863 = vmatpush1.msra.mxu0 0.0
  %864 = vmatprep.subr.mxu0 0.0
  %865 = vmatpush1.msra.mxu0 0.0
  %866 = vmatprep.subr.mxu0 0.0
  %867 = vmatpush1.msra.mxu0 0.0
  %868 = vmatprep.subr.mxu0 0.0
  %869 = vmatpush1.msra.mxu0 0.0
  %870 = vmatprep.subr.mxu0 0.0
  %871 = vmatpush1.msra.mxu0 0.0
  %872 = vmatprep.subr.mxu0 0.0
  %873 = vmatpush1.msra.mxu0 0.0
  %874 = vmatprep.subr.mxu0 0.0
  %875 = vmatpush1.msra.mxu0 0.0
  %876 = vmatprep.subr.mxu0 0.0
  %877 = vmatpush1.msra.mxu0 0.0
  %878 = vmatprep.subr.mxu0 0.0
  %879 = vmatpush1.msra.mxu0 0.0
  %880 = vmatprep.subr.mxu0 0.0
  %881 = vmatpush1.msra.mxu0 0.0
  %882 = vmatprep.subr.mxu0 0.0
  %883 = vmatpush1.msra.mxu0 0.0
  %884 = vmatprep.subr.mxu0 0.0
  %885 = vmatpush1.msra.mxu0 0.0
  %886 = vmatprep.subr.mxu0 0.0
  %887 = vmatpush1.msra.mxu0 0.0
  %888 = vmatprep.subr.mxu0 0.0
  %889 = vmatpush1.msra.mxu0 0.0
  %890 = vmatprep.subr.mxu0 0.0
  %891 = vmatpush1.msra.mxu0 0.0
  %892 = vmatprep.subr.mxu0 0.0
  %893 = vmatpush1.msra.mxu0 0.0
  %894 = vmatprep.subr.mxu0 0.0
  %895 = vmatpush1.msra.mxu0 0.0
  %896 = vmatprep.subr.mxu0 0.0
  %897 = vmatpush1.msra.mxu0 0.0
  %898 = vmatprep.subr.mxu0 0.0
  %899 = vmatpush1.msra.mxu0 0.0
  %900 = vmatprep.subr.mxu0 0.0
  %901 = vmatpush1.msra.mxu0 0.0
  %902 = vmatprep.subr.mxu0 0.0
  %903 = vmatpush1.msra.mxu0 0.0
  %904 = vmatprep.subr.mxu0 0.0
  %905 = vmatpush1.msra.mxu0 0.0
  %906 = vmatprep.subr.mxu0 0.0
  %907 = vmatpush1.msra.mxu0 0.0
  %908 = vmatprep.subr.mxu0 0.0
  %909 = vmatpush1.msra.mxu0 0.0
  %910 = vmatprep.subr.mxu0 0.0
  %911 = vmatpush1.msra.mxu0 0.0
  %912 = vmatprep.subr.mxu0 0.0
  %913 = vmatpush1.msra.mxu0 0.0
  %914 = vmatprep.mubr.f32.mxu0 0.0
  %915 = vmatmul.mubr.f32.gmra.mrb[0].mxu0 %v838
  %v916 = vpop.f32.mrb[0].mxu0
  %v917 = vadd.f32 0.0, %v916
  %v918 = vpop.f32.mrb[0].mxu0
  %919 = vmatprep.mubr.f32.mxu0 0.0
  %920 = vmatmul.mubr.f32.gmra.mrb[0].mxu0 %v840
  %v921 = vpop.f32.mrb[0].mxu0
  %v922 = vadd.f32 0.0, %v921
  %v923 = vpop.f32.mrb[0].mxu0
  %924 = vmatprep.mubr.f32.mxu0 0.0
  %925 = vmatmul.mubr.f32.gmra.mrb[0].mxu0 %v842
  %v926 = vpop.f32.mrb[0].mxu0
  %v927 = vpop.f32.mrb[0].mxu0
  %928 = vmatprep.mubr.f32.mxu0 0.0
  %929 = vmatmul.mubr.f32.gmra.mrb[0].mxu0 %v844
  %v930 = vpop.f32.mrb[0].mxu0
  %v931 = vpop.f32.mrb[0].mxu0
  %932 = vmatprep.mubr.f32.mxu0 0.0
  %933 = vmatmul.mubr.f32.gmra.mrb[0].mxu0 %v846
  %v934 = vpop.f32.mrb[0].mxu0
  %v935 = vpop.f32.mrb[0].mxu0
  %936 = vmatprep.mubr.f32.mxu0 0.0
  %937 = vmatmul.mubr.f32.gmra.mrb[0].mxu0 %v838
  %v938 = vpop.f32.mrb[0].mxu0
  %v939 = vpop.f32.mrb[0].mxu0
  %940 = vmatprep.mubr.f32.mxu0 0.0
  %941 = vmatmul.mubr.f32.gmra.mrb[0].mxu0 %v838
  %v942 = vpop.f32.mrb[0].mxu0
  %v943 = vadd.f32 0.0, %v942
  %v944 = vpop.f32.mrb[0].mxu0
  %945 = vmatprep.mubr.f32.mxu0 0.0
  %946 = vmatmul.mubr.f32.gmra.mrb[0].mxu0 %v838
  %v947 = vpop.f32.mrb[0].mxu0
  %v948 = vadd.f32 0.0, %v947
  %v949 = vpop.f32.mrb[0].mxu0
  %950 = vmatprep.mubr.f32.mxu0 0.0
  %951 = vmatmul.mubr.f32.gmra.mrb[0].mxu0 %v848
  %v952 = vpop.f32.mrb[0].mxu0
  %v953 = vadd.f32 0.0, %v952
  %v954 = vpop.f32.mrb[0].mxu0
  %955 = vdwg.mxu0
  %v956 = vadd.f32 %v817, %v917
  %v957 = vadd.f32 %v818, %v922
  %v958 = vadd.f32 %v819, %v943
  %v959 = vadd.f32 %v820, %v948
  %v960 = vadd.f32 %v821, %v953
  %s961 = scalar_lea.vmem %s2, 192
  %v962 = vld [vmem:[%s961] sm:$0xff]
  %v963 = vld [vmem:[%s961 + $0x8] sm:$0xff]
  %v964 = vld [vmem:[%s961 + $0x10] sm:$0xff]
  %v965 = vld [vmem:[%s961 + $0x18] sm:$0xff]
  %vm966 = vcmask 1041408
  %v967 = vrot.slane 0.0, 6
  %v968 = vsel %vm966, %v967, %v967
  %v969 = vrot.slane %v144, 6
  %v970 = vsel %vm966, %v967, %v969
  %v971 = vrot.slane %v133, 6
  %v972 = vsel %vm966, %v969, %v971
  %v973 = vrot.slane %v145, 6
  %v974 = vsel %vm966, %v971, %v973
  %v975 = vsel %vm966, %v973, %v967
  %v976 = vrot.slane %v146, 6
  %v977 = vsel %vm966, %v967, %v976
  %v978 = vsel %vm170, %v968, 0
  %v980 = vsel %vm170, %v970, 0
  %v982 = vsel %vm170, %v972, 0
  %v984 = vsel %vm170, %v974, 0
  %v986 = vsel %vm170, %v975, 0
  %v988 = vsel %vm170, %v977, 0
  %990 = vmatprep.subr.mxu0 0.0
  %991 = vmatpush1.msra.mxu0 %v962
  %992 = vmatprep.subr.mxu0 0.0
  %993 = vmatpush1.msra.mxu0 %v963
  %994 = vmatprep.subr.mxu0 0.0
  %995 = vmatpush1.msra.mxu0 %v964
  %996 = vmatprep.subr.mxu0 0.0
  %997 = vmatpush1.msra.mxu0 %v965
  %998 = vmatprep.subr.mxu0 0.0
  %999 = vmatpush1.msra.mxu0 0.0
  %1000 = vmatprep.subr.mxu0 0.0
  %1001 = vmatpush1.msra.mxu0 0.0
  %1002 = vmatprep.subr.mxu0 0.0
  %1003 = vmatpush1.msra.mxu0 0.0
  %1004 = vmatprep.subr.mxu0 0.0
  %1005 = vmatpush1.msra.mxu0 0.0
  %1006 = vmatprep.subr.mxu0 0.0
  %1007 = vmatpush1.msra.mxu0 0.0
  %1008 = vmatprep.subr.mxu0 0.0
  %1009 = vmatpush1.msra.mxu0 0.0
  %1010 = vmatprep.subr.mxu0 0.0
  %1011 = vmatpush1.msra.mxu0 0.0
  %1012 = vmatprep.subr.mxu0 0.0
  %1013 = vmatpush1.msra.mxu0 0.0
  %1014 = vmatprep.subr.mxu0 0.0
  %1015 = vmatpush1.msra.mxu0 0.0
  %1016 = vmatprep.subr.mxu0 0.0
  %1017 = vmatpush1.msra.mxu0 0.0
  %1018 = vmatprep.subr.mxu0 0.0
  %1019 = vmatpush1.msra.mxu0 0.0
  %1020 = vmatprep.subr.mxu0 0.0
  %1021 = vmatpush1.msra.mxu0 0.0
  %1022 = vmatprep.subr.mxu0 0.0
  %1023 = vmatpush1.msra.mxu0 0.0
  %1024 = vmatprep.subr.mxu0 0.0
  %1025 = vmatpush1.msra.mxu0 0.0
  %1026 = vmatprep.subr.mxu0 0.0
  %1027 = vmatpush1.msra.mxu0 0.0
  %1028 = vmatprep.subr.mxu0 0.0
  %1029 = vmatpush1.msra.mxu0 0.0
  %1030 = vmatprep.subr.mxu0 0.0
  %1031 = vmatpush1.msra.mxu0 0.0
  %1032 = vmatprep.subr.mxu0 0.0
  %1033 = vmatpush1.msra.mxu0 0.0
  %1034 = vmatprep.subr.mxu0 0.0
  %1035 = vmatpush1.msra.mxu0 0.0
  %1036 = vmatprep.subr.mxu0 0.0
  %1037 = vmatpush1.msra.mxu0 0.0
  %1038 = vmatprep.subr.mxu0 0.0
  %1039 = vmatpush1.msra.mxu0 0.0
  %1040 = vmatprep.subr.mxu0 0.0
  %1041 = vmatpush1.msra.mxu0 0.0
  %1042 = vmatprep.subr.mxu0 0.0
  %1043 = vmatpush1.msra.mxu0 0.0
  %1044 = vmatprep.subr.mxu0 0.0
  %1045 = vmatpush1.msra.mxu0 0.0
  %1046 = vmatprep.subr.mxu0 0.0
  %1047 = vmatpush1.msra.mxu0 0.0
  %1048 = vmatprep.subr.mxu0 0.0
  %1049 = vmatpush1.msra.mxu0 0.0
  %1050 = vmatprep.subr.mxu0 0.0
  %1051 = vmatpush1.msra.mxu0 0.0
  %1052 = vmatprep.subr.mxu0 0.0
  %1053 = vmatpush1.msra.mxu0 0.0
  %1054 = vmatprep.mubr.f32.mxu0 0.0
  %1055 = vmatmul.mubr.f32.gmra.mrb[0].mxu0 %v978
  %v1056 = vpop.f32.mrb[0].mxu0
  %v1057 = vadd.f32 0.0, %v1056
  %v1058 = vpop.f32.mrb[0].mxu0
  %1059 = vmatprep.mubr.f32.mxu0 0.0
  %1060 = vmatmul.mubr.f32.gmra.mrb[0].mxu0 %v980
  %v1061 = vpop.f32.mrb[0].mxu0
  %v1062 = vadd.f32 0.0, %v1061
  %v1063 = vpop.f32.mrb[0].mxu0
  %1064 = vmatprep.mubr.f32.mxu0 0.0
  %1065 = vmatmul.mubr.f32.gmra.mrb[0].mxu0 %v982
  %v1066 = vpop.f32.mrb[0].mxu0
  %v1067 = vpop.f32.mrb[0].mxu0
  %1068 = vmatprep.mubr.f32.mxu0 0.0
  %1069 = vmatmul.mubr.f32.gmra.mrb[0].mxu0 %v984
  %v1070 = vpop.f32.mrb[0].mxu0
  %v1071 = vpop.f32.mrb[0].mxu0
  %1072 = vmatprep.mubr.f32.mxu0 0.0
  %1073 = vmatmul.mubr.f32.gmra.mrb[0].mxu0 %v986
  %v1074 = vpop.f32.mrb[0].mxu0
  %v1075 = vpop.f32.mrb[0].mxu0
  %1076 = vmatprep.mubr.f32.mxu0 0.0
  %1077 = vmatmul.mubr.f32.gmra.mrb[0].mxu0 %v978
  %v1078 = vpop.f32.mrb[0].mxu0
  %v1079 = vpop.f32.mrb[0].mxu0
  %1080 = vmatprep.mubr.f32.mxu0 0.0
  %1081 = vmatmul.mubr.f32.gmra.mrb[0].mxu0 %v978
  %v1082 = vpop.f32.mrb[0].mxu0
  %v1083 = vadd.f32 0.0, %v1082
  %v1084 = vpop.f32.mrb[0].mxu0
  %1085 = vmatprep.mubr.f32.mxu0 0.0
  %1086 = vmatmul.mubr.f32.gmra.mrb[0].mxu0 %v978
  %v1087 = vpop.f32.mrb[0].mxu0
  %v1088 = vadd.f32 0.0, %v1087
  %v1089 = vpop.f32.mrb[0].mxu0
  %1090 = vmatprep.mubr.f32.mxu0 0.0
  %1091 = vmatmul.mubr.f32.gmra.mrb[0].mxu0 %v988
  %v1092 = vpop.f32.mrb[0].mxu0
  %v1093 = vadd.f32 0.0, %v1092
  %v1094 = vpop.f32.mrb[0].mxu0
  %1095 = vdwg.mxu0
  %v1096 = vadd.f32 %v956, %v1057
  %v1097 = vadd.f32 %v957, %v1062
  %v1098 = vadd.f32 %v958, %v1083
  %v1099 = vadd.f32 %v959, %v1088
  %v1100 = vadd.f32 %v960, %v1093
  %s1101 = scalar_lea.vmem %s2, 224
  %v1102 = vld [vmem:[%s1101] sm:$0xff]
  %v1103 = vld [vmem:[%s1101 + $0x8] sm:$0xff]
  %v1104 = vld [vmem:[%s1101 + $0x10] sm:$0xff]
  %v1105 = vld [vmem:[%s1101 + $0x18] sm:$0xff]
  %v1106 = vrot.slane 0.0, 7
  %v1107 = vsel %vm138, %v1106, %v1106
  %v1108 = vrot.slane %v144, 7
  %v1109 = vsel %vm138, %v1106, %v1108
  %v1110 = vrot.slane %v133, 7
  %v1111 = vsel %vm138, %v1108, %v1110
  %v1112 = vrot.slane %v145, 7
  %v1113 = vsel %vm138, %v1110, %v1112
  %v1114 = vsel %vm138, %v1112, %v1106
  %v1115 = vrot.slane %v146, 7
  %v1116 = vsel %vm138, %v1106, %v1115
  %v1117 = vsel %vm170, %v1107, 0
  %v1119 = vsel %vm170, %v1109, 0
  %v1121 = vsel %vm170, %v1111, 0
  %v1123 = vsel %vm170, %v1113, 0
  %v1125 = vsel %vm170, %v1114, 0
  %v1127 = vsel %vm170, %v1116, 0
  %1129 = vmatprep.subr.mxu0 0.0
  %1130 = vmatpush1.msra.mxu0 %v1102
  %1131 = vmatprep.subr.mxu0 0.0
  %1132 = vmatpush1.msra.mxu0 %v1103
  %1133 = vmatprep.subr.mxu0 0.0
  %1134 = vmatpush1.msra.mxu0 %v1104
  %1135 = vmatprep.subr.mxu0 0.0
  %1136 = vmatpush1.msra.mxu0 %v1105
  %1137 = vmatprep.subr.mxu0 0.0
  %1138 = vmatpush1.msra.mxu0 0.0
  %1139 = vmatprep.subr.mxu0 0.0
  %1140 = vmatpush1.msra.mxu0 0.0
  %1141 = vmatprep.subr.mxu0 0.0
  %1142 = vmatpush1.msra.mxu0 0.0
  %1143 = vmatprep.subr.mxu0 0.0
  %1144 = vmatpush1.msra.mxu0 0.0
  %1145 = vmatprep.subr.mxu0 0.0
  %1146 = vmatpush1.msra.mxu0 0.0
  %1147 = vmatprep.subr.mxu0 0.0
  %1148 = vmatpush1.msra.mxu0 0.0
  %1149 = vmatprep.subr.mxu0 0.0
  %1150 = vmatpush1.msra.mxu0 0.0
  %1151 = vmatprep.subr.mxu0 0.0
  %1152 = vmatpush1.msra.mxu0 0.0
  %1153 = vmatprep.subr.mxu0 0.0
  %1154 = vmatpush1.msra.mxu0 0.0
  %1155 = vmatprep.subr.mxu0 0.0
  %1156 = vmatpush1.msra.mxu0 0.0
  %1157 = vmatprep.subr.mxu0 0.0
  %1158 = vmatpush1.msra.mxu0 0.0
  %1159 = vmatprep.subr.mxu0 0.0
  %1160 = vmatpush1.msra.mxu0 0.0
  %1161 = vmatprep.subr.mxu0 0.0
  %1162 = vmatpush1.msra.mxu0 0.0
  %1163 = vmatprep.subr.mxu0 0.0
  %1164 = vmatpush1.msra.mxu0 0.0
  %1165 = vmatprep.subr.mxu0 0.0
  %1166 = vmatpush1.msra.mxu0 0.0
  %1167 = vmatprep.subr.mxu0 0.0
  %1168 = vmatpush1.msra.mxu0 0.0
  %1169 = vmatprep.subr.mxu0 0.0
  %1170 = vmatpush1.msra.mxu0 0.0
  %1171 = vmatprep.subr.mxu0 0.0
  %1172 = vmatpush1.msra.mxu0 0.0
  %1173 = vmatprep.subr.mxu0 0.0
  %1174 = vmatpush1.msra.mxu0 0.0
  %1175 = vmatprep.subr.mxu0 0.0
  %1176 = vmatpush1.msra.mxu0 0.0
  %1177 = vmatprep.subr.mxu0 0.0
  %1178 = vmatpush1.msra.mxu0 0.0
  %1179 = vmatprep.subr.mxu0 0.0
  %1180 = vmatpush1.msra.mxu0 0.0
  %1181 = vmatprep.subr.mxu0 0.0
  %1182 = vmatpush1.msra.mxu0 0.0
  %1183 = vmatprep.subr.mxu0 0.0
  %1184 = vmatpush1.msra.mxu0 0.0
  %1185 = vmatprep.subr.mxu0 0.0
  %1186 = vmatpush1.msra.mxu0 0.0
  %1187 = vmatprep.subr.mxu0 0.0
  %1188 = vmatpush1.msra.mxu0 0.0
  %1189 = vmatprep.subr.mxu0 0.0
  %1190 = vmatpush1.msra.mxu0 0.0
  %1191 = vmatprep.subr.mxu0 0.0
  %1192 = vmatpush1.msra.mxu0 0.0
  %1193 = vmatprep.mubr.f32.mxu0 0.0
  %1194 = vmatmul.mubr.f32.gmra.mrb[0].mxu0 %v1117
  %v1195 = vpop.f32.mrb[0].mxu0
  %v1196 = vadd.f32 0.0, %v1195
  %v1197 = vpop.f32.mrb[0].mxu0
  %1198 = vmatprep.mubr.f32.mxu0 0.0
  %1199 = vmatmul.mubr.f32.gmra.mrb[0].mxu0 %v1119
  %v1200 = vpop.f32.mrb[0].mxu0
  %v1201 = vadd.f32 0.0, %v1200
  %v1202 = vpop.f32.mrb[0].mxu0
  %1203 = vmatprep.mubr.f32.mxu0 0.0
  %1204 = vmatmul.mubr.f32.gmra.mrb[0].mxu0 %v1121
  %v1205 = vpop.f32.mrb[0].mxu0
  %v1206 = vpop.f32.mrb[0].mxu0
  %1207 = vmatprep.mubr.f32.mxu0 0.0
  %1208 = vmatmul.mubr.f32.gmra.mrb[0].mxu0 %v1123
  %v1209 = vpop.f32.mrb[0].mxu0
  %v1210 = vpop.f32.mrb[0].mxu0
  %1211 = vmatprep.mubr.f32.mxu0 0.0
  %1212 = vmatmul.mubr.f32.gmra.mrb[0].mxu0 %v1125
  %v1213 = vpop.f32.mrb[0].mxu0
  %v1214 = vpop.f32.mrb[0].mxu0
  %1215 = vmatprep.mubr.f32.mxu0 0.0
  %1216 = vmatmul.mubr.f32.gmra.mrb[0].mxu0 %v1117
  %v1217 = vpop.f32.mrb[0].mxu0
  %v1218 = vpop.f32.mrb[0].mxu0
  %1219 = vmatprep.mubr.f32.mxu0 0.0
  %1220 = vmatmul.mubr.f32.gmra.mrb[0].mxu0 %v1117
  %v1221 = vpop.f32.mrb[0].mxu0
  %v1222 = vadd.f32 0.0, %v1221
  %v1223 = vpop.f32.mrb[0].mxu0
  %1224 = vmatprep.mubr.f32.mxu0 0.0
  %1225 = vmatmul.mubr.f32.gmra.mrb[0].mxu0 %v1117
  %v1226 = vpop.f32.mrb[0].mxu0
  %v1227 = vadd.f32 0.0, %v1226
  %v1228 = vpop.f32.mrb[0].mxu0
  %1229 = vmatprep.mubr.f32.mxu0 0.0
  %1230 = vmatmul.mubr.f32.gmra.mrb[0].mxu0 %v1127
  %v1231 = vpop.f32.mrb[0].mxu0
  %v1232 = vadd.f32 0.0, %v1231
  %v1233 = vpop.f32.mrb[0].mxu0
  %1234 = vdwg.mxu0
  %v1235 = vadd.f32 %v1096, %v1196
  %v1236 = vadd.f32 %v1097, %v1201
  %v1237 = vadd.f32 %v1098, %v1222
  %v1238 = vadd.f32 %v1099, %v1227
  %v1239 = vadd.f32 %v1100, %v1232
  %s1240 = scalar_lea.vmem %s2, 256
  %v1241 = vld [vmem:[%s1240] sm:$0xff]
  %v1242 = vld [vmem:[%s1240 + $0x8] sm:$0xff]
  %v1243 = vld [vmem:[%s1240 + $0x10] sm:$0xff]
  %v1244 = vld [vmem:[%s1240 + $0x18] sm:$0xff]
  %v1245 = vsel %vm170, %v146, 0
  %1247 = vmatprep.subr.mxu0 0.0
  %1248 = vmatpush1.msra.mxu0 %v1241
  %1249 = vmatprep.subr.mxu0 0.0
  %1250 = vmatpush1.msra.mxu0 %v1242
  %1251 = vmatprep.subr.mxu0 0.0
  %1252 = vmatpush1.msra.mxu0 %v1243
  %1253 = vmatprep.subr.mxu0 0.0
  %1254 = vmatpush1.msra.mxu0 %v1244
  %1255 = vmatprep.subr.mxu0 0.0
  %1256 = vmatpush1.msra.mxu0 0.0
  %1257 = vmatprep.subr.mxu0 0.0
  %1258 = vmatpush1.msra.mxu0 0.0
  %1259 = vmatprep.subr.mxu0 0.0
  %1260 = vmatpush1.msra.mxu0 0.0
  %1261 = vmatprep.subr.mxu0 0.0
  %1262 = vmatpush1.msra.mxu0 0.0
  %1263 = vmatprep.subr.mxu0 0.0
  %1264 = vmatpush1.msra.mxu0 0.0
  %1265 = vmatprep.subr.mxu0 0.0
  %1266 = vmatpush1.msra.mxu0 0.0
  %1267 = vmatprep.subr.mxu0 0.0
  %1268 = vmatpush1.msra.mxu0 0.0
  %1269 = vmatprep.subr.mxu0 0.0
  %1270 = vmatpush1.msra.mxu0 0.0
  %1271 = vmatprep.subr.mxu0 0.0
  %1272 = vmatpush1.msra.mxu0 0.0
  %1273 = vmatprep.subr.mxu0 0.0
  %1274 = vmatpush1.msra.mxu0 0.0
  %1275 = vmatprep.subr.mxu0 0.0
  %1276 = vmatpush1.msra.mxu0 0.0
  %1277 = vmatprep.subr.mxu0 0.0
  %1278 = vmatpush1.msra.mxu0 0.0
  %1279 = vmatprep.subr.mxu0 0.0
  %1280 = vmatpush1.msra.mxu0 0.0
  %1281 = vmatprep.subr.mxu0 0.0
  %1282 = vmatpush1.msra.mxu0 0.0
  %1283 = vmatprep.subr.mxu0 0.0
  %1284 = vmatpush1.msra.mxu0 0.0
  %1285 = vmatprep.subr.mxu0 0.0
  %1286 = vmatpush1.msra.mxu0 0.0
  %1287 = vmatprep.subr.mxu0 0.0
  %1288 = vmatpush1.msra.mxu0 0.0
  %1289 = vmatprep.subr.mxu0 0.0
  %1290 = vmatpush1.msra.mxu0 0.0
  %1291 = vmatprep.subr.mxu0 0.0
  %1292 = vmatpush1.msra.mxu0 0.0
  %1293 = vmatprep.subr.mxu0 0.0
  %1294 = vmatpush1.msra.mxu0 0.0
  %1295 = vmatprep.subr.mxu0 0.0
  %1296 = vmatpush1.msra.mxu0 0.0
  %1297 = vmatprep.subr.mxu0 0.0
  %1298 = vmatpush1.msra.mxu0 0.0
  %1299 = vmatprep.subr.mxu0 0.0
  %1300 = vmatpush1.msra.mxu0 0.0
  %1301 = vmatprep.subr.mxu0 0.0
  %1302 = vmatpush1.msra.mxu0 0.0
  %1303 = vmatprep.subr.mxu0 0.0
  %1304 = vmatpush1.msra.mxu0 0.0
  %1305 = vmatprep.subr.mxu0 0.0
  %1306 = vmatpush1.msra.mxu0 0.0
  %1307 = vmatprep.subr.mxu0 0.0
  %1308 = vmatpush1.msra.mxu0 0.0
  %1309 = vmatprep.subr.mxu0 0.0
  %1310 = vmatpush1.msra.mxu0 0.0
  %1311 = vmatprep.mubr.f32.mxu0 0.0
  %1312 = vmatmul.mubr.f32.gmra.mrb[0].mxu0 %v289
  %v1313 = vpop.f32.mrb[0].mxu0
  %v1314 = vadd.f32 0.0, %v1313
  %v1315 = vpop.f32.mrb[0].mxu0
  %1316 = vmatprep.mubr.f32.mxu0 0.0
  %1317 = vmatmul.mubr.f32.gmra.mrb[0].mxu0 %v291
  %v1318 = vpop.f32.mrb[0].mxu0
  %v1319 = vadd.f32 0.0, %v1318
  %v1320 = vpop.f32.mrb[0].mxu0
  %1321 = vmatprep.mubr.f32.mxu0 0.0
  %1322 = vmatmul.mubr.f32.gmra.mrb[0].mxu0 %v293
  %v1323 = vpop.f32.mrb[0].mxu0
  %v1324 = vpop.f32.mrb[0].mxu0
  %1325 = vmatprep.mubr.f32.mxu0 0.0
  %1326 = vmatmul.mubr.f32.gmra.mrb[0].mxu0 %v295
  %v1327 = vpop.f32.mrb[0].mxu0
  %v1328 = vpop.f32.mrb[0].mxu0
  %1329 = vmatprep.mubr.f32.mxu0 0.0
  %1330 = vmatmul.mubr.f32.gmra.mrb[0].mxu0 %v289
  %v1331 = vpop.f32.mrb[0].mxu0
  %v1332 = vpop.f32.mrb[0].mxu0
  %1333 = vmatprep.mubr.f32.mxu0 0.0
  %1334 = vmatmul.mubr.f32.gmra.mrb[0].mxu0 %v289
  %v1335 = vpop.f32.mrb[0].mxu0
  %v1336 = vpop.f32.mrb[0].mxu0
  %1337 = vmatprep.mubr.f32.mxu0 0.0
  %1338 = vmatmul.mubr.f32.gmra.mrb[0].mxu0 %v289
  %v1339 = vpop.f32.mrb[0].mxu0
  %v1340 = vadd.f32 0.0, %v1339
  %v1341 = vpop.f32.mrb[0].mxu0
  %1342 = vmatprep.mubr.f32.mxu0 0.0
  %1343 = vmatmul.mubr.f32.gmra.mrb[0].mxu0 %v289
  %v1344 = vpop.f32.mrb[0].mxu0
  %v1345 = vadd.f32 0.0, %v1344
  %v1346 = vpop.f32.mrb[0].mxu0
  %1347 = vmatprep.mubr.f32.mxu0 0.0
  %1348 = vmatmul.mubr.f32.gmra.mrb[0].mxu0 %v1245
  %v1349 = vpop.f32.mrb[0].mxu0
  %v1350 = vadd.f32 0.0, %v1349
  %v1351 = vpop.f32.mrb[0].mxu0
  %1352 = vdwg.mxu0
  %v1353 = vadd.f32 %v1235, %v1314
  %v1354 = vadd.f32 %v1236, %v1319
  %v1355 = vadd.f32 %v1237, %v1340
  %v1356 = vadd.f32 %v1238, %v1345
  %v1357 = vadd.f32 %v1239, %v1350
  %s1358 = scalar_lea.vmem %s2, 288
  %v1359 = vld [vmem:[%s1358] sm:$0xff]
  %v1360 = vld [vmem:[%s1358 + $0x8] sm:$0xff]
  %v1361 = vld [vmem:[%s1358 + $0x10] sm:$0xff]
  %v1362 = vld [vmem:[%s1358 + $0x18] sm:$0xff]
  %v1363 = vrot.slane %v146, 1
  %v1364 = vsel %vm160, %v161, %v1363
  %v1365 = vsel %vm170, %v1364, 0
  %v1367 = vsel %vm170, %v1363, 0
  %1369 = vmatprep.subr.mxu0 0.0
  %1370 = vmatpush1.msra.mxu0 %v1359
  %1371 = vmatprep.subr.mxu0 0.0
  %1372 = vmatpush1.msra.mxu0 %v1360
  %1373 = vmatprep.subr.mxu0 0.0
  %1374 = vmatpush1.msra.mxu0 %v1361
  %1375 = vmatprep.subr.mxu0 0.0
  %1376 = vmatpush1.msra.mxu0 %v1362
  %1377 = vmatprep.subr.mxu0 0.0
  %1378 = vmatpush1.msra.mxu0 0.0
  %1379 = vmatprep.subr.mxu0 0.0
  %1380 = vmatpush1.msra.mxu0 0.0
  %1381 = vmatprep.subr.mxu0 0.0
  %1382 = vmatpush1.msra.mxu0 0.0
  %1383 = vmatprep.subr.mxu0 0.0
  %1384 = vmatpush1.msra.mxu0 0.0
  %1385 = vmatprep.subr.mxu0 0.0
  %1386 = vmatpush1.msra.mxu0 0.0
  %1387 = vmatprep.subr.mxu0 0.0
  %1388 = vmatpush1.msra.mxu0 0.0
  %1389 = vmatprep.subr.mxu0 0.0
  %1390 = vmatpush1.msra.mxu0 0.0
  %1391 = vmatprep.subr.mxu0 0.0
  %1392 = vmatpush1.msra.mxu0 0.0
  %1393 = vmatprep.subr.mxu0 0.0
  %1394 = vmatpush1.msra.mxu0 0.0
  %1395 = vmatprep.subr.mxu0 0.0
  %1396 = vmatpush1.msra.mxu0 0.0
  %1397 = vmatprep.subr.mxu0 0.0
  %1398 = vmatpush1.msra.mxu0 0.0
  %1399 = vmatprep.subr.mxu0 0.0
  %1400 = vmatpush1.msra.mxu0 0.0
  %1401 = vmatprep.subr.mxu0 0.0
  %1402 = vmatpush1.msra.mxu0 0.0
  %1403 = vmatprep.subr.mxu0 0.0
  %1404 = vmatpush1.msra.mxu0 0.0
  %1405 = vmatprep.subr.mxu0 0.0
  %1406 = vmatpush1.msra.mxu0 0.0
  %1407 = vmatprep.subr.mxu0 0.0
  %1408 = vmatpush1.msra.mxu0 0.0
  %1409 = vmatprep.subr.mxu0 0.0
  %1410 = vmatpush1.msra.mxu0 0.0
  %1411 = vmatprep.subr.mxu0 0.0
  %1412 = vmatpush1.msra.mxu0 0.0
  %1413 = vmatprep.subr.mxu0 0.0
  %1414 = vmatpush1.msra.mxu0 0.0
  %1415 = vmatprep.subr.mxu0 0.0
  %1416 = vmatpush1.msra.mxu0 0.0
  %1417 = vmatprep.subr.mxu0 0.0
  %1418 = vmatpush1.msra.mxu0 0.0
  %1419 = vmatprep.subr.mxu0 0.0
  %1420 = vmatpush1.msra.mxu0 0.0
  %1421 = vmatprep.subr.mxu0 0.0
  %1422 = vmatpush1.msra.mxu0 0.0
  %1423 = vmatprep.subr.mxu0 0.0
  %1424 = vmatpush1.msra.mxu0 0.0
  %1425 = vmatprep.subr.mxu0 0.0
  %1426 = vmatpush1.msra.mxu0 0.0
  %1427 = vmatprep.subr.mxu0 0.0
  %1428 = vmatpush1.msra.mxu0 0.0
  %1429 = vmatprep.subr.mxu0 0.0
  %1430 = vmatpush1.msra.mxu0 0.0
  %1431 = vmatprep.subr.mxu0 0.0
  %1432 = vmatpush1.msra.mxu0 0.0
  %1433 = vmatprep.mubr.f32.mxu0 0.0
  %1434 = vmatmul.mubr.f32.gmra.mrb[0].mxu0 %v173
  %v1435 = vpop.f32.mrb[0].mxu0
  %v1436 = vadd.f32 0.0, %v1435
  %v1437 = vpop.f32.mrb[0].mxu0
  %1438 = vmatprep.mubr.f32.mxu0 0.0
  %1439 = vmatmul.mubr.f32.gmra.mrb[0].mxu0 %v175
  %v1440 = vpop.f32.mrb[0].mxu0
  %v1441 = vadd.f32 0.0, %v1440
  %v1442 = vpop.f32.mrb[0].mxu0
  %1443 = vmatprep.mubr.f32.mxu0 0.0
  %1444 = vmatmul.mubr.f32.gmra.mrb[0].mxu0 %v177
  %v1445 = vpop.f32.mrb[0].mxu0
  %v1446 = vpop.f32.mrb[0].mxu0
  %1447 = vmatprep.mubr.f32.mxu0 0.0
  %1448 = vmatmul.mubr.f32.gmra.mrb[0].mxu0 %v179
  %v1449 = vpop.f32.mrb[0].mxu0
  %v1450 = vpop.f32.mrb[0].mxu0
  %1451 = vmatprep.mubr.f32.mxu0 0.0
  %1452 = vmatmul.mubr.f32.gmra.mrb[0].mxu0 %v171
  %v1453 = vpop.f32.mrb[0].mxu0
  %v1454 = vpop.f32.mrb[0].mxu0
  %1455 = vmatprep.mubr.f32.mxu0 0.0
  %1456 = vmatmul.mubr.f32.gmra.mrb[0].mxu0 %v171
  %v1457 = vpop.f32.mrb[0].mxu0
  %v1458 = vpop.f32.mrb[0].mxu0
  %1459 = vmatprep.mubr.f32.mxu0 0.0
  %1460 = vmatmul.mubr.f32.gmra.mrb[0].mxu0 %v171
  %v1461 = vpop.f32.mrb[0].mxu0
  %v1462 = vadd.f32 0.0, %v1461
  %v1463 = vpop.f32.mrb[0].mxu0
  %1464 = vmatprep.mubr.f32.mxu0 0.0
  %1465 = vmatmul.mubr.f32.gmra.mrb[0].mxu0 %v1365
  %v1466 = vpop.f32.mrb[0].mxu0
  %v1467 = vadd.f32 0.0, %v1466
  %v1468 = vpop.f32.mrb[0].mxu0
  %1469 = vmatprep.mubr.f32.mxu0 0.0
  %1470 = vmatmul.mubr.f32.gmra.mrb[0].mxu0 %v1367
  %v1471 = vpop.f32.mrb[0].mxu0
  %v1472 = vadd.f32 0.0, %v1471
  %v1473 = vpop.f32.mrb[0].mxu0
  %1474 = vdwg.mxu0
  %v1475 = vadd.f32 %v1353, %v1436
  %v1476 = vadd.f32 %v1354, %v1441
  %v1477 = vadd.f32 %v1355, %v1462
  %v1478 = vadd.f32 %v1356, %v1467
  %v1479 = vadd.f32 %v1357, %v1472
  %s1480 = scalar_lea.vmem %s2, 320
  %v1481 = vld [vmem:[%s1480] sm:$0xff]
  %v1482 = vld [vmem:[%s1480 + $0x8] sm:$0xff]
  %v1483 = vld [vmem:[%s1480 + $0x10] sm:$0xff]
  %v1484 = vld [vmem:[%s1480 + $0x18] sm:$0xff]
  %v1485 = vrot.slane %v146, 2
  %v1486 = vsel %vm408, %v409, %v1485
  %v1487 = vsel %vm170, %v1486, 0
  %v1489 = vsel %vm170, %v1485, 0
  %1491 = vmatprep.subr.mxu0 0.0
  %1492 = vmatpush1.msra.mxu0 %v1481
  %1493 = vmatprep.subr.mxu0 0.0
  %1494 = vmatpush1.msra.mxu0 %v1482
  %1495 = vmatprep.subr.mxu0 0.0
  %1496 = vmatpush1.msra.mxu0 %v1483
  %1497 = vmatprep.subr.mxu0 0.0
  %1498 = vmatpush1.msra.mxu0 %v1484
  %1499 = vmatprep.subr.mxu0 0.0
  %1500 = vmatpush1.msra.mxu0 0.0
  %1501 = vmatprep.subr.mxu0 0.0
  %1502 = vmatpush1.msra.mxu0 0.0
  %1503 = vmatprep.subr.mxu0 0.0
  %1504 = vmatpush1.msra.mxu0 0.0
  %1505 = vmatprep.subr.mxu0 0.0
  %1506 = vmatpush1.msra.mxu0 0.0
  %1507 = vmatprep.subr.mxu0 0.0
  %1508 = vmatpush1.msra.mxu0 0.0
  %1509 = vmatprep.subr.mxu0 0.0
  %1510 = vmatpush1.msra.mxu0 0.0
  %1511 = vmatprep.subr.mxu0 0.0
  %1512 = vmatpush1.msra.mxu0 0.0
  %1513 = vmatprep.subr.mxu0 0.0
  %1514 = vmatpush1.msra.mxu0 0.0
  %1515 = vmatprep.subr.mxu0 0.0
  %1516 = vmatpush1.msra.mxu0 0.0
  %1517 = vmatprep.subr.mxu0 0.0
  %1518 = vmatpush1.msra.mxu0 0.0
  %1519 = vmatprep.subr.mxu0 0.0
  %1520 = vmatpush1.msra.mxu0 0.0
  %1521 = vmatprep.subr.mxu0 0.0
  %1522 = vmatpush1.msra.mxu0 0.0
  %1523 = vmatprep.subr.mxu0 0.0
  %1524 = vmatpush1.msra.mxu0 0.0
  %1525 = vmatprep.subr.mxu0 0.0
  %1526 = vmatpush1.msra.mxu0 0.0
  %1527 = vmatprep.subr.mxu0 0.0
  %1528 = vmatpush1.msra.mxu0 0.0
  %1529 = vmatprep.subr.mxu0 0.0
  %1530 = vmatpush1.msra.mxu0 0.0
  %1531 = vmatprep.subr.mxu0 0.0
  %1532 = vmatpush1.msra.mxu0 0.0
  %1533 = vmatprep.subr.mxu0 0.0
  %1534 = vmatpush1.msra.mxu0 0.0
  %1535 = vmatprep.subr.mxu0 0.0
  %1536 = vmatpush1.msra.mxu0 0.0
  %1537 = vmatprep.subr.mxu0 0.0
  %1538 = vmatpush1.msra.mxu0 0.0
  %1539 = vmatprep.subr.mxu0 0.0
  %1540 = vmatpush1.msra.mxu0 0.0
  %1541 = vmatprep.subr.mxu0 0.0
  %1542 = vmatpush1.msra.mxu0 0.0
  %1543 = vmatprep.subr.mxu0 0.0
  %1544 = vmatpush1.msra.mxu0 0.0
  %1545 = vmatprep.subr.mxu0 0.0
  %1546 = vmatpush1.msra.mxu0 0.0
  %1547 = vmatprep.subr.mxu0 0.0
  %1548 = vmatpush1.msra.mxu0 0.0
  %1549 = vmatprep.subr.mxu0 0.0
  %1550 = vmatpush1.msra.mxu0 0.0
  %1551 = vmatprep.subr.mxu0 0.0
  %1552 = vmatpush1.msra.mxu0 0.0
  %1553 = vmatprep.subr.mxu0 0.0
  %1554 = vmatpush1.msra.mxu0 0.0
  %1555 = vmatprep.mubr.f32.mxu0 0.0
  %1556 = vmatmul.mubr.f32.gmra.mrb[0].mxu0 %v420
  %v1557 = vpop.f32.mrb[0].mxu0
  %v1558 = vadd.f32 0.0, %v1557
  %v1559 = vpop.f32.mrb[0].mxu0
  %1560 = vmatprep.mubr.f32.mxu0 0.0
  %1561 = vmatmul.mubr.f32.gmra.mrb[0].mxu0 %v422
  %v1562 = vpop.f32.mrb[0].mxu0
  %v1563 = vadd.f32 0.0, %v1562
  %v1564 = vpop.f32.mrb[0].mxu0
  %1565 = vmatprep.mubr.f32.mxu0 0.0
  %1566 = vmatmul.mubr.f32.gmra.mrb[0].mxu0 %v424
  %v1567 = vpop.f32.mrb[0].mxu0
  %v1568 = vpop.f32.mrb[0].mxu0
  %1569 = vmatprep.mubr.f32.mxu0 0.0
  %1570 = vmatmul.mubr.f32.gmra.mrb[0].mxu0 %v426
  %v1571 = vpop.f32.mrb[0].mxu0
  %v1572 = vpop.f32.mrb[0].mxu0
  %1573 = vmatprep.mubr.f32.mxu0 0.0
  %1574 = vmatmul.mubr.f32.gmra.mrb[0].mxu0 %v418
  %v1575 = vpop.f32.mrb[0].mxu0
  %v1576 = vpop.f32.mrb[0].mxu0
  %1577 = vmatprep.mubr.f32.mxu0 0.0
  %1578 = vmatmul.mubr.f32.gmra.mrb[0].mxu0 %v418
  %v1579 = vpop.f32.mrb[0].mxu0
  %v1580 = vpop.f32.mrb[0].mxu0
  %1581 = vmatprep.mubr.f32.mxu0 0.0
  %1582 = vmatmul.mubr.f32.gmra.mrb[0].mxu0 %v418
  %v1583 = vpop.f32.mrb[0].mxu0
  %v1584 = vadd.f32 0.0, %v1583
  %v1585 = vpop.f32.mrb[0].mxu0
  %1586 = vmatprep.mubr.f32.mxu0 0.0
  %1587 = vmatmul.mubr.f32.gmra.mrb[0].mxu0 %v1487
  %v1588 = vpop.f32.mrb[0].mxu0
  %v1589 = vadd.f32 0.0, %v1588
  %v1590 = vpop.f32.mrb[0].mxu0
  %1591 = vmatprep.mubr.f32.mxu0 0.0
  %1592 = vmatmul.mubr.f32.gmra.mrb[0].mxu0 %v1489
  %v1593 = vpop.f32.mrb[0].mxu0
  %v1594 = vadd.f32 0.0, %v1593
  %v1595 = vpop.f32.mrb[0].mxu0
  %1596 = vdwg.mxu0
  %v1597 = vadd.f32 %v1475, %v1558
  %v1598 = vadd.f32 %v1476, %v1563
  %v1599 = vadd.f32 %v1477, %v1584
  %v1600 = vadd.f32 %v1478, %v1589
  %v1601 = vadd.f32 %v1479, %v1594
  %s1602 = scalar_lea.vmem %s2, 352
  %v1603 = vld [vmem:[%s1602] sm:$0xff]
  %v1604 = vld [vmem:[%s1602 + $0x8] sm:$0xff]
  %v1605 = vld [vmem:[%s1602 + $0x10] sm:$0xff]
  %v1606 = vld [vmem:[%s1602 + $0x18] sm:$0xff]
  %v1607 = vrot.slane %v141, 3
  %v1608 = vsel %vm547, %v557, %v1607
  %v1609 = vsel %vm170, %v1608, 0
  %1611 = vmatprep.subr.mxu0 0.0
  %1612 = vmatpush1.msra.mxu0 %v1603
  %1613 = vmatprep.subr.mxu0 0.0
  %1614 = vmatpush1.msra.mxu0 %v1604
  %1615 = vmatprep.subr.mxu0 0.0
  %1616 = vmatpush1.msra.mxu0 %v1605
  %1617 = vmatprep.subr.mxu0 0.0
  %1618 = vmatpush1.msra.mxu0 %v1606
  %1619 = vmatprep.subr.mxu0 0.0
  %1620 = vmatpush1.msra.mxu0 0.0
  %1621 = vmatprep.subr.mxu0 0.0
  %1622 = vmatpush1.msra.mxu0 0.0
  %1623 = vmatprep.subr.mxu0 0.0
  %1624 = vmatpush1.msra.mxu0 0.0
  %1625 = vmatprep.subr.mxu0 0.0
  %1626 = vmatpush1.msra.mxu0 0.0
  %1627 = vmatprep.subr.mxu0 0.0
  %1628 = vmatpush1.msra.mxu0 0.0
  %1629 = vmatprep.subr.mxu0 0.0
  %1630 = vmatpush1.msra.mxu0 0.0
  %1631 = vmatprep.subr.mxu0 0.0
  %1632 = vmatpush1.msra.mxu0 0.0
  %1633 = vmatprep.subr.mxu0 0.0
  %1634 = vmatpush1.msra.mxu0 0.0
  %1635 = vmatprep.subr.mxu0 0.0
  %1636 = vmatpush1.msra.mxu0 0.0
  %1637 = vmatprep.subr.mxu0 0.0
  %1638 = vmatpush1.msra.mxu0 0.0
  %1639 = vmatprep.subr.mxu0 0.0
  %1640 = vmatpush1.msra.mxu0 0.0
  %1641 = vmatprep.subr.mxu0 0.0
  %1642 = vmatpush1.msra.mxu0 0.0
  %1643 = vmatprep.subr.mxu0 0.0
  %1644 = vmatpush1.msra.mxu0 0.0
  %1645 = vmatprep.subr.mxu0 0.0
  %1646 = vmatpush1.msra.mxu0 0.0
  %1647 = vmatprep.subr.mxu0 0.0
  %1648 = vmatpush1.msra.mxu0 0.0
  %1649 = vmatprep.subr.mxu0 0.0
  %1650 = vmatpush1.msra.mxu0 0.0
  %1651 = vmatprep.subr.mxu0 0.0
  %1652 = vmatpush1.msra.mxu0 0.0
  %1653 = vmatprep.subr.mxu0 0.0
  %1654 = vmatpush1.msra.mxu0 0.0
  %1655 = vmatprep.subr.mxu0 0.0
  %1656 = vmatpush1.msra.mxu0 0.0
  %1657 = vmatprep.subr.mxu0 0.0
  %1658 = vmatpush1.msra.mxu0 0.0
  %1659 = vmatprep.subr.mxu0 0.0
  %1660 = vmatpush1.msra.mxu0 0.0
  %1661 = vmatprep.subr.mxu0 0.0
  %1662 = vmatpush1.msra.mxu0 0.0
  %1663 = vmatprep.subr.mxu0 0.0
  %1664 = vmatpush1.msra.mxu0 0.0
  %1665 = vmatprep.subr.mxu0 0.0
  %1666 = vmatpush1.msra.mxu0 0.0
  %1667 = vmatprep.subr.mxu0 0.0
  %1668 = vmatpush1.msra.mxu0 0.0
  %1669 = vmatprep.subr.mxu0 0.0
  %1670 = vmatpush1.msra.mxu0 0.0
  %1671 = vmatprep.subr.mxu0 0.0
  %1672 = vmatpush1.msra.mxu0 0.0
  %1673 = vmatprep.subr.mxu0 0.0
  %1674 = vmatpush1.msra.mxu0 0.0
  %1675 = vmatprep.mubr.f32.mxu0 0.0
  %1676 = vmatmul.mubr.f32.gmra.mrb[0].mxu0 %v561
  %v1677 = vpop.f32.mrb[0].mxu0
  %v1678 = vadd.f32 0.0, %v1677
  %v1679 = vpop.f32.mrb[0].mxu0
  %1680 = vmatprep.mubr.f32.mxu0 0.0
  %1681 = vmatmul.mubr.f32.gmra.mrb[0].mxu0 %v563
  %v1682 = vpop.f32.mrb[0].mxu0
  %v1683 = vadd.f32 0.0, %v1682
  %v1684 = vpop.f32.mrb[0].mxu0
  %1685 = vmatprep.mubr.f32.mxu0 0.0
  %1686 = vmatmul.mubr.f32.gmra.mrb[0].mxu0 %v565
  %v1687 = vpop.f32.mrb[0].mxu0
  %v1688 = vpop.f32.mrb[0].mxu0
  %1689 = vmatprep.mubr.f32.mxu0 0.0
  %1690 = vmatmul.mubr.f32.gmra.mrb[0].mxu0 %v567
  %v1691 = vpop.f32.mrb[0].mxu0
  %v1692 = vpop.f32.mrb[0].mxu0
  %1693 = vmatprep.mubr.f32.mxu0 0.0
  %1694 = vmatmul.mubr.f32.gmra.mrb[0].mxu0 %v559
  %v1695 = vpop.f32.mrb[0].mxu0
  %v1696 = vpop.f32.mrb[0].mxu0
  %1697 = vmatprep.mubr.f32.mxu0 0.0
  %1698 = vmatmul.mubr.f32.gmra.mrb[0].mxu0 %v559
  %v1699 = vpop.f32.mrb[0].mxu0
  %v1700 = vpop.f32.mrb[0].mxu0
  %1701 = vmatprep.mubr.f32.mxu0 0.0
  %1702 = vmatmul.mubr.f32.gmra.mrb[0].mxu0 %v559
  %v1703 = vpop.f32.mrb[0].mxu0
  %v1704 = vadd.f32 0.0, %v1703
  %v1705 = vpop.f32.mrb[0].mxu0
  %1706 = vmatprep.mubr.f32.mxu0 0.0
  %1707 = vmatmul.mubr.f32.gmra.mrb[0].mxu0 %v569
  %v1708 = vpop.f32.mrb[0].mxu0
  %v1709 = vadd.f32 0.0, %v1708
  %v1710 = vpop.f32.mrb[0].mxu0
  %1711 = vmatprep.mubr.f32.mxu0 0.0
  %1712 = vmatmul.mubr.f32.gmra.mrb[0].mxu0 %v1609
  %v1713 = vpop.f32.mrb[0].mxu0
  %v1714 = vadd.f32 0.0, %v1713
  %v1715 = vpop.f32.mrb[0].mxu0
  %1716 = vdwg.mxu0
  %v1717 = vadd.f32 %v1597, %v1678
  %v1718 = vadd.f32 %v1598, %v1683
  %v1719 = vadd.f32 %v1599, %v1704
  %v1720 = vadd.f32 %v1600, %v1709
  %v1721 = vadd.f32 %v1601, %v1714
  %s1722 = scalar_lea.vmem %s2, 384
  %v1723 = vld [vmem:[%s1722] sm:$0xff]
  %v1724 = vld [vmem:[%s1722 + $0x8] sm:$0xff]
  %v1725 = vld [vmem:[%s1722 + $0x10] sm:$0xff]
  %v1726 = vld [vmem:[%s1722 + $0x18] sm:$0xff]
  %v1727 = vrot.slane %v141, 4
  %v1728 = vsel %vm687, %v697, %v1727
  %v1729 = vsel %vm170, %v1728, 0
  %1731 = vmatprep.subr.mxu0 0.0
  %1732 = vmatpush1.msra.mxu0 %v1723
  %1733 = vmatprep.subr.mxu0 0.0
  %1734 = vmatpush1.msra.mxu0 %v1724
  %1735 = vmatprep.subr.mxu0 0.0
  %1736 = vmatpush1.msra.mxu0 %v1725
  %1737 = vmatprep.subr.mxu0 0.0
  %1738 = vmatpush1.msra.mxu0 %v1726
  %1739 = vmatprep.subr.mxu0 0.0
  %1740 = vmatpush1.msra.mxu0 0.0
  %1741 = vmatprep.subr.mxu0 0.0
  %1742 = vmatpush1.msra.mxu0 0.0
  %1743 = vmatprep.subr.mxu0 0.0
  %1744 = vmatpush1.msra.mxu0 0.0
  %1745 = vmatprep.subr.mxu0 0.0
  %1746 = vmatpush1.msra.mxu0 0.0
  %1747 = vmatprep.subr.mxu0 0.0
  %1748 = vmatpush1.msra.mxu0 0.0
  %1749 = vmatprep.subr.mxu0 0.0
  %1750 = vmatpush1.msra.mxu0 0.0
  %1751 = vmatprep.subr.mxu0 0.0
  %1752 = vmatpush1.msra.mxu0 0.0
  %1753 = vmatprep.subr.mxu0 0.0
  %1754 = vmatpush1.msra.mxu0 0.0
  %1755 = vmatprep.subr.mxu0 0.0
  %1756 = vmatpush1.msra.mxu0 0.0
  %1757 = vmatprep.subr.mxu0 0.0
  %1758 = vmatpush1.msra.mxu0 0.0
  %1759 = vmatprep.subr.mxu0 0.0
  %1760 = vmatpush1.msra.mxu0 0.0
  %1761 = vmatprep.subr.mxu0 0.0
  %1762 = vmatpush1.msra.mxu0 0.0
  %1763 = vmatprep.subr.mxu0 0.0
  %1764 = vmatpush1.msra.mxu0 0.0
  %1765 = vmatprep.subr.mxu0 0.0
  %1766 = vmatpush1.msra.mxu0 0.0
  %1767 = vmatprep.subr.mxu0 0.0
  %1768 = vmatpush1.msra.mxu0 0.0
  %1769 = vmatprep.subr.mxu0 0.0
  %1770 = vmatpush1.msra.mxu0 0.0
  %1771 = vmatprep.subr.mxu0 0.0
  %1772 = vmatpush1.msra.mxu0 0.0
  %1773 = vmatprep.subr.mxu0 0.0
  %1774 = vmatpush1.msra.mxu0 0.0
  %1775 = vmatprep.subr.mxu0 0.0
  %1776 = vmatpush1.msra.mxu0 0.0
  %1777 = vmatprep.subr.mxu0 0.0
  %1778 = vmatpush1.msra.mxu0 0.0
  %1779 = vmatprep.subr.mxu0 0.0
  %1780 = vmatpush1.msra.mxu0 0.0
  %1781 = vmatprep.subr.mxu0 0.0
  %1782 = vmatpush1.msra.mxu0 0.0
  %1783 = vmatprep.subr.mxu0 0.0
  %1784 = vmatpush1.msra.mxu0 0.0
  %1785 = vmatprep.subr.mxu0 0.0
  %1786 = vmatpush1.msra.mxu0 0.0
  %1787 = vmatprep.subr.mxu0 0.0
  %1788 = vmatpush1.msra.mxu0 0.0
  %1789 = vmatprep.subr.mxu0 0.0
  %1790 = vmatpush1.msra.mxu0 0.0
  %1791 = vmatprep.subr.mxu0 0.0
  %1792 = vmatpush1.msra.mxu0 0.0
  %1793 = vmatprep.subr.mxu0 0.0
  %1794 = vmatpush1.msra.mxu0 0.0
  %1795 = vmatprep.mubr.f32.mxu0 0.0
  %1796 = vmatmul.mubr.f32.gmra.mrb[0].mxu0 %v701
  %v1797 = vpop.f32.mrb[0].mxu0
  %v1798 = vadd.f32 0.0, %v1797
  %v1799 = vpop.f32.mrb[0].mxu0
  %1800 = vmatprep.mubr.f32.mxu0 0.0
  %1801 = vmatmul.mubr.f32.gmra.mrb[0].mxu0 %v703
  %v1802 = vpop.f32.mrb[0].mxu0
  %v1803 = vadd.f32 0.0, %v1802
  %v1804 = vpop.f32.mrb[0].mxu0
  %1805 = vmatprep.mubr.f32.mxu0 0.0
  %1806 = vmatmul.mubr.f32.gmra.mrb[0].mxu0 %v705
  %v1807 = vpop.f32.mrb[0].mxu0
  %v1808 = vpop.f32.mrb[0].mxu0
  %1809 = vmatprep.mubr.f32.mxu0 0.0
  %1810 = vmatmul.mubr.f32.gmra.mrb[0].mxu0 %v707
  %v1811 = vpop.f32.mrb[0].mxu0
  %v1812 = vpop.f32.mrb[0].mxu0
  %1813 = vmatprep.mubr.f32.mxu0 0.0
  %1814 = vmatmul.mubr.f32.gmra.mrb[0].mxu0 %v699
  %v1815 = vpop.f32.mrb[0].mxu0
  %v1816 = vpop.f32.mrb[0].mxu0
  %1817 = vmatprep.mubr.f32.mxu0 0.0
  %1818 = vmatmul.mubr.f32.gmra.mrb[0].mxu0 %v699
  %v1819 = vpop.f32.mrb[0].mxu0
  %v1820 = vpop.f32.mrb[0].mxu0
  %1821 = vmatprep.mubr.f32.mxu0 0.0
  %1822 = vmatmul.mubr.f32.gmra.mrb[0].mxu0 %v699
  %v1823 = vpop.f32.mrb[0].mxu0
  %v1824 = vadd.f32 0.0, %v1823
  %v1825 = vpop.f32.mrb[0].mxu0
  %1826 = vmatprep.mubr.f32.mxu0 0.0
  %1827 = vmatmul.mubr.f32.gmra.mrb[0].mxu0 %v709
  %v1828 = vpop.f32.mrb[0].mxu0
  %v1829 = vadd.f32 0.0, %v1828
  %v1830 = vpop.f32.mrb[0].mxu0
  %1831 = vmatprep.mubr.f32.mxu0 0.0
  %1832 = vmatmul.mubr.f32.gmra.mrb[0].mxu0 %v1729
  %v1833 = vpop.f32.mrb[0].mxu0
  %v1834 = vadd.f32 0.0, %v1833
  %v1835 = vpop.f32.mrb[0].mxu0
  %1836 = vdwg.mxu0
  %v1837 = vadd.f32 %v1717, %v1798
  %v1838 = vadd.f32 %v1718, %v1803
  %v1839 = vadd.f32 %v1719, %v1824
  %v1840 = vadd.f32 %v1720, %v1829
  %v1841 = vadd.f32 %v1721, %v1834
  %s1842 = scalar_lea.vmem %s2, 416
  %v1843 = vld [vmem:[%s1842] sm:$0xff]
  %v1844 = vld [vmem:[%s1842 + $0x8] sm:$0xff]
  %v1845 = vld [vmem:[%s1842 + $0x10] sm:$0xff]
  %v1846 = vld [vmem:[%s1842 + $0x18] sm:$0xff]
  %v1847 = vrot.slane %v141, 5
  %v1848 = vsel %vm130, %v836, %v1847
  %v1849 = vsel %vm170, %v1848, 0
  %1851 = vmatprep.subr.mxu0 0.0
  %1852 = vmatpush1.msra.mxu0 %v1843
  %1853 = vmatprep.subr.mxu0 0.0
  %1854 = vmatpush1.msra.mxu0 %v1844
  %1855 = vmatprep.subr.mxu0 0.0
  %1856 = vmatpush1.msra.mxu0 %v1845
  %1857 = vmatprep.subr.mxu0 0.0
  %1858 = vmatpush1.msra.mxu0 %v1846
  %1859 = vmatprep.subr.mxu0 0.0
  %1860 = vmatpush1.msra.mxu0 0.0
  %1861 = vmatprep.subr.mxu0 0.0
  %1862 = vmatpush1.msra.mxu0 0.0
  %1863 = vmatprep.subr.mxu0 0.0
  %1864 = vmatpush1.msra.mxu0 0.0
  %1865 = vmatprep.subr.mxu0 0.0
  %1866 = vmatpush1.msra.mxu0 0.0
  %1867 = vmatprep.subr.mxu0 0.0
  %1868 = vmatpush1.msra.mxu0 0.0
  %1869 = vmatprep.subr.mxu0 0.0
  %1870 = vmatpush1.msra.mxu0 0.0
  %1871 = vmatprep.subr.mxu0 0.0
  %1872 = vmatpush1.msra.mxu0 0.0
  %1873 = vmatprep.subr.mxu0 0.0
  %1874 = vmatpush1.msra.mxu0 0.0
  %1875 = vmatprep.subr.mxu0 0.0
  %1876 = vmatpush1.msra.mxu0 0.0
  %1877 = vmatprep.subr.mxu0 0.0
  %1878 = vmatpush1.msra.mxu0 0.0
  %1879 = vmatprep.subr.mxu0 0.0
  %1880 = vmatpush1.msra.mxu0 0.0
  %1881 = vmatprep.subr.mxu0 0.0
  %1882 = vmatpush1.msra.mxu0 0.0
  %1883 = vmatprep.subr.mxu0 0.0
  %1884 = vmatpush1.msra.mxu0 0.0
  %1885 = vmatprep.subr.mxu0 0.0
  %1886 = vmatpush1.msra.mxu0 0.0
  %1887 = vmatprep.subr.mxu0 0.0
  %1888 = vmatpush1.msra.mxu0 0.0
  %1889 = vmatprep.subr.mxu0 0.0
  %1890 = vmatpush1.msra.mxu0 0.0
  %1891 = vmatprep.subr.mxu0 0.0
  %1892 = vmatpush1.msra.mxu0 0.0
  %1893 = vmatprep.subr.mxu0 0.0
  %1894 = vmatpush1.msra.mxu0 0.0
  %1895 = vmatprep.subr.mxu0 0.0
  %1896 = vmatpush1.msra.mxu0 0.0
  %1897 = vmatprep.subr.mxu0 0.0
  %1898 = vmatpush1.msra.mxu0 0.0
  %1899 = vmatprep.subr.mxu0 0.0
  %1900 = vmatpush1.msra.mxu0 0.0
  %1901 = vmatprep.subr.mxu0 0.0
  %1902 = vmatpush1.msra.mxu0 0.0
  %1903 = vmatprep.subr.mxu0 0.0
  %1904 = vmatpush1.msra.mxu0 0.0
  %1905 = vmatprep.subr.mxu0 0.0
  %1906 = vmatpush1.msra.mxu0 0.0
  %1907 = vmatprep.subr.mxu0 0.0
  %1908 = vmatpush1.msra.mxu0 0.0
  %1909 = vmatprep.subr.mxu0 0.0
  %1910 = vmatpush1.msra.mxu0 0.0
  %1911 = vmatprep.subr.mxu0 0.0
  %1912 = vmatpush1.msra.mxu0 0.0
  %1913 = vmatprep.subr.mxu0 0.0
  %1914 = vmatpush1.msra.mxu0 0.0
  %1915 = vmatprep.mubr.f32.mxu0 0.0
  %1916 = vmatmul.mubr.f32.gmra.mrb[0].mxu0 %v840
  %v1917 = vpop.f32.mrb[0].mxu0
  %v1918 = vadd.f32 0.0, %v1917
  %v1919 = vpop.f32.mrb[0].mxu0
  %1920 = vmatprep.mubr.f32.mxu0 0.0
  %1921 = vmatmul.mubr.f32.gmra.mrb[0].mxu0 %v842
  %v1922 = vpop.f32.mrb[0].mxu0
  %v1923 = vadd.f32 0.0, %v1922
  %v1924 = vpop.f32.mrb[0].mxu0
  %1925 = vmatprep.mubr.f32.mxu0 0.0
  %1926 = vmatmul.mubr.f32.gmra.mrb[0].mxu0 %v844
  %v1927 = vpop.f32.mrb[0].mxu0
  %v1928 = vpop.f32.mrb[0].mxu0
  %1929 = vmatprep.mubr.f32.mxu0 0.0
  %1930 = vmatmul.mubr.f32.gmra.mrb[0].mxu0 %v846
  %v1931 = vpop.f32.mrb[0].mxu0
  %v1932 = vpop.f32.mrb[0].mxu0
  %1933 = vmatprep.mubr.f32.mxu0 0.0
  %1934 = vmatmul.mubr.f32.gmra.mrb[0].mxu0 %v838
  %v1935 = vpop.f32.mrb[0].mxu0
  %v1936 = vpop.f32.mrb[0].mxu0
  %1937 = vmatprep.mubr.f32.mxu0 0.0
  %1938 = vmatmul.mubr.f32.gmra.mrb[0].mxu0 %v838
  %v1939 = vpop.f32.mrb[0].mxu0
  %v1940 = vpop.f32.mrb[0].mxu0
  %1941 = vmatprep.mubr.f32.mxu0 0.0
  %1942 = vmatmul.mubr.f32.gmra.mrb[0].mxu0 %v838
  %v1943 = vpop.f32.mrb[0].mxu0
  %v1944 = vadd.f32 0.0, %v1943
  %v1945 = vpop.f32.mrb[0].mxu0
  %1946 = vmatprep.mubr.f32.mxu0 0.0
  %1947 = vmatmul.mubr.f32.gmra.mrb[0].mxu0 %v848
  %v1948 = vpop.f32.mrb[0].mxu0
  %v1949 = vadd.f32 0.0, %v1948
  %v1950 = vpop.f32.mrb[0].mxu0
  %1951 = vmatprep.mubr.f32.mxu0 0.0
  %1952 = vmatmul.mubr.f32.gmra.mrb[0].mxu0 %v1849
  %v1953 = vpop.f32.mrb[0].mxu0
  %v1954 = vadd.f32 0.0, %v1953
  %v1955 = vpop.f32.mrb[0].mxu0
  %1956 = vdwg.mxu0
  %v1957 = vadd.f32 %v1837, %v1918
  %v1958 = vadd.f32 %v1838, %v1923
  %v1959 = vadd.f32 %v1839, %v1944
  %v1960 = vadd.f32 %v1840, %v1949
  %v1961 = vadd.f32 %v1841, %v1954
  %s1962 = scalar_lea.vmem %s2, 448
  %v1963 = vld [vmem:[%s1962] sm:$0xff]
  %v1964 = vld [vmem:[%s1962 + $0x8] sm:$0xff]
  %v1965 = vld [vmem:[%s1962 + $0x10] sm:$0xff]
  %v1966 = vld [vmem:[%s1962 + $0x18] sm:$0xff]
  %v1967 = vrot.slane %v141, 6
  %v1968 = vsel %vm966, %v976, %v1967
  %v1969 = vsel %vm170, %v1968, 0
  %1971 = vmatprep.subr.mxu0 0.0
  %1972 = vmatpush1.msra.mxu0 %v1963
  %1973 = vmatprep.subr.mxu0 0.0
  %1974 = vmatpush1.msra.mxu0 %v1964
  %1975 = vmatprep.subr.mxu0 0.0
  %1976 = vmatpush1.msra.mxu0 %v1965
  %1977 = vmatprep.subr.mxu0 0.0
  %1978 = vmatpush1.msra.mxu0 %v1966
  %1979 = vmatprep.subr.mxu0 0.0
  %1980 = vmatpush1.msra.mxu0 0.0
  %1981 = vmatprep.subr.mxu0 0.0
  %1982 = vmatpush1.msra.mxu0 0.0
  %1983 = vmatprep.subr.mxu0 0.0
  %1984 = vmatpush1.msra.mxu0 0.0
  %1985 = vmatprep.subr.mxu0 0.0
  %1986 = vmatpush1.msra.mxu0 0.0
  %1987 = vmatprep.subr.mxu0 0.0
  %1988 = vmatpush1.msra.mxu0 0.0
  %1989 = vmatprep.subr.mxu0 0.0
  %1990 = vmatpush1.msra.mxu0 0.0
  %1991 = vmatprep.subr.mxu0 0.0
  %1992 = vmatpush1.msra.mxu0 0.0
  %1993 = vmatprep.subr.mxu0 0.0
  %1994 = vmatpush1.msra.mxu0 0.0
  %1995 = vmatprep.subr.mxu0 0.0
  %1996 = vmatpush1.msra.mxu0 0.0
  %1997 = vmatprep.subr.mxu0 0.0
  %1998 = vmatpush1.msra.mxu0 0.0
  %1999 = vmatprep.subr.mxu0 0.0
  %2000 = vmatpush1.msra.mxu0 0.0
  %2001 = vmatprep.subr.mxu0 0.0
  %2002 = vmatpush1.msra.mxu0 0.0
  %2003 = vmatprep.subr.mxu0 0.0
  %2004 = vmatpush1.msra.mxu0 0.0
  %2005 = vmatprep.subr.mxu0 0.0
  %2006 = vmatpush1.msra.mxu0 0.0
  %2007 = vmatprep.subr.mxu0 0.0
  %2008 = vmatpush1.msra.mxu0 0.0
  %2009 = vmatprep.subr.mxu0 0.0
  %2010 = vmatpush1.msra.mxu0 0.0
  %2011 = vmatprep.subr.mxu0 0.0
  %2012 = vmatpush1.msra.mxu0 0.0
  %2013 = vmatprep.subr.mxu0 0.0
  %2014 = vmatpush1.msra.mxu0 0.0
  %2015 = vmatprep.subr.mxu0 0.0
  %2016 = vmatpush1.msra.mxu0 0.0
  %2017 = vmatprep.subr.mxu0 0.0
  %2018 = vmatpush1.msra.mxu0 0.0
  %2019 = vmatprep.subr.mxu0 0.0
  %2020 = vmatpush1.msra.mxu0 0.0
  %2021 = vmatprep.subr.mxu0 0.0
  %2022 = vmatpush1.msra.mxu0 0.0
  %2023 = vmatprep.subr.mxu0 0.0
  %2024 = vmatpush1.msra.mxu0 0.0
  %2025 = vmatprep.subr.mxu0 0.0
  %2026 = vmatpush1.msra.mxu0 0.0
  %2027 = vmatprep.subr.mxu0 0.0
  %2028 = vmatpush1.msra.mxu0 0.0
  %2029 = vmatprep.subr.mxu0 0.0
  %2030 = vmatpush1.msra.mxu0 0.0
  %2031 = vmatprep.subr.mxu0 0.0
  %2032 = vmatpush1.msra.mxu0 0.0
  %2033 = vmatprep.subr.mxu0 0.0
  %2034 = vmatpush1.msra.mxu0 0.0
  %2035 = vmatprep.mubr.f32.mxu0 0.0
  %2036 = vmatmul.mubr.f32.gmra.mrb[0].mxu0 %v980
  %v2037 = vpop.f32.mrb[0].mxu0
  %v2038 = vadd.f32 0.0, %v2037
  %v2039 = vpop.f32.mrb[0].mxu0
  %2040 = vmatprep.mubr.f32.mxu0 0.0
  %2041 = vmatmul.mubr.f32.gmra.mrb[0].mxu0 %v982
  %v2042 = vpop.f32.mrb[0].mxu0
  %v2043 = vadd.f32 0.0, %v2042
  %v2044 = vpop.f32.mrb[0].mxu0
  %2045 = vmatprep.mubr.f32.mxu0 0.0
  %2046 = vmatmul.mubr.f32.gmra.mrb[0].mxu0 %v984
  %v2047 = vpop.f32.mrb[0].mxu0
  %v2048 = vpop.f32.mrb[0].mxu0
  %2049 = vmatprep.mubr.f32.mxu0 0.0
  %2050 = vmatmul.mubr.f32.gmra.mrb[0].mxu0 %v986
  %v2051 = vpop.f32.mrb[0].mxu0
  %v2052 = vpop.f32.mrb[0].mxu0
  %2053 = vmatprep.mubr.f32.mxu0 0.0
  %2054 = vmatmul.mubr.f32.gmra.mrb[0].mxu0 %v978
  %v2055 = vpop.f32.mrb[0].mxu0
  %v2056 = vpop.f32.mrb[0].mxu0
  %2057 = vmatprep.mubr.f32.mxu0 0.0
  %2058 = vmatmul.mubr.f32.gmra.mrb[0].mxu0 %v978
  %v2059 = vpop.f32.mrb[0].mxu0
  %v2060 = vpop.f32.mrb[0].mxu0
  %2061 = vmatprep.mubr.f32.mxu0 0.0
  %2062 = vmatmul.mubr.f32.gmra.mrb[0].mxu0 %v978
  %v2063 = vpop.f32.mrb[0].mxu0
  %v2064 = vadd.f32 0.0, %v2063
  %v2065 = vpop.f32.mrb[0].mxu0
  %2066 = vmatprep.mubr.f32.mxu0 0.0
  %2067 = vmatmul.mubr.f32.gmra.mrb[0].mxu0 %v988
  %v2068 = vpop.f32.mrb[0].mxu0
  %v2069 = vadd.f32 0.0, %v2068
  %v2070 = vpop.f32.mrb[0].mxu0
  %2071 = vmatprep.mubr.f32.mxu0 0.0
  %2072 = vmatmul.mubr.f32.gmra.mrb[0].mxu0 %v1969
  %v2073 = vpop.f32.mrb[0].mxu0
  %v2074 = vadd.f32 0.0, %v2073
  %v2075 = vpop.f32.mrb[0].mxu0
  %2076 = vdwg.mxu0
  %v2077 = vadd.f32 %v1957, %v2038
  %v2078 = vadd.f32 %v1958, %v2043
  %v2079 = vadd.f32 %v1959, %v2064
  %v2080 = vadd.f32 %v1960, %v2069
  %v2081 = vadd.f32 %v1961, %v2074
  %s2082 = scalar_lea.vmem %s2, 480
  %v2083 = vld [vmem:[%s2082] sm:$0xff]
  %v2084 = vld [vmem:[%s2082 + $0x8] sm:$0xff]
  %v2085 = vld [vmem:[%s2082 + $0x10] sm:$0xff]
  %v2086 = vld [vmem:[%s2082 + $0x18] sm:$0xff]
  %v2087 = vrot.slane %v141, 7
  %v2088 = vsel %vm138, %v1115, %v2087
  %v2089 = vsel %vm170, %v2088, 0
  %2091 = vmatprep.subr.mxu0 0.0
  %2092 = vmatpush1.msra.mxu0 %v2083
  %2093 = vmatprep.subr.mxu0 0.0
  %2094 = vmatpush1.msra.mxu0 %v2084
  %2095 = vmatprep.subr.mxu0 0.0
  %2096 = vmatpush1.msra.mxu0 %v2085
  %2097 = vmatprep.subr.mxu0 0.0
  %2098 = vmatpush1.msra.mxu0 %v2086
  %2099 = vmatprep.subr.mxu0 0.0
  %2100 = vmatpush1.msra.mxu0 0.0
  %2101 = vmatprep.subr.mxu0 0.0
  %2102 = vmatpush1.msra.mxu0 0.0
  %2103 = vmatprep.subr.mxu0 0.0
  %2104 = vmatpush1.msra.mxu0 0.0
  %2105 = vmatprep.subr.mxu0 0.0
  %2106 = vmatpush1.msra.mxu0 0.0
  %2107 = vmatprep.subr.mxu0 0.0
  %2108 = vmatpush1.msra.mxu0 0.0
  %2109 = vmatprep.subr.mxu0 0.0
  %2110 = vmatpush1.msra.mxu0 0.0
  %2111 = vmatprep.subr.mxu0 0.0
  %2112 = vmatpush1.msra.mxu0 0.0
  %2113 = vmatprep.subr.mxu0 0.0
  %2114 = vmatpush1.msra.mxu0 0.0
  %2115 = vmatprep.subr.mxu0 0.0
  %2116 = vmatpush1.msra.mxu0 0.0
  %2117 = vmatprep.subr.mxu0 0.0
  %2118 = vmatpush1.msra.mxu0 0.0
  %2119 = vmatprep.subr.mxu0 0.0
  %2120 = vmatpush1.msra.mxu0 0.0
  %2121 = vmatprep.subr.mxu0 0.0
  %2122 = vmatpush1.msra.mxu0 0.0
  %2123 = vmatprep.subr.mxu0 0.0
  %2124 = vmatpush1.msra.mxu0 0.0
  %2125 = vmatprep.subr.mxu0 0.0
  %2126 = vmatpush1.msra.mxu0 0.0
  %2127 = vmatprep.subr.mxu0 0.0
  %2128 = vmatpush1.msra.mxu0 0.0
  %2129 = vmatprep.subr.mxu0 0.0
  %2130 = vmatpush1.msra.mxu0 0.0
  %2131 = vmatprep.subr.mxu0 0.0
  %2132 = vmatpush1.msra.mxu0 0.0
  %2133 = vmatprep.subr.mxu0 0.0
  %2134 = vmatpush1.msra.mxu0 0.0
  %2135 = vmatprep.subr.mxu0 0.0
  %2136 = vmatpush1.msra.mxu0 0.0
  %2137 = vmatprep.subr.mxu0 0.0
  %2138 = vmatpush1.msra.mxu0 0.0
  %2139 = vmatprep.subr.mxu0 0.0
  %2140 = vmatpush1.msra.mxu0 0.0
  %2141 = vmatprep.subr.mxu0 0.0
  %2142 = vmatpush1.msra.mxu0 0.0
  %2143 = vmatprep.subr.mxu0 0.0
  %2144 = vmatpush1.msra.mxu0 0.0
  %2145 = vmatprep.subr.mxu0 0.0
  %2146 = vmatpush1.msra.mxu0 0.0
  %2147 = vmatprep.subr.mxu0 0.0
  %2148 = vmatpush1.msra.mxu0 0.0
  %2149 = vmatprep.subr.mxu0 0.0
  %2150 = vmatpush1.msra.mxu0 0.0
  %2151 = vmatprep.subr.mxu0 0.0
  %2152 = vmatpush1.msra.mxu0 0.0
  %2153 = vmatprep.subr.mxu0 0.0
  %2154 = vmatpush1.msra.mxu0 0.0
  %2155 = vmatprep.mubr.f32.mxu0 0.0
  %2156 = vmatmul.mubr.f32.gmra.mrb[0].mxu0 %v1119
  %v2157 = vpop.f32.mrb[0].mxu0
  %v2158 = vadd.f32 0.0, %v2157
  %v2159 = vpop.f32.mrb[0].mxu0
  %2160 = vmatprep.mubr.f32.mxu0 0.0
  %2161 = vmatmul.mubr.f32.gmra.mrb[0].mxu0 %v1121
  %v2162 = vpop.f32.mrb[0].mxu0
  %v2163 = vadd.f32 0.0, %v2162
  %v2164 = vpop.f32.mrb[0].mxu0
  %2165 = vmatprep.mubr.f32.mxu0 0.0
  %2166 = vmatmul.mubr.f32.gmra.mrb[0].mxu0 %v1123
  %v2167 = vpop.f32.mrb[0].mxu0
  %v2168 = vpop.f32.mrb[0].mxu0
  %2169 = vmatprep.mubr.f32.mxu0 0.0
  %2170 = vmatmul.mubr.f32.gmra.mrb[0].mxu0 %v1125
  %v2171 = vpop.f32.mrb[0].mxu0
  %v2172 = vpop.f32.mrb[0].mxu0
  %2173 = vmatprep.mubr.f32.mxu0 0.0
  %2174 = vmatmul.mubr.f32.gmra.mrb[0].mxu0 %v1117
  %v2175 = vpop.f32.mrb[0].mxu0
  %v2176 = vpop.f32.mrb[0].mxu0
  %2177 = vmatprep.mubr.f32.mxu0 0.0
  %2178 = vmatmul.mubr.f32.gmra.mrb[0].mxu0 %v1117
  %v2179 = vpop.f32.mrb[0].mxu0
  %v2180 = vpop.f32.mrb[0].mxu0
  %2181 = vmatprep.mubr.f32.mxu0 0.0
  %2182 = vmatmul.mubr.f32.gmra.mrb[0].mxu0 %v1117
  %v2183 = vpop.f32.mrb[0].mxu0
  %v2184 = vadd.f32 0.0, %v2183
  %v2185 = vpop.f32.mrb[0].mxu0
  %2186 = vmatprep.mubr.f32.mxu0 0.0
  %2187 = vmatmul.mubr.f32.gmra.mrb[0].mxu0 %v1127
  %v2188 = vpop.f32.mrb[0].mxu0
  %v2189 = vadd.f32 0.0, %v2188
  %v2190 = vpop.f32.mrb[0].mxu0
  %2191 = vmatprep.mubr.f32.mxu0 0.0
  %2192 = vmatmul.mubr.f32.gmra.mrb[0].mxu0 %v2089
  %v2193 = vpop.f32.mrb[0].mxu0
  %v2194 = vadd.f32 0.0, %v2193
  %v2195 = vpop.f32.mrb[0].mxu0
  %2196 = vdwg.mxu0
  %v2197 = vadd.f32 %v2077, %v2158
  %v2198 = vadd.f32 %v2078, %v2163
  %v2199 = vadd.f32 %v2079, %v2184
  %v2200 = vadd.f32 %v2080, %v2189
  %v2201 = vadd.f32 %v2081, %v2194
  %s2202 = scalar_lea.vmem %s2, 512
  %v2203 = vld [vmem:[%s2202] sm:$0xff]
  %v2204 = vld [vmem:[%s2202 + $0x8] sm:$0xff]
  %v2205 = vld [vmem:[%s2202 + $0x10] sm:$0xff]
  %v2206 = vld [vmem:[%s2202 + $0x18] sm:$0xff]
  %v2207 = vsel %vm170, %v141, 0
  %2209 = vmatprep.subr.mxu0 0.0
  %2210 = vmatpush1.msra.mxu0 %v2203
  %2211 = vmatprep.subr.mxu0 0.0
  %2212 = vmatpush1.msra.mxu0 %v2204
  %2213 = vmatprep.subr.mxu0 0.0
  %2214 = vmatpush1.msra.mxu0 %v2205
  %2215 = vmatprep.subr.mxu0 0.0
  %2216 = vmatpush1.msra.mxu0 %v2206
  %2217 = vmatprep.subr.mxu0 0.0
  %2218 = vmatpush1.msra.mxu0 0.0
  %2219 = vmatprep.subr.mxu0 0.0
  %2220 = vmatpush1.msra.mxu0 0.0
  %2221 = vmatprep.subr.mxu0 0.0
  %2222 = vmatpush1.msra.mxu0 0.0
  %2223 = vmatprep.subr.mxu0 0.0
  %2224 = vmatpush1.msra.mxu0 0.0
  %2225 = vmatprep.subr.mxu0 0.0
  %2226 = vmatpush1.msra.mxu0 0.0
  %2227 = vmatprep.subr.mxu0 0.0
  %2228 = vmatpush1.msra.mxu0 0.0
  %2229 = vmatprep.subr.mxu0 0.0
  %2230 = vmatpush1.msra.mxu0 0.0
  %2231 = vmatprep.subr.mxu0 0.0
  %2232 = vmatpush1.msra.mxu0 0.0
  %2233 = vmatprep.subr.mxu0 0.0
  %2234 = vmatpush1.msra.mxu0 0.0
  %2235 = vmatprep.subr.mxu0 0.0
  %2236 = vmatpush1.msra.mxu0 0.0
  %2237 = vmatprep.subr.mxu0 0.0
  %2238 = vmatpush1.msra.mxu0 0.0
  %2239 = vmatprep.subr.mxu0 0.0
  %2240 = vmatpush1.msra.mxu0 0.0
  %2241 = vmatprep.subr.mxu0 0.0
  %2242 = vmatpush1.msra.mxu0 0.0
  %2243 = vmatprep.subr.mxu0 0.0
  %2244 = vmatpush1.msra.mxu0 0.0
  %2245 = vmatprep.subr.mxu0 0.0
  %2246 = vmatpush1.msra.mxu0 0.0
  %2247 = vmatprep.subr.mxu0 0.0
  %2248 = vmatpush1.msra.mxu0 0.0
  %2249 = vmatprep.subr.mxu0 0.0
  %2250 = vmatpush1.msra.mxu0 0.0
  %2251 = vmatprep.subr.mxu0 0.0
  %2252 = vmatpush1.msra.mxu0 0.0
  %2253 = vmatprep.subr.mxu0 0.0
  %2254 = vmatpush1.msra.mxu0 0.0
  %2255 = vmatprep.subr.mxu0 0.0
  %2256 = vmatpush1.msra.mxu0 0.0
  %2257 = vmatprep.subr.mxu0 0.0
  %2258 = vmatpush1.msra.mxu0 0.0
  %2259 = vmatprep.subr.mxu0 0.0
  %2260 = vmatpush1.msra.mxu0 0.0
  %2261 = vmatprep.subr.mxu0 0.0
  %2262 = vmatpush1.msra.mxu0 0.0
  %2263 = vmatprep.subr.mxu0 0.0
  %2264 = vmatpush1.msra.mxu0 0.0
  %2265 = vmatprep.subr.mxu0 0.0
  %2266 = vmatpush1.msra.mxu0 0.0
  %2267 = vmatprep.subr.mxu0 0.0
  %2268 = vmatpush1.msra.mxu0 0.0
  %2269 = vmatprep.subr.mxu0 0.0
  %2270 = vmatpush1.msra.mxu0 0.0
  %2271 = vmatprep.subr.mxu0 0.0
  %2272 = vmatpush1.msra.mxu0 0.0
  %2273 = vmatprep.mubr.f32.mxu0 0.0
  %2274 = vmatmul.mubr.f32.gmra.mrb[0].mxu0 %v291
  %v2275 = vpop.f32.mrb[0].mxu0
  %v2276 = vadd.f32 0.0, %v2275
  %v2277 = vpop.f32.mrb[0].mxu0
  %2278 = vmatprep.mubr.f32.mxu0 0.0
  %2279 = vmatmul.mubr.f32.gmra.mrb[0].mxu0 %v293
  %v2280 = vpop.f32.mrb[0].mxu0
  %v2281 = vadd.f32 0.0, %v2280
  %v2282 = vpop.f32.mrb[0].mxu0
  %2283 = vmatprep.mubr.f32.mxu0 0.0
  %2284 = vmatmul.mubr.f32.gmra.mrb[0].mxu0 %v295
  %v2285 = vpop.f32.mrb[0].mxu0
  %v2286 = vpop.f32.mrb[0].mxu0
  %2287 = vmatprep.mubr.f32.mxu0 0.0
  %2288 = vmatmul.mubr.f32.gmra.mrb[0].mxu0 %v289
  %v2289 = vpop.f32.mrb[0].mxu0
  %v2290 = vpop.f32.mrb[0].mxu0
  %2291 = vmatprep.mubr.f32.mxu0 0.0
  %2292 = vmatmul.mubr.f32.gmra.mrb[0].mxu0 %v289
  %v2293 = vpop.f32.mrb[0].mxu0
  %v2294 = vpop.f32.mrb[0].mxu0
  %2295 = vmatprep.mubr.f32.mxu0 0.0
  %2296 = vmatmul.mubr.f32.gmra.mrb[0].mxu0 %v289
  %v2297 = vpop.f32.mrb[0].mxu0
  %v2298 = vpop.f32.mrb[0].mxu0
  %2299 = vmatprep.mubr.f32.mxu0 0.0
  %2300 = vmatmul.mubr.f32.gmra.mrb[0].mxu0 %v289
  %v2301 = vpop.f32.mrb[0].mxu0
  %v2302 = vadd.f32 0.0, %v2301
  %v2303 = vpop.f32.mrb[0].mxu0
  %2304 = vmatprep.mubr.f32.mxu0 0.0
  %2305 = vmatmul.mubr.f32.gmra.mrb[0].mxu0 %v1245
  %v2306 = vpop.f32.mrb[0].mxu0
  %v2307 = vadd.f32 0.0, %v2306
  %v2308 = vpop.f32.mrb[0].mxu0
  %2309 = vmatprep.mubr.f32.mxu0 0.0
  %2310 = vmatmul.mubr.f32.gmra.mrb[0].mxu0 %v2207
  %v2311 = vpop.f32.mrb[0].mxu0
  %v2312 = vadd.f32 0.0, %v2311
  %v2313 = vpop.f32.mrb[0].mxu0
  %2314 = vdwg.mxu0
  %v2315 = vadd.f32 %v2197, %v2276
  %v2316 = vadd.f32 %v2198, %v2281
  %v2317 = vadd.f32 %v2199, %v2302
  %v2318 = vadd.f32 %v2200, %v2307
  %v2319 = vadd.f32 %v2201, %v2312
  %s2320 = scalar_lea.vmem %s2, 544
  %v2321 = vld [vmem:[%s2320] sm:$0xff]
  %v2322 = vld [vmem:[%s2320 + $0x8] sm:$0xff]
  %v2323 = vld [vmem:[%s2320 + $0x10] sm:$0xff]
  %v2324 = vld [vmem:[%s2320 + $0x18] sm:$0xff]
  %v2325 = vrot.slane %v141, 1
  %v2326 = vsel %vm160, %v1363, %v2325
  %v2327 = vsel %vm170, %v2326, 0
  %v2329 = vsel %vm170, %v2325, 0
  %2331 = vmatprep.subr.mxu0 0.0
  %2332 = vmatpush1.msra.mxu0 %v2321
  %2333 = vmatprep.subr.mxu0 0.0
  %2334 = vmatpush1.msra.mxu0 %v2322
  %2335 = vmatprep.subr.mxu0 0.0
  %2336 = vmatpush1.msra.mxu0 %v2323
  %2337 = vmatprep.subr.mxu0 0.0
  %2338 = vmatpush1.msra.mxu0 %v2324
  %2339 = vmatprep.subr.mxu0 0.0
  %2340 = vmatpush1.msra.mxu0 0.0
  %2341 = vmatprep.subr.mxu0 0.0
  %2342 = vmatpush1.msra.mxu0 0.0
  %2343 = vmatprep.subr.mxu0 0.0
  %2344 = vmatpush1.msra.mxu0 0.0
  %2345 = vmatprep.subr.mxu0 0.0
  %2346 = vmatpush1.msra.mxu0 0.0
  %2347 = vmatprep.subr.mxu0 0.0
  %2348 = vmatpush1.msra.mxu0 0.0
  %2349 = vmatprep.subr.mxu0 0.0
  %2350 = vmatpush1.msra.mxu0 0.0
  %2351 = vmatprep.subr.mxu0 0.0
  %2352 = vmatpush1.msra.mxu0 0.0
  %2353 = vmatprep.subr.mxu0 0.0
  %2354 = vmatpush1.msra.mxu0 0.0
  %2355 = vmatprep.subr.mxu0 0.0
  %2356 = vmatpush1.msra.mxu0 0.0
  %2357 = vmatprep.subr.mxu0 0.0
  %2358 = vmatpush1.msra.mxu0 0.0
  %2359 = vmatprep.subr.mxu0 0.0
  %2360 = vmatpush1.msra.mxu0 0.0
  %2361 = vmatprep.subr.mxu0 0.0
  %2362 = vmatpush1.msra.mxu0 0.0
  %2363 = vmatprep.subr.mxu0 0.0
  %2364 = vmatpush1.msra.mxu0 0.0
  %2365 = vmatprep.subr.mxu0 0.0
  %2366 = vmatpush1.msra.mxu0 0.0
  %2367 = vmatprep.subr.mxu0 0.0
  %2368 = vmatpush1.msra.mxu0 0.0
  %2369 = vmatprep.subr.mxu0 0.0
  %2370 = vmatpush1.msra.mxu0 0.0
  %2371 = vmatprep.subr.mxu0 0.0
  %2372 = vmatpush1.msra.mxu0 0.0
  %2373 = vmatprep.subr.mxu0 0.0
  %2374 = vmatpush1.msra.mxu0 0.0
  %2375 = vmatprep.subr.mxu0 0.0
  %2376 = vmatpush1.msra.mxu0 0.0
  %2377 = vmatprep.subr.mxu0 0.0
  %2378 = vmatpush1.msra.mxu0 0.0
  %2379 = vmatprep.subr.mxu0 0.0
  %2380 = vmatpush1.msra.mxu0 0.0
  %2381 = vmatprep.subr.mxu0 0.0
  %2382 = vmatpush1.msra.mxu0 0.0
  %2383 = vmatprep.subr.mxu0 0.0
  %2384 = vmatpush1.msra.mxu0 0.0
  %2385 = vmatprep.subr.mxu0 0.0
  %2386 = vmatpush1.msra.mxu0 0.0
  %2387 = vmatprep.subr.mxu0 0.0
  %2388 = vmatpush1.msra.mxu0 0.0
  %2389 = vmatprep.subr.mxu0 0.0
  %2390 = vmatpush1.msra.mxu0 0.0
  %2391 = vmatprep.subr.mxu0 0.0
  %2392 = vmatpush1.msra.mxu0 0.0
  %2393 = vmatprep.subr.mxu0 0.0
  %2394 = vmatpush1.msra.mxu0 0.0
  %2395 = vmatprep.mubr.f32.mxu0 0.0
  %2396 = vmatmul.mubr.f32.gmra.mrb[0].mxu0 %v175
  %v2397 = vpop.f32.mrb[0].mxu0
  %v2398 = vadd.f32 0.0, %v2397
  %v2399 = vpop.f32.mrb[0].mxu0
  %2400 = vmatprep.mubr.f32.mxu0 0.0
  %2401 = vmatmul.mubr.f32.gmra.mrb[0].mxu0 %v177
  %v2402 = vpop.f32.mrb[0].mxu0
  %v2403 = vadd.f32 0.0, %v2402
  %v2404 = vpop.f32.mrb[0].mxu0
  %2405 = vmatprep.mubr.f32.mxu0 0.0
  %2406 = vmatmul.mubr.f32.gmra.mrb[0].mxu0 %v179
  %v2407 = vpop.f32.mrb[0].mxu0
  %v2408 = vpop.f32.mrb[0].mxu0
  %2409 = vmatprep.mubr.f32.mxu0 0.0
  %2410 = vmatmul.mubr.f32.gmra.mrb[0].mxu0 %v171
  %v2411 = vpop.f32.mrb[0].mxu0
  %v2412 = vpop.f32.mrb[0].mxu0
  %2413 = vmatprep.mubr.f32.mxu0 0.0
  %2414 = vmatmul.mubr.f32.gmra.mrb[0].mxu0 %v171
  %v2415 = vpop.f32.mrb[0].mxu0
  %v2416 = vpop.f32.mrb[0].mxu0
  %2417 = vmatprep.mubr.f32.mxu0 0.0
  %2418 = vmatmul.mubr.f32.gmra.mrb[0].mxu0 %v171
  %v2419 = vpop.f32.mrb[0].mxu0
  %v2420 = vpop.f32.mrb[0].mxu0
  %2421 = vmatprep.mubr.f32.mxu0 0.0
  %2422 = vmatmul.mubr.f32.gmra.mrb[0].mxu0 %v1365
  %v2423 = vpop.f32.mrb[0].mxu0
  %v2424 = vadd.f32 0.0, %v2423
  %v2425 = vpop.f32.mrb[0].mxu0
  %2426 = vmatprep.mubr.f32.mxu0 0.0
  %2427 = vmatmul.mubr.f32.gmra.mrb[0].mxu0 %v2327
  %v2428 = vpop.f32.mrb[0].mxu0
  %v2429 = vadd.f32 0.0, %v2428
  %v2430 = vpop.f32.mrb[0].mxu0
  %2431 = vmatprep.mubr.f32.mxu0 0.0
  %2432 = vmatmul.mubr.f32.gmra.mrb[0].mxu0 %v2329
  %v2433 = vpop.f32.mrb[0].mxu0
  %v2434 = vadd.f32 0.0, %v2433
  %v2435 = vpop.f32.mrb[0].mxu0
  %2436 = vdwg.mxu0
  %v2437 = vadd.f32 %v2315, %v2398
  %v2438 = vadd.f32 %v2316, %v2403
  %v2439 = vadd.f32 %v2317, %v2424
  %v2440 = vadd.f32 %v2318, %v2429
  %v2441 = vadd.f32 %v2319, %v2434
  %s2442 = scalar_lea.vmem %s2, 576
  %v2443 = vld [vmem:[%s2442] sm:$0xff]
  %v2444 = vld [vmem:[%s2442 + $0x8] sm:$0xff]
  %v2445 = vld [vmem:[%s2442 + $0x10] sm:$0xff]
  %v2446 = vld [vmem:[%s2442 + $0x18] sm:$0xff]
  %v2447 = vrot.slane %v141, 2
  %v2448 = vsel %vm408, %v1485, %v2447
  %v2449 = vsel %vm170, %v2448, 0
  %v2451 = vsel %vm170, %v2447, 0
  %2453 = vmatprep.subr.mxu0 0.0
  %2454 = vmatpush1.msra.mxu0 %v2443
  %2455 = vmatprep.subr.mxu0 0.0
  %2456 = vmatpush1.msra.mxu0 %v2444
  %2457 = vmatprep.subr.mxu0 0.0
  %2458 = vmatpush1.msra.mxu0 %v2445
  %2459 = vmatprep.subr.mxu0 0.0
  %2460 = vmatpush1.msra.mxu0 %v2446
  %2461 = vmatprep.subr.mxu0 0.0
  %2462 = vmatpush1.msra.mxu0 0.0
  %2463 = vmatprep.subr.mxu0 0.0
  %2464 = vmatpush1.msra.mxu0 0.0
  %2465 = vmatprep.subr.mxu0 0.0
  %2466 = vmatpush1.msra.mxu0 0.0
  %2467 = vmatprep.subr.mxu0 0.0
  %2468 = vmatpush1.msra.mxu0 0.0
  %2469 = vmatprep.subr.mxu0 0.0
  %2470 = vmatpush1.msra.mxu0 0.0
  %2471 = vmatprep.subr.mxu0 0.0
  %2472 = vmatpush1.msra.mxu0 0.0
  %2473 = vmatprep.subr.mxu0 0.0
  %2474 = vmatpush1.msra.mxu0 0.0
  %2475 = vmatprep.subr.mxu0 0.0
  %2476 = vmatpush1.msra.mxu0 0.0
  %2477 = vmatprep.subr.mxu0 0.0
  %2478 = vmatpush1.msra.mxu0 0.0
  %2479 = vmatprep.subr.mxu0 0.0
  %2480 = vmatpush1.msra.mxu0 0.0
  %2481 = vmatprep.subr.mxu0 0.0
  %2482 = vmatpush1.msra.mxu0 0.0
  %2483 = vmatprep.subr.mxu0 0.0
  %2484 = vmatpush1.msra.mxu0 0.0
  %2485 = vmatprep.subr.mxu0 0.0
  %2486 = vmatpush1.msra.mxu0 0.0
  %2487 = vmatprep.subr.mxu0 0.0
  %2488 = vmatpush1.msra.mxu0 0.0
  %2489 = vmatprep.subr.mxu0 0.0
  %2490 = vmatpush1.msra.mxu0 0.0
  %2491 = vmatprep.subr.mxu0 0.0
  %2492 = vmatpush1.msra.mxu0 0.0
  %2493 = vmatprep.subr.mxu0 0.0
  %2494 = vmatpush1.msra.mxu0 0.0
  %2495 = vmatprep.subr.mxu0 0.0
  %2496 = vmatpush1.msra.mxu0 0.0
  %2497 = vmatprep.subr.mxu0 0.0
  %2498 = vmatpush1.msra.mxu0 0.0
  %2499 = vmatprep.subr.mxu0 0.0
  %2500 = vmatpush1.msra.mxu0 0.0
  %2501 = vmatprep.subr.mxu0 0.0
  %2502 = vmatpush1.msra.mxu0 0.0
  %2503 = vmatprep.subr.mxu0 0.0
  %2504 = vmatpush1.msra.mxu0 0.0
  %2505 = vmatprep.subr.mxu0 0.0
  %2506 = vmatpush1.msra.mxu0 0.0
  %2507 = vmatprep.subr.mxu0 0.0
  %2508 = vmatpush1.msra.mxu0 0.0
  %2509 = vmatprep.subr.mxu0 0.0
  %2510 = vmatpush1.msra.mxu0 0.0
  %2511 = vmatprep.subr.mxu0 0.0
  %2512 = vmatpush1.msra.mxu0 0.0
  %2513 = vmatprep.subr.mxu0 0.0
  %2514 = vmatpush1.msra.mxu0 0.0
  %2515 = vmatprep.subr.mxu0 0.0
  %2516 = vmatpush1.msra.mxu0 0.0
  %2517 = vmatprep.mubr.f32.mxu0 0.0
  %2518 = vmatmul.mubr.f32.gmra.mrb[0].mxu0 %v422
  %v2519 = vpop.f32.mrb[0].mxu0
  %v2520 = vadd.f32 0.0, %v2519
  %v2521 = vpop.f32.mrb[0].mxu0
  %2522 = vmatprep.mubr.f32.mxu0 0.0
  %2523 = vmatmul.mubr.f32.gmra.mrb[0].mxu0 %v424
  %v2524 = vpop.f32.mrb[0].mxu0
  %v2525 = vadd.f32 0.0, %v2524
  %v2526 = vpop.f32.mrb[0].mxu0
  %2527 = vmatprep.mubr.f32.mxu0 0.0
  %2528 = vmatmul.mubr.f32.gmra.mrb[0].mxu0 %v426
  %v2529 = vpop.f32.mrb[0].mxu0
  %v2530 = vpop.f32.mrb[0].mxu0
  %2531 = vmatprep.mubr.f32.mxu0 0.0
  %2532 = vmatmul.mubr.f32.gmra.mrb[0].mxu0 %v418
  %v2533 = vpop.f32.mrb[0].mxu0
  %v2534 = vpop.f32.mrb[0].mxu0
  %2535 = vmatprep.mubr.f32.mxu0 0.0
  %2536 = vmatmul.mubr.f32.gmra.mrb[0].mxu0 %v418
  %v2537 = vpop.f32.mrb[0].mxu0
  %v2538 = vpop.f32.mrb[0].mxu0
  %2539 = vmatprep.mubr.f32.mxu0 0.0
  %2540 = vmatmul.mubr.f32.gmra.mrb[0].mxu0 %v418
  %v2541 = vpop.f32.mrb[0].mxu0
  %v2542 = vpop.f32.mrb[0].mxu0
  %2543 = vmatprep.mubr.f32.mxu0 0.0
  %2544 = vmatmul.mubr.f32.gmra.mrb[0].mxu0 %v1487
  %v2545 = vpop.f32.mrb[0].mxu0
  %v2546 = vadd.f32 0.0, %v2545
  %v2547 = vpop.f32.mrb[0].mxu0
  %2548 = vmatprep.mubr.f32.mxu0 0.0
  %2549 = vmatmul.mubr.f32.gmra.mrb[0].mxu0 %v2449
  %v2550 = vpop.f32.mrb[0].mxu0
  %v2551 = vadd.f32 0.0, %v2550
  %v2552 = vpop.f32.mrb[0].mxu0
  %2553 = vmatprep.mubr.f32.mxu0 0.0
  %2554 = vmatmul.mubr.f32.gmra.mrb[0].mxu0 %v2451
  %v2555 = vpop.f32.mrb[0].mxu0
  %v2556 = vadd.f32 0.0, %v2555
  %v2557 = vpop.f32.mrb[0].mxu0
  %2558 = vdwg.mxu0
  %v2559 = vadd.f32 %v2437, %v2520
  %v2560 = vadd.f32 %v2438, %v2525
  %v2561 = vadd.f32 %v2439, %v2546
  %v2562 = vadd.f32 %v2440, %v2551
  %v2563 = vadd.f32 %v2441, %v2556
  %s2564 = scalar_lea.vmem %s2, 608
  %v2565 = vld [vmem:[%s2564] sm:$0xff]
  %v2566 = vld [vmem:[%s2564 + $0x8] sm:$0xff]
  %v2567 = vld [vmem:[%s2564 + $0x10] sm:$0xff]
  %v2568 = vld [vmem:[%s2564 + $0x18] sm:$0xff]
  %v2570 = vrot.slane %v147, 3
  %v2571 = vsel %vm547, %v1607, %v2570
  %v2572 = vsel %vm170, %v2571, 0
  %2574 = vmatprep.subr.mxu0 0.0
  %2575 = vmatpush1.msra.mxu0 %v2565
  %2576 = vmatprep.subr.mxu0 0.0
  %2577 = vmatpush1.msra.mxu0 %v2566
  %2578 = vmatprep.subr.mxu0 0.0
  %2579 = vmatpush1.msra.mxu0 %v2567
  %2580 = vmatprep.subr.mxu0 0.0
  %2581 = vmatpush1.msra.mxu0 %v2568
  %2582 = vmatprep.subr.mxu0 0.0
  %2583 = vmatpush1.msra.mxu0 0.0
  %2584 = vmatprep.subr.mxu0 0.0
  %2585 = vmatpush1.msra.mxu0 0.0
  %2586 = vmatprep.subr.mxu0 0.0
  %2587 = vmatpush1.msra.mxu0 0.0
  %2588 = vmatprep.subr.mxu0 0.0
  %2589 = vmatpush1.msra.mxu0 0.0
  %2590 = vmatprep.subr.mxu0 0.0
  %2591 = vmatpush1.msra.mxu0 0.0
  %2592 = vmatprep.subr.mxu0 0.0
  %2593 = vmatpush1.msra.mxu0 0.0
  %2594 = vmatprep.subr.mxu0 0.0
  %2595 = vmatpush1.msra.mxu0 0.0
  %2596 = vmatprep.subr.mxu0 0.0
  %2597 = vmatpush1.msra.mxu0 0.0
  %2598 = vmatprep.subr.mxu0 0.0
  %2599 = vmatpush1.msra.mxu0 0.0
  %2600 = vmatprep.subr.mxu0 0.0
  %2601 = vmatpush1.msra.mxu0 0.0
  %2602 = vmatprep.subr.mxu0 0.0
  %2603 = vmatpush1.msra.mxu0 0.0
  %2604 = vmatprep.subr.mxu0 0.0
  %2605 = vmatpush1.msra.mxu0 0.0
  %2606 = vmatprep.subr.mxu0 0.0
  %2607 = vmatpush1.msra.mxu0 0.0
  %2608 = vmatprep.subr.mxu0 0.0
  %2609 = vmatpush1.msra.mxu0 0.0
  %2610 = vmatprep.subr.mxu0 0.0
  %2611 = vmatpush1.msra.mxu0 0.0
  %2612 = vmatprep.subr.mxu0 0.0
  %2613 = vmatpush1.msra.mxu0 0.0
  %2614 = vmatprep.subr.mxu0 0.0
  %2615 = vmatpush1.msra.mxu0 0.0
  %2616 = vmatprep.subr.mxu0 0.0
  %2617 = vmatpush1.msra.mxu0 0.0
  %2618 = vmatprep.subr.mxu0 0.0
  %2619 = vmatpush1.msra.mxu0 0.0
  %2620 = vmatprep.subr.mxu0 0.0
  %2621 = vmatpush1.msra.mxu0 0.0
  %2622 = vmatprep.subr.mxu0 0.0
  %2623 = vmatpush1.msra.mxu0 0.0
  %2624 = vmatprep.subr.mxu0 0.0
  %2625 = vmatpush1.msra.mxu0 0.0
  %2626 = vmatprep.subr.mxu0 0.0
  %2627 = vmatpush1.msra.mxu0 0.0
  %2628 = vmatprep.subr.mxu0 0.0
  %2629 = vmatpush1.msra.mxu0 0.0
  %2630 = vmatprep.subr.mxu0 0.0
  %2631 = vmatpush1.msra.mxu0 0.0
  %2632 = vmatprep.subr.mxu0 0.0
  %2633 = vmatpush1.msra.mxu0 0.0
  %2634 = vmatprep.subr.mxu0 0.0
  %2635 = vmatpush1.msra.mxu0 0.0
  %2636 = vmatprep.subr.mxu0 0.0
  %2637 = vmatpush1.msra.mxu0 0.0
  %2638 = vmatprep.mubr.f32.mxu0 0.0
  %2639 = vmatmul.mubr.f32.gmra.mrb[0].mxu0 %v563
  %v2640 = vpop.f32.mrb[0].mxu0
  %v2641 = vadd.f32 0.0, %v2640
  %v2642 = vpop.f32.mrb[0].mxu0
  %2643 = vmatprep.mubr.f32.mxu0 0.0
  %2644 = vmatmul.mubr.f32.gmra.mrb[0].mxu0 %v565
  %v2645 = vpop.f32.mrb[0].mxu0
  %v2646 = vadd.f32 0.0, %v2645
  %v2647 = vpop.f32.mrb[0].mxu0
  %2648 = vmatprep.mubr.f32.mxu0 0.0
  %2649 = vmatmul.mubr.f32.gmra.mrb[0].mxu0 %v567
  %v2650 = vpop.f32.mrb[0].mxu0
  %v2651 = vpop.f32.mrb[0].mxu0
  %2652 = vmatprep.mubr.f32.mxu0 0.0
  %2653 = vmatmul.mubr.f32.gmra.mrb[0].mxu0 %v559
  %v2654 = vpop.f32.mrb[0].mxu0
  %v2655 = vpop.f32.mrb[0].mxu0
  %2656 = vmatprep.mubr.f32.mxu0 0.0
  %2657 = vmatmul.mubr.f32.gmra.mrb[0].mxu0 %v559
  %v2658 = vpop.f32.mrb[0].mxu0
  %v2659 = vpop.f32.mrb[0].mxu0
  %2660 = vmatprep.mubr.f32.mxu0 0.0
  %2661 = vmatmul.mubr.f32.gmra.mrb[0].mxu0 %v559
  %v2662 = vpop.f32.mrb[0].mxu0
  %v2663 = vpop.f32.mrb[0].mxu0
  %2664 = vmatprep.mubr.f32.mxu0 0.0
  %2665 = vmatmul.mubr.f32.gmra.mrb[0].mxu0 %v569
  %v2666 = vpop.f32.mrb[0].mxu0
  %v2667 = vadd.f32 0.0, %v2666
  %v2668 = vpop.f32.mrb[0].mxu0
  %2669 = vmatprep.mubr.f32.mxu0 0.0
  %2670 = vmatmul.mubr.f32.gmra.mrb[0].mxu0 %v1609
  %v2671 = vpop.f32.mrb[0].mxu0
  %v2672 = vadd.f32 0.0, %v2671
  %v2673 = vpop.f32.mrb[0].mxu0
  %2674 = vmatprep.mubr.f32.mxu0 0.0
  %2675 = vmatmul.mubr.f32.gmra.mrb[0].mxu0 %v2572
  %v2676 = vpop.f32.mrb[0].mxu0
  %v2677 = vadd.f32 0.0, %v2676
  %v2678 = vpop.f32.mrb[0].mxu0
  %2679 = vdwg.mxu0
  %v2680 = vadd.f32 %v2559, %v2641
  %v2681 = vadd.f32 %v2560, %v2646
  %v2682 = vadd.f32 %v2561, %v2667
  %v2683 = vadd.f32 %v2562, %v2672
  %v2684 = vadd.f32 %v2563, %v2677
  %s2685 = scalar_lea.vmem %s2, 640
  %v2686 = vld [vmem:[%s2685] sm:$0xff]
  %v2687 = vld [vmem:[%s2685 + $0x8] sm:$0xff]
  %v2688 = vld [vmem:[%s2685 + $0x10] sm:$0xff]
  %v2689 = vld [vmem:[%s2685 + $0x18] sm:$0xff]
  %v2690 = vrot.slane %v147, 4
  %v2691 = vsel %vm687, %v1727, %v2690
  %v2692 = vsel %vm170, %v2691, 0
  %2694 = vmatprep.subr.mxu0 0.0
  %2695 = vmatpush1.msra.mxu0 %v2686
  %2696 = vmatprep.subr.mxu0 0.0
  %2697 = vmatpush1.msra.mxu0 %v2687
  %2698 = vmatprep.subr.mxu0 0.0
  %2699 = vmatpush1.msra.mxu0 %v2688
  %2700 = vmatprep.subr.mxu0 0.0
  %2701 = vmatpush1.msra.mxu0 %v2689
  %2702 = vmatprep.subr.mxu0 0.0
  %2703 = vmatpush1.msra.mxu0 0.0
  %2704 = vmatprep.subr.mxu0 0.0
  %2705 = vmatpush1.msra.mxu0 0.0
  %2706 = vmatprep.subr.mxu0 0.0
  %2707 = vmatpush1.msra.mxu0 0.0
  %2708 = vmatprep.subr.mxu0 0.0
  %2709 = vmatpush1.msra.mxu0 0.0
  %2710 = vmatprep.subr.mxu0 0.0
  %2711 = vmatpush1.msra.mxu0 0.0
  %2712 = vmatprep.subr.mxu0 0.0
  %2713 = vmatpush1.msra.mxu0 0.0
  %2714 = vmatprep.subr.mxu0 0.0
  %2715 = vmatpush1.msra.mxu0 0.0
  %2716 = vmatprep.subr.mxu0 0.0
  %2717 = vmatpush1.msra.mxu0 0.0
  %2718 = vmatprep.subr.mxu0 0.0
  %2719 = vmatpush1.msra.mxu0 0.0
  %2720 = vmatprep.subr.mxu0 0.0
  %2721 = vmatpush1.msra.mxu0 0.0
  %2722 = vmatprep.subr.mxu0 0.0
  %2723 = vmatpush1.msra.mxu0 0.0
  %2724 = vmatprep.subr.mxu0 0.0
  %2725 = vmatpush1.msra.mxu0 0.0
  %2726 = vmatprep.subr.mxu0 0.0
  %2727 = vmatpush1.msra.mxu0 0.0
  %2728 = vmatprep.subr.mxu0 0.0
  %2729 = vmatpush1.msra.mxu0 0.0
  %2730 = vmatprep.subr.mxu0 0.0
  %2731 = vmatpush1.msra.mxu0 0.0
  %2732 = vmatprep.subr.mxu0 0.0
  %2733 = vmatpush1.msra.mxu0 0.0
  %2734 = vmatprep.subr.mxu0 0.0
  %2735 = vmatpush1.msra.mxu0 0.0
  %2736 = vmatprep.subr.mxu0 0.0
  %2737 = vmatpush1.msra.mxu0 0.0
  %2738 = vmatprep.subr.mxu0 0.0
  %2739 = vmatpush1.msra.mxu0 0.0
  %2740 = vmatprep.subr.mxu0 0.0
  %2741 = vmatpush1.msra.mxu0 0.0
  %2742 = vmatprep.subr.mxu0 0.0
  %2743 = vmatpush1.msra.mxu0 0.0
  %2744 = vmatprep.subr.mxu0 0.0
  %2745 = vmatpush1.msra.mxu0 0.0
  %2746 = vmatprep.subr.mxu0 0.0
  %2747 = vmatpush1.msra.mxu0 0.0
  %2748 = vmatprep.subr.mxu0 0.0
  %2749 = vmatpush1.msra.mxu0 0.0
  %2750 = vmatprep.subr.mxu0 0.0
  %2751 = vmatpush1.msra.mxu0 0.0
  %2752 = vmatprep.subr.mxu0 0.0
  %2753 = vmatpush1.msra.mxu0 0.0
  %2754 = vmatprep.subr.mxu0 0.0
  %2755 = vmatpush1.msra.mxu0 0.0
  %2756 = vmatprep.subr.mxu0 0.0
  %2757 = vmatpush1.msra.mxu0 0.0
  %2758 = vmatprep.mubr.f32.mxu0 0.0
  %2759 = vmatmul.mubr.f32.gmra.mrb[0].mxu0 %v703
  %v2760 = vpop.f32.mrb[0].mxu0
  %v2761 = vadd.f32 0.0, %v2760
  %v2762 = vpop.f32.mrb[0].mxu0
  %2763 = vmatprep.mubr.f32.mxu0 0.0
  %2764 = vmatmul.mubr.f32.gmra.mrb[0].mxu0 %v705
  %v2765 = vpop.f32.mrb[0].mxu0
  %v2766 = vadd.f32 0.0, %v2765
  %v2767 = vpop.f32.mrb[0].mxu0
  %2768 = vmatprep.mubr.f32.mxu0 0.0
  %2769 = vmatmul.mubr.f32.gmra.mrb[0].mxu0 %v707
  %v2770 = vpop.f32.mrb[0].mxu0
  %v2771 = vpop.f32.mrb[0].mxu0
  %2772 = vmatprep.mubr.f32.mxu0 0.0
  %2773 = vmatmul.mubr.f32.gmra.mrb[0].mxu0 %v699
  %v2774 = vpop.f32.mrb[0].mxu0
  %v2775 = vpop.f32.mrb[0].mxu0
  %2776 = vmatprep.mubr.f32.mxu0 0.0
  %2777 = vmatmul.mubr.f32.gmra.mrb[0].mxu0 %v699
  %v2778 = vpop.f32.mrb[0].mxu0
  %v2779 = vpop.f32.mrb[0].mxu0
  %2780 = vmatprep.mubr.f32.mxu0 0.0
  %2781 = vmatmul.mubr.f32.gmra.mrb[0].mxu0 %v699
  %v2782 = vpop.f32.mrb[0].mxu0
  %v2783 = vpop.f32.mrb[0].mxu0
  %2784 = vmatprep.mubr.f32.mxu0 0.0
  %2785 = vmatmul.mubr.f32.gmra.mrb[0].mxu0 %v709
  %v2786 = vpop.f32.mrb[0].mxu0
  %v2787 = vadd.f32 0.0, %v2786
  %v2788 = vpop.f32.mrb[0].mxu0
  %2789 = vmatprep.mubr.f32.mxu0 0.0
  %2790 = vmatmul.mubr.f32.gmra.mrb[0].mxu0 %v1729
  %v2791 = vpop.f32.mrb[0].mxu0
  %v2792 = vadd.f32 0.0, %v2791
  %v2793 = vpop.f32.mrb[0].mxu0
  %2794 = vmatprep.mubr.f32.mxu0 0.0
  %2795 = vmatmul.mubr.f32.gmra.mrb[0].mxu0 %v2692
  %v2796 = vpop.f32.mrb[0].mxu0
  %v2797 = vadd.f32 0.0, %v2796
  %v2798 = vpop.f32.mrb[0].mxu0
  %2799 = vdwg.mxu0
  %v2800 = vadd.f32 %v2680, %v2761
  %v2801 = vadd.f32 %v2681, %v2766
  %v2802 = vadd.f32 %v2682, %v2787
  %v2803 = vadd.f32 %v2683, %v2792
  %v2804 = vadd.f32 %v2684, %v2797
  %s2805 = scalar_lea.vmem %s2, 672
  %v2806 = vld [vmem:[%s2805] sm:$0xff]
  %v2807 = vld [vmem:[%s2805 + $0x8] sm:$0xff]
  %v2808 = vld [vmem:[%s2805 + $0x10] sm:$0xff]
  %v2809 = vld [vmem:[%s2805 + $0x18] sm:$0xff]
  %v2810 = vrot.slane %v147, 5
  %v2811 = vsel %vm130, %v1847, %v2810
  %v2812 = vsel %vm170, %v2811, 0
  %2814 = vmatprep.subr.mxu0 0.0
  %2815 = vmatpush1.msra.mxu0 %v2806
  %2816 = vmatprep.subr.mxu0 0.0
  %2817 = vmatpush1.msra.mxu0 %v2807
  %2818 = vmatprep.subr.mxu0 0.0
  %2819 = vmatpush1.msra.mxu0 %v2808
  %2820 = vmatprep.subr.mxu0 0.0
  %2821 = vmatpush1.msra.mxu0 %v2809
  %2822 = vmatprep.subr.mxu0 0.0
  %2823 = vmatpush1.msra.mxu0 0.0
  %2824 = vmatprep.subr.mxu0 0.0
  %2825 = vmatpush1.msra.mxu0 0.0
  %2826 = vmatprep.subr.mxu0 0.0
  %2827 = vmatpush1.msra.mxu0 0.0
  %2828 = vmatprep.subr.mxu0 0.0
  %2829 = vmatpush1.msra.mxu0 0.0
  %2830 = vmatprep.subr.mxu0 0.0
  %2831 = vmatpush1.msra.mxu0 0.0
  %2832 = vmatprep.subr.mxu0 0.0
  %2833 = vmatpush1.msra.mxu0 0.0
  %2834 = vmatprep.subr.mxu0 0.0
  %2835 = vmatpush1.msra.mxu0 0.0
  %2836 = vmatprep.subr.mxu0 0.0
  %2837 = vmatpush1.msra.mxu0 0.0
  %2838 = vmatprep.subr.mxu0 0.0
  %2839 = vmatpush1.msra.mxu0 0.0
  %2840 = vmatprep.subr.mxu0 0.0
  %2841 = vmatpush1.msra.mxu0 0.0
  %2842 = vmatprep.subr.mxu0 0.0
  %2843 = vmatpush1.msra.mxu0 0.0
  %2844 = vmatprep.subr.mxu0 0.0
  %2845 = vmatpush1.msra.mxu0 0.0
  %2846 = vmatprep.subr.mxu0 0.0
  %2847 = vmatpush1.msra.mxu0 0.0
  %2848 = vmatprep.subr.mxu0 0.0
  %2849 = vmatpush1.msra.mxu0 0.0
  %2850 = vmatprep.subr.mxu0 0.0
  %2851 = vmatpush1.msra.mxu0 0.0
  %2852 = vmatprep.subr.mxu0 0.0
  %2853 = vmatpush1.msra.mxu0 0.0
  %2854 = vmatprep.subr.mxu0 0.0
  %2855 = vmatpush1.msra.mxu0 0.0
  %2856 = vmatprep.subr.mxu0 0.0
  %2857 = vmatpush1.msra.mxu0 0.0
  %2858 = vmatprep.subr.mxu0 0.0
  %2859 = vmatpush1.msra.mxu0 0.0
  %2860 = vmatprep.subr.mxu0 0.0
  %2861 = vmatpush1.msra.mxu0 0.0
  %2862 = vmatprep.subr.mxu0 0.0
  %2863 = vmatpush1.msra.mxu0 0.0
  %2864 = vmatprep.subr.mxu0 0.0
  %2865 = vmatpush1.msra.mxu0 0.0
  %2866 = vmatprep.subr.mxu0 0.0
  %2867 = vmatpush1.msra.mxu0 0.0
  %2868 = vmatprep.subr.mxu0 0.0
  %2869 = vmatpush1.msra.mxu0 0.0
  %2870 = vmatprep.subr.mxu0 0.0
  %2871 = vmatpush1.msra.mxu0 0.0
  %2872 = vmatprep.subr.mxu0 0.0
  %2873 = vmatpush1.msra.mxu0 0.0
  %2874 = vmatprep.subr.mxu0 0.0
  %2875 = vmatpush1.msra.mxu0 0.0
  %2876 = vmatprep.subr.mxu0 0.0
  %2877 = vmatpush1.msra.mxu0 0.0
  %2878 = vmatprep.mubr.f32.mxu0 0.0
  %2879 = vmatmul.mubr.f32.gmra.mrb[0].mxu0 %v842
  %v2880 = vpop.f32.mrb[0].mxu0
  %v2881 = vadd.f32 0.0, %v2880
  %v2882 = vpop.f32.mrb[0].mxu0
  %2883 = vmatprep.mubr.f32.mxu0 0.0
  %2884 = vmatmul.mubr.f32.gmra.mrb[0].mxu0 %v844
  %v2885 = vpop.f32.mrb[0].mxu0
  %v2886 = vadd.f32 0.0, %v2885
  %v2887 = vpop.f32.mrb[0].mxu0
  %2888 = vmatprep.mubr.f32.mxu0 0.0
  %2889 = vmatmul.mubr.f32.gmra.mrb[0].mxu0 %v846
  %v2890 = vpop.f32.mrb[0].mxu0
  %v2891 = vpop.f32.mrb[0].mxu0
  %2892 = vmatprep.mubr.f32.mxu0 0.0
  %2893 = vmatmul.mubr.f32.gmra.mrb[0].mxu0 %v838
  %v2894 = vpop.f32.mrb[0].mxu0
  %v2895 = vpop.f32.mrb[0].mxu0
  %2896 = vmatprep.mubr.f32.mxu0 0.0
  %2897 = vmatmul.mubr.f32.gmra.mrb[0].mxu0 %v838
  %v2898 = vpop.f32.mrb[0].mxu0
  %v2899 = vpop.f32.mrb[0].mxu0
  %2900 = vmatprep.mubr.f32.mxu0 0.0
  %2901 = vmatmul.mubr.f32.gmra.mrb[0].mxu0 %v838
  %v2902 = vpop.f32.mrb[0].mxu0
  %v2903 = vpop.f32.mrb[0].mxu0
  %2904 = vmatprep.mubr.f32.mxu0 0.0
  %2905 = vmatmul.mubr.f32.gmra.mrb[0].mxu0 %v848
  %v2906 = vpop.f32.mrb[0].mxu0
  %v2907 = vadd.f32 0.0, %v2906
  %v2908 = vpop.f32.mrb[0].mxu0
  %2909 = vmatprep.mubr.f32.mxu0 0.0
  %2910 = vmatmul.mubr.f32.gmra.mrb[0].mxu0 %v1849
  %v2911 = vpop.f32.mrb[0].mxu0
  %v2912 = vadd.f32 0.0, %v2911
  %v2913 = vpop.f32.mrb[0].mxu0
  %2914 = vmatprep.mubr.f32.mxu0 0.0
  %2915 = vmatmul.mubr.f32.gmra.mrb[0].mxu0 %v2812
  %v2916 = vpop.f32.mrb[0].mxu0
  %v2917 = vadd.f32 0.0, %v2916
  %v2918 = vpop.f32.mrb[0].mxu0
  %2919 = vdwg.mxu0
  %v2920 = vadd.f32 %v2800, %v2881
  %v2921 = vadd.f32 %v2801, %v2886
  %v2922 = vadd.f32 %v2802, %v2907
  %v2923 = vadd.f32 %v2803, %v2912
  %v2924 = vadd.f32 %v2804, %v2917
  %s2925 = scalar_lea.vmem %s2, 704
  %v2926 = vld [vmem:[%s2925] sm:$0xff]
  %v2927 = vld [vmem:[%s2925 + $0x8] sm:$0xff]
  %v2928 = vld [vmem:[%s2925 + $0x10] sm:$0xff]
  %v2929 = vld [vmem:[%s2925 + $0x18] sm:$0xff]
  %v2930 = vrot.slane %v147, 6
  %v2931 = vsel %vm966, %v1967, %v2930
  %v2932 = vsel %vm170, %v2931, 0
  %2934 = vmatprep.subr.mxu0 0.0
  %2935 = vmatpush1.msra.mxu0 %v2926
  %2936 = vmatprep.subr.mxu0 0.0
  %2937 = vmatpush1.msra.mxu0 %v2927
  %2938 = vmatprep.subr.mxu0 0.0
  %2939 = vmatpush1.msra.mxu0 %v2928
  %2940 = vmatprep.subr.mxu0 0.0
  %2941 = vmatpush1.msra.mxu0 %v2929
  %2942 = vmatprep.subr.mxu0 0.0
  %2943 = vmatpush1.msra.mxu0 0.0
  %2944 = vmatprep.subr.mxu0 0.0
  %2945 = vmatpush1.msra.mxu0 0.0
  %2946 = vmatprep.subr.mxu0 0.0
  %2947 = vmatpush1.msra.mxu0 0.0
  %2948 = vmatprep.subr.mxu0 0.0
  %2949 = vmatpush1.msra.mxu0 0.0
  %2950 = vmatprep.subr.mxu0 0.0
  %2951 = vmatpush1.msra.mxu0 0.0
  %2952 = vmatprep.subr.mxu0 0.0
  %2953 = vmatpush1.msra.mxu0 0.0
  %2954 = vmatprep.subr.mxu0 0.0
  %2955 = vmatpush1.msra.mxu0 0.0
  %2956 = vmatprep.subr.mxu0 0.0
  %2957 = vmatpush1.msra.mxu0 0.0
  %2958 = vmatprep.subr.mxu0 0.0
  %2959 = vmatpush1.msra.mxu0 0.0
  %2960 = vmatprep.subr.mxu0 0.0
  %2961 = vmatpush1.msra.mxu0 0.0
  %2962 = vmatprep.subr.mxu0 0.0
  %2963 = vmatpush1.msra.mxu0 0.0
  %2964 = vmatprep.subr.mxu0 0.0
  %2965 = vmatpush1.msra.mxu0 0.0
  %2966 = vmatprep.subr.mxu0 0.0
  %2967 = vmatpush1.msra.mxu0 0.0
  %2968 = vmatprep.subr.mxu0 0.0
  %2969 = vmatpush1.msra.mxu0 0.0
  %2970 = vmatprep.subr.mxu0 0.0
  %2971 = vmatpush1.msra.mxu0 0.0
  %2972 = vmatprep.subr.mxu0 0.0
  %2973 = vmatpush1.msra.mxu0 0.0
  %2974 = vmatprep.subr.mxu0 0.0
  %2975 = vmatpush1.msra.mxu0 0.0
  %2976 = vmatprep.subr.mxu0 0.0
  %2977 = vmatpush1.msra.mxu0 0.0
  %2978 = vmatprep.subr.mxu0 0.0
  %2979 = vmatpush1.msra.mxu0 0.0
  %2980 = vmatprep.subr.mxu0 0.0
  %2981 = vmatpush1.msra.mxu0 0.0
  %2982 = vmatprep.subr.mxu0 0.0
  %2983 = vmatpush1.msra.mxu0 0.0
  %2984 = vmatprep.subr.mxu0 0.0
  %2985 = vmatpush1.msra.mxu0 0.0
  %2986 = vmatprep.subr.mxu0 0.0
  %2987 = vmatpush1.msra.mxu0 0.0
  %2988 = vmatprep.subr.mxu0 0.0
  %2989 = vmatpush1.msra.mxu0 0.0
  %2990 = vmatprep.subr.mxu0 0.0
  %2991 = vmatpush1.msra.mxu0 0.0
  %2992 = vmatprep.subr.mxu0 0.0
  %2993 = vmatpush1.msra.mxu0 0.0
  %2994 = vmatprep.subr.mxu0 0.0
  %2995 = vmatpush1.msra.mxu0 0.0
  %2996 = vmatprep.subr.mxu0 0.0
  %2997 = vmatpush1.msra.mxu0 0.0
  %2998 = vmatprep.mubr.f32.mxu0 0.0
  %2999 = vmatmul.mubr.f32.gmra.mrb[0].mxu0 %v982
  %v3000 = vpop.f32.mrb[0].mxu0
  %v3001 = vadd.f32 0.0, %v3000
  %v3002 = vpop.f32.mrb[0].mxu0
  %3003 = vmatprep.mubr.f32.mxu0 0.0
  %3004 = vmatmul.mubr.f32.gmra.mrb[0].mxu0 %v984
  %v3005 = vpop.f32.mrb[0].mxu0
  %v3006 = vadd.f32 0.0, %v3005
  %v3007 = vpop.f32.mrb[0].mxu0
  %3008 = vmatprep.mubr.f32.mxu0 0.0
  %3009 = vmatmul.mubr.f32.gmra.mrb[0].mxu0 %v986
  %v3010 = vpop.f32.mrb[0].mxu0
  %v3011 = vpop.f32.mrb[0].mxu0
  %3012 = vmatprep.mubr.f32.mxu0 0.0
  %3013 = vmatmul.mubr.f32.gmra.mrb[0].mxu0 %v978
  %v3014 = vpop.f32.mrb[0].mxu0
  %v3015 = vpop.f32.mrb[0].mxu0
  %3016 = vmatprep.mubr.f32.mxu0 0.0
  %3017 = vmatmul.mubr.f32.gmra.mrb[0].mxu0 %v978
  %v3018 = vpop.f32.mrb[0].mxu0
  %v3019 = vpop.f32.mrb[0].mxu0
  %3020 = vmatprep.mubr.f32.mxu0 0.0
  %3021 = vmatmul.mubr.f32.gmra.mrb[0].mxu0 %v978
  %v3022 = vpop.f32.mrb[0].mxu0
  %v3023 = vpop.f32.mrb[0].mxu0
  %3024 = vmatprep.mubr.f32.mxu0 0.0
  %3025 = vmatmul.mubr.f32.gmra.mrb[0].mxu0 %v988
  %v3026 = vpop.f32.mrb[0].mxu0
  %v3027 = vadd.f32 0.0, %v3026
  %v3028 = vpop.f32.mrb[0].mxu0
  %3029 = vmatprep.mubr.f32.mxu0 0.0
  %3030 = vmatmul.mubr.f32.gmra.mrb[0].mxu0 %v1969
  %v3031 = vpop.f32.mrb[0].mxu0
  %v3032 = vadd.f32 0.0, %v3031
  %v3033 = vpop.f32.mrb[0].mxu0
  %3034 = vmatprep.mubr.f32.mxu0 0.0
  %3035 = vmatmul.mubr.f32.gmra.mrb[0].mxu0 %v2932
  %v3036 = vpop.f32.mrb[0].mxu0
  %v3037 = vadd.f32 0.0, %v3036
  %v3038 = vpop.f32.mrb[0].mxu0
  %3039 = vdwg.mxu0
  %v3040 = vadd.f32 %v2920, %v3001
  %v3041 = vadd.f32 %v2921, %v3006
  %v3042 = vadd.f32 %v2922, %v3027
  %v3043 = vadd.f32 %v2923, %v3032
  %v3044 = vadd.f32 %v2924, %v3037
  %s3045 = scalar_lea.vmem %s2, 736
  %v3046 = vld [vmem:[%s3045] sm:$0xff]
  %v3047 = vld [vmem:[%s3045 + $0x8] sm:$0xff]
  %v3048 = vld [vmem:[%s3045 + $0x10] sm:$0xff]
  %v3049 = vld [vmem:[%s3045 + $0x18] sm:$0xff]
  %v3050 = vrot.slane %v147, 7
  %v3051 = vsel %vm138, %v2087, %v3050
  %v3052 = vsel %vm170, %v3051, 0
  %3054 = vmatprep.subr.mxu0 0.0
  %3055 = vmatpush1.msra.mxu0 %v3046
  %3056 = vmatprep.subr.mxu0 0.0
  %3057 = vmatpush1.msra.mxu0 %v3047
  %3058 = vmatprep.subr.mxu0 0.0
  %3059 = vmatpush1.msra.mxu0 %v3048
  %3060 = vmatprep.subr.mxu0 0.0
  %3061 = vmatpush1.msra.mxu0 %v3049
  %3062 = vmatprep.subr.mxu0 0.0
  %3063 = vmatpush1.msra.mxu0 0.0
  %3064 = vmatprep.subr.mxu0 0.0
  %3065 = vmatpush1.msra.mxu0 0.0
  %3066 = vmatprep.subr.mxu0 0.0
  %3067 = vmatpush1.msra.mxu0 0.0
  %3068 = vmatprep.subr.mxu0 0.0
  %3069 = vmatpush1.msra.mxu0 0.0
  %3070 = vmatprep.subr.mxu0 0.0
  %3071 = vmatpush1.msra.mxu0 0.0
  %3072 = vmatprep.subr.mxu0 0.0
  %3073 = vmatpush1.msra.mxu0 0.0
  %3074 = vmatprep.subr.mxu0 0.0
  %3075 = vmatpush1.msra.mxu0 0.0
  %3076 = vmatprep.subr.mxu0 0.0
  %3077 = vmatpush1.msra.mxu0 0.0
  %3078 = vmatprep.subr.mxu0 0.0
  %3079 = vmatpush1.msra.mxu0 0.0
  %3080 = vmatprep.subr.mxu0 0.0
  %3081 = vmatpush1.msra.mxu0 0.0
  %3082 = vmatprep.subr.mxu0 0.0
  %3083 = vmatpush1.msra.mxu0 0.0
  %3084 = vmatprep.subr.mxu0 0.0
  %3085 = vmatpush1.msra.mxu0 0.0
  %3086 = vmatprep.subr.mxu0 0.0
  %3087 = vmatpush1.msra.mxu0 0.0
  %3088 = vmatprep.subr.mxu0 0.0
  %3089 = vmatpush1.msra.mxu0 0.0
  %3090 = vmatprep.subr.mxu0 0.0
  %3091 = vmatpush1.msra.mxu0 0.0
  %3092 = vmatprep.subr.mxu0 0.0
  %3093 = vmatpush1.msra.mxu0 0.0
  %3094 = vmatprep.subr.mxu0 0.0
  %3095 = vmatpush1.msra.mxu0 0.0
  %3096 = vmatprep.subr.mxu0 0.0
  %3097 = vmatpush1.msra.mxu0 0.0
  %3098 = vmatprep.subr.mxu0 0.0
  %3099 = vmatpush1.msra.mxu0 0.0
  %3100 = vmatprep.subr.mxu0 0.0
  %3101 = vmatpush1.msra.mxu0 0.0
  %3102 = vmatprep.subr.mxu0 0.0
  %3103 = vmatpush1.msra.mxu0 0.0
  %3104 = vmatprep.subr.mxu0 0.0
  %3105 = vmatpush1.msra.mxu0 0.0
  %3106 = vmatprep.subr.mxu0 0.0
  %3107 = vmatpush1.msra.mxu0 0.0
  %3108 = vmatprep.subr.mxu0 0.0
  %3109 = vmatpush1.msra.mxu0 0.0
  %3110 = vmatprep.subr.mxu0 0.0
  %3111 = vmatpush1.msra.mxu0 0.0
  %3112 = vmatprep.subr.mxu0 0.0
  %3113 = vmatpush1.msra.mxu0 0.0
  %3114 = vmatprep.subr.mxu0 0.0
  %3115 = vmatpush1.msra.mxu0 0.0
  %3116 = vmatprep.subr.mxu0 0.0
  %3117 = vmatpush1.msra.mxu0 0.0
  %3118 = vmatprep.mubr.f32.mxu0 0.0
  %3119 = vmatmul.mubr.f32.gmra.mrb[0].mxu0 %v1121
  %v3120 = vpop.f32.mrb[0].mxu0
  %v3121 = vadd.f32 0.0, %v3120
  %v3122 = vpop.f32.mrb[0].mxu0
  %3123 = vmatprep.mubr.f32.mxu0 0.0
  %3124 = vmatmul.mubr.f32.gmra.mrb[0].mxu0 %v1123
  %v3125 = vpop.f32.mrb[0].mxu0
  %v3126 = vadd.f32 0.0, %v3125
  %v3127 = vpop.f32.mrb[0].mxu0
  %3128 = vmatprep.mubr.f32.mxu0 0.0
  %3129 = vmatmul.mubr.f32.gmra.mrb[0].mxu0 %v1125
  %v3130 = vpop.f32.mrb[0].mxu0
  %v3131 = vpop.f32.mrb[0].mxu0
  %3132 = vmatprep.mubr.f32.mxu0 0.0
  %3133 = vmatmul.mubr.f32.gmra.mrb[0].mxu0 %v1117
  %v3134 = vpop.f32.mrb[0].mxu0
  %v3135 = vpop.f32.mrb[0].mxu0
  %3136 = vmatprep.mubr.f32.mxu0 0.0
  %3137 = vmatmul.mubr.f32.gmra.mrb[0].mxu0 %v1117
  %v3138 = vpop.f32.mrb[0].mxu0
  %v3139 = vpop.f32.mrb[0].mxu0
  %3140 = vmatprep.mubr.f32.mxu0 0.0
  %3141 = vmatmul.mubr.f32.gmra.mrb[0].mxu0 %v1117
  %v3142 = vpop.f32.mrb[0].mxu0
  %v3143 = vpop.f32.mrb[0].mxu0
  %3144 = vmatprep.mubr.f32.mxu0 0.0
  %3145 = vmatmul.mubr.f32.gmra.mrb[0].mxu0 %v1127
  %v3146 = vpop.f32.mrb[0].mxu0
  %v3147 = vadd.f32 0.0, %v3146
  %v3148 = vpop.f32.mrb[0].mxu0
  %3149 = vmatprep.mubr.f32.mxu0 0.0
  %3150 = vmatmul.mubr.f32.gmra.mrb[0].mxu0 %v2089
  %v3151 = vpop.f32.mrb[0].mxu0
  %v3152 = vadd.f32 0.0, %v3151
  %v3153 = vpop.f32.mrb[0].mxu0
  %3154 = vmatprep.mubr.f32.mxu0 0.0
  %3155 = vmatmul.mubr.f32.gmra.mrb[0].mxu0 %v3052
  %v3156 = vpop.f32.mrb[0].mxu0
  %v3157 = vadd.f32 0.0, %v3156
  %v3158 = vpop.f32.mrb[0].mxu0
  %3159 = vdwg.mxu0
  %v3160 = vadd.f32 %v3040, %v3121
  %v3161 = vadd.f32 %v3041, %v3126
  %v3162 = vadd.f32 %v3042, %v3147
  %v3163 = vadd.f32 %v3043, %v3152
  %v3164 = vadd.f32 %v3044, %v3157
  %s3165 = scalar_lea.vmem %s2, 768
  %v3166 = vld [vmem:[%s3165] sm:$0xff]
  %v3167 = vld [vmem:[%s3165 + $0x8] sm:$0xff]
  %v3168 = vld [vmem:[%s3165 + $0x10] sm:$0xff]
  %v3169 = vld [vmem:[%s3165 + $0x18] sm:$0xff]
  %v3170 = vsel %vm170, %v147, 0
  %3172 = vmatprep.subr.mxu0 0.0
  %3173 = vmatpush1.msra.mxu0 %v3166
  %3174 = vmatprep.subr.mxu0 0.0
  %3175 = vmatpush1.msra.mxu0 %v3167
  %3176 = vmatprep.subr.mxu0 0.0
  %3177 = vmatpush1.msra.mxu0 %v3168
  %3178 = vmatprep.subr.mxu0 0.0
  %3179 = vmatpush1.msra.mxu0 %v3169
  %3180 = vmatprep.subr.mxu0 0.0
  %3181 = vmatpush1.msra.mxu0 0.0
  %3182 = vmatprep.subr.mxu0 0.0
  %3183 = vmatpush1.msra.mxu0 0.0
  %3184 = vmatprep.subr.mxu0 0.0
  %3185 = vmatpush1.msra.mxu0 0.0
  %3186 = vmatprep.subr.mxu0 0.0
  %3187 = vmatpush1.msra.mxu0 0.0
  %3188 = vmatprep.subr.mxu0 0.0
  %3189 = vmatpush1.msra.mxu0 0.0
  %3190 = vmatprep.subr.mxu0 0.0
  %3191 = vmatpush1.msra.mxu0 0.0
  %3192 = vmatprep.subr.mxu0 0.0
  %3193 = vmatpush1.msra.mxu0 0.0
  %3194 = vmatprep.subr.mxu0 0.0
  %3195 = vmatpush1.msra.mxu0 0.0
  %3196 = vmatprep.subr.mxu0 0.0
  %3197 = vmatpush1.msra.mxu0 0.0
  %3198 = vmatprep.subr.mxu0 0.0
  %3199 = vmatpush1.msra.mxu0 0.0
  %3200 = vmatprep.subr.mxu0 0.0
  %3201 = vmatpush1.msra.mxu0 0.0
  %3202 = vmatprep.subr.mxu0 0.0
  %3203 = vmatpush1.msra.mxu0 0.0
  %3204 = vmatprep.subr.mxu0 0.0
  %3205 = vmatpush1.msra.mxu0 0.0
  %3206 = vmatprep.subr.mxu0 0.0
  %3207 = vmatpush1.msra.mxu0 0.0
  %3208 = vmatprep.subr.mxu0 0.0
  %3209 = vmatpush1.msra.mxu0 0.0
  %3210 = vmatprep.subr.mxu0 0.0
  %3211 = vmatpush1.msra.mxu0 0.0
  %3212 = vmatprep.subr.mxu0 0.0
  %3213 = vmatpush1.msra.mxu0 0.0
  %3214 = vmatprep.subr.mxu0 0.0
  %3215 = vmatpush1.msra.mxu0 0.0
  %3216 = vmatprep.subr.mxu0 0.0
  %3217 = vmatpush1.msra.mxu0 0.0
  %3218 = vmatprep.subr.mxu0 0.0
  %3219 = vmatpush1.msra.mxu0 0.0
  %3220 = vmatprep.subr.mxu0 0.0
  %3221 = vmatpush1.msra.mxu0 0.0
  %3222 = vmatprep.subr.mxu0 0.0
  %3223 = vmatpush1.msra.mxu0 0.0
  %3224 = vmatprep.subr.mxu0 0.0
  %3225 = vmatpush1.msra.mxu0 0.0
  %3226 = vmatprep.subr.mxu0 0.0
  %3227 = vmatpush1.msra.mxu0 0.0
  %3228 = vmatprep.subr.mxu0 0.0
  %3229 = vmatpush1.msra.mxu0 0.0
  %3230 = vmatprep.subr.mxu0 0.0
  %3231 = vmatpush1.msra.mxu0 0.0
  %3232 = vmatprep.subr.mxu0 0.0
  %3233 = vmatpush1.msra.mxu0 0.0
  %3234 = vmatprep.subr.mxu0 0.0
  %3235 = vmatpush1.msra.mxu0 0.0
  %3236 = vmatprep.mubr.f32.mxu0 0.0
  %3237 = vmatmul.mubr.f32.gmra.mrb[0].mxu0 %v293
  %v3238 = vpop.f32.mrb[0].mxu0
  %v3239 = vadd.f32 0.0, %v3238
  %v3240 = vpop.f32.mrb[0].mxu0
  %3241 = vmatprep.mubr.f32.mxu0 0.0
  %3242 = vmatmul.mubr.f32.gmra.mrb[0].mxu0 %v295
  %v3243 = vpop.f32.mrb[0].mxu0
  %v3244 = vadd.f32 0.0, %v3243
  %v3245 = vpop.f32.mrb[0].mxu0
  %3246 = vmatprep.mubr.f32.mxu0 0.0
  %3247 = vmatmul.mubr.f32.gmra.mrb[0].mxu0 %v289
  %v3248 = vpop.f32.mrb[0].mxu0
  %v3249 = vpop.f32.mrb[0].mxu0
  %3250 = vmatprep.mubr.f32.mxu0 0.0
  %3251 = vmatmul.mubr.f32.gmra.mrb[0].mxu0 %v289
  %v3252 = vpop.f32.mrb[0].mxu0
  %v3253 = vpop.f32.mrb[0].mxu0
  %3254 = vmatprep.mubr.f32.mxu0 0.0
  %3255 = vmatmul.mubr.f32.gmra.mrb[0].mxu0 %v289
  %v3256 = vpop.f32.mrb[0].mxu0
  %v3257 = vpop.f32.mrb[0].mxu0
  %3258 = vmatprep.mubr.f32.mxu0 0.0
  %3259 = vmatmul.mubr.f32.gmra.mrb[0].mxu0 %v289
  %v3260 = vpop.f32.mrb[0].mxu0
  %v3261 = vpop.f32.mrb[0].mxu0
  %3262 = vmatprep.mubr.f32.mxu0 0.0
  %3263 = vmatmul.mubr.f32.gmra.mrb[0].mxu0 %v1245
  %v3264 = vpop.f32.mrb[0].mxu0
  %v3265 = vadd.f32 0.0, %v3264
  %v3266 = vpop.f32.mrb[0].mxu0
  %3267 = vmatprep.mubr.f32.mxu0 0.0
  %3268 = vmatmul.mubr.f32.gmra.mrb[0].mxu0 %v2207
  %v3269 = vpop.f32.mrb[0].mxu0
  %v3270 = vadd.f32 0.0, %v3269
  %v3271 = vpop.f32.mrb[0].mxu0
  %3272 = vmatprep.mubr.f32.mxu0 0.0
  %3273 = vmatmul.mubr.f32.gmra.mrb[0].mxu0 %v3170
  %v3274 = vpop.f32.mrb[0].mxu0
  %v3275 = vadd.f32 0.0, %v3274
  %v3276 = vpop.f32.mrb[0].mxu0
  %3277 = vdwg.mxu0
  %v3278 = vadd.f32 %v3160, %v3239
  %v3279 = vadd.f32 %v3161, %v3244
  %v3280 = vadd.f32 %v3162, %v3265
  %v3281 = vadd.f32 %v3163, %v3270
  %v3282 = vadd.f32 %v3164, %v3275
  %s3283 = scalar_lea.vmem %s2, 800
  %v3284 = vld [vmem:[%s3283] sm:$0xff]
  %v3285 = vld [vmem:[%s3283 + $0x8] sm:$0xff]
  %v3286 = vld [vmem:[%s3283 + $0x10] sm:$0xff]
  %v3287 = vld [vmem:[%s3283 + $0x18] sm:$0xff]
  %v3288 = vrot.slane %v147, 1
  %v3289 = vsel %vm160, %v2325, %v3288
  %v3290 = vsel %vm170, %v3289, 0
  %v3292 = vsel %vm170, %v3288, 0
  %3294 = vmatprep.subr.mxu0 0.0
  %3295 = vmatpush1.msra.mxu0 %v3284
  %3296 = vmatprep.subr.mxu0 0.0
  %3297 = vmatpush1.msra.mxu0 %v3285
  %3298 = vmatprep.subr.mxu0 0.0
  %3299 = vmatpush1.msra.mxu0 %v3286
  %3300 = vmatprep.subr.mxu0 0.0
  %3301 = vmatpush1.msra.mxu0 %v3287
  %3302 = vmatprep.subr.mxu0 0.0
  %3303 = vmatpush1.msra.mxu0 0.0
  %3304 = vmatprep.subr.mxu0 0.0
  %3305 = vmatpush1.msra.mxu0 0.0
  %3306 = vmatprep.subr.mxu0 0.0
  %3307 = vmatpush1.msra.mxu0 0.0
  %3308 = vmatprep.subr.mxu0 0.0
  %3309 = vmatpush1.msra.mxu0 0.0
  %3310 = vmatprep.subr.mxu0 0.0
  %3311 = vmatpush1.msra.mxu0 0.0
  %3312 = vmatprep.subr.mxu0 0.0
  %3313 = vmatpush1.msra.mxu0 0.0
  %3314 = vmatprep.subr.mxu0 0.0
  %3315 = vmatpush1.msra.mxu0 0.0
  %3316 = vmatprep.subr.mxu0 0.0
  %3317 = vmatpush1.msra.mxu0 0.0
  %3318 = vmatprep.subr.mxu0 0.0
  %3319 = vmatpush1.msra.mxu0 0.0
  %3320 = vmatprep.subr.mxu0 0.0
  %3321 = vmatpush1.msra.mxu0 0.0
  %3322 = vmatprep.subr.mxu0 0.0
  %3323 = vmatpush1.msra.mxu0 0.0
  %3324 = vmatprep.subr.mxu0 0.0
  %3325 = vmatpush1.msra.mxu0 0.0
  %3326 = vmatprep.subr.mxu0 0.0
  %3327 = vmatpush1.msra.mxu0 0.0
  %3328 = vmatprep.subr.mxu0 0.0
  %3329 = vmatpush1.msra.mxu0 0.0
  %3330 = vmatprep.subr.mxu0 0.0
  %3331 = vmatpush1.msra.mxu0 0.0
  %3332 = vmatprep.subr.mxu0 0.0
  %3333 = vmatpush1.msra.mxu0 0.0
  %3334 = vmatprep.subr.mxu0 0.0
  %3335 = vmatpush1.msra.mxu0 0.0
  %3336 = vmatprep.subr.mxu0 0.0
  %3337 = vmatpush1.msra.mxu0 0.0
  %3338 = vmatprep.subr.mxu0 0.0
  %3339 = vmatpush1.msra.mxu0 0.0
  %3340 = vmatprep.subr.mxu0 0.0
  %3341 = vmatpush1.msra.mxu0 0.0
  %3342 = vmatprep.subr.mxu0 0.0
  %3343 = vmatpush1.msra.mxu0 0.0
  %3344 = vmatprep.subr.mxu0 0.0
  %3345 = vmatpush1.msra.mxu0 0.0
  %3346 = vmatprep.subr.mxu0 0.0
  %3347 = vmatpush1.msra.mxu0 0.0
  %3348 = vmatprep.subr.mxu0 0.0
  %3349 = vmatpush1.msra.mxu0 0.0
  %3350 = vmatprep.subr.mxu0 0.0
  %3351 = vmatpush1.msra.mxu0 0.0
  %3352 = vmatprep.subr.mxu0 0.0
  %3353 = vmatpush1.msra.mxu0 0.0
  %3354 = vmatprep.subr.mxu0 0.0
  %3355 = vmatpush1.msra.mxu0 0.0
  %3356 = vmatprep.subr.mxu0 0.0
  %3357 = vmatpush1.msra.mxu0 0.0
  %3358 = vmatprep.mubr.f32.mxu0 0.0
  %3359 = vmatmul.mubr.f32.gmra.mrb[0].mxu0 %v177
  %v3360 = vpop.f32.mrb[0].mxu0
  %v3361 = vadd.f32 0.0, %v3360
  %v3362 = vpop.f32.mrb[0].mxu0
  %3363 = vmatprep.mubr.f32.mxu0 0.0
  %3364 = vmatmul.mubr.f32.gmra.mrb[0].mxu0 %v179
  %v3365 = vpop.f32.mrb[0].mxu0
  %v3366 = vadd.f32 0.0, %v3365
  %v3367 = vpop.f32.mrb[0].mxu0
  %3368 = vmatprep.mubr.f32.mxu0 0.0
  %3369 = vmatmul.mubr.f32.gmra.mrb[0].mxu0 %v171
  %v3370 = vpop.f32.mrb[0].mxu0
  %v3371 = vpop.f32.mrb[0].mxu0
  %3372 = vmatprep.mubr.f32.mxu0 0.0
  %3373 = vmatmul.mubr.f32.gmra.mrb[0].mxu0 %v171
  %v3374 = vpop.f32.mrb[0].mxu0
  %v3375 = vpop.f32.mrb[0].mxu0
  %3376 = vmatprep.mubr.f32.mxu0 0.0
  %3377 = vmatmul.mubr.f32.gmra.mrb[0].mxu0 %v171
  %v3378 = vpop.f32.mrb[0].mxu0
  %v3379 = vpop.f32.mrb[0].mxu0
  %3380 = vmatprep.mubr.f32.mxu0 0.0
  %3381 = vmatmul.mubr.f32.gmra.mrb[0].mxu0 %v1365
  %v3382 = vpop.f32.mrb[0].mxu0
  %v3383 = vpop.f32.mrb[0].mxu0
  %3384 = vmatprep.mubr.f32.mxu0 0.0
  %3385 = vmatmul.mubr.f32.gmra.mrb[0].mxu0 %v2327
  %v3386 = vpop.f32.mrb[0].mxu0
  %v3387 = vadd.f32 0.0, %v3386
  %v3388 = vpop.f32.mrb[0].mxu0
  %3389 = vmatprep.mubr.f32.mxu0 0.0
  %3390 = vmatmul.mubr.f32.gmra.mrb[0].mxu0 %v3290
  %v3391 = vpop.f32.mrb[0].mxu0
  %v3392 = vadd.f32 0.0, %v3391
  %v3393 = vpop.f32.mrb[0].mxu0
  %3394 = vmatprep.mubr.f32.mxu0 0.0
  %3395 = vmatmul.mubr.f32.gmra.mrb[0].mxu0 %v3292
  %v3396 = vpop.f32.mrb[0].mxu0
  %v3397 = vadd.f32 0.0, %v3396
  %v3398 = vpop.f32.mrb[0].mxu0
  %3399 = vdwg.mxu0
  %v3400 = vadd.f32 %v3278, %v3361
  %v3401 = vadd.f32 %v3279, %v3366
  %v3402 = vadd.f32 %v3280, %v3387
  %v3403 = vadd.f32 %v3281, %v3392
  %v3404 = vadd.f32 %v3282, %v3397
  %s3405 = scalar_lea.vmem %s2, 832
  %v3406 = vld [vmem:[%s3405] sm:$0xff]
  %v3407 = vld [vmem:[%s3405 + $0x8] sm:$0xff]
  %v3408 = vld [vmem:[%s3405 + $0x10] sm:$0xff]
  %v3409 = vld [vmem:[%s3405 + $0x18] sm:$0xff]
  %v3410 = vrot.slane %v147, 2
  %v3411 = vsel %vm408, %v2447, %v3410
  %v3412 = vsel %vm170, %v3411, 0
  %v3414 = vsel %vm170, %v3410, 0
  %3416 = vmatprep.subr.mxu0 0.0
  %3417 = vmatpush1.msra.mxu0 %v3406
  %3418 = vmatprep.subr.mxu0 0.0
  %3419 = vmatpush1.msra.mxu0 %v3407
  %3420 = vmatprep.subr.mxu0 0.0
  %3421 = vmatpush1.msra.mxu0 %v3408
  %3422 = vmatprep.subr.mxu0 0.0
  %3423 = vmatpush1.msra.mxu0 %v3409
  %3424 = vmatprep.subr.mxu0 0.0
  %3425 = vmatpush1.msra.mxu0 0.0
  %3426 = vmatprep.subr.mxu0 0.0
  %3427 = vmatpush1.msra.mxu0 0.0
  %3428 = vmatprep.subr.mxu0 0.0
  %3429 = vmatpush1.msra.mxu0 0.0
  %3430 = vmatprep.subr.mxu0 0.0
  %3431 = vmatpush1.msra.mxu0 0.0
  %3432 = vmatprep.subr.mxu0 0.0
  %3433 = vmatpush1.msra.mxu0 0.0
  %3434 = vmatprep.subr.mxu0 0.0
  %3435 = vmatpush1.msra.mxu0 0.0
  %3436 = vmatprep.subr.mxu0 0.0
  %3437 = vmatpush1.msra.mxu0 0.0
  %3438 = vmatprep.subr.mxu0 0.0
  %3439 = vmatpush1.msra.mxu0 0.0
  %3440 = vmatprep.subr.mxu0 0.0
  %3441 = vmatpush1.msra.mxu0 0.0
  %3442 = vmatprep.subr.mxu0 0.0
  %3443 = vmatpush1.msra.mxu0 0.0
  %3444 = vmatprep.subr.mxu0 0.0
  %3445 = vmatpush1.msra.mxu0 0.0
  %3446 = vmatprep.subr.mxu0 0.0
  %3447 = vmatpush1.msra.mxu0 0.0
  %3448 = vmatprep.subr.mxu0 0.0
  %3449 = vmatpush1.msra.mxu0 0.0
  %3450 = vmatprep.subr.mxu0 0.0
  %3451 = vmatpush1.msra.mxu0 0.0
  %3452 = vmatprep.subr.mxu0 0.0
  %3453 = vmatpush1.msra.mxu0 0.0
  %3454 = vmatprep.subr.mxu0 0.0
  %3455 = vmatpush1.msra.mxu0 0.0
  %3456 = vmatprep.subr.mxu0 0.0
  %3457 = vmatpush1.msra.mxu0 0.0
  %3458 = vmatprep.subr.mxu0 0.0
  %3459 = vmatpush1.msra.mxu0 0.0
  %3460 = vmatprep.subr.mxu0 0.0
  %3461 = vmatpush1.msra.mxu0 0.0
  %3462 = vmatprep.subr.mxu0 0.0
  %3463 = vmatpush1.msra.mxu0 0.0
  %3464 = vmatprep.subr.mxu0 0.0
  %3465 = vmatpush1.msra.mxu0 0.0
  %3466 = vmatprep.subr.mxu0 0.0
  %3467 = vmatpush1.msra.mxu0 0.0
  %3468 = vmatprep.subr.mxu0 0.0
  %3469 = vmatpush1.msra.mxu0 0.0
  %3470 = vmatprep.subr.mxu0 0.0
  %3471 = vmatpush1.msra.mxu0 0.0
  %3472 = vmatprep.subr.mxu0 0.0
  %3473 = vmatpush1.msra.mxu0 0.0
  %3474 = vmatprep.subr.mxu0 0.0
  %3475 = vmatpush1.msra.mxu0 0.0
  %3476 = vmatprep.subr.mxu0 0.0
  %3477 = vmatpush1.msra.mxu0 0.0
  %3478 = vmatprep.subr.mxu0 0.0
  %3479 = vmatpush1.msra.mxu0 0.0
  %3480 = vmatprep.mubr.f32.mxu0 0.0
  %3481 = vmatmul.mubr.f32.gmra.mrb[0].mxu0 %v424
  %v3482 = vpop.f32.mrb[0].mxu0
  %v3483 = vadd.f32 0.0, %v3482
  %v3484 = vpop.f32.mrb[0].mxu0
  %3485 = vmatprep.mubr.f32.mxu0 0.0
  %3486 = vmatmul.mubr.f32.gmra.mrb[0].mxu0 %v426
  %v3487 = vpop.f32.mrb[0].mxu0
  %v3488 = vadd.f32 0.0, %v3487
  %v3489 = vpop.f32.mrb[0].mxu0
  %3490 = vmatprep.mubr.f32.mxu0 0.0
  %3491 = vmatmul.mubr.f32.gmra.mrb[0].mxu0 %v418
  %v3492 = vpop.f32.mrb[0].mxu0
  %v3493 = vpop.f32.mrb[0].mxu0
  %3494 = vmatprep.mubr.f32.mxu0 0.0
  %3495 = vmatmul.mubr.f32.gmra.mrb[0].mxu0 %v418
  %v3496 = vpop.f32.mrb[0].mxu0
  %v3497 = vpop.f32.mrb[0].mxu0
  %3498 = vmatprep.mubr.f32.mxu0 0.0
  %3499 = vmatmul.mubr.f32.gmra.mrb[0].mxu0 %v418
  %v3500 = vpop.f32.mrb[0].mxu0
  %v3501 = vpop.f32.mrb[0].mxu0
  %3502 = vmatprep.mubr.f32.mxu0 0.0
  %3503 = vmatmul.mubr.f32.gmra.mrb[0].mxu0 %v1487
  %v3504 = vpop.f32.mrb[0].mxu0
  %v3505 = vpop.f32.mrb[0].mxu0
  %3506 = vmatprep.mubr.f32.mxu0 0.0
  %3507 = vmatmul.mubr.f32.gmra.mrb[0].mxu0 %v2449
  %v3508 = vpop.f32.mrb[0].mxu0
  %v3509 = vadd.f32 0.0, %v3508
  %v3510 = vpop.f32.mrb[0].mxu0
  %3511 = vmatprep.mubr.f32.mxu0 0.0
  %3512 = vmatmul.mubr.f32.gmra.mrb[0].mxu0 %v3412
  %v3513 = vpop.f32.mrb[0].mxu0
  %v3514 = vadd.f32 0.0, %v3513
  %v3515 = vpop.f32.mrb[0].mxu0
  %3516 = vmatprep.mubr.f32.mxu0 0.0
  %3517 = vmatmul.mubr.f32.gmra.mrb[0].mxu0 %v3414
  %v3518 = vpop.f32.mrb[0].mxu0
  %v3519 = vadd.f32 0.0, %v3518
  %v3520 = vpop.f32.mrb[0].mxu0
  %3521 = vdwg.mxu0
  %v3522 = vadd.f32 %v3400, %v3483
  %v3523 = vadd.f32 %v3401, %v3488
  %v3524 = vadd.f32 %v3402, %v3509
  %v3525 = vadd.f32 %v3403, %v3514
  %v3526 = vadd.f32 %v3404, %v3519
  %s3527 = scalar_lea.vmem %s2, 864
  %v3528 = vld [vmem:[%s3527] sm:$0xff]
  %v3529 = vld [vmem:[%s3527 + $0x8] sm:$0xff]
  %v3530 = vld [vmem:[%s3527 + $0x10] sm:$0xff]
  %v3531 = vld [vmem:[%s3527 + $0x18] sm:$0xff]
  %v3532 = vsel %vm547, %v2570, %v548
  %v3533 = vsel %vm170, %v3532, 0
  %3535 = vmatprep.subr.mxu0 0.0
  %3536 = vmatpush1.msra.mxu0 %v3528
  %3537 = vmatprep.subr.mxu0 0.0
  %3538 = vmatpush1.msra.mxu0 %v3529
  %3539 = vmatprep.subr.mxu0 0.0
  %3540 = vmatpush1.msra.mxu0 %v3530
  %3541 = vmatprep.subr.mxu0 0.0
  %3542 = vmatpush1.msra.mxu0 %v3531
  %3543 = vmatprep.subr.mxu0 0.0
  %3544 = vmatpush1.msra.mxu0 0.0
  %3545 = vmatprep.subr.mxu0 0.0
  %3546 = vmatpush1.msra.mxu0 0.0
  %3547 = vmatprep.subr.mxu0 0.0
  %3548 = vmatpush1.msra.mxu0 0.0
  %3549 = vmatprep.subr.mxu0 0.0
  %3550 = vmatpush1.msra.mxu0 0.0
  %3551 = vmatprep.subr.mxu0 0.0
  %3552 = vmatpush1.msra.mxu0 0.0
  %3553 = vmatprep.subr.mxu0 0.0
  %3554 = vmatpush1.msra.mxu0 0.0
  %3555 = vmatprep.subr.mxu0 0.0
  %3556 = vmatpush1.msra.mxu0 0.0
  %3557 = vmatprep.subr.mxu0 0.0
  %3558 = vmatpush1.msra.mxu0 0.0
  %3559 = vmatprep.subr.mxu0 0.0
  %3560 = vmatpush1.msra.mxu0 0.0
  %3561 = vmatprep.subr.mxu0 0.0
  %3562 = vmatpush1.msra.mxu0 0.0
  %3563 = vmatprep.subr.mxu0 0.0
  %3564 = vmatpush1.msra.mxu0 0.0
  %3565 = vmatprep.subr.mxu0 0.0
  %3566 = vmatpush1.msra.mxu0 0.0
  %3567 = vmatprep.subr.mxu0 0.0
  %3568 = vmatpush1.msra.mxu0 0.0
  %3569 = vmatprep.subr.mxu0 0.0
  %3570 = vmatpush1.msra.mxu0 0.0
  %3571 = vmatprep.subr.mxu0 0.0
  %3572 = vmatpush1.msra.mxu0 0.0
  %3573 = vmatprep.subr.mxu0 0.0
  %3574 = vmatpush1.msra.mxu0 0.0
  %3575 = vmatprep.subr.mxu0 0.0
  %3576 = vmatpush1.msra.mxu0 0.0
  %3577 = vmatprep.subr.mxu0 0.0
  %3578 = vmatpush1.msra.mxu0 0.0
  %3579 = vmatprep.subr.mxu0 0.0
  %3580 = vmatpush1.msra.mxu0 0.0
  %3581 = vmatprep.subr.mxu0 0.0
  %3582 = vmatpush1.msra.mxu0 0.0
  %3583 = vmatprep.subr.mxu0 0.0
  %3584 = vmatpush1.msra.mxu0 0.0
  %3585 = vmatprep.subr.mxu0 0.0
  %3586 = vmatpush1.msra.mxu0 0.0
  %3587 = vmatprep.subr.mxu0 0.0
  %3588 = vmatpush1.msra.mxu0 0.0
  %3589 = vmatprep.subr.mxu0 0.0
  %3590 = vmatpush1.msra.mxu0 0.0
  %3591 = vmatprep.subr.mxu0 0.0
  %3592 = vmatpush1.msra.mxu0 0.0
  %3593 = vmatprep.subr.mxu0 0.0
  %3594 = vmatpush1.msra.mxu0 0.0
  %3595 = vmatprep.subr.mxu0 0.0
  %3596 = vmatpush1.msra.mxu0 0.0
  %3597 = vmatprep.subr.mxu0 0.0
  %3598 = vmatpush1.msra.mxu0 0.0
  %3599 = vmatprep.mubr.f32.mxu0 0.0
  %3600 = vmatmul.mubr.f32.gmra.mrb[0].mxu0 %v565
  %v3601 = vpop.f32.mrb[0].mxu0
  %v3602 = vadd.f32 0.0, %v3601
  %v3603 = vpop.f32.mrb[0].mxu0
  %3604 = vmatprep.mubr.f32.mxu0 0.0
  %3605 = vmatmul.mubr.f32.gmra.mrb[0].mxu0 %v567
  %v3606 = vpop.f32.mrb[0].mxu0
  %v3607 = vadd.f32 0.0, %v3606
  %v3608 = vpop.f32.mrb[0].mxu0
  %3609 = vmatprep.mubr.f32.mxu0 0.0
  %3610 = vmatmul.mubr.f32.gmra.mrb[0].mxu0 %v559
  %v3611 = vpop.f32.mrb[0].mxu0
  %v3612 = vpop.f32.mrb[0].mxu0
  %3613 = vmatprep.mubr.f32.mxu0 0.0
  %3614 = vmatmul.mubr.f32.gmra.mrb[0].mxu0 %v559
  %v3615 = vpop.f32.mrb[0].mxu0
  %v3616 = vpop.f32.mrb[0].mxu0
  %3617 = vmatprep.mubr.f32.mxu0 0.0
  %3618 = vmatmul.mubr.f32.gmra.mrb[0].mxu0 %v559
  %v3619 = vpop.f32.mrb[0].mxu0
  %v3620 = vpop.f32.mrb[0].mxu0
  %3621 = vmatprep.mubr.f32.mxu0 0.0
  %3622 = vmatmul.mubr.f32.gmra.mrb[0].mxu0 %v569
  %v3623 = vpop.f32.mrb[0].mxu0
  %v3624 = vpop.f32.mrb[0].mxu0
  %3625 = vmatprep.mubr.f32.mxu0 0.0
  %3626 = vmatmul.mubr.f32.gmra.mrb[0].mxu0 %v1609
  %v3627 = vpop.f32.mrb[0].mxu0
  %v3628 = vadd.f32 0.0, %v3627
  %v3629 = vpop.f32.mrb[0].mxu0
  %3630 = vmatprep.mubr.f32.mxu0 0.0
  %3631 = vmatmul.mubr.f32.gmra.mrb[0].mxu0 %v2572
  %v3632 = vpop.f32.mrb[0].mxu0
  %v3633 = vadd.f32 0.0, %v3632
  %v3634 = vpop.f32.mrb[0].mxu0
  %3635 = vmatprep.mubr.f32.mxu0 0.0
  %3636 = vmatmul.mubr.f32.gmra.mrb[0].mxu0 %v3533
  %v3637 = vpop.f32.mrb[0].mxu0
  %v3638 = vadd.f32 0.0, %v3637
  %v3639 = vpop.f32.mrb[0].mxu0
  %3640 = vdwg.mxu0
  %v3641 = vadd.f32 %v3522, %v3602
  %v3642 = vadd.f32 %v3523, %v3607
  %v3643 = vadd.f32 %v3524, %v3628
  %v3644 = vadd.f32 %v3525, %v3633
  %v3645 = vadd.f32 %v3526, %v3638
  %s3646 = scalar_lea.vmem %s2, 896
  %v3647 = vld [vmem:[%s3646] sm:$0xff]
  %v3648 = vld [vmem:[%s3646 + $0x8] sm:$0xff]
  %v3649 = vld [vmem:[%s3646 + $0x10] sm:$0xff]
  %v3650 = vld [vmem:[%s3646 + $0x18] sm:$0xff]
  %v3651 = vsel %vm687, %v2690, %v688
  %v3652 = vsel %vm170, %v3651, 0
  %3654 = vmatprep.subr.mxu0 0.0
  %3655 = vmatpush1.msra.mxu0 %v3647
  %3656 = vmatprep.subr.mxu0 0.0
  %3657 = vmatpush1.msra.mxu0 %v3648
  %3658 = vmatprep.subr.mxu0 0.0
  %3659 = vmatpush1.msra.mxu0 %v3649
  %3660 = vmatprep.subr.mxu0 0.0
  %3661 = vmatpush1.msra.mxu0 %v3650
  %3662 = vmatprep.subr.mxu0 0.0
  %3663 = vmatpush1.msra.mxu0 0.0
  %3664 = vmatprep.subr.mxu0 0.0
  %3665 = vmatpush1.msra.mxu0 0.0
  %3666 = vmatprep.subr.mxu0 0.0
  %3667 = vmatpush1.msra.mxu0 0.0
  %3668 = vmatprep.subr.mxu0 0.0
  %3669 = vmatpush1.msra.mxu0 0.0
  %3670 = vmatprep.subr.mxu0 0.0
  %3671 = vmatpush1.msra.mxu0 0.0
  %3672 = vmatprep.subr.mxu0 0.0
  %3673 = vmatpush1.msra.mxu0 0.0
  %3674 = vmatprep.subr.mxu0 0.0
  %3675 = vmatpush1.msra.mxu0 0.0
  %3676 = vmatprep.subr.mxu0 0.0
  %3677 = vmatpush1.msra.mxu0 0.0
  %3678 = vmatprep.subr.mxu0 0.0
  %3679 = vmatpush1.msra.mxu0 0.0
  %3680 = vmatprep.subr.mxu0 0.0
  %3681 = vmatpush1.msra.mxu0 0.0
  %3682 = vmatprep.subr.mxu0 0.0
  %3683 = vmatpush1.msra.mxu0 0.0
  %3684 = vmatprep.subr.mxu0 0.0
  %3685 = vmatpush1.msra.mxu0 0.0
  %3686 = vmatprep.subr.mxu0 0.0
  %3687 = vmatpush1.msra.mxu0 0.0
  %3688 = vmatprep.subr.mxu0 0.0
  %3689 = vmatpush1.msra.mxu0 0.0
  %3690 = vmatprep.subr.mxu0 0.0
  %3691 = vmatpush1.msra.mxu0 0.0
  %3692 = vmatprep.subr.mxu0 0.0
  %3693 = vmatpush1.msra.mxu0 0.0
  %3694 = vmatprep.subr.mxu0 0.0
  %3695 = vmatpush1.msra.mxu0 0.0
  %3696 = vmatprep.subr.mxu0 0.0
  %3697 = vmatpush1.msra.mxu0 0.0
  %3698 = vmatprep.subr.mxu0 0.0
  %3699 = vmatpush1.msra.mxu0 0.0
  %3700 = vmatprep.subr.mxu0 0.0
  %3701 = vmatpush1.msra.mxu0 0.0
  %3702 = vmatprep.subr.mxu0 0.0
  %3703 = vmatpush1.msra.mxu0 0.0
  %3704 = vmatprep.subr.mxu0 0.0
  %3705 = vmatpush1.msra.mxu0 0.0
  %3706 = vmatprep.subr.mxu0 0.0
  %3707 = vmatpush1.msra.mxu0 0.0
  %3708 = vmatprep.subr.mxu0 0.0
  %3709 = vmatpush1.msra.mxu0 0.0
  %3710 = vmatprep.subr.mxu0 0.0
  %3711 = vmatpush1.msra.mxu0 0.0
  %3712 = vmatprep.subr.mxu0 0.0
  %3713 = vmatpush1.msra.mxu0 0.0
  %3714 = vmatprep.subr.mxu0 0.0
  %3715 = vmatpush1.msra.mxu0 0.0
  %3716 = vmatprep.subr.mxu0 0.0
  %3717 = vmatpush1.msra.mxu0 0.0
  %3718 = vmatprep.mubr.f32.mxu0 0.0
  %3719 = vmatmul.mubr.f32.gmra.mrb[0].mxu0 %v705
  %v3720 = vpop.f32.mrb[0].mxu0
  %v3721 = vadd.f32 0.0, %v3720
  %v3722 = vpop.f32.mrb[0].mxu0
  %3723 = vmatprep.mubr.f32.mxu0 0.0
  %3724 = vmatmul.mubr.f32.gmra.mrb[0].mxu0 %v707
  %v3725 = vpop.f32.mrb[0].mxu0
  %v3726 = vadd.f32 0.0, %v3725
  %v3727 = vpop.f32.mrb[0].mxu0
  %3728 = vmatprep.mubr.f32.mxu0 0.0
  %3729 = vmatmul.mubr.f32.gmra.mrb[0].mxu0 %v699
  %v3730 = vpop.f32.mrb[0].mxu0
  %v3731 = vpop.f32.mrb[0].mxu0
  %3732 = vmatprep.mubr.f32.mxu0 0.0
  %3733 = vmatmul.mubr.f32.gmra.mrb[0].mxu0 %v699
  %v3734 = vpop.f32.mrb[0].mxu0
  %v3735 = vpop.f32.mrb[0].mxu0
  %3736 = vmatprep.mubr.f32.mxu0 0.0
  %3737 = vmatmul.mubr.f32.gmra.mrb[0].mxu0 %v699
  %v3738 = vpop.f32.mrb[0].mxu0
  %v3739 = vpop.f32.mrb[0].mxu0
  %3740 = vmatprep.mubr.f32.mxu0 0.0
  %3741 = vmatmul.mubr.f32.gmra.mrb[0].mxu0 %v709
  %v3742 = vpop.f32.mrb[0].mxu0
  %v3743 = vpop.f32.mrb[0].mxu0
  %3744 = vmatprep.mubr.f32.mxu0 0.0
  %3745 = vmatmul.mubr.f32.gmra.mrb[0].mxu0 %v1729
  %v3746 = vpop.f32.mrb[0].mxu0
  %v3747 = vadd.f32 0.0, %v3746
  %v3748 = vpop.f32.mrb[0].mxu0
  %3749 = vmatprep.mubr.f32.mxu0 0.0
  %3750 = vmatmul.mubr.f32.gmra.mrb[0].mxu0 %v2692
  %v3751 = vpop.f32.mrb[0].mxu0
  %v3752 = vadd.f32 0.0, %v3751
  %v3753 = vpop.f32.mrb[0].mxu0
  %3754 = vmatprep.mubr.f32.mxu0 0.0
  %3755 = vmatmul.mubr.f32.gmra.mrb[0].mxu0 %v3652
  %v3756 = vpop.f32.mrb[0].mxu0
  %v3757 = vadd.f32 0.0, %v3756
  %v3758 = vpop.f32.mrb[0].mxu0
  %3759 = vdwg.mxu0
  %v3760 = vadd.f32 %v3641, %v3721
  %v3761 = vadd.f32 %v3642, %v3726
  %v3762 = vadd.f32 %v3643, %v3747
  %v3763 = vadd.f32 %v3644, %v3752
  %v3764 = vadd.f32 %v3645, %v3757
  %s3765 = scalar_lea.vmem %s2, 928
  %v3766 = vld [vmem:[%s3765] sm:$0xff]
  %v3767 = vld [vmem:[%s3765 + $0x8] sm:$0xff]
  %v3768 = vld [vmem:[%s3765 + $0x10] sm:$0xff]
  %v3769 = vld [vmem:[%s3765 + $0x18] sm:$0xff]
  %v3770 = vsel %vm130, %v2810, %v827
  %v3771 = vsel %vm170, %v3770, 0
  %3773 = vmatprep.subr.mxu0 0.0
  %3774 = vmatpush1.msra.mxu0 %v3766
  %3775 = vmatprep.subr.mxu0 0.0
  %3776 = vmatpush1.msra.mxu0 %v3767
  %3777 = vmatprep.subr.mxu0 0.0
  %3778 = vmatpush1.msra.mxu0 %v3768
  %3779 = vmatprep.subr.mxu0 0.0
  %3780 = vmatpush1.msra.mxu0 %v3769
  %3781 = vmatprep.subr.mxu0 0.0
  %3782 = vmatpush1.msra.mxu0 0.0
  %3783 = vmatprep.subr.mxu0 0.0
  %3784 = vmatpush1.msra.mxu0 0.0
  %3785 = vmatprep.subr.mxu0 0.0
  %3786 = vmatpush1.msra.mxu0 0.0
  %3787 = vmatprep.subr.mxu0 0.0
  %3788 = vmatpush1.msra.mxu0 0.0
  %3789 = vmatprep.subr.mxu0 0.0
  %3790 = vmatpush1.msra.mxu0 0.0
  %3791 = vmatprep.subr.mxu0 0.0
  %3792 = vmatpush1.msra.mxu0 0.0
  %3793 = vmatprep.subr.mxu0 0.0
  %3794 = vmatpush1.msra.mxu0 0.0
  %3795 = vmatprep.subr.mxu0 0.0
  %3796 = vmatpush1.msra.mxu0 0.0
  %3797 = vmatprep.subr.mxu0 0.0
  %3798 = vmatpush1.msra.mxu0 0.0
  %3799 = vmatprep.subr.mxu0 0.0
  %3800 = vmatpush1.msra.mxu0 0.0
  %3801 = vmatprep.subr.mxu0 0.0
  %3802 = vmatpush1.msra.mxu0 0.0
  %3803 = vmatprep.subr.mxu0 0.0
  %3804 = vmatpush1.msra.mxu0 0.0
  %3805 = vmatprep.subr.mxu0 0.0
  %3806 = vmatpush1.msra.mxu0 0.0
  %3807 = vmatprep.subr.mxu0 0.0
  %3808 = vmatpush1.msra.mxu0 0.0
  %3809 = vmatprep.subr.mxu0 0.0
  %3810 = vmatpush1.msra.mxu0 0.0
  %3811 = vmatprep.subr.mxu0 0.0
  %3812 = vmatpush1.msra.mxu0 0.0
  %3813 = vmatprep.subr.mxu0 0.0
  %3814 = vmatpush1.msra.mxu0 0.0
  %3815 = vmatprep.subr.mxu0 0.0
  %3816 = vmatpush1.msra.mxu0 0.0
  %3817 = vmatprep.subr.mxu0 0.0
  %3818 = vmatpush1.msra.mxu0 0.0
  %3819 = vmatprep.subr.mxu0 0.0
  %3820 = vmatpush1.msra.mxu0 0.0
  %3821 = vmatprep.subr.mxu0 0.0
  %3822 = vmatpush1.msra.mxu0 0.0
  %3823 = vmatprep.subr.mxu0 0.0
  %3824 = vmatpush1.msra.mxu0 0.0
  %3825 = vmatprep.subr.mxu0 0.0
  %3826 = vmatpush1.msra.mxu0 0.0
  %3827 = vmatprep.subr.mxu0 0.0
  %3828 = vmatpush1.msra.mxu0 0.0
  %3829 = vmatprep.subr.mxu0 0.0
  %3830 = vmatpush1.msra.mxu0 0.0
  %3831 = vmatprep.subr.mxu0 0.0
  %3832 = vmatpush1.msra.mxu0 0.0
  %3833 = vmatprep.subr.mxu0 0.0
  %3834 = vmatpush1.msra.mxu0 0.0
  %3835 = vmatprep.subr.mxu0 0.0
  %3836 = vmatpush1.msra.mxu0 0.0
  %3837 = vmatprep.mubr.f32.mxu0 0.0
  %3838 = vmatmul.mubr.f32.gmra.mrb[0].mxu0 %v844
  %v3839 = vpop.f32.mrb[0].mxu0
  %v3840 = vadd.f32 0.0, %v3839
  %v3841 = vpop.f32.mrb[0].mxu0
  %3842 = vmatprep.mubr.f32.mxu0 0.0
  %3843 = vmatmul.mubr.f32.gmra.mrb[0].mxu0 %v846
  %v3844 = vpop.f32.mrb[0].mxu0
  %v3845 = vadd.f32 0.0, %v3844
  %v3846 = vpop.f32.mrb[0].mxu0
  %3847 = vmatprep.mubr.f32.mxu0 0.0
  %3848 = vmatmul.mubr.f32.gmra.mrb[0].mxu0 %v838
  %v3849 = vpop.f32.mrb[0].mxu0
  %v3850 = vpop.f32.mrb[0].mxu0
  %3851 = vmatprep.mubr.f32.mxu0 0.0
  %3852 = vmatmul.mubr.f32.gmra.mrb[0].mxu0 %v838
  %v3853 = vpop.f32.mrb[0].mxu0
  %v3854 = vpop.f32.mrb[0].mxu0
  %3855 = vmatprep.mubr.f32.mxu0 0.0
  %3856 = vmatmul.mubr.f32.gmra.mrb[0].mxu0 %v838
  %v3857 = vpop.f32.mrb[0].mxu0
  %v3858 = vpop.f32.mrb[0].mxu0
  %3859 = vmatprep.mubr.f32.mxu0 0.0
  %3860 = vmatmul.mubr.f32.gmra.mrb[0].mxu0 %v848
  %v3861 = vpop.f32.mrb[0].mxu0
  %v3862 = vpop.f32.mrb[0].mxu0
  %3863 = vmatprep.mubr.f32.mxu0 0.0
  %3864 = vmatmul.mubr.f32.gmra.mrb[0].mxu0 %v1849
  %v3865 = vpop.f32.mrb[0].mxu0
  %v3866 = vadd.f32 0.0, %v3865
  %v3867 = vpop.f32.mrb[0].mxu0
  %3868 = vmatprep.mubr.f32.mxu0 0.0
  %3869 = vmatmul.mubr.f32.gmra.mrb[0].mxu0 %v2812
  %v3870 = vpop.f32.mrb[0].mxu0
  %v3871 = vadd.f32 0.0, %v3870
  %v3872 = vpop.f32.mrb[0].mxu0
  %3873 = vmatprep.mubr.f32.mxu0 0.0
  %3874 = vmatmul.mubr.f32.gmra.mrb[0].mxu0 %v3771
  %v3875 = vpop.f32.mrb[0].mxu0
  %v3876 = vadd.f32 0.0, %v3875
  %v3877 = vpop.f32.mrb[0].mxu0
  %3878 = vdwg.mxu0
  %v3879 = vadd.f32 %v3760, %v3840
  %v3880 = vadd.f32 %v3761, %v3845
  %v3881 = vadd.f32 %v3762, %v3866
  %v3882 = vadd.f32 %v3763, %v3871
  %v3883 = vadd.f32 %v3764, %v3876
  %s3884 = scalar_lea.vmem %s2, 960
  %v3885 = vld [vmem:[%s3884] sm:$0xff]
  %v3886 = vld [vmem:[%s3884 + $0x8] sm:$0xff]
  %v3887 = vld [vmem:[%s3884 + $0x10] sm:$0xff]
  %v3888 = vld [vmem:[%s3884 + $0x18] sm:$0xff]
  %v3889 = vsel %vm966, %v2930, %v967
  %v3890 = vsel %vm170, %v3889, 0
  %3892 = vmatprep.subr.mxu0 0.0
  %3893 = vmatpush1.msra.mxu0 %v3885
  %3894 = vmatprep.subr.mxu0 0.0
  %3895 = vmatpush1.msra.mxu0 %v3886
  %3896 = vmatprep.subr.mxu0 0.0
  %3897 = vmatpush1.msra.mxu0 %v3887
  %3898 = vmatprep.subr.mxu0 0.0
  %3899 = vmatpush1.msra.mxu0 %v3888
  %3900 = vmatprep.subr.mxu0 0.0
  %3901 = vmatpush1.msra.mxu0 0.0
  %3902 = vmatprep.subr.mxu0 0.0
  %3903 = vmatpush1.msra.mxu0 0.0
  %3904 = vmatprep.subr.mxu0 0.0
  %3905 = vmatpush1.msra.mxu0 0.0
  %3906 = vmatprep.subr.mxu0 0.0
  %3907 = vmatpush1.msra.mxu0 0.0
  %3908 = vmatprep.subr.mxu0 0.0
  %3909 = vmatpush1.msra.mxu0 0.0
  %3910 = vmatprep.subr.mxu0 0.0
  %3911 = vmatpush1.msra.mxu0 0.0
  %3912 = vmatprep.subr.mxu0 0.0
  %3913 = vmatpush1.msra.mxu0 0.0
  %3914 = vmatprep.subr.mxu0 0.0
  %3915 = vmatpush1.msra.mxu0 0.0
  %3916 = vmatprep.subr.mxu0 0.0
  %3917 = vmatpush1.msra.mxu0 0.0
  %3918 = vmatprep.subr.mxu0 0.0
  %3919 = vmatpush1.msra.mxu0 0.0
  %3920 = vmatprep.subr.mxu0 0.0
  %3921 = vmatpush1.msra.mxu0 0.0
  %3922 = vmatprep.subr.mxu0 0.0
  %3923 = vmatpush1.msra.mxu0 0.0
  %3924 = vmatprep.subr.mxu0 0.0
  %3925 = vmatpush1.msra.mxu0 0.0
  %3926 = vmatprep.subr.mxu0 0.0
  %3927 = vmatpush1.msra.mxu0 0.0
  %3928 = vmatprep.subr.mxu0 0.0
  %3929 = vmatpush1.msra.mxu0 0.0
  %3930 = vmatprep.subr.mxu0 0.0
  %3931 = vmatpush1.msra.mxu0 0.0
  %3932 = vmatprep.subr.mxu0 0.0
  %3933 = vmatpush1.msra.mxu0 0.0
  %3934 = vmatprep.subr.mxu0 0.0
  %3935 = vmatpush1.msra.mxu0 0.0
  %3936 = vmatprep.subr.mxu0 0.0
  %3937 = vmatpush1.msra.mxu0 0.0
  %3938 = vmatprep.subr.mxu0 0.0
  %3939 = vmatpush1.msra.mxu0 0.0
  %3940 = vmatprep.subr.mxu0 0.0
  %3941 = vmatpush1.msra.mxu0 0.0
  %3942 = vmatprep.subr.mxu0 0.0
  %3943 = vmatpush1.msra.mxu0 0.0
  %3944 = vmatprep.subr.mxu0 0.0
  %3945 = vmatpush1.msra.mxu0 0.0
  %3946 = vmatprep.subr.mxu0 0.0
  %3947 = vmatpush1.msra.mxu0 0.0
  %3948 = vmatprep.subr.mxu0 0.0
  %3949 = vmatpush1.msra.mxu0 0.0
  %3950 = vmatprep.subr.mxu0 0.0
  %3951 = vmatpush1.msra.mxu0 0.0
  %3952 = vmatprep.subr.mxu0 0.0
  %3953 = vmatpush1.msra.mxu0 0.0
  %3954 = vmatprep.subr.mxu0 0.0
  %3955 = vmatpush1.msra.mxu0 0.0
  %3956 = vmatprep.mubr.f32.mxu0 0.0
  %3957 = vmatmul.mubr.f32.gmra.mrb[0].mxu0 %v984
  %v3958 = vpop.f32.mrb[0].mxu0
  %v3959 = vadd.f32 0.0, %v3958
  %v3960 = vpop.f32.mrb[0].mxu0
  %3961 = vmatprep.mubr.f32.mxu0 0.0
  %3962 = vmatmul.mubr.f32.gmra.mrb[0].mxu0 %v986
  %v3963 = vpop.f32.mrb[0].mxu0
  %v3964 = vadd.f32 0.0, %v3963
  %v3965 = vpop.f32.mrb[0].mxu0
  %3966 = vmatprep.mubr.f32.mxu0 0.0
  %3967 = vmatmul.mubr.f32.gmra.mrb[0].mxu0 %v978
  %v3968 = vpop.f32.mrb[0].mxu0
  %v3969 = vpop.f32.mrb[0].mxu0
  %3970 = vmatprep.mubr.f32.mxu0 0.0
  %3971 = vmatmul.mubr.f32.gmra.mrb[0].mxu0 %v978
  %v3972 = vpop.f32.mrb[0].mxu0
  %v3973 = vpop.f32.mrb[0].mxu0
  %3974 = vmatprep.mubr.f32.mxu0 0.0
  %3975 = vmatmul.mubr.f32.gmra.mrb[0].mxu0 %v978
  %v3976 = vpop.f32.mrb[0].mxu0
  %v3977 = vpop.f32.mrb[0].mxu0
  %3978 = vmatprep.mubr.f32.mxu0 0.0
  %3979 = vmatmul.mubr.f32.gmra.mrb[0].mxu0 %v988
  %v3980 = vpop.f32.mrb[0].mxu0
  %v3981 = vpop.f32.mrb[0].mxu0
  %3982 = vmatprep.mubr.f32.mxu0 0.0
  %3983 = vmatmul.mubr.f32.gmra.mrb[0].mxu0 %v1969
  %v3984 = vpop.f32.mrb[0].mxu0
  %v3985 = vadd.f32 0.0, %v3984
  %v3986 = vpop.f32.mrb[0].mxu0
  %3987 = vmatprep.mubr.f32.mxu0 0.0
  %3988 = vmatmul.mubr.f32.gmra.mrb[0].mxu0 %v2932
  %v3989 = vpop.f32.mrb[0].mxu0
  %v3990 = vadd.f32 0.0, %v3989
  %v3991 = vpop.f32.mrb[0].mxu0
  %3992 = vmatprep.mubr.f32.mxu0 0.0
  %3993 = vmatmul.mubr.f32.gmra.mrb[0].mxu0 %v3890
  %v3994 = vpop.f32.mrb[0].mxu0
  %v3995 = vadd.f32 0.0, %v3994
  %v3996 = vpop.f32.mrb[0].mxu0
  %3997 = vdwg.mxu0
  %v3998 = vadd.f32 %v3879, %v3959
  %v3999 = vadd.f32 %v3880, %v3964
  %v4000 = vadd.f32 %v3881, %v3985
  %v4001 = vadd.f32 %v3882, %v3990
  %v4002 = vadd.f32 %v3883, %v3995
  %s4003 = scalar_lea.vmem %s2, 992
  %v4004 = vld [vmem:[%s4003] sm:$0xff]
  %v4005 = vld [vmem:[%s4003 + $0x8] sm:$0xff]
  %v4006 = vld [vmem:[%s4003 + $0x10] sm:$0xff]
  %v4007 = vld [vmem:[%s4003 + $0x18] sm:$0xff]
  %v4008 = vsel %vm138, %v3050, %v1106
  %v4009 = vsel %vm170, %v4008, 0
  %4011 = vmatprep.subr.mxu0 0.0
  %4012 = vmatpush1.msra.mxu0 %v4004
  %4013 = vmatprep.subr.mxu0 0.0
  %4014 = vmatpush1.msra.mxu0 %v4005
  %4015 = vmatprep.subr.mxu0 0.0
  %4016 = vmatpush1.msra.mxu0 %v4006
  %4017 = vmatprep.subr.mxu0 0.0
  %4018 = vmatpush1.msra.mxu0 %v4007
  %4019 = vmatprep.subr.mxu0 0.0
  %4020 = vmatpush1.msra.mxu0 0.0
  %4021 = vmatprep.subr.mxu0 0.0
  %4022 = vmatpush1.msra.mxu0 0.0
  %4023 = vmatprep.subr.mxu0 0.0
  %4024 = vmatpush1.msra.mxu0 0.0
  %4025 = vmatprep.subr.mxu0 0.0
  %4026 = vmatpush1.msra.mxu0 0.0
  %4027 = vmatprep.subr.mxu0 0.0
  %4028 = vmatpush1.msra.mxu0 0.0
  %4029 = vmatprep.subr.mxu0 0.0
  %4030 = vmatpush1.msra.mxu0 0.0
  %4031 = vmatprep.subr.mxu0 0.0
  %4032 = vmatpush1.msra.mxu0 0.0
  %4033 = vmatprep.subr.mxu0 0.0
  %4034 = vmatpush1.msra.mxu0 0.0
  %4035 = vmatprep.subr.mxu0 0.0
  %4036 = vmatpush1.msra.mxu0 0.0
  %4037 = vmatprep.subr.mxu0 0.0
  %4038 = vmatpush1.msra.mxu0 0.0
  %4039 = vmatprep.subr.mxu0 0.0
  %4040 = vmatpush1.msra.mxu0 0.0
  %4041 = vmatprep.subr.mxu0 0.0
  %4042 = vmatpush1.msra.mxu0 0.0
  %4043 = vmatprep.subr.mxu0 0.0
  %4044 = vmatpush1.msra.mxu0 0.0
  %4045 = vmatprep.subr.mxu0 0.0
  %4046 = vmatpush1.msra.mxu0 0.0
  %4047 = vmatprep.subr.mxu0 0.0
  %4048 = vmatpush1.msra.mxu0 0.0
  %4049 = vmatprep.subr.mxu0 0.0
  %4050 = vmatpush1.msra.mxu0 0.0
  %4051 = vmatprep.subr.mxu0 0.0
  %4052 = vmatpush1.msra.mxu0 0.0
  %4053 = vmatprep.subr.mxu0 0.0
  %4054 = vmatpush1.msra.mxu0 0.0
  %4055 = vmatprep.subr.mxu0 0.0
  %4056 = vmatpush1.msra.mxu0 0.0
  %4057 = vmatprep.subr.mxu0 0.0
  %4058 = vmatpush1.msra.mxu0 0.0
  %4059 = vmatprep.subr.mxu0 0.0
  %4060 = vmatpush1.msra.mxu0 0.0
  %4061 = vmatprep.subr.mxu0 0.0
  %4062 = vmatpush1.msra.mxu0 0.0
  %4063 = vmatprep.subr.mxu0 0.0
  %4064 = vmatpush1.msra.mxu0 0.0
  %4065 = vmatprep.subr.mxu0 0.0
  %4066 = vmatpush1.msra.mxu0 0.0
  %4067 = vmatprep.subr.mxu0 0.0
  %4068 = vmatpush1.msra.mxu0 0.0
  %4069 = vmatprep.subr.mxu0 0.0
  %4070 = vmatpush1.msra.mxu0 0.0
  %4071 = vmatprep.subr.mxu0 0.0
  %4072 = vmatpush1.msra.mxu0 0.0
  %4073 = vmatprep.subr.mxu0 0.0
  %4074 = vmatpush1.msra.mxu0 0.0
  %4075 = vmatprep.mubr.f32.mxu0 0.0
  %4076 = vmatmul.mubr.f32.gmra.mrb[0].mxu0 %v1123
  %v4077 = vpop.f32.mrb[0].mxu0
  %v4078 = vadd.f32 0.0, %v4077
  %v4079 = vpop.f32.mrb[0].mxu0
  %4080 = vmatprep.mubr.f32.mxu0 0.0
  %4081 = vmatmul.mubr.f32.gmra.mrb[0].mxu0 %v1125
  %v4082 = vpop.f32.mrb[0].mxu0
  %v4083 = vadd.f32 0.0, %v4082
  %v4084 = vpop.f32.mrb[0].mxu0
  %4085 = vmatprep.mubr.f32.mxu0 0.0
  %4086 = vmatmul.mubr.f32.gmra.mrb[0].mxu0 %v1117
  %v4087 = vpop.f32.mrb[0].mxu0
  %v4088 = vpop.f32.mrb[0].mxu0
  %4089 = vmatprep.mubr.f32.mxu0 0.0
  %4090 = vmatmul.mubr.f32.gmra.mrb[0].mxu0 %v1117
  %v4091 = vpop.f32.mrb[0].mxu0
  %v4092 = vpop.f32.mrb[0].mxu0
  %4093 = vmatprep.mubr.f32.mxu0 0.0
  %4094 = vmatmul.mubr.f32.gmra.mrb[0].mxu0 %v1117
  %v4095 = vpop.f32.mrb[0].mxu0
  %v4096 = vpop.f32.mrb[0].mxu0
  %4097 = vmatprep.mubr.f32.mxu0 0.0
  %4098 = vmatmul.mubr.f32.gmra.mrb[0].mxu0 %v1127
  %v4099 = vpop.f32.mrb[0].mxu0
  %v4100 = vpop.f32.mrb[0].mxu0
  %4101 = vmatprep.mubr.f32.mxu0 0.0
  %4102 = vmatmul.mubr.f32.gmra.mrb[0].mxu0 %v2089
  %v4103 = vpop.f32.mrb[0].mxu0
  %v4104 = vadd.f32 0.0, %v4103
  %v4105 = vpop.f32.mrb[0].mxu0
  %4106 = vmatprep.mubr.f32.mxu0 0.0
  %4107 = vmatmul.mubr.f32.gmra.mrb[0].mxu0 %v3052
  %v4108 = vpop.f32.mrb[0].mxu0
  %v4109 = vadd.f32 0.0, %v4108
  %v4110 = vpop.f32.mrb[0].mxu0
  %4111 = vmatprep.mubr.f32.mxu0 0.0
  %4112 = vmatmul.mubr.f32.gmra.mrb[0].mxu0 %v4009
  %v4113 = vpop.f32.mrb[0].mxu0
  %v4114 = vadd.f32 0.0, %v4113
  %v4115 = vpop.f32.mrb[0].mxu0
  %4116 = vdwg.mxu0
  %v4117 = vadd.f32 %v3998, %v4078
  %v4118 = vadd.f32 %v3999, %v4083
  %v4119 = vadd.f32 %v4000, %v4104
  %v4120 = vadd.f32 %v4001, %v4109
  %v4121 = vadd.f32 %v4002, %v4114
  %s4122 = scalar_lea.vmem %s2, 1024
  %v4123 = vld [vmem:[%s4122] sm:$0xff]
  %v4124 = vld [vmem:[%s4122 + $0x8] sm:$0xff]
  %v4125 = vld [vmem:[%s4122 + $0x10] sm:$0xff]
  %v4126 = vld [vmem:[%s4122 + $0x18] sm:$0xff]
  %4127 = vmatprep.subr.mxu0 0.0
  %4128 = vmatpush1.msra.mxu0 %v4123
  %4129 = vmatprep.subr.mxu0 0.0
  %4130 = vmatpush1.msra.mxu0 %v4124
  %4131 = vmatprep.subr.mxu0 0.0
  %4132 = vmatpush1.msra.mxu0 %v4125
  %4133 = vmatprep.subr.mxu0 0.0
  %4134 = vmatpush1.msra.mxu0 %v4126
  %4135 = vmatprep.subr.mxu0 0.0
  %4136 = vmatpush1.msra.mxu0 0.0
  %4137 = vmatprep.subr.mxu0 0.0
  %4138 = vmatpush1.msra.mxu0 0.0
  %4139 = vmatprep.subr.mxu0 0.0
  %4140 = vmatpush1.msra.mxu0 0.0
  %4141 = vmatprep.subr.mxu0 0.0
  %4142 = vmatpush1.msra.mxu0 0.0
  %4143 = vmatprep.subr.mxu0 0.0
  %4144 = vmatpush1.msra.mxu0 0.0
  %4145 = vmatprep.subr.mxu0 0.0
  %4146 = vmatpush1.msra.mxu0 0.0
  %4147 = vmatprep.subr.mxu0 0.0
  %4148 = vmatpush1.msra.mxu0 0.0
  %4149 = vmatprep.subr.mxu0 0.0
  %4150 = vmatpush1.msra.mxu0 0.0
  %4151 = vmatprep.subr.mxu0 0.0
  %4152 = vmatpush1.msra.mxu0 0.0
  %4153 = vmatprep.subr.mxu0 0.0
  %4154 = vmatpush1.msra.mxu0 0.0
  %4155 = vmatprep.subr.mxu0 0.0
  %4156 = vmatpush1.msra.mxu0 0.0
  %4157 = vmatprep.subr.mxu0 0.0
  %4158 = vmatpush1.msra.mxu0 0.0
  %4159 = vmatprep.subr.mxu0 0.0
  %4160 = vmatpush1.msra.mxu0 0.0
  %4161 = vmatprep.subr.mxu0 0.0
  %4162 = vmatpush1.msra.mxu0 0.0
  %4163 = vmatprep.subr.mxu0 0.0
  %4164 = vmatpush1.msra.mxu0 0.0
  %4165 = vmatprep.subr.mxu0 0.0
  %4166 = vmatpush1.msra.mxu0 0.0
  %4167 = vmatprep.subr.mxu0 0.0
  %4168 = vmatpush1.msra.mxu0 0.0
  %4169 = vmatprep.subr.mxu0 0.0
  %4170 = vmatpush1.msra.mxu0 0.0
  %4171 = vmatprep.subr.mxu0 0.0
  %4172 = vmatpush1.msra.mxu0 0.0
  %4173 = vmatprep.subr.mxu0 0.0
  %4174 = vmatpush1.msra.mxu0 0.0
  %4175 = vmatprep.subr.mxu0 0.0
  %4176 = vmatpush1.msra.mxu0 0.0
  %4177 = vmatprep.subr.mxu0 0.0
  %4178 = vmatpush1.msra.mxu0 0.0
  %4179 = vmatprep.subr.mxu0 0.0
  %4180 = vmatpush1.msra.mxu0 0.0
  %4181 = vmatprep.subr.mxu0 0.0
  %4182 = vmatpush1.msra.mxu0 0.0
  %4183 = vmatprep.subr.mxu0 0.0
  %4184 = vmatpush1.msra.mxu0 0.0
  %4185 = vmatprep.subr.mxu0 0.0
  %4186 = vmatpush1.msra.mxu0 0.0
  %4187 = vmatprep.subr.mxu0 0.0
  %4188 = vmatpush1.msra.mxu0 0.0
  %4189 = vmatprep.subr.mxu0 0.0
  %4190 = vmatpush1.msra.mxu0 0.0
  %4191 = vmatprep.mubr.f32.mxu0 0.0
  %4192 = vmatmul.mubr.f32.gmra.mrb[0].mxu0 %v295
  %v4193 = vpop.f32.mrb[0].mxu0
  %v4194 = vadd.f32 0.0, %v4193
  %v4195 = vpop.f32.mrb[0].mxu0
  %4196 = vmatprep.mubr.f32.mxu0 0.0
  %4197 = vmatmul.mubr.f32.gmra.mrb[0].mxu0 %v289
  %v4198 = vpop.f32.mrb[0].mxu0
  %v4199 = vadd.f32 0.0, %v4198
  %v4200 = vpop.f32.mrb[0].mxu0
  %4201 = vmatprep.mubr.f32.mxu0 0.0
  %4202 = vmatmul.mubr.f32.gmra.mrb[0].mxu0 %v289
  %v4203 = vpop.f32.mrb[0].mxu0
  %v4204 = vpop.f32.mrb[0].mxu0
  %4205 = vmatprep.mubr.f32.mxu0 0.0
  %4206 = vmatmul.mubr.f32.gmra.mrb[0].mxu0 %v289
  %v4207 = vpop.f32.mrb[0].mxu0
  %v4208 = vpop.f32.mrb[0].mxu0
  %4209 = vmatprep.mubr.f32.mxu0 0.0
  %4210 = vmatmul.mubr.f32.gmra.mrb[0].mxu0 %v289
  %v4211 = vpop.f32.mrb[0].mxu0
  %v4212 = vpop.f32.mrb[0].mxu0
  %4213 = vmatprep.mubr.f32.mxu0 0.0
  %4214 = vmatmul.mubr.f32.gmra.mrb[0].mxu0 %v1245
  %v4215 = vpop.f32.mrb[0].mxu0
  %v4216 = vpop.f32.mrb[0].mxu0
  %4217 = vmatprep.mubr.f32.mxu0 0.0
  %4218 = vmatmul.mubr.f32.gmra.mrb[0].mxu0 %v2207
  %v4219 = vpop.f32.mrb[0].mxu0
  %v4220 = vadd.f32 0.0, %v4219
  %v4221 = vpop.f32.mrb[0].mxu0
  %4222 = vmatprep.mubr.f32.mxu0 0.0
  %4223 = vmatmul.mubr.f32.gmra.mrb[0].mxu0 %v3170
  %v4224 = vpop.f32.mrb[0].mxu0
  %v4225 = vadd.f32 0.0, %v4224
  %v4226 = vpop.f32.mrb[0].mxu0
  %4227 = vmatprep.mubr.f32.mxu0 0.0
  %4228 = vmatmul.mubr.f32.gmra.mrb[0].mxu0 %v289
  %v4229 = vpop.f32.mrb[0].mxu0
  %v4230 = vadd.f32 0.0, %v4229
  %v4231 = vpop.f32.mrb[0].mxu0
  %4232 = vdwg.mxu0
  %v4233 = vadd.f32 %v4117, %v4194
  %v4234 = vadd.f32 %v4118, %v4199
  %v4235 = vadd.f32 %v4119, %v4220
  %v4236 = vadd.f32 %v4120, %v4225
  %v4237 = vadd.f32 %v4121, %v4230
  %s4238 = scalar_lea.vmem %s2, 1056
  %v4239 = vld [vmem:[%s4238] sm:$0xff]
  %v4240 = vld [vmem:[%s4238 + $0x8] sm:$0xff]
  %v4241 = vld [vmem:[%s4238 + $0x10] sm:$0xff]
  %v4242 = vld [vmem:[%s4238 + $0x18] sm:$0xff]
  %v4243 = vsel %vm160, %v3288, %v161
  %v4244 = vsel %vm170, %v4243, 0
  %4246 = vmatprep.subr.mxu0 0.0
  %4247 = vmatpush1.msra.mxu0 %v4239
  %4248 = vmatprep.subr.mxu0 0.0
  %4249 = vmatpush1.msra.mxu0 %v4240
  %4250 = vmatprep.subr.mxu0 0.0
  %4251 = vmatpush1.msra.mxu0 %v4241
  %4252 = vmatprep.subr.mxu0 0.0
  %4253 = vmatpush1.msra.mxu0 %v4242
  %4254 = vmatprep.subr.mxu0 0.0
  %4255 = vmatpush1.msra.mxu0 0.0
  %4256 = vmatprep.subr.mxu0 0.0
  %4257 = vmatpush1.msra.mxu0 0.0
  %4258 = vmatprep.subr.mxu0 0.0
  %4259 = vmatpush1.msra.mxu0 0.0
  %4260 = vmatprep.subr.mxu0 0.0
  %4261 = vmatpush1.msra.mxu0 0.0
  %4262 = vmatprep.subr.mxu0 0.0
  %4263 = vmatpush1.msra.mxu0 0.0
  %4264 = vmatprep.subr.mxu0 0.0
  %4265 = vmatpush1.msra.mxu0 0.0
  %4266 = vmatprep.subr.mxu0 0.0
  %4267 = vmatpush1.msra.mxu0 0.0
  %4268 = vmatprep.subr.mxu0 0.0
  %4269 = vmatpush1.msra.mxu0 0.0
  %4270 = vmatprep.subr.mxu0 0.0
  %4271 = vmatpush1.msra.mxu0 0.0
  %4272 = vmatprep.subr.mxu0 0.0
  %4273 = vmatpush1.msra.mxu0 0.0
  %4274 = vmatprep.subr.mxu0 0.0
  %4275 = vmatpush1.msra.mxu0 0.0
  %4276 = vmatprep.subr.mxu0 0.0
  %4277 = vmatpush1.msra.mxu0 0.0
  %4278 = vmatprep.subr.mxu0 0.0
  %4279 = vmatpush1.msra.mxu0 0.0
  %4280 = vmatprep.subr.mxu0 0.0
  %4281 = vmatpush1.msra.mxu0 0.0
  %4282 = vmatprep.subr.mxu0 0.0
  %4283 = vmatpush1.msra.mxu0 0.0
  %4284 = vmatprep.subr.mxu0 0.0
  %4285 = vmatpush1.msra.mxu0 0.0
  %4286 = vmatprep.subr.mxu0 0.0
  %4287 = vmatpush1.msra.mxu0 0.0
  %4288 = vmatprep.subr.mxu0 0.0
  %4289 = vmatpush1.msra.mxu0 0.0
  %4290 = vmatprep.subr.mxu0 0.0
  %4291 = vmatpush1.msra.mxu0 0.0
  %4292 = vmatprep.subr.mxu0 0.0
  %4293 = vmatpush1.msra.mxu0 0.0
  %4294 = vmatprep.subr.mxu0 0.0
  %4295 = vmatpush1.msra.mxu0 0.0
  %4296 = vmatprep.subr.mxu0 0.0
  %4297 = vmatpush1.msra.mxu0 0.0
  %4298 = vmatprep.subr.mxu0 0.0
  %4299 = vmatpush1.msra.mxu0 0.0
  %4300 = vmatprep.subr.mxu0 0.0
  %4301 = vmatpush1.msra.mxu0 0.0
  %4302 = vmatprep.subr.mxu0 0.0
  %4303 = vmatpush1.msra.mxu0 0.0
  %4304 = vmatprep.subr.mxu0 0.0
  %4305 = vmatpush1.msra.mxu0 0.0
  %4306 = vmatprep.subr.mxu0 0.0
  %4307 = vmatpush1.msra.mxu0 0.0
  %4308 = vmatprep.subr.mxu0 0.0
  %4309 = vmatpush1.msra.mxu0 0.0
  %4310 = vmatprep.mubr.f32.mxu0 0.0
  %4311 = vmatmul.mubr.f32.gmra.mrb[0].mxu0 %v179
  %v4312 = vpop.f32.mrb[0].mxu0
  %v4313 = vadd.f32 0.0, %v4312
  %v4314 = vpop.f32.mrb[0].mxu0
  %4315 = vmatprep.mubr.f32.mxu0 0.0
  %4316 = vmatmul.mubr.f32.gmra.mrb[0].mxu0 %v171
  %v4317 = vpop.f32.mrb[0].mxu0
  %v4318 = vadd.f32 0.0, %v4317
  %v4319 = vpop.f32.mrb[0].mxu0
  %4320 = vmatprep.mubr.f32.mxu0 0.0
  %4321 = vmatmul.mubr.f32.gmra.mrb[0].mxu0 %v171
  %v4322 = vpop.f32.mrb[0].mxu0
  %v4323 = vpop.f32.mrb[0].mxu0
  %4324 = vmatprep.mubr.f32.mxu0 0.0
  %4325 = vmatmul.mubr.f32.gmra.mrb[0].mxu0 %v171
  %v4326 = vpop.f32.mrb[0].mxu0
  %v4327 = vpop.f32.mrb[0].mxu0
  %4328 = vmatprep.mubr.f32.mxu0 0.0
  %4329 = vmatmul.mubr.f32.gmra.mrb[0].mxu0 %v1365
  %v4330 = vpop.f32.mrb[0].mxu0
  %v4331 = vpop.f32.mrb[0].mxu0
  %4332 = vmatprep.mubr.f32.mxu0 0.0
  %4333 = vmatmul.mubr.f32.gmra.mrb[0].mxu0 %v2327
  %v4334 = vpop.f32.mrb[0].mxu0
  %v4335 = vpop.f32.mrb[0].mxu0
  %4336 = vmatprep.mubr.f32.mxu0 0.0
  %4337 = vmatmul.mubr.f32.gmra.mrb[0].mxu0 %v3290
  %v4338 = vpop.f32.mrb[0].mxu0
  %v4339 = vadd.f32 0.0, %v4338
  %v4340 = vpop.f32.mrb[0].mxu0
  %4341 = vmatprep.mubr.f32.mxu0 0.0
  %4342 = vmatmul.mubr.f32.gmra.mrb[0].mxu0 %v4244
  %v4343 = vpop.f32.mrb[0].mxu0
  %v4344 = vadd.f32 0.0, %v4343
  %v4345 = vpop.f32.mrb[0].mxu0
  %4346 = vmatprep.mubr.f32.mxu0 0.0
  %4347 = vmatmul.mubr.f32.gmra.mrb[0].mxu0 %v181
  %v4348 = vpop.f32.mrb[0].mxu0
  %v4349 = vadd.f32 0.0, %v4348
  %v4350 = vpop.f32.mrb[0].mxu0
  %4351 = vdwg.mxu0
  %v4352 = vadd.f32 %v4233, %v4313
  %v4353 = vadd.f32 %v4234, %v4318
  %v4354 = vadd.f32 %v4235, %v4339
  %v4355 = vadd.f32 %v4236, %v4344
  %v4356 = vadd.f32 %v4237, %v4349
  %s4357 = scalar_lea.vmem %s2, 1088
  %v4358 = vld [vmem:[%s4357] sm:$0xff]
  %v4359 = vld [vmem:[%s4357 + $0x8] sm:$0xff]
  %v4360 = vld [vmem:[%s4357 + $0x10] sm:$0xff]
  %v4361 = vld [vmem:[%s4357 + $0x18] sm:$0xff]
  %v4362 = vsel %vm408, %v3410, %v409
  %v4363 = vsel %vm170, %v4362, 0
  %4365 = vmatprep.subr.mxu0 0.0
  %4366 = vmatpush1.msra.mxu0 %v4358
  %4367 = vmatprep.subr.mxu0 0.0
  %4368 = vmatpush1.msra.mxu0 %v4359
  %4369 = vmatprep.subr.mxu0 0.0
  %4370 = vmatpush1.msra.mxu0 %v4360
  %4371 = vmatprep.subr.mxu0 0.0
  %4372 = vmatpush1.msra.mxu0 %v4361
  %4373 = vmatprep.subr.mxu0 0.0
  %4374 = vmatpush1.msra.mxu0 0.0
  %4375 = vmatprep.subr.mxu0 0.0
  %4376 = vmatpush1.msra.mxu0 0.0
  %4377 = vmatprep.subr.mxu0 0.0
  %4378 = vmatpush1.msra.mxu0 0.0
  %4379 = vmatprep.subr.mxu0 0.0
  %4380 = vmatpush1.msra.mxu0 0.0
  %4381 = vmatprep.subr.mxu0 0.0
  %4382 = vmatpush1.msra.mxu0 0.0
  %4383 = vmatprep.subr.mxu0 0.0
  %4384 = vmatpush1.msra.mxu0 0.0
  %4385 = vmatprep.subr.mxu0 0.0
  %4386 = vmatpush1.msra.mxu0 0.0
  %4387 = vmatprep.subr.mxu0 0.0
  %4388 = vmatpush1.msra.mxu0 0.0
  %4389 = vmatprep.subr.mxu0 0.0
  %4390 = vmatpush1.msra.mxu0 0.0
  %4391 = vmatprep.subr.mxu0 0.0
  %4392 = vmatpush1.msra.mxu0 0.0
  %4393 = vmatprep.subr.mxu0 0.0
  %4394 = vmatpush1.msra.mxu0 0.0
  %4395 = vmatprep.subr.mxu0 0.0
  %4396 = vmatpush1.msra.mxu0 0.0
  %4397 = vmatprep.subr.mxu0 0.0
  %4398 = vmatpush1.msra.mxu0 0.0
  %4399 = vmatprep.subr.mxu0 0.0
  %4400 = vmatpush1.msra.mxu0 0.0
  %4401 = vmatprep.subr.mxu0 0.0
  %4402 = vmatpush1.msra.mxu0 0.0
  %4403 = vmatprep.subr.mxu0 0.0
  %4404 = vmatpush1.msra.mxu0 0.0
  %4405 = vmatprep.subr.mxu0 0.0
  %4406 = vmatpush1.msra.mxu0 0.0
  %4407 = vmatprep.subr.mxu0 0.0
  %4408 = vmatpush1.msra.mxu0 0.0
  %4409 = vmatprep.subr.mxu0 0.0
  %4410 = vmatpush1.msra.mxu0 0.0
  %4411 = vmatprep.subr.mxu0 0.0
  %4412 = vmatpush1.msra.mxu0 0.0
  %4413 = vmatprep.subr.mxu0 0.0
  %4414 = vmatpush1.msra.mxu0 0.0
  %4415 = vmatprep.subr.mxu0 0.0
  %4416 = vmatpush1.msra.mxu0 0.0
  %4417 = vmatprep.subr.mxu0 0.0
  %4418 = vmatpush1.msra.mxu0 0.0
  %4419 = vmatprep.subr.mxu0 0.0
  %4420 = vmatpush1.msra.mxu0 0.0
  %4421 = vmatprep.subr.mxu0 0.0
  %4422 = vmatpush1.msra.mxu0 0.0
  %4423 = vmatprep.subr.mxu0 0.0
  %4424 = vmatpush1.msra.mxu0 0.0
  %4425 = vmatprep.subr.mxu0 0.0
  %4426 = vmatpush1.msra.mxu0 0.0
  %4427 = vmatprep.subr.mxu0 0.0
  %4428 = vmatpush1.msra.mxu0 0.0
  %4429 = vmatprep.mubr.f32.mxu0 0.0
  %4430 = vmatmul.mubr.f32.gmra.mrb[0].mxu0 %v426
  %v4431 = vpop.f32.mrb[0].mxu0
  %v4432 = vadd.f32 0.0, %v4431
  %v4433 = vpop.f32.mrb[0].mxu0
  %4434 = vmatprep.mubr.f32.mxu0 0.0
  %4435 = vmatmul.mubr.f32.gmra.mrb[0].mxu0 %v418
  %v4436 = vpop.f32.mrb[0].mxu0
  %v4437 = vadd.f32 0.0, %v4436
  %v4438 = vpop.f32.mrb[0].mxu0
  %4439 = vmatprep.mubr.f32.mxu0 0.0
  %4440 = vmatmul.mubr.f32.gmra.mrb[0].mxu0 %v418
  %v4441 = vpop.f32.mrb[0].mxu0
  %v4442 = vpop.f32.mrb[0].mxu0
  %4443 = vmatprep.mubr.f32.mxu0 0.0
  %4444 = vmatmul.mubr.f32.gmra.mrb[0].mxu0 %v418
  %v4445 = vpop.f32.mrb[0].mxu0
  %v4446 = vpop.f32.mrb[0].mxu0
  %4447 = vmatprep.mubr.f32.mxu0 0.0
  %4448 = vmatmul.mubr.f32.gmra.mrb[0].mxu0 %v1487
  %v4449 = vpop.f32.mrb[0].mxu0
  %v4450 = vpop.f32.mrb[0].mxu0
  %4451 = vmatprep.mubr.f32.mxu0 0.0
  %4452 = vmatmul.mubr.f32.gmra.mrb[0].mxu0 %v2449
  %v4453 = vpop.f32.mrb[0].mxu0
  %v4454 = vpop.f32.mrb[0].mxu0
  %4455 = vmatprep.mubr.f32.mxu0 0.0
  %4456 = vmatmul.mubr.f32.gmra.mrb[0].mxu0 %v3412
  %v4457 = vpop.f32.mrb[0].mxu0
  %v4458 = vadd.f32 0.0, %v4457
  %v4459 = vpop.f32.mrb[0].mxu0
  %4460 = vmatprep.mubr.f32.mxu0 0.0
  %4461 = vmatmul.mubr.f32.gmra.mrb[0].mxu0 %v4363
  %v4462 = vpop.f32.mrb[0].mxu0
  %v4463 = vadd.f32 0.0, %v4462
  %v4464 = vpop.f32.mrb[0].mxu0
  %4465 = vmatprep.mubr.f32.mxu0 0.0
  %4466 = vmatmul.mubr.f32.gmra.mrb[0].mxu0 %v428
  %v4467 = vpop.f32.mrb[0].mxu0
  %v4468 = vadd.f32 0.0, %v4467
  %v4469 = vpop.f32.mrb[0].mxu0
  %4470 = vdwg.mxu0
  %v4471 = vadd.f32 %v4352, %v4432
  %v4472 = vadd.f32 %v4353, %v4437
  %v4473 = vadd.f32 %v4354, %v4458
  %v4474 = vadd.f32 %v4355, %v4463
  %v4475 = vadd.f32 %v4356, %v4468
  %s4476 = scalar_lea.vmem %s2, 1120
  %v4477 = vld [vmem:[%s4476] sm:$0xff]
  %v4478 = vld [vmem:[%s4476 + $0x8] sm:$0xff]
  %v4479 = vld [vmem:[%s4476 + $0x10] sm:$0xff]
  %v4480 = vld [vmem:[%s4476 + $0x18] sm:$0xff]
  %4481 = vmatprep.subr.mxu0 0.0
  %4482 = vmatpush1.msra.mxu0 %v4477
  %4483 = vmatprep.subr.mxu0 0.0
  %4484 = vmatpush1.msra.mxu0 %v4478
  %4485 = vmatprep.subr.mxu0 0.0
  %4486 = vmatpush1.msra.mxu0 %v4479
  %4487 = vmatprep.subr.mxu0 0.0
  %4488 = vmatpush1.msra.mxu0 %v4480
  %4489 = vmatprep.subr.mxu0 0.0
  %4490 = vmatpush1.msra.mxu0 0.0
  %4491 = vmatprep.subr.mxu0 0.0
  %4492 = vmatpush1.msra.mxu0 0.0
  %4493 = vmatprep.subr.mxu0 0.0
  %4494 = vmatpush1.msra.mxu0 0.0
  %4495 = vmatprep.subr.mxu0 0.0
  %4496 = vmatpush1.msra.mxu0 0.0
  %4497 = vmatprep.subr.mxu0 0.0
  %4498 = vmatpush1.msra.mxu0 0.0
  %4499 = vmatprep.subr.mxu0 0.0
  %4500 = vmatpush1.msra.mxu0 0.0
  %4501 = vmatprep.subr.mxu0 0.0
  %4502 = vmatpush1.msra.mxu0 0.0
  %4503 = vmatprep.subr.mxu0 0.0
  %4504 = vmatpush1.msra.mxu0 0.0
  %4505 = vmatprep.subr.mxu0 0.0
  %4506 = vmatpush1.msra.mxu0 0.0
  %4507 = vmatprep.subr.mxu0 0.0
  %4508 = vmatpush1.msra.mxu0 0.0
  %4509 = vmatprep.subr.mxu0 0.0
  %4510 = vmatpush1.msra.mxu0 0.0
  %4511 = vmatprep.subr.mxu0 0.0
  %4512 = vmatpush1.msra.mxu0 0.0
  %4513 = vmatprep.subr.mxu0 0.0
  %4514 = vmatpush1.msra.mxu0 0.0
  %4515 = vmatprep.subr.mxu0 0.0
  %4516 = vmatpush1.msra.mxu0 0.0
  %4517 = vmatprep.subr.mxu0 0.0
  %4518 = vmatpush1.msra.mxu0 0.0
  %4519 = vmatprep.subr.mxu0 0.0
  %4520 = vmatpush1.msra.mxu0 0.0
  %4521 = vmatprep.subr.mxu0 0.0
  %4522 = vmatpush1.msra.mxu0 0.0
  %4523 = vmatprep.subr.mxu0 0.0
  %4524 = vmatpush1.msra.mxu0 0.0
  %4525 = vmatprep.subr.mxu0 0.0
  %4526 = vmatpush1.msra.mxu0 0.0
  %4527 = vmatprep.subr.mxu0 0.0
  %4528 = vmatpush1.msra.mxu0 0.0
  %4529 = vmatprep.subr.mxu0 0.0
  %4530 = vmatpush1.msra.mxu0 0.0
  %4531 = vmatprep.subr.mxu0 0.0
  %4532 = vmatpush1.msra.mxu0 0.0
  %4533 = vmatprep.subr.mxu0 0.0
  %4534 = vmatpush1.msra.mxu0 0.0
  %4535 = vmatprep.subr.mxu0 0.0
  %4536 = vmatpush1.msra.mxu0 0.0
  %4537 = vmatprep.subr.mxu0 0.0
  %4538 = vmatpush1.msra.mxu0 0.0
  %4539 = vmatprep.subr.mxu0 0.0
  %4540 = vmatpush1.msra.mxu0 0.0
  %4541 = vmatprep.subr.mxu0 0.0
  %4542 = vmatpush1.msra.mxu0 0.0
  %4543 = vmatprep.subr.mxu0 0.0
  %4544 = vmatpush1.msra.mxu0 0.0
  %4545 = vmatprep.mubr.f32.mxu0 0.0
  %4546 = vmatmul.mubr.f32.gmra.mrb[0].mxu0 %v567
  %v4547 = vpop.f32.mrb[0].mxu0
  %v4548 = vadd.f32 0.0, %v4547
  %v4549 = vpop.f32.mrb[0].mxu0
  %4550 = vmatprep.mubr.f32.mxu0 0.0
  %4551 = vmatmul.mubr.f32.gmra.mrb[0].mxu0 %v559
  %v4552 = vpop.f32.mrb[0].mxu0
  %v4553 = vadd.f32 0.0, %v4552
  %v4554 = vpop.f32.mrb[0].mxu0
  %4555 = vmatprep.mubr.f32.mxu0 0.0
  %4556 = vmatmul.mubr.f32.gmra.mrb[0].mxu0 %v559
  %v4557 = vpop.f32.mrb[0].mxu0
  %v4558 = vpop.f32.mrb[0].mxu0
  %4559 = vmatprep.mubr.f32.mxu0 0.0
  %4560 = vmatmul.mubr.f32.gmra.mrb[0].mxu0 %v559
  %v4561 = vpop.f32.mrb[0].mxu0
  %v4562 = vpop.f32.mrb[0].mxu0
  %4563 = vmatprep.mubr.f32.mxu0 0.0
  %4564 = vmatmul.mubr.f32.gmra.mrb[0].mxu0 %v569
  %v4565 = vpop.f32.mrb[0].mxu0
  %v4566 = vpop.f32.mrb[0].mxu0
  %4567 = vmatprep.mubr.f32.mxu0 0.0
  %4568 = vmatmul.mubr.f32.gmra.mrb[0].mxu0 %v1609
  %v4569 = vpop.f32.mrb[0].mxu0
  %v4570 = vpop.f32.mrb[0].mxu0
  %4571 = vmatprep.mubr.f32.mxu0 0.0
  %4572 = vmatmul.mubr.f32.gmra.mrb[0].mxu0 %v2572
  %v4573 = vpop.f32.mrb[0].mxu0
  %v4574 = vadd.f32 0.0, %v4573
  %v4575 = vpop.f32.mrb[0].mxu0
  %4576 = vmatprep.mubr.f32.mxu0 0.0
  %4577 = vmatmul.mubr.f32.gmra.mrb[0].mxu0 %v3533
  %v4578 = vpop.f32.mrb[0].mxu0
  %v4579 = vadd.f32 0.0, %v4578
  %v4580 = vpop.f32.mrb[0].mxu0
  %4581 = vmatprep.mubr.f32.mxu0 0.0
  %4582 = vmatmul.mubr.f32.gmra.mrb[0].mxu0 %v559
  %v4583 = vpop.f32.mrb[0].mxu0
  %v4584 = vadd.f32 0.0, %v4583
  %v4585 = vpop.f32.mrb[0].mxu0
  %4586 = vdwg.mxu0
  %v4587 = vadd.f32 %v4471, %v4548
  %v4588 = vadd.f32 %v4472, %v4553
  %v4589 = vadd.f32 %v4473, %v4574
  %v4590 = vadd.f32 %v4474, %v4579
  %v4591 = vadd.f32 %v4475, %v4584
  %s4592 = scalar_lea.vmem %s2, 1152
  %v4593 = vld [vmem:[%s4592] sm:$0xff]
  %v4594 = vld [vmem:[%s4592 + $0x8] sm:$0xff]
  %v4595 = vld [vmem:[%s4592 + $0x10] sm:$0xff]
  %v4596 = vld [vmem:[%s4592 + $0x18] sm:$0xff]
  %4597 = vmatprep.subr.mxu0 0.0
  %4598 = vmatpush1.msra.mxu0 %v4593
  %4599 = vmatprep.subr.mxu0 0.0
  %4600 = vmatpush1.msra.mxu0 %v4594
  %4601 = vmatprep.subr.mxu0 0.0
  %4602 = vmatpush1.msra.mxu0 %v4595
  %4603 = vmatprep.subr.mxu0 0.0
  %4604 = vmatpush1.msra.mxu0 %v4596
  %4605 = vmatprep.subr.mxu0 0.0
  %4606 = vmatpush1.msra.mxu0 0.0
  %4607 = vmatprep.subr.mxu0 0.0
  %4608 = vmatpush1.msra.mxu0 0.0
  %4609 = vmatprep.subr.mxu0 0.0
  %4610 = vmatpush1.msra.mxu0 0.0
  %4611 = vmatprep.subr.mxu0 0.0
  %4612 = vmatpush1.msra.mxu0 0.0
  %4613 = vmatprep.subr.mxu0 0.0
  %4614 = vmatpush1.msra.mxu0 0.0
  %4615 = vmatprep.subr.mxu0 0.0
  %4616 = vmatpush1.msra.mxu0 0.0
  %4617 = vmatprep.subr.mxu0 0.0
  %4618 = vmatpush1.msra.mxu0 0.0
  %4619 = vmatprep.subr.mxu0 0.0
  %4620 = vmatpush1.msra.mxu0 0.0
  %4621 = vmatprep.subr.mxu0 0.0
  %4622 = vmatpush1.msra.mxu0 0.0
  %4623 = vmatprep.subr.mxu0 0.0
  %4624 = vmatpush1.msra.mxu0 0.0
  %4625 = vmatprep.subr.mxu0 0.0
  %4626 = vmatpush1.msra.mxu0 0.0
  %4627 = vmatprep.subr.mxu0 0.0
  %4628 = vmatpush1.msra.mxu0 0.0
  %4629 = vmatprep.subr.mxu0 0.0
  %4630 = vmatpush1.msra.mxu0 0.0
  %4631 = vmatprep.subr.mxu0 0.0
  %4632 = vmatpush1.msra.mxu0 0.0
  %4633 = vmatprep.subr.mxu0 0.0
  %4634 = vmatpush1.msra.mxu0 0.0
  %4635 = vmatprep.subr.mxu0 0.0
  %4636 = vmatpush1.msra.mxu0 0.0
  %4637 = vmatprep.subr.mxu0 0.0
  %4638 = vmatpush1.msra.mxu0 0.0
  %4639 = vmatprep.subr.mxu0 0.0
  %4640 = vmatpush1.msra.mxu0 0.0
  %4641 = vmatprep.subr.mxu0 0.0
  %4642 = vmatpush1.msra.mxu0 0.0
  %4643 = vmatprep.subr.mxu0 0.0
  %4644 = vmatpush1.msra.mxu0 0.0
  %4645 = vmatprep.subr.mxu0 0.0
  %4646 = vmatpush1.msra.mxu0 0.0
  %4647 = vmatprep.subr.mxu0 0.0
  %4648 = vmatpush1.msra.mxu0 0.0
  %4649 = vmatprep.subr.mxu0 0.0
  %4650 = vmatpush1.msra.mxu0 0.0
  %4651 = vmatprep.subr.mxu0 0.0
  %4652 = vmatpush1.msra.mxu0 0.0
  %4653 = vmatprep.subr.mxu0 0.0
  %4654 = vmatpush1.msra.mxu0 0.0
  %4655 = vmatprep.subr.mxu0 0.0
  %4656 = vmatpush1.msra.mxu0 0.0
  %4657 = vmatprep.subr.mxu0 0.0
  %4658 = vmatpush1.msra.mxu0 0.0
  %4659 = vmatprep.subr.mxu0 0.0
  %4660 = vmatpush1.msra.mxu0 0.0
  %4661 = vmatprep.mubr.f32.mxu0 0.0
  %4662 = vmatmul.mubr.f32.gmra.mrb[0].mxu0 %v707
  %v4663 = vpop.f32.mrb[0].mxu0
  %v4664 = vadd.f32 0.0, %v4663
  %v4665 = vpop.f32.mrb[0].mxu0
  %4666 = vmatprep.mubr.f32.mxu0 0.0
  %4667 = vmatmul.mubr.f32.gmra.mrb[0].mxu0 %v699
  %v4668 = vpop.f32.mrb[0].mxu0
  %v4669 = vadd.f32 0.0, %v4668
  %v4670 = vpop.f32.mrb[0].mxu0
  %4671 = vmatprep.mubr.f32.mxu0 0.0
  %4672 = vmatmul.mubr.f32.gmra.mrb[0].mxu0 %v699
  %v4673 = vpop.f32.mrb[0].mxu0
  %v4674 = vpop.f32.mrb[0].mxu0
  %4675 = vmatprep.mubr.f32.mxu0 0.0
  %4676 = vmatmul.mubr.f32.gmra.mrb[0].mxu0 %v699
  %v4677 = vpop.f32.mrb[0].mxu0
  %v4678 = vpop.f32.mrb[0].mxu0
  %4679 = vmatprep.mubr.f32.mxu0 0.0
  %4680 = vmatmul.mubr.f32.gmra.mrb[0].mxu0 %v709
  %v4681 = vpop.f32.mrb[0].mxu0
  %v4682 = vpop.f32.mrb[0].mxu0
  %4683 = vmatprep.mubr.f32.mxu0 0.0
  %4684 = vmatmul.mubr.f32.gmra.mrb[0].mxu0 %v1729
  %v4685 = vpop.f32.mrb[0].mxu0
  %v4686 = vpop.f32.mrb[0].mxu0
  %4687 = vmatprep.mubr.f32.mxu0 0.0
  %4688 = vmatmul.mubr.f32.gmra.mrb[0].mxu0 %v2692
  %v4689 = vpop.f32.mrb[0].mxu0
  %v4690 = vadd.f32 0.0, %v4689
  %v4691 = vpop.f32.mrb[0].mxu0
  %4692 = vmatprep.mubr.f32.mxu0 0.0
  %4693 = vmatmul.mubr.f32.gmra.mrb[0].mxu0 %v3652
  %v4694 = vpop.f32.mrb[0].mxu0
  %v4695 = vadd.f32 0.0, %v4694
  %v4696 = vpop.f32.mrb[0].mxu0
  %4697 = vmatprep.mubr.f32.mxu0 0.0
  %4698 = vmatmul.mubr.f32.gmra.mrb[0].mxu0 %v699
  %v4699 = vpop.f32.mrb[0].mxu0
  %v4700 = vadd.f32 0.0, %v4699
  %v4701 = vpop.f32.mrb[0].mxu0
  %4702 = vdwg.mxu0
  %v4703 = vadd.f32 %v4587, %v4664
  %v4704 = vadd.f32 %v4588, %v4669
  %v4705 = vadd.f32 %v4589, %v4690
  %v4706 = vadd.f32 %v4590, %v4695
  %v4707 = vadd.f32 %v4591, %v4700
  %s4708 = scalar_lea.vmem %s2, 1184
  %v4709 = vld [vmem:[%s4708] sm:$0xff]
  %v4710 = vld [vmem:[%s4708 + $0x8] sm:$0xff]
  %v4711 = vld [vmem:[%s4708 + $0x10] sm:$0xff]
  %v4712 = vld [vmem:[%s4708 + $0x18] sm:$0xff]
  %4713 = vmatprep.subr.mxu0 0.0
  %4714 = vmatpush1.msra.mxu0 %v4709
  %4715 = vmatprep.subr.mxu0 0.0
  %4716 = vmatpush1.msra.mxu0 %v4710
  %4717 = vmatprep.subr.mxu0 0.0
  %4718 = vmatpush1.msra.mxu0 %v4711
  %4719 = vmatprep.subr.mxu0 0.0
  %4720 = vmatpush1.msra.mxu0 %v4712
  %4721 = vmatprep.subr.mxu0 0.0
  %4722 = vmatpush1.msra.mxu0 0.0
  %4723 = vmatprep.subr.mxu0 0.0
  %4724 = vmatpush1.msra.mxu0 0.0
  %4725 = vmatprep.subr.mxu0 0.0
  %4726 = vmatpush1.msra.mxu0 0.0
  %4727 = vmatprep.subr.mxu0 0.0
  %4728 = vmatpush1.msra.mxu0 0.0
  %4729 = vmatprep.subr.mxu0 0.0
  %4730 = vmatpush1.msra.mxu0 0.0
  %4731 = vmatprep.subr.mxu0 0.0
  %4732 = vmatpush1.msra.mxu0 0.0
  %4733 = vmatprep.subr.mxu0 0.0
  %4734 = vmatpush1.msra.mxu0 0.0
  %4735 = vmatprep.subr.mxu0 0.0
  %4736 = vmatpush1.msra.mxu0 0.0
  %4737 = vmatprep.subr.mxu0 0.0
  %4738 = vmatpush1.msra.mxu0 0.0
  %4739 = vmatprep.subr.mxu0 0.0
  %4740 = vmatpush1.msra.mxu0 0.0
  %4741 = vmatprep.subr.mxu0 0.0
  %4742 = vmatpush1.msra.mxu0 0.0
  %4743 = vmatprep.subr.mxu0 0.0
  %4744 = vmatpush1.msra.mxu0 0.0
  %4745 = vmatprep.subr.mxu0 0.0
  %4746 = vmatpush1.msra.mxu0 0.0
  %4747 = vmatprep.subr.mxu0 0.0
  %4748 = vmatpush1.msra.mxu0 0.0
  %4749 = vmatprep.subr.mxu0 0.0
  %4750 = vmatpush1.msra.mxu0 0.0
  %4751 = vmatprep.subr.mxu0 0.0
  %4752 = vmatpush1.msra.mxu0 0.0
  %4753 = vmatprep.subr.mxu0 0.0
  %4754 = vmatpush1.msra.mxu0 0.0
  %4755 = vmatprep.subr.mxu0 0.0
  %4756 = vmatpush1.msra.mxu0 0.0
  %4757 = vmatprep.subr.mxu0 0.0
  %4758 = vmatpush1.msra.mxu0 0.0
  %4759 = vmatprep.subr.mxu0 0.0
  %4760 = vmatpush1.msra.mxu0 0.0
  %4761 = vmatprep.subr.mxu0 0.0
  %4762 = vmatpush1.msra.mxu0 0.0
  %4763 = vmatprep.subr.mxu0 0.0
  %4764 = vmatpush1.msra.mxu0 0.0
  %4765 = vmatprep.subr.mxu0 0.0
  %4766 = vmatpush1.msra.mxu0 0.0
  %4767 = vmatprep.subr.mxu0 0.0
  %4768 = vmatpush1.msra.mxu0 0.0
  %4769 = vmatprep.subr.mxu0 0.0
  %4770 = vmatpush1.msra.mxu0 0.0
  %4771 = vmatprep.subr.mxu0 0.0
  %4772 = vmatpush1.msra.mxu0 0.0
  %4773 = vmatprep.subr.mxu0 0.0
  %4774 = vmatpush1.msra.mxu0 0.0
  %4775 = vmatprep.subr.mxu0 0.0
  %4776 = vmatpush1.msra.mxu0 0.0
  %4777 = vmatprep.mubr.f32.mxu0 0.0
  %4778 = vmatmul.mubr.f32.gmra.mrb[0].mxu0 %v846
  %v4779 = vpop.f32.mrb[0].mxu0
  %v4780 = vadd.f32 0.0, %v4779
  %v4781 = vpop.f32.mrb[0].mxu0
  %4782 = vmatprep.mubr.f32.mxu0 0.0
  %4783 = vmatmul.mubr.f32.gmra.mrb[0].mxu0 %v838
  %v4784 = vpop.f32.mrb[0].mxu0
  %v4785 = vadd.f32 0.0, %v4784
  %v4786 = vpop.f32.mrb[0].mxu0
  %4787 = vmatprep.mubr.f32.mxu0 0.0
  %4788 = vmatmul.mubr.f32.gmra.mrb[0].mxu0 %v838
  %v4789 = vpop.f32.mrb[0].mxu0
  %v4790 = vpop.f32.mrb[0].mxu0
  %4791 = vmatprep.mubr.f32.mxu0 0.0
  %4792 = vmatmul.mubr.f32.gmra.mrb[0].mxu0 %v838
  %v4793 = vpop.f32.mrb[0].mxu0
  %v4794 = vpop.f32.mrb[0].mxu0
  %4795 = vmatprep.mubr.f32.mxu0 0.0
  %4796 = vmatmul.mubr.f32.gmra.mrb[0].mxu0 %v848
  %v4797 = vpop.f32.mrb[0].mxu0
  %v4798 = vpop.f32.mrb[0].mxu0
  %4799 = vmatprep.mubr.f32.mxu0 0.0
  %4800 = vmatmul.mubr.f32.gmra.mrb[0].mxu0 %v1849
  %v4801 = vpop.f32.mrb[0].mxu0
  %v4802 = vpop.f32.mrb[0].mxu0
  %4803 = vmatprep.mubr.f32.mxu0 0.0
  %4804 = vmatmul.mubr.f32.gmra.mrb[0].mxu0 %v2812
  %v4805 = vpop.f32.mrb[0].mxu0
  %v4806 = vadd.f32 0.0, %v4805
  %v4807 = vpop.f32.mrb[0].mxu0
  %4808 = vmatprep.mubr.f32.mxu0 0.0
  %4809 = vmatmul.mubr.f32.gmra.mrb[0].mxu0 %v3771
  %v4810 = vpop.f32.mrb[0].mxu0
  %v4811 = vadd.f32 0.0, %v4810
  %v4812 = vpop.f32.mrb[0].mxu0
  %4813 = vmatprep.mubr.f32.mxu0 0.0
  %4814 = vmatmul.mubr.f32.gmra.mrb[0].mxu0 %v838
  %v4815 = vpop.f32.mrb[0].mxu0
  %v4816 = vadd.f32 0.0, %v4815
  %v4817 = vpop.f32.mrb[0].mxu0
  %4818 = vdwg.mxu0
  %v4819 = vadd.f32 %v4703, %v4780
  %v4820 = vadd.f32 %v4704, %v4785
  %v4821 = vadd.f32 %v4705, %v4806
  %v4822 = vadd.f32 %v4706, %v4811
  %v4823 = vadd.f32 %v4707, %v4816
  %s4824 = scalar_lea.vmem %s2, 1216
  %v4825 = vld [vmem:[%s4824] sm:$0xff]
  %v4826 = vld [vmem:[%s4824 + $0x8] sm:$0xff]
  %v4827 = vld [vmem:[%s4824 + $0x10] sm:$0xff]
  %v4828 = vld [vmem:[%s4824 + $0x18] sm:$0xff]
  %4829 = vmatprep.subr.mxu0 0.0
  %4830 = vmatpush1.msra.mxu0 %v4825
  %4831 = vmatprep.subr.mxu0 0.0
  %4832 = vmatpush1.msra.mxu0 %v4826
  %4833 = vmatprep.subr.mxu0 0.0
  %4834 = vmatpush1.msra.mxu0 %v4827
  %4835 = vmatprep.subr.mxu0 0.0
  %4836 = vmatpush1.msra.mxu0 %v4828
  %4837 = vmatprep.subr.mxu0 0.0
  %4838 = vmatpush1.msra.mxu0 0.0
  %4839 = vmatprep.subr.mxu0 0.0
  %4840 = vmatpush1.msra.mxu0 0.0
  %4841 = vmatprep.subr.mxu0 0.0
  %4842 = vmatpush1.msra.mxu0 0.0
  %4843 = vmatprep.subr.mxu0 0.0
  %4844 = vmatpush1.msra.mxu0 0.0
  %4845 = vmatprep.subr.mxu0 0.0
  %4846 = vmatpush1.msra.mxu0 0.0
  %4847 = vmatprep.subr.mxu0 0.0
  %4848 = vmatpush1.msra.mxu0 0.0
  %4849 = vmatprep.subr.mxu0 0.0
  %4850 = vmatpush1.msra.mxu0 0.0
  %4851 = vmatprep.subr.mxu0 0.0
  %4852 = vmatpush1.msra.mxu0 0.0
  %4853 = vmatprep.subr.mxu0 0.0
  %4854 = vmatpush1.msra.mxu0 0.0
  %4855 = vmatprep.subr.mxu0 0.0
  %4856 = vmatpush1.msra.mxu0 0.0
  %4857 = vmatprep.subr.mxu0 0.0
  %4858 = vmatpush1.msra.mxu0 0.0
  %4859 = vmatprep.subr.mxu0 0.0
  %4860 = vmatpush1.msra.mxu0 0.0
  %4861 = vmatprep.subr.mxu0 0.0
  %4862 = vmatpush1.msra.mxu0 0.0
  %4863 = vmatprep.subr.mxu0 0.0
  %4864 = vmatpush1.msra.mxu0 0.0
  %4865 = vmatprep.subr.mxu0 0.0
  %4866 = vmatpush1.msra.mxu0 0.0
  %4867 = vmatprep.subr.mxu0 0.0
  %4868 = vmatpush1.msra.mxu0 0.0
  %4869 = vmatprep.subr.mxu0 0.0
  %4870 = vmatpush1.msra.mxu0 0.0
  %4871 = vmatprep.subr.mxu0 0.0
  %4872 = vmatpush1.msra.mxu0 0.0
  %4873 = vmatprep.subr.mxu0 0.0
  %4874 = vmatpush1.msra.mxu0 0.0
  %4875 = vmatprep.subr.mxu0 0.0
  %4876 = vmatpush1.msra.mxu0 0.0
  %4877 = vmatprep.subr.mxu0 0.0
  %4878 = vmatpush1.msra.mxu0 0.0
  %4879 = vmatprep.subr.mxu0 0.0
  %4880 = vmatpush1.msra.mxu0 0.0
  %4881 = vmatprep.subr.mxu0 0.0
  %4882 = vmatpush1.msra.mxu0 0.0
  %4883 = vmatprep.subr.mxu0 0.0
  %4884 = vmatpush1.msra.mxu0 0.0
  %4885 = vmatprep.subr.mxu0 0.0
  %4886 = vmatpush1.msra.mxu0 0.0
  %4887 = vmatprep.subr.mxu0 0.0
  %4888 = vmatpush1.msra.mxu0 0.0
  %4889 = vmatprep.subr.mxu0 0.0
  %4890 = vmatpush1.msra.mxu0 0.0
  %4891 = vmatprep.subr.mxu0 0.0
  %4892 = vmatpush1.msra.mxu0 0.0
  %4893 = vmatprep.mubr.f32.mxu0 0.0
  %4894 = vmatmul.mubr.f32.gmra.mrb[0].mxu0 %v986
  %v4895 = vpop.f32.mrb[0].mxu0
  %v4896 = vadd.f32 0.0, %v4895
  %v4897 = vpop.f32.mrb[0].mxu0
  %4898 = vmatprep.mubr.f32.mxu0 0.0
  %4899 = vmatmul.mubr.f32.gmra.mrb[0].mxu0 %v978
  %v4900 = vpop.f32.mrb[0].mxu0
  %v4901 = vadd.f32 0.0, %v4900
  %v4902 = vpop.f32.mrb[0].mxu0
  %4903 = vmatprep.mubr.f32.mxu0 0.0
  %4904 = vmatmul.mubr.f32.gmra.mrb[0].mxu0 %v978
  %v4905 = vpop.f32.mrb[0].mxu0
  %v4906 = vpop.f32.mrb[0].mxu0
  %4907 = vmatprep.mubr.f32.mxu0 0.0
  %4908 = vmatmul.mubr.f32.gmra.mrb[0].mxu0 %v978
  %v4909 = vpop.f32.mrb[0].mxu0
  %v4910 = vpop.f32.mrb[0].mxu0
  %4911 = vmatprep.mubr.f32.mxu0 0.0
  %4912 = vmatmul.mubr.f32.gmra.mrb[0].mxu0 %v988
  %v4913 = vpop.f32.mrb[0].mxu0
  %v4914 = vpop.f32.mrb[0].mxu0
  %4915 = vmatprep.mubr.f32.mxu0 0.0
  %4916 = vmatmul.mubr.f32.gmra.mrb[0].mxu0 %v1969
  %v4917 = vpop.f32.mrb[0].mxu0
  %v4918 = vpop.f32.mrb[0].mxu0
  %4919 = vmatprep.mubr.f32.mxu0 0.0
  %4920 = vmatmul.mubr.f32.gmra.mrb[0].mxu0 %v2932
  %v4921 = vpop.f32.mrb[0].mxu0
  %v4922 = vadd.f32 0.0, %v4921
  %v4923 = vpop.f32.mrb[0].mxu0
  %4924 = vmatprep.mubr.f32.mxu0 0.0
  %4925 = vmatmul.mubr.f32.gmra.mrb[0].mxu0 %v3890
  %v4926 = vpop.f32.mrb[0].mxu0
  %v4927 = vadd.f32 0.0, %v4926
  %v4928 = vpop.f32.mrb[0].mxu0
  %4929 = vmatprep.mubr.f32.mxu0 0.0
  %4930 = vmatmul.mubr.f32.gmra.mrb[0].mxu0 %v978
  %v4931 = vpop.f32.mrb[0].mxu0
  %v4932 = vadd.f32 0.0, %v4931
  %v4933 = vpop.f32.mrb[0].mxu0
  %4934 = vdwg.mxu0
  %v4935 = vadd.f32 %v4819, %v4896
  %v4936 = vadd.f32 %v4820, %v4901
  %v4937 = vadd.f32 %v4821, %v4922
  %v4938 = vadd.f32 %v4822, %v4927
  %v4939 = vadd.f32 %v4823, %v4932
  %v4943 = vrot.slane %v4937, 6
  %v4944 = vrot.slane %v4938, 6
  %v4945 = vsel %vm966, %v4943, %v4944
  %v4946 = vrot.slane %v4939, 6
  %v4947 = vsel %vm966, %v4944, %v4946
  %v4954 = vrot.slane %v23, 7
  %v4955 = vrot.slane %v24, 7
  %v4956 = vsel %vm138, %v4954, %v4955
  %v4957 = vrot.slane %v25, 7
  %v4958 = vrot.slane %v26, 7
  %v4959 = vsel %vm138, %v4957, %v4958
  %v4966 = vsel %vm138, -3.4028235e+38, %v4954
  %v4967 = vsel %vm138, -3.4028235e+38, %v4957
  %v4968 = vsel %vm138, %v4955, -3.4028235e+38
  %v4969 = vsel %vm138, %v4958, -3.4028235e+38
  %v4974 = vrot.slane %v4966, 1
  %v4975 = vrot.slane %v4956, 1
  %v4976 = vsel %vm160, %v4974, %v4975
  %v4977 = vrot.slane %v4968, 1
  %v4978 = vsel %vm160, %v4975, %v4977
  %v4979 = vrot.slane %v4967, 1
  %v4980 = vrot.slane %v4959, 1
  %v4981 = vsel %vm160, %v4979, %v4980
  %v4982 = vrot.slane %v4969, 1
  %v4983 = vsel %vm160, %v4980, %v4982
  %v4988 = vmax.f32 %v4966, %v4976
  %v4989 = vmax.f32 %v4956, %v4978
  %v4990 = vmax.f32 %v4967, %v4981
  %v4991 = vmax.f32 %v4959, %v4983
  %v4992 = vrot.slane %v4966, 2
  %v4993 = vrot.slane %v4956, 2
  %v4994 = vsel %vm408, %v4992, %v4993
  %v4995 = vrot.slane %v4968, 2
  %v4996 = vsel %vm408, %v4993, %v4995
  %v4997 = vrot.slane %v4967, 2
  %v4998 = vrot.slane %v4959, 2
  %v4999 = vsel %vm408, %v4997, %v4998
  %v5000 = vrot.slane %v4969, 2
  %v5001 = vsel %vm408, %v4998, %v5000
  %v5006 = vmax.f32 %v4988, %v4994
  %v5007 = vmax.f32 %v4989, %v4996
  %v5008 = vmax.f32 %v4990, %v4999
  %v5009 = vmax.f32 %v4991, %v5001
  %v5010 = vld [vmem:[%s3] sm:$0xff]
  %v5011 = vld [vmem:[%s3 + $0x8] sm:$0xff]
  %v5012 = vld [vmem:[%s3 + $0x10] sm:$0xff]
  %v5013 = vld [vmem:[%s3 + $0x18] sm:$0xff]
  %v5014 = vld [vmem:[%s3 + $0x20] sm:$0xff]
  %v5015 = vld [vmem:[%s3 + $0x28] sm:$0xff]
  %v5016 = vld [vmem:[%s3 + $0x30] sm:$0xff]
  %v5017 = vld [vmem:[%s3 + $0x38] sm:$0xff]
  %v5018 = vld [vmem:[%s3 + $0x40] sm:$0xff]
  %v5019 = vld [vmem:[%s3 + $0x48] sm:$0xff]
  %v5020 = vld [vmem:[%s3 + $0x50] sm:$0xff]
  %v5021 = vld [vmem:[%s3 + $0x58] sm:$0xff]
  %v5022 = vld [vmem:[%s3 + $0x60] sm:$0xff]
  %v5023 = vld [vmem:[%s3 + $0x68] sm:$0xff]
  %v5024 = vld [vmem:[%s3 + $0x70] sm:$0xff]
  %v5025 = vld [vmem:[%s3 + $0x78] sm:$0xff]
  %5026 = vmatprep.subr.mxu0 0.0
  %5027 = vmatpush1.msra.mxu0 %v5010
  %5028 = vmatprep.subr.mxu0 0.0
  %5029 = vmatpush1.msra.mxu0 %v5011
  %5030 = vmatprep.subr.mxu0 0.0
  %5031 = vmatpush1.msra.mxu0 %v5012
  %5032 = vmatprep.subr.mxu0 0.0
  %5033 = vmatpush1.msra.mxu0 %v5013
  %5034 = vmatprep.subr.mxu0 0.0
  %5035 = vmatpush1.msra.mxu0 %v5014
  %5036 = vmatprep.subr.mxu0 0.0
  %5037 = vmatpush1.msra.mxu0 %v5015
  %5038 = vmatprep.subr.mxu0 0.0
  %5039 = vmatpush1.msra.mxu0 %v5016
  %5040 = vmatprep.subr.mxu0 0.0
  %5041 = vmatpush1.msra.mxu0 %v5017
  %5042 = vmatprep.subr.mxu0 0.0
  %5043 = vmatpush1.msra.mxu0 %v5018
  %5044 = vmatprep.subr.mxu0 0.0
  %5045 = vmatpush1.msra.mxu0 %v5019
  %5046 = vmatprep.subr.mxu0 0.0
  %5047 = vmatpush1.msra.mxu0 %v5020
  %5048 = vmatprep.subr.mxu0 0.0
  %5049 = vmatpush1.msra.mxu0 %v5021
  %5050 = vmatprep.subr.mxu0 0.0
  %5051 = vmatpush1.msra.mxu0 %v5022
  %5052 = vmatprep.subr.mxu0 0.0
  %5053 = vmatpush1.msra.mxu0 %v5023
  %5054 = vmatprep.subr.mxu0 0.0
  %5055 = vmatpush1.msra.mxu0 %v5024
  %5056 = vmatprep.subr.mxu0 0.0
  %5057 = vmatpush1.msra.mxu0 %v5025
  %5058 = vmatprep.subr.mxu0 0.0
  %5059 = vmatpush1.msra.mxu0 0.0
  %5060 = vmatprep.subr.mxu0 0.0
  %5061 = vmatpush1.msra.mxu0 0.0
  %5062 = vmatprep.subr.mxu0 0.0
  %5063 = vmatpush1.msra.mxu0 0.0
  %5064 = vmatprep.subr.mxu0 0.0
  %5065 = vmatpush1.msra.mxu0 0.0
  %5066 = vmatprep.subr.mxu0 0.0
  %5067 = vmatpush1.msra.mxu0 0.0
  %5068 = vmatprep.subr.mxu0 0.0
  %5069 = vmatpush1.msra.mxu0 0.0
  %5070 = vmatprep.subr.mxu0 0.0
  %5071 = vmatpush1.msra.mxu0 0.0
  %5072 = vmatprep.subr.mxu0 0.0
  %5073 = vmatpush1.msra.mxu0 0.0
  %5074 = vmatprep.subr.mxu0 0.0
  %5075 = vmatpush1.msra.mxu0 0.0
  %5076 = vmatprep.subr.mxu0 0.0
  %5077 = vmatpush1.msra.mxu0 0.0
  %5078 = vmatprep.subr.mxu0 0.0
  %5079 = vmatpush1.msra.mxu0 0.0
  %5080 = vmatprep.subr.mxu0 0.0
  %5081 = vmatpush1.msra.mxu0 0.0
  %5082 = vmatprep.subr.mxu0 0.0
  %5083 = vmatpush1.msra.mxu0 0.0
  %5084 = vmatprep.subr.mxu0 0.0
  %5085 = vmatpush1.msra.mxu0 0.0
  %5086 = vmatprep.subr.mxu0 0.0
  %5087 = vmatpush1.msra.mxu0 0.0
  %5088 = vmatprep.subr.mxu0 0.0
  %5089 = vmatpush1.msra.mxu0 0.0
  %5090 = vmatprep.mubr.f32.mxu0 0.0
  %5091 = vmatmul.mubr.f32.gmra.mrb[0].mxu0 %v5006
  %v5092 = vpop.f32.mrb[0].mxu0
  %v5093 = vadd.f32 0.0, %v5092
  %v5094 = vpop.f32.mrb[0].mxu0
  %5095 = vmatprep.mubr.f32.mxu0 0.0
  %5096 = vmatmul.mubr.f32.gmra.mrb[0].mxu0 %v5007
  %v5097 = vpop.f32.mrb[0].mxu0
  %v5098 = vadd.f32 0.0, %v5097
  %v5099 = vpop.f32.mrb[0].mxu0
  %5100 = vmatprep.mubr.f32.mxu0 0.0
  %5101 = vmatmul.mubr.f32.gmra.mrb[0].mxu0 %v5008
  %v5102 = vpop.f32.mrb[0].mxu0
  %v5103 = vadd.f32 0.0, %v5102
  %v5104 = vpop.f32.mrb[0].mxu0
  %5105 = vmatprep.mubr.f32.mxu0 0.0
  %5106 = vmatmul.mubr.f32.gmra.mrb[0].mxu0 %v5009
  %v5107 = vpop.f32.mrb[0].mxu0
  %v5108 = vadd.f32 0.0, %v5107
  %v5109 = vpop.f32.mrb[0].mxu0
  %5110 = vdwg.mxu0
  %5115 = vrot.lane.b32.xlu0 %v5093, 96
  %v5116 = vpop.permute.xlu0 %5115
  %5117 = vrot.lane.b32.xlu0 %v5098, 96
  %v5118 = vpop.permute.xlu0 %5117
  %5119 = vrot.lane.b32.xlu0 %v5103, 96
  %v5120 = vpop.permute.xlu0 %5119
  %5121 = vrot.lane.b32.xlu0 %v5108, 96
  %v5122 = vpop.permute.xlu0 %5121
  %vm5127 = vcmask 785408
  %v5128 = vsel %vm5127, %v4935, %v5116
  %v5129 = vsel %vm5127, %v4936, %v5118
  %v5130 = vsel %vm5127, %v4945, %v5120
  %v5131 = vsel %vm5127, %v4947, %v5122
  %v5132 = vld [vmem:[%s4] sm:$0x1]
  %v5134 = vlaneseq
  %v5135 = vshrl.u32 %v5134, 7
  %v5136 = vsub.s32 0, %v5135
  %v5137 = vrot.slane %v5132, %v5136
  %v5139 = vmul.f32 %v5128, %v5137
  %v5140 = vmul.f32 %v5129, %v5137
  %v5141 = vmul.f32 %v5130, %v5137
  %v5142 = vmul.f32 %v5131, %v5137
  %v5143 = vld [vmem:[%s5] sm:$0x1]
  %v5145 = vlaneseq
  %v5146 = vshrl.u32 %v5145, 7
  %v5147 = vsub.s32 0, %v5146
  %v5148 = vrot.slane %v5143, %v5147
  %v5150 = vadd.f32 %v5139, %v5148
  %v5151 = vadd.f32 %v5140, %v5148
  %v5152 = vadd.f32 %v5141, %v5148
  %v5153 = vadd.f32 %v5142, %v5148
  %v5154 = vmax.f32 %v5150, 0.0
  %v5155 = vmax.f32 %v5151, 0.0
  %v5156 = vmax.f32 %v5152, 0.0
  %v5157 = vmax.f32 %v5153, 0.0
  %5158 = vst [vmem:[%s6] sm:$0xff] %v5154
  %5159 = vst [vmem:[%s6 + $0x8] sm:$0xff] %v5155
  %5160 = vst [vmem:[%s6 + $0x10] sm:$0xff] %v5156
  %5161 = vst [vmem:[%s6 + $0x18] sm:$0xff] %v5157
  // Predicated region
  $region26: #{inceptiontime_fwd.10} parent=0 // pred_check
    _
  $region27: #{inceptiontime_fwd.10} parent=0 // pred_check_branch
    %5163 = sbr.rel (0) target = $region29
  $region28: #{inceptiontime_fwd.10} parent=0 // pred_region
    _
  $region29: #{inceptiontime_fwd.10} parent=0 // pred_fallthru
    _
  // Predicated region
  $region30: #{inceptiontime_fwd.10} parent=0 // pred_check
    _
  $region31: #{inceptiontime_fwd.10} parent=0 // pred_check_branch
    %5165 = sbr.rel (0) target = $region33
  $region32: #{inceptiontime_fwd.10} parent=0 // pred_region
    _
  $region33: #{inceptiontime_fwd.10} parent=0 // pred_fallthru
    _

// kernel: inceptiontime_fwd.9
$region0: #{inceptiontime_fwd.9}
  #allocation0 [shape = 'u32[]', space=smem, size = 0x4, offset = 0x4, fixed_abs, tag = 'smem constant byte address 0x4 - core index']
  #allocation1 [shape = 'u32[144,128]{1,0:T(1,128)}', space=vmem, size = 0x12000, scoped, tag = 'internal scratch']
  %s0 = inlined_call_operand.vmem [shape: f32[2,16,4], index: 0, kind: input, shape index: {}]
  %s1 = inlined_call_operand.hbm [shape: f32[4,32], index: 1, kind: input, shape index: {}]
  %s2 = inlined_call_operand.hbm [shape: f32[39,32,96], index: 2, kind: input, shape index: {}]
  %s3 = inlined_call_operand.hbm [shape: f32[4,32], index: 3, kind: input, shape index: {}]
  %s4 = inlined_call_operand.hbm [shape: f32[1,128], index: 4, kind: input, shape index: {}]
  %s5 = inlined_call_operand.hbm [shape: f32[1,128], index: 5, kind: input, shape index: {}]
  %s6 = inlined_call_operand.vmem [shape: f32[2,16,128], index: 6, kind: output, shape index: {}]
  %s7 = sld [smem:[#allocation0]]
  $region54: #{inceptiontime_fwd.9} parent=0
    _
  %s9 = ssub.s32 1, %s7
  %s10 = scalar_select 0, %s9, %s7
  $region1: #{inceptiontime_fwd.9} parent=0
    #allocation2 [shape = 'u8[2048]{0}', space=vmem, size = 0x800, scoped, tag = 'input window, operand 1, single buffered']
    #allocation3 [shape = 's32[1]{0}', space=sflag, size = 0x4, scoped, tag = 'scoped memory for inceptiontime_fwd.9']
    #allocation4 [shape = 'u8[638976]{0}', space=vmem, size = 0x9c000, scoped, tag = 'input window, operand 2, single buffered']
    #allocation5 [shape = 's32[1]{0}', space=sflag, size = 0x4, scoped, tag = 'scoped memory for inceptiontime_fwd.9']
    #allocation6 [shape = 'u8[2048]{0}', space=vmem, size = 0x800, scoped, tag = 'input window, operand 3, single buffered']
    #allocation7 [shape = 'u8[512]{0}', space=vmem, size = 0x400, scoped, tag = 'input window, operand 4, single buffered']
    #allocation8 [shape = 's32[1]{0}', space=sflag, size = 0x4, scoped, tag = 'scoped memory for inceptiontime_fwd.9']
    #allocation9 [shape = 'u8[512]{0}', space=vmem, size = 0x400, scoped, tag = 'input window, operand 5, single buffered']
    %11 = vsyncpa [#allocation3], 0
    %12 = vsyncpa [#allocation5], 0
    %13 = vsyncpa [#allocation8], 0
    // Predicated region
    $region2: #{inceptiontime_fwd.9} parent=1 // pred_check
      _
    $region3: #{inceptiontime_fwd.9} parent=1 // pred_check_branch
      %15 = sbr.rel (0) target = $region5
    $region4: #{inceptiontime_fwd.9} parent=1 // pred_region
      _
    $region5: #{inceptiontime_fwd.9} parent=1 // pred_fallthru
      _
    // Predicated region
    $region6: #{inceptiontime_fwd.9} parent=1 // pred_check
      _
    $region7: #{inceptiontime_fwd.9} parent=1 // pred_check_branch
      %17 = sbr.rel (0) target = $region9
    $region8: #{inceptiontime_fwd.9} parent=1 // pred_region
      %s19 = ssub.s32 64, 64
      %20 = vsyncadd [#allocation3], %s19
      %s22 = sshll.u32 [#allocation2], 4
      %s23 = int_to_ptr.vmem [resolvable:$true] %s22
      %25 = dma.hbm_to_vmem [thread:$0]  %s1, 64, %s23, [#allocation3]
    $region9: #{inceptiontime_fwd.9} parent=1 // pred_fallthru
      _
    // Predicated region
    $region10: #{inceptiontime_fwd.9} parent=1 // pred_check
      _
    $region11: #{inceptiontime_fwd.9} parent=1 // pred_check_branch
      %27 = sbr.rel (0) target = $region13
    $region12: #{inceptiontime_fwd.9} parent=1 // pred_region
      %s29 = ssub.s32 19968, 19968
      %30 = vsyncadd [#allocation5], %s29
      %s31 = sshll.u32 [#allocation4], 4
      %s32 = int_to_ptr.vmem [resolvable:$true] %s31
      %37 = dma.hbm_to_vmem [thread:$0]  %s2, 19968, %s32, [#allocation5], 128, 128, 8
    $region13: #{inceptiontime_fwd.9} parent=1 // pred_fallthru
      _
    // Predicated region
    $region14: #{inceptiontime_fwd.9} parent=1 // pred_check
      _
    $region15: #{inceptiontime_fwd.9} parent=1 // pred_check_branch
      %39 = sbr.rel (0) target = $region17
    $region16: #{inceptiontime_fwd.9} parent=1 // pred_region
      %s41 = ssub.s32 64, 64
      %42 = vsyncadd [#allocation5], %s41
      %s44 = sshll.u32 [#allocation6], 4
      %s45 = int_to_ptr.vmem [resolvable:$true] %s44
      %47 = dma.hbm_to_vmem [thread:$0]  %s3, 64, %s45, [#allocation5]
    $region17: #{inceptiontime_fwd.9} parent=1 // pred_fallthru
      _
    // Predicated region
    $region18: #{inceptiontime_fwd.9} parent=1 // pred_check
      _
    $region19: #{inceptiontime_fwd.9} parent=1 // pred_check_branch
      %49 = sbr.rel (0) target = $region21
    $region20: #{inceptiontime_fwd.9} parent=1 // pred_region
      %s51 = ssub.s32 16, 16
      %52 = vsyncadd [#allocation8], %s51
      %s54 = sshll.u32 [#allocation7], 4
      %s55 = int_to_ptr.vmem [resolvable:$true] %s54
      %57 = dma.hbm_to_vmem [thread:$0]  %s4, 16, %s55, [#allocation8]
    $region21: #{inceptiontime_fwd.9} parent=1 // pred_fallthru
      _
    // Predicated region
    $region22: #{inceptiontime_fwd.9} parent=1 // pred_check
      _
    $region23: #{inceptiontime_fwd.9} parent=1 // pred_check_branch
      %59 = sbr.rel (0) target = $region25
    $region24: #{inceptiontime_fwd.9} parent=1 // pred_region
      %s61 = ssub.s32 16, 16
      %62 = vsyncadd [#allocation8], %s61
      %s64 = sshll.u32 [#allocation9], 4
      %s65 = int_to_ptr.vmem [resolvable:$true] %s64
      %67 = dma.hbm_to_vmem [thread:$0]  %s5, 16, %s65, [#allocation8]
    $region25: #{inceptiontime_fwd.9} parent=1 // pred_fallthru
      _
    // Predicated region
    $region26: #{inceptiontime_fwd.9} parent=1 // pred_check
      _
    $region27: #{inceptiontime_fwd.9} parent=1 // pred_check_branch
      %69 = sbr.rel (0) target = $region29
    $region28: #{inceptiontime_fwd.9} parent=1 // pred_region
      %70 = dma.done [#allocation3], 64
    $region29: #{inceptiontime_fwd.9} parent=1 // pred_fallthru
      _
    // Predicated region
    $region30: #{inceptiontime_fwd.9} parent=1 // pred_check
      _
    $region31: #{inceptiontime_fwd.9} parent=1 // pred_check_branch
      %72 = sbr.rel (0) target = $region33
    $region32: #{inceptiontime_fwd.9} parent=1 // pred_region
      %73 = dma.done [#allocation5], 19968
    $region33: #{inceptiontime_fwd.9} parent=1 // pred_fallthru
      _
    // Predicated region
    $region34: #{inceptiontime_fwd.9} parent=1 // pred_check
      _
    $region35: #{inceptiontime_fwd.9} parent=1 // pred_check_branch
      %75 = sbr.rel (0) target = $region37
    $region36: #{inceptiontime_fwd.9} parent=1 // pred_region
      %76 = dma.done [#allocation5], 64
    $region37: #{inceptiontime_fwd.9} parent=1 // pred_fallthru
      _
    // Predicated region
    $region38: #{inceptiontime_fwd.9} parent=1 // pred_check
      _
    $region39: #{inceptiontime_fwd.9} parent=1 // pred_check_branch
      %78 = sbr.rel (0) target = $region41
    $region40: #{inceptiontime_fwd.9} parent=1 // pred_region
      %79 = dma.done [#allocation8], 16
    $region41: #{inceptiontime_fwd.9} parent=1 // pred_fallthru
      _
    // Predicated region
    $region42: #{inceptiontime_fwd.9} parent=1 // pred_check
      _
    $region43: #{inceptiontime_fwd.9} parent=1 // pred_check_branch
      %81 = sbr.rel (0) target = $region45
    $region44: #{inceptiontime_fwd.9} parent=1 // pred_region
      %82 = dma.done [#allocation8], 16
    $region45: #{inceptiontime_fwd.9} parent=1 // pred_fallthru
      _
    %v83 = vld [vmem:[%s0] sm:$0xff]
    %v84 = vld [vmem:[%s0 + $0x8] sm:$0xff]
    %v85 = vld [vmem:[%s0 + $0x10] sm:$0xff]
    %v86 = vld [vmem:[%s0 + $0x18] sm:$0xff]
    %v87 = vld [vmem:[#allocation2] sm:$0xf]
    %vm88 = vcmask 31744
    %v90 = vsel %vm88, %v83, 0
    %v93 = vsel %vm88, %v84, 0
    %v96 = vsel %vm88, %v85, 0
    %v99 = vsel %vm88, %v86, 0
    %vm101 = vcmask 1043456
    %v103 = vsel %vm101, %v87, 0
    %105 = vmatprep.subr.mxu0 0.0
    %106 = vmatpush1.msra.mxu0 %v103
    %107 = vmatprep.subr.mxu0 0.0
    %108 = vmatpush1.msra.mxu0 0.0
    %109 = vmatprep.subr.mxu0 0.0
    %110 = vmatpush1.msra.mxu0 0.0
    %111 = vmatprep.subr.mxu0 0.0
    %112 = vmatpush1.msra.mxu0 0.0
    %113 = vmatprep.subr.mxu0 0.0
    %114 = vmatpush1.msra.mxu0 0.0
    %115 = vmatprep.subr.mxu0 0.0
    %116 = vmatpush1.msra.mxu0 0.0
    %117 = vmatprep.subr.mxu0 0.0
    %118 = vmatpush1.msra.mxu0 0.0
    %119 = vmatprep.subr.mxu0 0.0
    %120 = vmatpush1.msra.mxu0 0.0
    %121 = vmatprep.subr.mxu0 0.0
    %122 = vmatpush1.msra.mxu0 0.0
    %123 = vmatprep.subr.mxu0 0.0
    %124 = vmatpush1.msra.mxu0 0.0
    %125 = vmatprep.subr.mxu0 0.0
    %126 = vmatpush1.msra.mxu0 0.0
    %127 = vmatprep.subr.mxu0 0.0
    %128 = vmatpush1.msra.mxu0 0.0
    %129 = vmatprep.subr.mxu0 0.0
    %130 = vmatpush1.msra.mxu0 0.0
    %131 = vmatprep.subr.mxu0 0.0
    %132 = vmatpush1.msra.mxu0 0.0
    %133 = vmatprep.subr.mxu0 0.0
    %134 = vmatpush1.msra.mxu0 0.0
    %135 = vmatprep.subr.mxu0 0.0
    %136 = vmatpush1.msra.mxu0 0.0
    %137 = vmatprep.subr.mxu0 0.0
    %138 = vmatpush1.msra.mxu0 0.0
    %139 = vmatprep.subr.mxu0 0.0
    %140 = vmatpush1.msra.mxu0 0.0
    %141 = vmatprep.subr.mxu0 0.0
    %142 = vmatpush1.msra.mxu0 0.0
    %143 = vmatprep.subr.mxu0 0.0
    %144 = vmatpush1.msra.mxu0 0.0
    %145 = vmatprep.subr.mxu0 0.0
    %146 = vmatpush1.msra.mxu0 0.0
    %147 = vmatprep.subr.mxu0 0.0
    %148 = vmatpush1.msra.mxu0 0.0
    %149 = vmatprep.subr.mxu0 0.0
    %150 = vmatpush1.msra.mxu0 0.0
    %151 = vmatprep.subr.mxu0 0.0
    %152 = vmatpush1.msra.mxu0 0.0
    %153 = vmatprep.subr.mxu0 0.0
    %154 = vmatpush1.msra.mxu0 0.0
    %155 = vmatprep.subr.mxu0 0.0
    %156 = vmatpush1.msra.mxu0 0.0
    %157 = vmatprep.subr.mxu0 0.0
    %158 = vmatpush1.msra.mxu0 0.0
    %159 = vmatprep.subr.mxu0 0.0
    %160 = vmatpush1.msra.mxu0 0.0
    %161 = vmatprep.subr.mxu0 0.0
    %162 = vmatpush1.msra.mxu0 0.0
    %163 = vmatprep.subr.mxu0 0.0
    %164 = vmatpush1.msra.mxu0 0.0
    %165 = vmatprep.subr.mxu0 0.0
    %166 = vmatpush1.msra.mxu0 0.0
    %167 = vmatprep.subr.mxu0 0.0
    %168 = vmatpush1.msra.mxu0 0.0
    %169 = vmatprep.mubr.f32.mxu0 0.0
    %170 = vmatmul.mubr.f32.gmra.mrb[0].mxu0 %v90
    %v171 = vpop.f32.mrb[0].mxu0
    %v172 = vadd.f32 0.0, %v171
    %v173 = vpop.f32.mrb[0].mxu0
    %174 = vmatprep.mubr.f32.mxu0 0.0
    %175 = vmatmul.mubr.f32.gmra.mrb[0].mxu0 %v93
    %v176 = vpop.f32.mrb[0].mxu0
    %v177 = vadd.f32 0.0, %v176
    %v178 = vpop.f32.mrb[0].mxu0
    %179 = vmatprep.mubr.f32.mxu0 0.0
    %180 = vmatmul.mubr.f32.gmra.mrb[0].mxu0 %v96
    %v181 = vpop.f32.mrb[0].mxu0
    %v182 = vadd.f32 0.0, %v181
    %v183 = vpop.f32.mrb[0].mxu0
    %184 = vmatprep.mubr.f32.mxu0 0.0
    %185 = vmatmul.mubr.f32.gmra.mrb[0].mxu0 %v99
    %v186 = vpop.f32.mrb[0].mxu0
    %v187 = vadd.f32 0.0, %v186
    %v188 = vpop.f32.mrb[0].mxu0
    %189 = vdwg.mxu0
    %vm192 = vcmask 1042432
    %v193 = vrot.slane %v172, 5
    %v194 = vrot.slane %v177, 5
    %v195 = vsel %vm192, %v193, %v194
    %vm200 = vcmask 1040384
    %v201 = vrot.slane %v182, 7
    %v202 = vrot.slane %v187, 7
    %v203 = vsel %vm200, %v201, %v202
    %v206 = vsel %vm192, 0.0, %v193
    %v207 = vsel %vm192, %v194, 0.0
    %v208 = vsel %vm200, 0.0, %v201
    %v209 = vsel %vm200, %v202, 0.0
    %v210 = vld [vmem:[#allocation4] sm:$0xff]
    %v211 = vld [vmem:[#allocation4 + $0x8] sm:$0xff]
    %v212 = vld [vmem:[#allocation4 + $0x10] sm:$0xff]
    %v213 = vld [vmem:[#allocation4 + $0x18] sm:$0xff]
    %s214 = scalar_lea.vmem [#allocation4], 32
    %v215 = vld [vmem:[%s214] sm:$0xff]
    %v216 = vld [vmem:[%s214 + $0x8] sm:$0xff]
    %v217 = vld [vmem:[%s214 + $0x10] sm:$0xff]
    %v218 = vld [vmem:[%s214 + $0x18] sm:$0xff]
    %vm222 = vcmask 1046528
    %v223 = vrot.slane 0.0, 1
    %v224 = vsel %vm222, %v223, %v223
    %v225 = vrot.slane %v206, 1
    %v226 = vsel %vm222, %v223, %v225
    %v227 = vrot.slane %v195, 1
    %v228 = vsel %vm222, %v225, %v227
    %v229 = vrot.slane %v207, 1
    %v230 = vsel %vm222, %v227, %v229
    %v231 = vsel %vm222, %v229, %v223
    %vm232 = vcmask 261120
    %v233 = vsel %vm232, %v224, 0
    %v235 = vsel %vm232, %v226, 0
    %v237 = vsel %vm232, %v228, 0
    %v239 = vsel %vm232, %v230, 0
    %v241 = vsel %vm232, %v231, 0
    %v243 = vsel %vm232, %v223, 0
    %245 = vmatprep.subr.mxu0 0.0
    %246 = vmatpush1.msra.mxu0 %v215
    %247 = vmatprep.subr.mxu0 0.0
    %248 = vmatpush1.msra.mxu0 %v216
    %249 = vmatprep.subr.mxu0 0.0
    %250 = vmatpush1.msra.mxu0 %v217
    %251 = vmatprep.subr.mxu0 0.0
    %252 = vmatpush1.msra.mxu0 %v218
    %253 = vmatprep.subr.mxu0 0.0
    %254 = vmatpush1.msra.mxu0 0.0
    %255 = vmatprep.subr.mxu0 0.0
    %256 = vmatpush1.msra.mxu0 0.0
    %257 = vmatprep.subr.mxu0 0.0
    %258 = vmatpush1.msra.mxu0 0.0
    %259 = vmatprep.subr.mxu0 0.0
    %260 = vmatpush1.msra.mxu0 0.0
    %261 = vmatprep.subr.mxu0 0.0
    %262 = vmatpush1.msra.mxu0 0.0
    %263 = vmatprep.subr.mxu0 0.0
    %264 = vmatpush1.msra.mxu0 0.0
    %265 = vmatprep.subr.mxu0 0.0
    %266 = vmatpush1.msra.mxu0 0.0
    %267 = vmatprep.subr.mxu0 0.0
    %268 = vmatpush1.msra.mxu0 0.0
    %269 = vmatprep.subr.mxu0 0.0
    %270 = vmatpush1.msra.mxu0 0.0
    %271 = vmatprep.subr.mxu0 0.0
    %272 = vmatpush1.msra.mxu0 0.0
    %273 = vmatprep.subr.mxu0 0.0
    %274 = vmatpush1.msra.mxu0 0.0
    %275 = vmatprep.subr.mxu0 0.0
    %276 = vmatpush1.msra.mxu0 0.0
    %277 = vmatprep.subr.mxu0 0.0
    %278 = vmatpush1.msra.mxu0 0.0
    %279 = vmatprep.subr.mxu0 0.0
    %280 = vmatpush1.msra.mxu0 0.0
    %281 = vmatprep.subr.mxu0 0.0
    %282 = vmatpush1.msra.mxu0 0.0
    %283 = vmatprep.subr.mxu0 0.0
    %284 = vmatpush1.msra.mxu0 0.0
    %285 = vmatprep.subr.mxu0 0.0
    %286 = vmatpush1.msra.mxu0 0.0
    %287 = vmatprep.subr.mxu0 0.0
    %288 = vmatpush1.msra.mxu0 0.0
    %289 = vmatprep.subr.mxu0 0.0
    %290 = vmatpush1.msra.mxu0 0.0
    %291 = vmatprep.subr.mxu0 0.0
    %292 = vmatpush1.msra.mxu0 0.0
    %293 = vmatprep.subr.mxu0 0.0
    %294 = vmatpush1.msra.mxu0 0.0
    %295 = vmatprep.subr.mxu0 0.0
    %296 = vmatpush1.msra.mxu0 0.0
    %297 = vmatprep.subr.mxu0 0.0
    %298 = vmatpush1.msra.mxu0 0.0
    %299 = vmatprep.subr.mxu0 0.0
    %300 = vmatpush1.msra.mxu0 0.0
    %301 = vmatprep.subr.mxu0 0.0
    %302 = vmatpush1.msra.mxu0 0.0
    %303 = vmatprep.subr.mxu0 0.0
    %304 = vmatpush1.msra.mxu0 0.0
    %305 = vmatprep.subr.mxu0 0.0
    %306 = vmatpush1.msra.mxu0 0.0
    %307 = vmatprep.subr.mxu0 0.0
    %308 = vmatpush1.msra.mxu0 0.0
    %309 = vmatprep.mubr.f32.mxu0 0.0
    %310 = vmatmul.mubr.f32.gmra.mrb[0].mxu0 %v233
    %v311 = vpop.f32.mrb[0].mxu0
    %v312 = vadd.f32 0.0, %v311
    %v313 = vpop.f32.mrb[0].mxu0
    %314 = vmatprep.mubr.f32.mxu0 0.0
    %315 = vmatmul.mubr.f32.gmra.mrb[0].mxu0 %v235
    %v316 = vpop.f32.mrb[0].mxu0
    %v317 = vadd.f32 0.0, %v316
    %v318 = vpop.f32.mrb[0].mxu0
    %319 = vmatprep.mubr.f32.mxu0 0.0
    %320 = vmatmul.mubr.f32.gmra.mrb[0].mxu0 %v237
    %v321 = vpop.f32.mrb[0].mxu0
    %v322 = vpop.f32.mrb[0].mxu0
    %323 = vmatprep.mubr.f32.mxu0 0.0
    %324 = vmatmul.mubr.f32.gmra.mrb[0].mxu0 %v239
    %v325 = vpop.f32.mrb[0].mxu0
    %v326 = vpop.f32.mrb[0].mxu0
    %327 = vmatprep.mubr.f32.mxu0 0.0
    %328 = vmatmul.mubr.f32.gmra.mrb[0].mxu0 %v241
    %v329 = vpop.f32.mrb[0].mxu0
    %v330 = vpop.f32.mrb[0].mxu0
    %331 = vmatprep.mubr.f32.mxu0 0.0
    %332 = vmatmul.mubr.f32.gmra.mrb[0].mxu0 %v233
    %v333 = vpop.f32.mrb[0].mxu0
    %v334 = vpop.f32.mrb[0].mxu0
    %335 = vmatprep.mubr.f32.mxu0 0.0
    %336 = vmatmul.mubr.f32.gmra.mrb[0].mxu0 %v233
    %v337 = vpop.f32.mrb[0].mxu0
    %v338 = vadd.f32 0.0, %v337
    %v339 = vpop.f32.mrb[0].mxu0
    %340 = vmatprep.mubr.f32.mxu0 0.0
    %341 = vmatmul.mubr.f32.gmra.mrb[0].mxu0 %v233
    %v342 = vpop.f32.mrb[0].mxu0
    %v343 = vadd.f32 0.0, %v342
    %v344 = vpop.f32.mrb[0].mxu0
    %345 = vmatprep.mubr.f32.mxu0 0.0
    %346 = vmatmul.mubr.f32.gmra.mrb[0].mxu0 %v243
    %v347 = vpop.f32.mrb[0].mxu0
    %v348 = vadd.f32 0.0, %v347
    %v349 = vpop.f32.mrb[0].mxu0
    %350 = vdwg.mxu0
    %v351 = vsel %vm232, 0.0, 0
    %v353 = vsel %vm232, %v206, 0
    %v355 = vsel %vm232, %v195, 0
    %v357 = vsel %vm232, %v207, 0
    %359 = vmatprep.subr.mxu0 0.0
    %360 = vmatpush1.msra.mxu0 %v210
    %361 = vmatprep.subr.mxu0 0.0
    %362 = vmatpush1.msra.mxu0 %v211
    %363 = vmatprep.subr.mxu0 0.0
    %364 = vmatpush1.msra.mxu0 %v212
    %365 = vmatprep.subr.mxu0 0.0
    %366 = vmatpush1.msra.mxu0 %v213
    %367 = vmatprep.subr.mxu0 0.0
    %368 = vmatpush1.msra.mxu0 0.0
    %369 = vmatprep.subr.mxu0 0.0
    %370 = vmatpush1.msra.mxu0 0.0
    %371 = vmatprep.subr.mxu0 0.0
    %372 = vmatpush1.msra.mxu0 0.0
    %373 = vmatprep.subr.mxu0 0.0
    %374 = vmatpush1.msra.mxu0 0.0
    %375 = vmatprep.subr.mxu0 0.0
    %376 = vmatpush1.msra.mxu0 0.0
    %377 = vmatprep.subr.mxu0 0.0
    %378 = vmatpush1.msra.mxu0 0.0
    %379 = vmatprep.subr.mxu0 0.0
    %380 = vmatpush1.msra.mxu0 0.0
    %381 = vmatprep.subr.mxu0 0.0
    %382 = vmatpush1.msra.mxu0 0.0
    %383 = vmatprep.subr.mxu0 0.0
    %384 = vmatpush1.msra.mxu0 0.0
    %385 = vmatprep.subr.mxu0 0.0
    %386 = vmatpush1.msra.mxu0 0.0
    %387 = vmatprep.subr.mxu0 0.0
    %388 = vmatpush1.msra.mxu0 0.0
    %389 = vmatprep.subr.mxu0 0.0
    %390 = vmatpush1.msra.mxu0 0.0
    %391 = vmatprep.subr.mxu0 0.0
    %392 = vmatpush1.msra.mxu0 0.0
    %393 = vmatprep.subr.mxu0 0.0
    %394 = vmatpush1.msra.mxu0 0.0
    %395 = vmatprep.subr.mxu0 0.0
    %396 = vmatpush1.msra.mxu0 0.0
    %397 = vmatprep.subr.mxu0 0.0
    %398 = vmatpush1.msra.mxu0 0.0
    %399 = vmatprep.subr.mxu0 0.0
    %400 = vmatpush1.msra.mxu0 0.0
    %401 = vmatprep.subr.mxu0 0.0
    %402 = vmatpush1.msra.mxu0 0.0
    %403 = vmatprep.subr.mxu0 0.0
    %404 = vmatpush1.msra.mxu0 0.0
    %405 = vmatprep.subr.mxu0 0.0
    %406 = vmatpush1.msra.mxu0 0.0
    %407 = vmatprep.subr.mxu0 0.0
    %408 = vmatpush1.msra.mxu0 0.0
    %409 = vmatprep.subr.mxu0 0.0
    %410 = vmatpush1.msra.mxu0 0.0
    %411 = vmatprep.subr.mxu0 0.0
    %412 = vmatpush1.msra.mxu0 0.0
    %413 = vmatprep.subr.mxu0 0.0
    %414 = vmatpush1.msra.mxu0 0.0
    %415 = vmatprep.subr.mxu0 0.0
    %416 = vmatpush1.msra.mxu0 0.0
    %417 = vmatprep.subr.mxu0 0.0
    %418 = vmatpush1.msra.mxu0 0.0
    %419 = vmatprep.subr.mxu0 0.0
    %420 = vmatpush1.msra.mxu0 0.0
    %421 = vmatprep.subr.mxu0 0.0
    %422 = vmatpush1.msra.mxu0 0.0
    %423 = vmatprep.mubr.f32.mxu0 0.0
    %424 = vmatmul.mubr.f32.gmra.mrb[0].mxu0 %v351
    %v425 = vpop.f32.mrb[0].mxu0
    %v426 = vadd.f32 %v312, %v425
    %v427 = vpop.f32.mrb[0].mxu0
    %428 = vmatprep.mubr.f32.mxu0 0.0
    %429 = vmatmul.mubr.f32.gmra.mrb[0].mxu0 %v351
    %v430 = vpop.f32.mrb[0].mxu0
    %v431 = vadd.f32 %v317, %v430
    %v432 = vpop.f32.mrb[0].mxu0
    %433 = vmatprep.mubr.f32.mxu0 0.0
    %434 = vmatmul.mubr.f32.gmra.mrb[0].mxu0 %v353
    %v435 = vpop.f32.mrb[0].mxu0
    %v436 = vpop.f32.mrb[0].mxu0
    %437 = vmatprep.mubr.f32.mxu0 0.0
    %438 = vmatmul.mubr.f32.gmra.mrb[0].mxu0 %v355
    %v439 = vpop.f32.mrb[0].mxu0
    %v440 = vpop.f32.mrb[0].mxu0
    %441 = vmatprep.mubr.f32.mxu0 0.0
    %442 = vmatmul.mubr.f32.gmra.mrb[0].mxu0 %v357
    %v443 = vpop.f32.mrb[0].mxu0
    %v444 = vpop.f32.mrb[0].mxu0
    %445 = vmatprep.mubr.f32.mxu0 0.0
    %446 = vmatmul.mubr.f32.gmra.mrb[0].mxu0 %v351
    %v447 = vpop.f32.mrb[0].mxu0
    %v448 = vpop.f32.mrb[0].mxu0
    %449 = vmatprep.mubr.f32.mxu0 0.0
    %450 = vmatmul.mubr.f32.gmra.mrb[0].mxu0 %v351
    %v451 = vpop.f32.mrb[0].mxu0
    %v452 = vadd.f32 %v338, %v451
    %v453 = vpop.f32.mrb[0].mxu0
    %454 = vmatprep.mubr.f32.mxu0 0.0
    %455 = vmatmul.mubr.f32.gmra.mrb[0].mxu0 %v351
    %v456 = vpop.f32.mrb[0].mxu0
    %v457 = vadd.f32 %v343, %v456
    %v458 = vpop.f32.mrb[0].mxu0
    %459 = vmatprep.mubr.f32.mxu0 0.0
    %460 = vmatmul.mubr.f32.gmra.mrb[0].mxu0 %v351
    %v461 = vpop.f32.mrb[0].mxu0
    %v462 = vadd.f32 %v348, %v461
    %v463 = vpop.f32.mrb[0].mxu0
    %464 = vdwg.mxu0
    %s465 = scalar_lea.vmem [#allocation4], 64
    %v466 = vld [vmem:[%s465] sm:$0xff]
    %v467 = vld [vmem:[%s465 + $0x8] sm:$0xff]
    %v468 = vld [vmem:[%s465 + $0x10] sm:$0xff]
    %v469 = vld [vmem:[%s465 + $0x18] sm:$0xff]
    %vm470 = vcmask 1045504
    %v471 = vrot.slane 0.0, 2
    %v472 = vsel %vm470, %v471, %v471
    %v473 = vrot.slane %v206, 2
    %v474 = vsel %vm470, %v471, %v473
    %v475 = vrot.slane %v195, 2
    %v476 = vsel %vm470, %v473, %v475
    %v477 = vrot.slane %v207, 2
    %v478 = vsel %vm470, %v475, %v477
    %v479 = vsel %vm470, %v477, %v471
    %v480 = vsel %vm232, %v472, 0
    %v482 = vsel %vm232, %v474, 0
    %v484 = vsel %vm232, %v476, 0
    %v486 = vsel %vm232, %v478, 0
    %v488 = vsel %vm232, %v479, 0
    %v490 = vsel %vm232, %v471, 0
    %492 = vmatprep.subr.mxu0 0.0
    %493 = vmatpush1.msra.mxu0 %v466
    %494 = vmatprep.subr.mxu0 0.0
    %495 = vmatpush1.msra.mxu0 %v467
    %496 = vmatprep.subr.mxu0 0.0
    %497 = vmatpush1.msra.mxu0 %v468
    %498 = vmatprep.subr.mxu0 0.0
    %499 = vmatpush1.msra.mxu0 %v469
    %500 = vmatprep.subr.mxu0 0.0
    %501 = vmatpush1.msra.mxu0 0.0
    %502 = vmatprep.subr.mxu0 0.0
    %503 = vmatpush1.msra.mxu0 0.0
    %504 = vmatprep.subr.mxu0 0.0
    %505 = vmatpush1.msra.mxu0 0.0
    %506 = vmatprep.subr.mxu0 0.0
    %507 = vmatpush1.msra.mxu0 0.0
    %508 = vmatprep.subr.mxu0 0.0
    %509 = vmatpush1.msra.mxu0 0.0
    %510 = vmatprep.subr.mxu0 0.0
    %511 = vmatpush1.msra.mxu0 0.0
    %512 = vmatprep.subr.mxu0 0.0
    %513 = vmatpush1.msra.mxu0 0.0
    %514 = vmatprep.subr.mxu0 0.0
    %515 = vmatpush1.msra.mxu0 0.0
    %516 = vmatprep.subr.mxu0 0.0
    %517 = vmatpush1.msra.mxu0 0.0
    %518 = vmatprep.subr.mxu0 0.0
    %519 = vmatpush1.msra.mxu0 0.0
    %520 = vmatprep.subr.mxu0 0.0
    %521 = vmatpush1.msra.mxu0 0.0
    %522 = vmatprep.subr.mxu0 0.0
    %523 = vmatpush1.msra.mxu0 0.0
    %524 = vmatprep.subr.mxu0 0.0
    %525 = vmatpush1.msra.mxu0 0.0
    %526 = vmatprep.subr.mxu0 0.0
    %527 = vmatpush1.msra.mxu0 0.0
    %528 = vmatprep.subr.mxu0 0.0
    %529 = vmatpush1.msra.mxu0 0.0
    %530 = vmatprep.subr.mxu0 0.0
    %531 = vmatpush1.msra.mxu0 0.0
    %532 = vmatprep.subr.mxu0 0.0
    %533 = vmatpush1.msra.mxu0 0.0
    %534 = vmatprep.subr.mxu0 0.0
    %535 = vmatpush1.msra.mxu0 0.0
    %536 = vmatprep.subr.mxu0 0.0
    %537 = vmatpush1.msra.mxu0 0.0
    %538 = vmatprep.subr.mxu0 0.0
    %539 = vmatpush1.msra.mxu0 0.0
    %540 = vmatprep.subr.mxu0 0.0
    %541 = vmatpush1.msra.mxu0 0.0
    %542 = vmatprep.subr.mxu0 0.0
    %543 = vmatpush1.msra.mxu0 0.0
    %544 = vmatprep.subr.mxu0 0.0
    %545 = vmatpush1.msra.mxu0 0.0
    %546 = vmatprep.subr.mxu0 0.0
    %547 = vmatpush1.msra.mxu0 0.0
    %548 = vmatprep.subr.mxu0 0.0
    %549 = vmatpush1.msra.mxu0 0.0
    %550 = vmatprep.subr.mxu0 0.0
    %551 = vmatpush1.msra.mxu0 0.0
    %552 = vmatprep.subr.mxu0 0.0
    %553 = vmatpush1.msra.mxu0 0.0
    %554 = vmatprep.subr.mxu0 0.0
    %555 = vmatpush1.msra.mxu0 0.0
    %556 = vmatprep.mubr.f32.mxu0 0.0
    %557 = vmatmul.mubr.f32.gmra.mrb[0].mxu0 %v480
    %v558 = vpop.f32.mrb[0].mxu0
    %v559 = vadd.f32 0.0, %v558
    %v560 = vpop.f32.mrb[0].mxu0
    %561 = vmatprep.mubr.f32.mxu0 0.0
    %562 = vmatmul.mubr.f32.gmra.mrb[0].mxu0 %v482
    %v563 = vpop.f32.mrb[0].mxu0
    %v564 = vadd.f32 0.0, %v563
    %v565 = vpop.f32.mrb[0].mxu0
    %566 = vmatprep.mubr.f32.mxu0 0.0
    %567 = vmatmul.mubr.f32.gmra.mrb[0].mxu0 %v484
    %v568 = vpop.f32.mrb[0].mxu0
    %v569 = vpop.f32.mrb[0].mxu0
    %570 = vmatprep.mubr.f32.mxu0 0.0
    %571 = vmatmul.mubr.f32.gmra.mrb[0].mxu0 %v486
    %v572 = vpop.f32.mrb[0].mxu0
    %v573 = vpop.f32.mrb[0].mxu0
    %574 = vmatprep.mubr.f32.mxu0 0.0
    %575 = vmatmul.mubr.f32.gmra.mrb[0].mxu0 %v488
    %v576 = vpop.f32.mrb[0].mxu0
    %v577 = vpop.f32.mrb[0].mxu0
    %578 = vmatprep.mubr.f32.mxu0 0.0
    %579 = vmatmul.mubr.f32.gmra.mrb[0].mxu0 %v480
    %v580 = vpop.f32.mrb[0].mxu0
    %v581 = vpop.f32.mrb[0].mxu0
    %582 = vmatprep.mubr.f32.mxu0 0.0
    %583 = vmatmul.mubr.f32.gmra.mrb[0].mxu0 %v480
    %v584 = vpop.f32.mrb[0].mxu0
    %v585 = vadd.f32 0.0, %v584
    %v586 = vpop.f32.mrb[0].mxu0
    %587 = vmatprep.mubr.f32.mxu0 0.0
    %588 = vmatmul.mubr.f32.gmra.mrb[0].mxu0 %v480
    %v589 = vpop.f32.mrb[0].mxu0
    %v590 = vadd.f32 0.0, %v589
    %v591 = vpop.f32.mrb[0].mxu0
    %592 = vmatprep.mubr.f32.mxu0 0.0
    %593 = vmatmul.mubr.f32.gmra.mrb[0].mxu0 %v490
    %v594 = vpop.f32.mrb[0].mxu0
    %v595 = vadd.f32 0.0, %v594
    %v596 = vpop.f32.mrb[0].mxu0
    %597 = vdwg.mxu0
    %v598 = vadd.f32 %v426, %v559
    %v599 = vadd.f32 %v431, %v564
    %v600 = vadd.f32 %v452, %v585
    %v601 = vadd.f32 %v457, %v590
    %v602 = vadd.f32 %v462, %v595
    %s603 = scalar_lea.vmem [#allocation4], 96
    %v604 = vld [vmem:[%s603] sm:$0xff]
    %v605 = vld [vmem:[%s603 + $0x8] sm:$0xff]
    %v606 = vld [vmem:[%s603 + $0x10] sm:$0xff]
    %v607 = vld [vmem:[%s603 + $0x18] sm:$0xff]
    %vm609 = vcmask 1044480
    %v610 = vrot.slane 0.0, 3
    %v611 = vsel %vm609, %v610, %v610
    %v612 = vrot.slane %v206, 3
    %v613 = vsel %vm609, %v610, %v612
    %v614 = vrot.slane %v195, 3
    %v615 = vsel %vm609, %v612, %v614
    %v616 = vrot.slane %v207, 3
    %v617 = vsel %vm609, %v614, %v616
    %v618 = vsel %vm609, %v616, %v610
    %v619 = vrot.slane %v208, 3
    %v620 = vsel %vm609, %v610, %v619
    %v621 = vsel %vm232, %v611, 0
    %v623 = vsel %vm232, %v613, 0
    %v625 = vsel %vm232, %v615, 0
    %v627 = vsel %vm232, %v617, 0
    %v629 = vsel %vm232, %v618, 0
    %v631 = vsel %vm232, %v620, 0
    %633 = vmatprep.subr.mxu0 0.0
    %634 = vmatpush1.msra.mxu0 %v604
    %635 = vmatprep.subr.mxu0 0.0
    %636 = vmatpush1.msra.mxu0 %v605
    %637 = vmatprep.subr.mxu0 0.0
    %638 = vmatpush1.msra.mxu0 %v606
    %639 = vmatprep.subr.mxu0 0.0
    %640 = vmatpush1.msra.mxu0 %v607
    %641 = vmatprep.subr.mxu0 0.0
    %642 = vmatpush1.msra.mxu0 0.0
    %643 = vmatprep.subr.mxu0 0.0
    %644 = vmatpush1.msra.mxu0 0.0
    %645 = vmatprep.subr.mxu0 0.0
    %646 = vmatpush1.msra.mxu0 0.0
    %647 = vmatprep.subr.mxu0 0.0
    %648 = vmatpush1.msra.mxu0 0.0
    %649 = vmatprep.subr.mxu0 0.0
    %650 = vmatpush1.msra.mxu0 0.0
    %651 = vmatprep.subr.mxu0 0.0
    %652 = vmatpush1.msra.mxu0 0.0
    %653 = vmatprep.subr.mxu0 0.0
    %654 = vmatpush1.msra.mxu0 0.0
    %655 = vmatprep.subr.mxu0 0.0
    %656 = vmatpush1.msra.mxu0 0.0
    %657 = vmatprep.subr.mxu0 0.0
    %658 = vmatpush1.msra.mxu0 0.0
    %659 = vmatprep.subr.mxu0 0.0
    %660 = vmatpush1.msra.mxu0 0.0
    %661 = vmatprep.subr.mxu0 0.0
    %662 = vmatpush1.msra.mxu0 0.0
    %663 = vmatprep.subr.mxu0 0.0
    %664 = vmatpush1.msra.mxu0 0.0
    %665 = vmatprep.subr.mxu0 0.0
    %666 = vmatpush1.msra.mxu0 0.0
    %667 = vmatprep.subr.mxu0 0.0
    %668 = vmatpush1.msra.mxu0 0.0
    %669 = vmatprep.subr.mxu0 0.0
    %670 = vmatpush1.msra.mxu0 0.0
    %671 = vmatprep.subr.mxu0 0.0
    %672 = vmatpush1.msra.mxu0 0.0
    %673 = vmatprep.subr.mxu0 0.0
    %674 = vmatpush1.msra.mxu0 0.0
    %675 = vmatprep.subr.mxu0 0.0
    %676 = vmatpush1.msra.mxu0 0.0
    %677 = vmatprep.subr.mxu0 0.0
    %678 = vmatpush1.msra.mxu0 0.0
    %679 = vmatprep.subr.mxu0 0.0
    %680 = vmatpush1.msra.mxu0 0.0
    %681 = vmatprep.subr.mxu0 0.0
    %682 = vmatpush1.msra.mxu0 0.0
    %683 = vmatprep.subr.mxu0 0.0
    %684 = vmatpush1.msra.mxu0 0.0
    %685 = vmatprep.subr.mxu0 0.0
    %686 = vmatpush1.msra.mxu0 0.0
    %687 = vmatprep.subr.mxu0 0.0
    %688 = vmatpush1.msra.mxu0 0.0
    %689 = vmatprep.subr.mxu0 0.0
    %690 = vmatpush1.msra.mxu0 0.0
    %691 = vmatprep.subr.mxu0 0.0
    %692 = vmatpush1.msra.mxu0 0.0
    %693 = vmatprep.subr.mxu0 0.0
    %694 = vmatpush1.msra.mxu0 0.0
    %695 = vmatprep.subr.mxu0 0.0
    %696 = vmatpush1.msra.mxu0 0.0
    %697 = vmatprep.mubr.f32.mxu0 0.0
    %698 = vmatmul.mubr.f32.gmra.mrb[0].mxu0 %v621
    %v699 = vpop.f32.mrb[0].mxu0
    %v700 = vadd.f32 0.0, %v699
    %v701 = vpop.f32.mrb[0].mxu0
    %702 = vmatprep.mubr.f32.mxu0 0.0
    %703 = vmatmul.mubr.f32.gmra.mrb[0].mxu0 %v623
    %v704 = vpop.f32.mrb[0].mxu0
    %v705 = vadd.f32 0.0, %v704
    %v706 = vpop.f32.mrb[0].mxu0
    %707 = vmatprep.mubr.f32.mxu0 0.0
    %708 = vmatmul.mubr.f32.gmra.mrb[0].mxu0 %v625
    %v709 = vpop.f32.mrb[0].mxu0
    %v710 = vpop.f32.mrb[0].mxu0
    %711 = vmatprep.mubr.f32.mxu0 0.0
    %712 = vmatmul.mubr.f32.gmra.mrb[0].mxu0 %v627
    %v713 = vpop.f32.mrb[0].mxu0
    %v714 = vpop.f32.mrb[0].mxu0
    %715 = vmatprep.mubr.f32.mxu0 0.0
    %716 = vmatmul.mubr.f32.gmra.mrb[0].mxu0 %v629
    %v717 = vpop.f32.mrb[0].mxu0
    %v718 = vpop.f32.mrb[0].mxu0
    %719 = vmatprep.mubr.f32.mxu0 0.0
    %720 = vmatmul.mubr.f32.gmra.mrb[0].mxu0 %v621
    %v721 = vpop.f32.mrb[0].mxu0
    %v722 = vpop.f32.mrb[0].mxu0
    %723 = vmatprep.mubr.f32.mxu0 0.0
    %724 = vmatmul.mubr.f32.gmra.mrb[0].mxu0 %v621
    %v725 = vpop.f32.mrb[0].mxu0
    %v726 = vadd.f32 0.0, %v725
    %v727 = vpop.f32.mrb[0].mxu0
    %728 = vmatprep.mubr.f32.mxu0 0.0
    %729 = vmatmul.mubr.f32.gmra.mrb[0].mxu0 %v621
    %v730 = vpop.f32.mrb[0].mxu0
    %v731 = vadd.f32 0.0, %v730
    %v732 = vpop.f32.mrb[0].mxu0
    %733 = vmatprep.mubr.f32.mxu0 0.0
    %734 = vmatmul.mubr.f32.gmra.mrb[0].mxu0 %v631
    %v735 = vpop.f32.mrb[0].mxu0
    %v736 = vadd.f32 0.0, %v735
    %v737 = vpop.f32.mrb[0].mxu0
    %738 = vdwg.mxu0
    %v739 = vadd.f32 %v598, %v700
    %v740 = vadd.f32 %v599, %v705
    %v741 = vadd.f32 %v600, %v726
    %v742 = vadd.f32 %v601, %v731
    %v743 = vadd.f32 %v602, %v736
    %s744 = scalar_lea.vmem [#allocation4], 128
    %v745 = vld [vmem:[%s744] sm:$0xff]
    %v746 = vld [vmem:[%s744 + $0x8] sm:$0xff]
    %v747 = vld [vmem:[%s744 + $0x10] sm:$0xff]
    %v748 = vld [vmem:[%s744 + $0x18] sm:$0xff]
    %v749 = vrot.slane 0.0, 4
    %v750 = vsel %vm101, %v749, %v749
    %v751 = vrot.slane %v206, 4
    %v752 = vsel %vm101, %v749, %v751
    %v753 = vrot.slane %v195, 4
    %v754 = vsel %vm101, %v751, %v753
    %v755 = vrot.slane %v207, 4
    %v756 = vsel %vm101, %v753, %v755
    %v757 = vsel %vm101, %v755, %v749
    %v758 = vrot.slane %v208, 4
    %v759 = vsel %vm101, %v749, %v758
    %v760 = vsel %vm232, %v750, 0
    %v762 = vsel %vm232, %v752, 0
    %v764 = vsel %vm232, %v754, 0
    %v766 = vsel %vm232, %v756, 0
    %v768 = vsel %vm232, %v757, 0
    %v770 = vsel %vm232, %v759, 0
    %772 = vmatprep.subr.mxu0 0.0
    %773 = vmatpush1.msra.mxu0 %v745
    %774 = vmatprep.subr.mxu0 0.0
    %775 = vmatpush1.msra.mxu0 %v746
    %776 = vmatprep.subr.mxu0 0.0
    %777 = vmatpush1.msra.mxu0 %v747
    %778 = vmatprep.subr.mxu0 0.0
    %779 = vmatpush1.msra.mxu0 %v748
    %780 = vmatprep.subr.mxu0 0.0
    %781 = vmatpush1.msra.mxu0 0.0
    %782 = vmatprep.subr.mxu0 0.0
    %783 = vmatpush1.msra.mxu0 0.0
    %784 = vmatprep.subr.mxu0 0.0
    %785 = vmatpush1.msra.mxu0 0.0
    %786 = vmatprep.subr.mxu0 0.0
    %787 = vmatpush1.msra.mxu0 0.0
    %788 = vmatprep.subr.mxu0 0.0
    %789 = vmatpush1.msra.mxu0 0.0
    %790 = vmatprep.subr.mxu0 0.0
    %791 = vmatpush1.msra.mxu0 0.0
    %792 = vmatprep.subr.mxu0 0.0
    %793 = vmatpush1.msra.mxu0 0.0
    %794 = vmatprep.subr.mxu0 0.0
    %795 = vmatpush1.msra.mxu0 0.0
    %796 = vmatprep.subr.mxu0 0.0
    %797 = vmatpush1.msra.mxu0 0.0
    %798 = vmatprep.subr.mxu0 0.0
    %799 = vmatpush1.msra.mxu0 0.0
    %800 = vmatprep.subr.mxu0 0.0
    %801 = vmatpush1.msra.mxu0 0.0
    %802 = vmatprep.subr.mxu0 0.0
    %803 = vmatpush1.msra.mxu0 0.0
    %804 = vmatprep.subr.mxu0 0.0
    %805 = vmatpush1.msra.mxu0 0.0
    %806 = vmatprep.subr.mxu0 0.0
    %807 = vmatpush1.msra.mxu0 0.0
    %808 = vmatprep.subr.mxu0 0.0
    %809 = vmatpush1.msra.mxu0 0.0
    %810 = vmatprep.subr.mxu0 0.0
    %811 = vmatpush1.msra.mxu0 0.0
    %812 = vmatprep.subr.mxu0 0.0
    %813 = vmatpush1.msra.mxu0 0.0
    %814 = vmatprep.subr.mxu0 0.0
    %815 = vmatpush1.msra.mxu0 0.0
    %816 = vmatprep.subr.mxu0 0.0
    %817 = vmatpush1.msra.mxu0 0.0
    %818 = vmatprep.subr.mxu0 0.0
    %819 = vmatpush1.msra.mxu0 0.0
    %820 = vmatprep.subr.mxu0 0.0
    %821 = vmatpush1.msra.mxu0 0.0
    %822 = vmatprep.subr.mxu0 0.0
    %823 = vmatpush1.msra.mxu0 0.0
    %824 = vmatprep.subr.mxu0 0.0
    %825 = vmatpush1.msra.mxu0 0.0
    %826 = vmatprep.subr.mxu0 0.0
    %827 = vmatpush1.msra.mxu0 0.0
    %828 = vmatprep.subr.mxu0 0.0
    %829 = vmatpush1.msra.mxu0 0.0
    %830 = vmatprep.subr.mxu0 0.0
    %831 = vmatpush1.msra.mxu0 0.0
    %832 = vmatprep.subr.mxu0 0.0
    %833 = vmatpush1.msra.mxu0 0.0
    %834 = vmatprep.subr.mxu0 0.0
    %835 = vmatpush1.msra.mxu0 0.0
    %836 = vmatprep.mubr.f32.mxu0 0.0
    %837 = vmatmul.mubr.f32.gmra.mrb[0].mxu0 %v760
    %v838 = vpop.f32.mrb[0].mxu0
    %v839 = vadd.f32 0.0, %v838
    %v840 = vpop.f32.mrb[0].mxu0
    %841 = vmatprep.mubr.f32.mxu0 0.0
    %842 = vmatmul.mubr.f32.gmra.mrb[0].mxu0 %v762
    %v843 = vpop.f32.mrb[0].mxu0
    %v844 = vadd.f32 0.0, %v843
    %v845 = vpop.f32.mrb[0].mxu0
    %846 = vmatprep.mubr.f32.mxu0 0.0
    %847 = vmatmul.mubr.f32.gmra.mrb[0].mxu0 %v764
    %v848 = vpop.f32.mrb[0].mxu0
    %v849 = vpop.f32.mrb[0].mxu0
    %850 = vmatprep.mubr.f32.mxu0 0.0
    %851 = vmatmul.mubr.f32.gmra.mrb[0].mxu0 %v766
    %v852 = vpop.f32.mrb[0].mxu0
    %v853 = vpop.f32.mrb[0].mxu0
    %854 = vmatprep.mubr.f32.mxu0 0.0
    %855 = vmatmul.mubr.f32.gmra.mrb[0].mxu0 %v768
    %v856 = vpop.f32.mrb[0].mxu0
    %v857 = vpop.f32.mrb[0].mxu0
    %858 = vmatprep.mubr.f32.mxu0 0.0
    %859 = vmatmul.mubr.f32.gmra.mrb[0].mxu0 %v760
    %v860 = vpop.f32.mrb[0].mxu0
    %v861 = vpop.f32.mrb[0].mxu0
    %862 = vmatprep.mubr.f32.mxu0 0.0
    %863 = vmatmul.mubr.f32.gmra.mrb[0].mxu0 %v760
    %v864 = vpop.f32.mrb[0].mxu0
    %v865 = vadd.f32 0.0, %v864
    %v866 = vpop.f32.mrb[0].mxu0
    %867 = vmatprep.mubr.f32.mxu0 0.0
    %868 = vmatmul.mubr.f32.gmra.mrb[0].mxu0 %v760
    %v869 = vpop.f32.mrb[0].mxu0
    %v870 = vadd.f32 0.0, %v869
    %v871 = vpop.f32.mrb[0].mxu0
    %872 = vmatprep.mubr.f32.mxu0 0.0
    %873 = vmatmul.mubr.f32.gmra.mrb[0].mxu0 %v770
    %v874 = vpop.f32.mrb[0].mxu0
    %v875 = vadd.f32 0.0, %v874
    %v876 = vpop.f32.mrb[0].mxu0
    %877 = vdwg.mxu0
    %v878 = vadd.f32 %v739, %v839
    %v879 = vadd.f32 %v740, %v844
    %v880 = vadd.f32 %v741, %v865
    %v881 = vadd.f32 %v742, %v870
    %v882 = vadd.f32 %v743, %v875
    %s883 = scalar_lea.vmem [#allocation4], 160
    %v884 = vld [vmem:[%s883] sm:$0xff]
    %v885 = vld [vmem:[%s883 + $0x8] sm:$0xff]
    %v886 = vld [vmem:[%s883 + $0x10] sm:$0xff]
    %v887 = vld [vmem:[%s883 + $0x18] sm:$0xff]
    %v888 = vrot.slane 0.0, 5
    %v889 = vsel %vm192, %v888, %v888
    %v890 = vrot.slane %v206, 5
    %v891 = vsel %vm192, %v888, %v890
    %v892 = vrot.slane %v195, 5
    %v893 = vsel %vm192, %v890, %v892
    %v894 = vrot.slane %v207, 5
    %v895 = vsel %vm192, %v892, %v894
    %v896 = vsel %vm192, %v894, %v888
    %v897 = vrot.slane %v208, 5
    %v898 = vsel %vm192, %v888, %v897
    %v899 = vsel %vm232, %v889, 0
    %v901 = vsel %vm232, %v891, 0
    %v903 = vsel %vm232, %v893, 0
    %v905 = vsel %vm232, %v895, 0
    %v907 = vsel %vm232, %v896, 0
    %v909 = vsel %vm232, %v898, 0
    %911 = vmatprep.subr.mxu0 0.0
    %912 = vmatpush1.msra.mxu0 %v884
    %913 = vmatprep.subr.mxu0 0.0
    %914 = vmatpush1.msra.mxu0 %v885
    %915 = vmatprep.subr.mxu0 0.0
    %916 = vmatpush1.msra.mxu0 %v886
    %917 = vmatprep.subr.mxu0 0.0
    %918 = vmatpush1.msra.mxu0 %v887
    %919 = vmatprep.subr.mxu0 0.0
    %920 = vmatpush1.msra.mxu0 0.0
    %921 = vmatprep.subr.mxu0 0.0
    %922 = vmatpush1.msra.mxu0 0.0
    %923 = vmatprep.subr.mxu0 0.0
    %924 = vmatpush1.msra.mxu0 0.0
    %925 = vmatprep.subr.mxu0 0.0
    %926 = vmatpush1.msra.mxu0 0.0
    %927 = vmatprep.subr.mxu0 0.0
    %928 = vmatpush1.msra.mxu0 0.0
    %929 = vmatprep.subr.mxu0 0.0
    %930 = vmatpush1.msra.mxu0 0.0
    %931 = vmatprep.subr.mxu0 0.0
    %932 = vmatpush1.msra.mxu0 0.0
    %933 = vmatprep.subr.mxu0 0.0
    %934 = vmatpush1.msra.mxu0 0.0
    %935 = vmatprep.subr.mxu0 0.0
    %936 = vmatpush1.msra.mxu0 0.0
    %937 = vmatprep.subr.mxu0 0.0
    %938 = vmatpush1.msra.mxu0 0.0
    %939 = vmatprep.subr.mxu0 0.0
    %940 = vmatpush1.msra.mxu0 0.0
    %941 = vmatprep.subr.mxu0 0.0
    %942 = vmatpush1.msra.mxu0 0.0
    %943 = vmatprep.subr.mxu0 0.0
    %944 = vmatpush1.msra.mxu0 0.0
    %945 = vmatprep.subr.mxu0 0.0
    %946 = vmatpush1.msra.mxu0 0.0
    %947 = vmatprep.subr.mxu0 0.0
    %948 = vmatpush1.msra.mxu0 0.0
    %949 = vmatprep.subr.mxu0 0.0
    %950 = vmatpush1.msra.mxu0 0.0
    %951 = vmatprep.subr.mxu0 0.0
    %952 = vmatpush1.msra.mxu0 0.0
    %953 = vmatprep.subr.mxu0 0.0
    %954 = vmatpush1.msra.mxu0 0.0
    %955 = vmatprep.subr.mxu0 0.0
    %956 = vmatpush1.msra.mxu0 0.0
    %957 = vmatprep.subr.mxu0 0.0
    %958 = vmatpush1.msra.mxu0 0.0
    %959 = vmatprep.subr.mxu0 0.0
    %960 = vmatpush1.msra.mxu0 0.0
    %961 = vmatprep.subr.mxu0 0.0
    %962 = vmatpush1.msra.mxu0 0.0
    %963 = vmatprep.subr.mxu0 0.0
    %964 = vmatpush1.msra.mxu0 0.0
    %965 = vmatprep.subr.mxu0 0.0
    %966 = vmatpush1.msra.mxu0 0.0
    %967 = vmatprep.subr.mxu0 0.0
    %968 = vmatpush1.msra.mxu0 0.0
    %969 = vmatprep.subr.mxu0 0.0
    %970 = vmatpush1.msra.mxu0 0.0
    %971 = vmatprep.subr.mxu0 0.0
    %972 = vmatpush1.msra.mxu0 0.0
    %973 = vmatprep.subr.mxu0 0.0
    %974 = vmatpush1.msra.mxu0 0.0
    %975 = vmatprep.mubr.f32.mxu0 0.0
    %976 = vmatmul.mubr.f32.gmra.mrb[0].mxu0 %v899
    %v977 = vpop.f32.mrb[0].mxu0
    %v978 = vadd.f32 0.0, %v977
    %v979 = vpop.f32.mrb[0].mxu0
    %980 = vmatprep.mubr.f32.mxu0 0.0
    %981 = vmatmul.mubr.f32.gmra.mrb[0].mxu0 %v901
    %v982 = vpop.f32.mrb[0].mxu0
    %v983 = vadd.f32 0.0, %v982
    %v984 = vpop.f32.mrb[0].mxu0
    %985 = vmatprep.mubr.f32.mxu0 0.0
    %986 = vmatmul.mubr.f32.gmra.mrb[0].mxu0 %v903
    %v987 = vpop.f32.mrb[0].mxu0
    %v988 = vpop.f32.mrb[0].mxu0
    %989 = vmatprep.mubr.f32.mxu0 0.0
    %990 = vmatmul.mubr.f32.gmra.mrb[0].mxu0 %v905
    %v991 = vpop.f32.mrb[0].mxu0
    %v992 = vpop.f32.mrb[0].mxu0
    %993 = vmatprep.mubr.f32.mxu0 0.0
    %994 = vmatmul.mubr.f32.gmra.mrb[0].mxu0 %v907
    %v995 = vpop.f32.mrb[0].mxu0
    %v996 = vpop.f32.mrb[0].mxu0
    %997 = vmatprep.mubr.f32.mxu0 0.0
    %998 = vmatmul.mubr.f32.gmra.mrb[0].mxu0 %v899
    %v999 = vpop.f32.mrb[0].mxu0
    %v1000 = vpop.f32.mrb[0].mxu0
    %1001 = vmatprep.mubr.f32.mxu0 0.0
    %1002 = vmatmul.mubr.f32.gmra.mrb[0].mxu0 %v899
    %v1003 = vpop.f32.mrb[0].mxu0
    %v1004 = vadd.f32 0.0, %v1003
    %v1005 = vpop.f32.mrb[0].mxu0
    %1006 = vmatprep.mubr.f32.mxu0 0.0
    %1007 = vmatmul.mubr.f32.gmra.mrb[0].mxu0 %v899
    %v1008 = vpop.f32.mrb[0].mxu0
    %v1009 = vadd.f32 0.0, %v1008
    %v1010 = vpop.f32.mrb[0].mxu0
    %1011 = vmatprep.mubr.f32.mxu0 0.0
    %1012 = vmatmul.mubr.f32.gmra.mrb[0].mxu0 %v909
    %v1013 = vpop.f32.mrb[0].mxu0
    %v1014 = vadd.f32 0.0, %v1013
    %v1015 = vpop.f32.mrb[0].mxu0
    %1016 = vdwg.mxu0
    %v1017 = vadd.f32 %v878, %v978
    %v1018 = vadd.f32 %v879, %v983
    %v1019 = vadd.f32 %v880, %v1004
    %v1020 = vadd.f32 %v881, %v1009
    %v1021 = vadd.f32 %v882, %v1014
    %s1022 = scalar_lea.vmem [#allocation4], 192
    %v1023 = vld [vmem:[%s1022] sm:$0xff]
    %v1024 = vld [vmem:[%s1022 + $0x8] sm:$0xff]
    %v1025 = vld [vmem:[%s1022 + $0x10] sm:$0xff]
    %v1026 = vld [vmem:[%s1022 + $0x18] sm:$0xff]
    %vm1027 = vcmask 1041408
    %v1028 = vrot.slane 0.0, 6
    %v1029 = vsel %vm1027, %v1028, %v1028
    %v1030 = vrot.slane %v206, 6
    %v1031 = vsel %vm1027, %v1028, %v1030
    %v1032 = vrot.slane %v195, 6
    %v1033 = vsel %vm1027, %v1030, %v1032
    %v1034 = vrot.slane %v207, 6
    %v1035 = vsel %vm1027, %v1032, %v1034
    %v1036 = vsel %vm1027, %v1034, %v1028
    %v1037 = vrot.slane %v208, 6
    %v1038 = vsel %vm1027, %v1028, %v1037
    %v1039 = vsel %vm232, %v1029, 0
    %v1041 = vsel %vm232, %v1031, 0
    %v1043 = vsel %vm232, %v1033, 0
    %v1045 = vsel %vm232, %v1035, 0
    %v1047 = vsel %vm232, %v1036, 0
    %v1049 = vsel %vm232, %v1038, 0
    %1051 = vmatprep.subr.mxu0 0.0
    %1052 = vmatpush1.msra.mxu0 %v1023
    %1053 = vmatprep.subr.mxu0 0.0
    %1054 = vmatpush1.msra.mxu0 %v1024
    %1055 = vmatprep.subr.mxu0 0.0
    %1056 = vmatpush1.msra.mxu0 %v1025
    %1057 = vmatprep.subr.mxu0 0.0
    %1058 = vmatpush1.msra.mxu0 %v1026
    %1059 = vmatprep.subr.mxu0 0.0
    %1060 = vmatpush1.msra.mxu0 0.0
    %1061 = vmatprep.subr.mxu0 0.0
    %1062 = vmatpush1.msra.mxu0 0.0
    %1063 = vmatprep.subr.mxu0 0.0
    %1064 = vmatpush1.msra.mxu0 0.0
    %1065 = vmatprep.subr.mxu0 0.0
    %1066 = vmatpush1.msra.mxu0 0.0
    %1067 = vmatprep.subr.mxu0 0.0
    %1068 = vmatpush1.msra.mxu0 0.0
    %1069 = vmatprep.subr.mxu0 0.0
    %1070 = vmatpush1.msra.mxu0 0.0
    %1071 = vmatprep.subr.mxu0 0.0
    %1072 = vmatpush1.msra.mxu0 0.0
    %1073 = vmatprep.subr.mxu0 0.0
    %1074 = vmatpush1.msra.mxu0 0.0
    %1075 = vmatprep.subr.mxu0 0.0
    %1076 = vmatpush1.msra.mxu0 0.0
    %1077 = vmatprep.subr.mxu0 0.0
    %1078 = vmatpush1.msra.mxu0 0.0
    %1079 = vmatprep.subr.mxu0 0.0
    %1080 = vmatpush1.msra.mxu0 0.0
    %1081 = vmatprep.subr.mxu0 0.0
    %1082 = vmatpush1.msra.mxu0 0.0
    %1083 = vmatprep.subr.mxu0 0.0
    %1084 = vmatpush1.msra.mxu0 0.0
    %1085 = vmatprep.subr.mxu0 0.0
    %1086 = vmatpush1.msra.mxu0 0.0
    %1087 = vmatprep.subr.mxu0 0.0
    %1088 = vmatpush1.msra.mxu0 0.0
    %1089 = vmatprep.subr.mxu0 0.0
    %1090 = vmatpush1.msra.mxu0 0.0
    %1091 = vmatprep.subr.mxu0 0.0
    %1092 = vmatpush1.msra.mxu0 0.0
    %1093 = vmatprep.subr.mxu0 0.0
    %1094 = vmatpush1.msra.mxu0 0.0
    %1095 = vmatprep.subr.mxu0 0.0
    %1096 = vmatpush1.msra.mxu0 0.0
    %1097 = vmatprep.subr.mxu0 0.0
    %1098 = vmatpush1.msra.mxu0 0.0
    %1099 = vmatprep.subr.mxu0 0.0
    %1100 = vmatpush1.msra.mxu0 0.0
    %1101 = vmatprep.subr.mxu0 0.0
    %1102 = vmatpush1.msra.mxu0 0.0
    %1103 = vmatprep.subr.mxu0 0.0
    %1104 = vmatpush1.msra.mxu0 0.0
    %1105 = vmatprep.subr.mxu0 0.0
    %1106 = vmatpush1.msra.mxu0 0.0
    %1107 = vmatprep.subr.mxu0 0.0
    %1108 = vmatpush1.msra.mxu0 0.0
    %1109 = vmatprep.subr.mxu0 0.0
    %1110 = vmatpush1.msra.mxu0 0.0
    %1111 = vmatprep.subr.mxu0 0.0
    %1112 = vmatpush1.msra.mxu0 0.0
    %1113 = vmatprep.subr.mxu0 0.0
    %1114 = vmatpush1.msra.mxu0 0.0
    %1115 = vmatprep.mubr.f32.mxu0 0.0
    %1116 = vmatmul.mubr.f32.gmra.mrb[0].mxu0 %v1039
    %v1117 = vpop.f32.mrb[0].mxu0
    %v1118 = vadd.f32 0.0, %v1117
    %v1119 = vpop.f32.mrb[0].mxu0
    %1120 = vmatprep.mubr.f32.mxu0 0.0
    %1121 = vmatmul.mubr.f32.gmra.mrb[0].mxu0 %v1041
    %v1122 = vpop.f32.mrb[0].mxu0
    %v1123 = vadd.f32 0.0, %v1122
    %v1124 = vpop.f32.mrb[0].mxu0
    %1125 = vmatprep.mubr.f32.mxu0 0.0
    %1126 = vmatmul.mubr.f32.gmra.mrb[0].mxu0 %v1043
    %v1127 = vpop.f32.mrb[0].mxu0
    %v1128 = vpop.f32.mrb[0].mxu0
    %1129 = vmatprep.mubr.f32.mxu0 0.0
    %1130 = vmatmul.mubr.f32.gmra.mrb[0].mxu0 %v1045
    %v1131 = vpop.f32.mrb[0].mxu0
    %v1132 = vpop.f32.mrb[0].mxu0
    %1133 = vmatprep.mubr.f32.mxu0 0.0
    %1134 = vmatmul.mubr.f32.gmra.mrb[0].mxu0 %v1047
    %v1135 = vpop.f32.mrb[0].mxu0
    %v1136 = vpop.f32.mrb[0].mxu0
    %1137 = vmatprep.mubr.f32.mxu0 0.0
    %1138 = vmatmul.mubr.f32.gmra.mrb[0].mxu0 %v1039
    %v1139 = vpop.f32.mrb[0].mxu0
    %v1140 = vpop.f32.mrb[0].mxu0
    %1141 = vmatprep.mubr.f32.mxu0 0.0
    %1142 = vmatmul.mubr.f32.gmra.mrb[0].mxu0 %v1039
    %v1143 = vpop.f32.mrb[0].mxu0
    %v1144 = vadd.f32 0.0, %v1143
    %v1145 = vpop.f32.mrb[0].mxu0
    %1146 = vmatprep.mubr.f32.mxu0 0.0
    %1147 = vmatmul.mubr.f32.gmra.mrb[0].mxu0 %v1039
    %v1148 = vpop.f32.mrb[0].mxu0
    %v1149 = vadd.f32 0.0, %v1148
    %v1150 = vpop.f32.mrb[0].mxu0
    %1151 = vmatprep.mubr.f32.mxu0 0.0
    %1152 = vmatmul.mubr.f32.gmra.mrb[0].mxu0 %v1049
    %v1153 = vpop.f32.mrb[0].mxu0
    %v1154 = vadd.f32 0.0, %v1153
    %v1155 = vpop.f32.mrb[0].mxu0
    %1156 = vdwg.mxu0
    %v1157 = vadd.f32 %v1017, %v1118
    %v1158 = vadd.f32 %v1018, %v1123
    %v1159 = vadd.f32 %v1019, %v1144
    %v1160 = vadd.f32 %v1020, %v1149
    %v1161 = vadd.f32 %v1021, %v1154
    %s1162 = scalar_lea.vmem [#allocation4], 224
    %v1163 = vld [vmem:[%s1162] sm:$0xff]
    %v1164 = vld [vmem:[%s1162 + $0x8] sm:$0xff]
    %v1165 = vld [vmem:[%s1162 + $0x10] sm:$0xff]
    %v1166 = vld [vmem:[%s1162 + $0x18] sm:$0xff]
    %v1167 = vrot.slane 0.0, 7
    %v1168 = vsel %vm200, %v1167, %v1167
    %v1169 = vrot.slane %v206, 7
    %v1170 = vsel %vm200, %v1167, %v1169
    %v1171 = vrot.slane %v195, 7
    %v1172 = vsel %vm200, %v1169, %v1171
    %v1173 = vrot.slane %v207, 7
    %v1174 = vsel %vm200, %v1171, %v1173
    %v1175 = vsel %vm200, %v1173, %v1167
    %v1176 = vrot.slane %v208, 7
    %v1177 = vsel %vm200, %v1167, %v1176
    %v1178 = vsel %vm232, %v1168, 0
    %v1180 = vsel %vm232, %v1170, 0
    %v1182 = vsel %vm232, %v1172, 0
    %v1184 = vsel %vm232, %v1174, 0
    %v1186 = vsel %vm232, %v1175, 0
    %v1188 = vsel %vm232, %v1177, 0
    %1190 = vmatprep.subr.mxu0 0.0
    %1191 = vmatpush1.msra.mxu0 %v1163
    %1192 = vmatprep.subr.mxu0 0.0
    %1193 = vmatpush1.msra.mxu0 %v1164
    %1194 = vmatprep.subr.mxu0 0.0
    %1195 = vmatpush1.msra.mxu0 %v1165
    %1196 = vmatprep.subr.mxu0 0.0
    %1197 = vmatpush1.msra.mxu0 %v1166
    %1198 = vmatprep.subr.mxu0 0.0
    %1199 = vmatpush1.msra.mxu0 0.0
    %1200 = vmatprep.subr.mxu0 0.0
    %1201 = vmatpush1.msra.mxu0 0.0
    %1202 = vmatprep.subr.mxu0 0.0
    %1203 = vmatpush1.msra.mxu0 0.0
    %1204 = vmatprep.subr.mxu0 0.0
    %1205 = vmatpush1.msra.mxu0 0.0
    %1206 = vmatprep.subr.mxu0 0.0
    %1207 = vmatpush1.msra.mxu0 0.0
    %1208 = vmatprep.subr.mxu0 0.0
    %1209 = vmatpush1.msra.mxu0 0.0
    %1210 = vmatprep.subr.mxu0 0.0
    %1211 = vmatpush1.msra.mxu0 0.0
    %1212 = vmatprep.subr.mxu0 0.0
    %1213 = vmatpush1.msra.mxu0 0.0
    %1214 = vmatprep.subr.mxu0 0.0
    %1215 = vmatpush1.msra.mxu0 0.0
    %1216 = vmatprep.subr.mxu0 0.0
    %1217 = vmatpush1.msra.mxu0 0.0
    %1218 = vmatprep.subr.mxu0 0.0
    %1219 = vmatpush1.msra.mxu0 0.0
    %1220 = vmatprep.subr.mxu0 0.0
    %1221 = vmatpush1.msra.mxu0 0.0
    %1222 = vmatprep.subr.mxu0 0.0
    %1223 = vmatpush1.msra.mxu0 0.0
    %1224 = vmatprep.subr.mxu0 0.0
    %1225 = vmatpush1.msra.mxu0 0.0
    %1226 = vmatprep.subr.mxu0 0.0
    %1227 = vmatpush1.msra.mxu0 0.0
    %1228 = vmatprep.subr.mxu0 0.0
    %1229 = vmatpush1.msra.mxu0 0.0
    %1230 = vmatprep.subr.mxu0 0.0
    %1231 = vmatpush1.msra.mxu0 0.0
    %1232 = vmatprep.subr.mxu0 0.0
    %1233 = vmatpush1.msra.mxu0 0.0
    %1234 = vmatprep.subr.mxu0 0.0
    %1235 = vmatpush1.msra.mxu0 0.0
    %1236 = vmatprep.subr.mxu0 0.0
    %1237 = vmatpush1.msra.mxu0 0.0
    %1238 = vmatprep.subr.mxu0 0.0
    %1239 = vmatpush1.msra.mxu0 0.0
    %1240 = vmatprep.subr.mxu0 0.0
    %1241 = vmatpush1.msra.mxu0 0.0
    %1242 = vmatprep.subr.mxu0 0.0
    %1243 = vmatpush1.msra.mxu0 0.0
    %1244 = vmatprep.subr.mxu0 0.0
    %1245 = vmatpush1.msra.mxu0 0.0
    %1246 = vmatprep.subr.mxu0 0.0
    %1247 = vmatpush1.msra.mxu0 0.0
    %1248 = vmatprep.subr.mxu0 0.0
    %1249 = vmatpush1.msra.mxu0 0.0
    %1250 = vmatprep.subr.mxu0 0.0
    %1251 = vmatpush1.msra.mxu0 0.0
    %1252 = vmatprep.subr.mxu0 0.0
    %1253 = vmatpush1.msra.mxu0 0.0
    %1254 = vmatprep.mubr.f32.mxu0 0.0
    %1255 = vmatmul.mubr.f32.gmra.mrb[0].mxu0 %v1178
    %v1256 = vpop.f32.mrb[0].mxu0
    %v1257 = vadd.f32 0.0, %v1256
    %v1258 = vpop.f32.mrb[0].mxu0
    %1259 = vmatprep.mubr.f32.mxu0 0.0
    %1260 = vmatmul.mubr.f32.gmra.mrb[0].mxu0 %v1180
    %v1261 = vpop.f32.mrb[0].mxu0
    %v1262 = vadd.f32 0.0, %v1261
    %v1263 = vpop.f32.mrb[0].mxu0
    %1264 = vmatprep.mubr.f32.mxu0 0.0
    %1265 = vmatmul.mubr.f32.gmra.mrb[0].mxu0 %v1182
    %v1266 = vpop.f32.mrb[0].mxu0
    %v1267 = vpop.f32.mrb[0].mxu0
    %1268 = vmatprep.mubr.f32.mxu0 0.0
    %1269 = vmatmul.mubr.f32.gmra.mrb[0].mxu0 %v1184
    %v1270 = vpop.f32.mrb[0].mxu0
    %v1271 = vpop.f32.mrb[0].mxu0
    %1272 = vmatprep.mubr.f32.mxu0 0.0
    %1273 = vmatmul.mubr.f32.gmra.mrb[0].mxu0 %v1186
    %v1274 = vpop.f32.mrb[0].mxu0
    %v1275 = vpop.f32.mrb[0].mxu0
    %1276 = vmatprep.mubr.f32.mxu0 0.0
    %1277 = vmatmul.mubr.f32.gmra.mrb[0].mxu0 %v1178
    %v1278 = vpop.f32.mrb[0].mxu0
    %v1279 = vpop.f32.mrb[0].mxu0
    %1280 = vmatprep.mubr.f32.mxu0 0.0
    %1281 = vmatmul.mubr.f32.gmra.mrb[0].mxu0 %v1178
    %v1282 = vpop.f32.mrb[0].mxu0
    %v1283 = vadd.f32 0.0, %v1282
    %v1284 = vpop.f32.mrb[0].mxu0
    %1285 = vmatprep.mubr.f32.mxu0 0.0
    %1286 = vmatmul.mubr.f32.gmra.mrb[0].mxu0 %v1178
    %v1287 = vpop.f32.mrb[0].mxu0
    %v1288 = vadd.f32 0.0, %v1287
    %v1289 = vpop.f32.mrb[0].mxu0
    %1290 = vmatprep.mubr.f32.mxu0 0.0
    %1291 = vmatmul.mubr.f32.gmra.mrb[0].mxu0 %v1188
    %v1292 = vpop.f32.mrb[0].mxu0
    %v1293 = vadd.f32 0.0, %v1292
    %v1294 = vpop.f32.mrb[0].mxu0
    %1295 = vdwg.mxu0
    %v1296 = vadd.f32 %v1157, %v1257
    %v1297 = vadd.f32 %v1158, %v1262
    %v1298 = vadd.f32 %v1159, %v1283
    %v1299 = vadd.f32 %v1160, %v1288
    %v1300 = vadd.f32 %v1161, %v1293
    %s1301 = scalar_lea.vmem [#allocation4], 256
    %v1302 = vld [vmem:[%s1301] sm:$0xff]
    %v1303 = vld [vmem:[%s1301 + $0x8] sm:$0xff]
    %v1304 = vld [vmem:[%s1301 + $0x10] sm:$0xff]
    %v1305 = vld [vmem:[%s1301 + $0x18] sm:$0xff]
    %v1306 = vsel %vm232, %v208, 0
    %1308 = vmatprep.subr.mxu0 0.0
    %1309 = vmatpush1.msra.mxu0 %v1302
    %1310 = vmatprep.subr.mxu0 0.0
    %1311 = vmatpush1.msra.mxu0 %v1303
    %1312 = vmatprep.subr.mxu0 0.0
    %1313 = vmatpush1.msra.mxu0 %v1304
    %1314 = vmatprep.subr.mxu0 0.0
    %1315 = vmatpush1.msra.mxu0 %v1305
    %1316 = vmatprep.subr.mxu0 0.0
    %1317 = vmatpush1.msra.mxu0 0.0
    %1318 = vmatprep.subr.mxu0 0.0
    %1319 = vmatpush1.msra.mxu0 0.0
    %1320 = vmatprep.subr.mxu0 0.0
    %1321 = vmatpush1.msra.mxu0 0.0
    %1322 = vmatprep.subr.mxu0 0.0
    %1323 = vmatpush1.msra.mxu0 0.0
    %1324 = vmatprep.subr.mxu0 0.0
    %1325 = vmatpush1.msra.mxu0 0.0
    %1326 = vmatprep.subr.mxu0 0.0
    %1327 = vmatpush1.msra.mxu0 0.0
    %1328 = vmatprep.subr.mxu0 0.0
    %1329 = vmatpush1.msra.mxu0 0.0
    %1330 = vmatprep.subr.mxu0 0.0
    %1331 = vmatpush1.msra.mxu0 0.0
    %1332 = vmatprep.subr.mxu0 0.0
    %1333 = vmatpush1.msra.mxu0 0.0
    %1334 = vmatprep.subr.mxu0 0.0
    %1335 = vmatpush1.msra.mxu0 0.0
    %1336 = vmatprep.subr.mxu0 0.0
    %1337 = vmatpush1.msra.mxu0 0.0
    %1338 = vmatprep.subr.mxu0 0.0
    %1339 = vmatpush1.msra.mxu0 0.0
    %1340 = vmatprep.subr.mxu0 0.0
    %1341 = vmatpush1.msra.mxu0 0.0
    %1342 = vmatprep.subr.mxu0 0.0
    %1343 = vmatpush1.msra.mxu0 0.0
    %1344 = vmatprep.subr.mxu0 0.0
    %1345 = vmatpush1.msra.mxu0 0.0
    %1346 = vmatprep.subr.mxu0 0.0
    %1347 = vmatpush1.msra.mxu0 0.0
    %1348 = vmatprep.subr.mxu0 0.0
    %1349 = vmatpush1.msra.mxu0 0.0
    %1350 = vmatprep.subr.mxu0 0.0
    %1351 = vmatpush1.msra.mxu0 0.0
    %1352 = vmatprep.subr.mxu0 0.0
    %1353 = vmatpush1.msra.mxu0 0.0
    %1354 = vmatprep.subr.mxu0 0.0
    %1355 = vmatpush1.msra.mxu0 0.0
    %1356 = vmatprep.subr.mxu0 0.0
    %1357 = vmatpush1.msra.mxu0 0.0
    %1358 = vmatprep.subr.mxu0 0.0
    %1359 = vmatpush1.msra.mxu0 0.0
    %1360 = vmatprep.subr.mxu0 0.0
    %1361 = vmatpush1.msra.mxu0 0.0
    %1362 = vmatprep.subr.mxu0 0.0
    %1363 = vmatpush1.msra.mxu0 0.0
    %1364 = vmatprep.subr.mxu0 0.0
    %1365 = vmatpush1.msra.mxu0 0.0
    %1366 = vmatprep.subr.mxu0 0.0
    %1367 = vmatpush1.msra.mxu0 0.0
    %1368 = vmatprep.subr.mxu0 0.0
    %1369 = vmatpush1.msra.mxu0 0.0
    %1370 = vmatprep.subr.mxu0 0.0
    %1371 = vmatpush1.msra.mxu0 0.0
    %1372 = vmatprep.mubr.f32.mxu0 0.0
    %1373 = vmatmul.mubr.f32.gmra.mrb[0].mxu0 %v351
    %v1374 = vpop.f32.mrb[0].mxu0
    %v1375 = vadd.f32 0.0, %v1374
    %v1376 = vpop.f32.mrb[0].mxu0
    %1377 = vmatprep.mubr.f32.mxu0 0.0
    %1378 = vmatmul.mubr.f32.gmra.mrb[0].mxu0 %v353
    %v1379 = vpop.f32.mrb[0].mxu0
    %v1380 = vadd.f32 0.0, %v1379
    %v1381 = vpop.f32.mrb[0].mxu0
    %1382 = vmatprep.mubr.f32.mxu0 0.0
    %1383 = vmatmul.mubr.f32.gmra.mrb[0].mxu0 %v355
    %v1384 = vpop.f32.mrb[0].mxu0
    %v1385 = vpop.f32.mrb[0].mxu0
    %1386 = vmatprep.mubr.f32.mxu0 0.0
    %1387 = vmatmul.mubr.f32.gmra.mrb[0].mxu0 %v357
    %v1388 = vpop.f32.mrb[0].mxu0
    %v1389 = vpop.f32.mrb[0].mxu0
    %1390 = vmatprep.mubr.f32.mxu0 0.0
    %1391 = vmatmul.mubr.f32.gmra.mrb[0].mxu0 %v351
    %v1392 = vpop.f32.mrb[0].mxu0
    %v1393 = vpop.f32.mrb[0].mxu0
    %1394 = vmatprep.mubr.f32.mxu0 0.0
    %1395 = vmatmul.mubr.f32.gmra.mrb[0].mxu0 %v351
    %v1396 = vpop.f32.mrb[0].mxu0
    %v1397 = vpop.f32.mrb[0].mxu0
    %1398 = vmatprep.mubr.f32.mxu0 0.0
    %1399 = vmatmul.mubr.f32.gmra.mrb[0].mxu0 %v351
    %v1400 = vpop.f32.mrb[0].mxu0
    %v1401 = vadd.f32 0.0, %v1400
    %v1402 = vpop.f32.mrb[0].mxu0
    %1403 = vmatprep.mubr.f32.mxu0 0.0
    %1404 = vmatmul.mubr.f32.gmra.mrb[0].mxu0 %v351
    %v1405 = vpop.f32.mrb[0].mxu0
    %v1406 = vadd.f32 0.0, %v1405
    %v1407 = vpop.f32.mrb[0].mxu0
    %1408 = vmatprep.mubr.f32.mxu0 0.0
    %1409 = vmatmul.mubr.f32.gmra.mrb[0].mxu0 %v1306
    %v1410 = vpop.f32.mrb[0].mxu0
    %v1411 = vadd.f32 0.0, %v1410
    %v1412 = vpop.f32.mrb[0].mxu0
    %1413 = vdwg.mxu0
    %v1414 = vadd.f32 %v1296, %v1375
    %v1415 = vadd.f32 %v1297, %v1380
    %v1416 = vadd.f32 %v1298, %v1401
    %v1417 = vadd.f32 %v1299, %v1406
    %v1418 = vadd.f32 %v1300, %v1411
    %s1419 = scalar_lea.vmem [#allocation4], 288
    %v1420 = vld [vmem:[%s1419] sm:$0xff]
    %v1421 = vld [vmem:[%s1419 + $0x8] sm:$0xff]
    %v1422 = vld [vmem:[%s1419 + $0x10] sm:$0xff]
    %v1423 = vld [vmem:[%s1419 + $0x18] sm:$0xff]
    %v1424 = vrot.slane %v208, 1
    %v1425 = vsel %vm222, %v223, %v1424
    %v1426 = vsel %vm232, %v1425, 0
    %v1428 = vsel %vm232, %v1424, 0
    %1430 = vmatprep.subr.mxu0 0.0
    %1431 = vmatpush1.msra.mxu0 %v1420
    %1432 = vmatprep.subr.mxu0 0.0
    %1433 = vmatpush1.msra.mxu0 %v1421
    %1434 = vmatprep.subr.mxu0 0.0
    %1435 = vmatpush1.msra.mxu0 %v1422
    %1436 = vmatprep.subr.mxu0 0.0
    %1437 = vmatpush1.msra.mxu0 %v1423
    %1438 = vmatprep.subr.mxu0 0.0
    %1439 = vmatpush1.msra.mxu0 0.0
    %1440 = vmatprep.subr.mxu0 0.0
    %1441 = vmatpush1.msra.mxu0 0.0
    %1442 = vmatprep.subr.mxu0 0.0
    %1443 = vmatpush1.msra.mxu0 0.0
    %1444 = vmatprep.subr.mxu0 0.0
    %1445 = vmatpush1.msra.mxu0 0.0
    %1446 = vmatprep.subr.mxu0 0.0
    %1447 = vmatpush1.msra.mxu0 0.0
    %1448 = vmatprep.subr.mxu0 0.0
    %1449 = vmatpush1.msra.mxu0 0.0
    %1450 = vmatprep.subr.mxu0 0.0
    %1451 = vmatpush1.msra.mxu0 0.0
    %1452 = vmatprep.subr.mxu0 0.0
    %1453 = vmatpush1.msra.mxu0 0.0
    %1454 = vmatprep.subr.mxu0 0.0
    %1455 = vmatpush1.msra.mxu0 0.0
    %1456 = vmatprep.subr.mxu0 0.0
    %1457 = vmatpush1.msra.mxu0 0.0
    %1458 = vmatprep.subr.mxu0 0.0
    %1459 = vmatpush1.msra.mxu0 0.0
    %1460 = vmatprep.subr.mxu0 0.0
    %1461 = vmatpush1.msra.mxu0 0.0
    %1462 = vmatprep.subr.mxu0 0.0
    %1463 = vmatpush1.msra.mxu0 0.0
    %1464 = vmatprep.subr.mxu0 0.0
    %1465 = vmatpush1.msra.mxu0 0.0
    %1466 = vmatprep.subr.mxu0 0.0
    %1467 = vmatpush1.msra.mxu0 0.0
    %1468 = vmatprep.subr.mxu0 0.0
    %1469 = vmatpush1.msra.mxu0 0.0
    %1470 = vmatprep.subr.mxu0 0.0
    %1471 = vmatpush1.msra.mxu0 0.0
    %1472 = vmatprep.subr.mxu0 0.0
    %1473 = vmatpush1.msra.mxu0 0.0
    %1474 = vmatprep.subr.mxu0 0.0
    %1475 = vmatpush1.msra.mxu0 0.0
    %1476 = vmatprep.subr.mxu0 0.0
    %1477 = vmatpush1.msra.mxu0 0.0
    %1478 = vmatprep.subr.mxu0 0.0
    %1479 = vmatpush1.msra.mxu0 0.0
    %1480 = vmatprep.subr.mxu0 0.0
    %1481 = vmatpush1.msra.mxu0 0.0
    %1482 = vmatprep.subr.mxu0 0.0
    %1483 = vmatpush1.msra.mxu0 0.0
    %1484 = vmatprep.subr.mxu0 0.0
    %1485 = vmatpush1.msra.mxu0 0.0
    %1486 = vmatprep.subr.mxu0 0.0
    %1487 = vmatpush1.msra.mxu0 0.0
    %1488 = vmatprep.subr.mxu0 0.0
    %1489 = vmatpush1.msra.mxu0 0.0
    %1490 = vmatprep.subr.mxu0 0.0
    %1491 = vmatpush1.msra.mxu0 0.0
    %1492 = vmatprep.subr.mxu0 0.0
    %1493 = vmatpush1.msra.mxu0 0.0
    %1494 = vmatprep.mubr.f32.mxu0 0.0
    %1495 = vmatmul.mubr.f32.gmra.mrb[0].mxu0 %v235
    %v1496 = vpop.f32.mrb[0].mxu0
    %v1497 = vadd.f32 0.0, %v1496
    %v1498 = vpop.f32.mrb[0].mxu0
    %1499 = vmatprep.mubr.f32.mxu0 0.0
    %1500 = vmatmul.mubr.f32.gmra.mrb[0].mxu0 %v237
    %v1501 = vpop.f32.mrb[0].mxu0
    %v1502 = vadd.f32 0.0, %v1501
    %v1503 = vpop.f32.mrb[0].mxu0
    %1504 = vmatprep.mubr.f32.mxu0 0.0
    %1505 = vmatmul.mubr.f32.gmra.mrb[0].mxu0 %v239
    %v1506 = vpop.f32.mrb[0].mxu0
    %v1507 = vpop.f32.mrb[0].mxu0
    %1508 = vmatprep.mubr.f32.mxu0 0.0
    %1509 = vmatmul.mubr.f32.gmra.mrb[0].mxu0 %v241
    %v1510 = vpop.f32.mrb[0].mxu0
    %v1511 = vpop.f32.mrb[0].mxu0
    %1512 = vmatprep.mubr.f32.mxu0 0.0
    %1513 = vmatmul.mubr.f32.gmra.mrb[0].mxu0 %v233
    %v1514 = vpop.f32.mrb[0].mxu0
    %v1515 = vpop.f32.mrb[0].mxu0
    %1516 = vmatprep.mubr.f32.mxu0 0.0
    %1517 = vmatmul.mubr.f32.gmra.mrb[0].mxu0 %v233
    %v1518 = vpop.f32.mrb[0].mxu0
    %v1519 = vpop.f32.mrb[0].mxu0
    %1520 = vmatprep.mubr.f32.mxu0 0.0
    %1521 = vmatmul.mubr.f32.gmra.mrb[0].mxu0 %v233
    %v1522 = vpop.f32.mrb[0].mxu0
    %v1523 = vadd.f32 0.0, %v1522
    %v1524 = vpop.f32.mrb[0].mxu0
    %1525 = vmatprep.mubr.f32.mxu0 0.0
    %1526 = vmatmul.mubr.f32.gmra.mrb[0].mxu0 %v1426
    %v1527 = vpop.f32.mrb[0].mxu0
    %v1528 = vadd.f32 0.0, %v1527
    %v1529 = vpop.f32.mrb[0].mxu0
    %1530 = vmatprep.mubr.f32.mxu0 0.0
    %1531 = vmatmul.mubr.f32.gmra.mrb[0].mxu0 %v1428
    %v1532 = vpop.f32.mrb[0].mxu0
    %v1533 = vadd.f32 0.0, %v1532
    %v1534 = vpop.f32.mrb[0].mxu0
    %1535 = vdwg.mxu0
    %v1536 = vadd.f32 %v1414, %v1497
    %v1537 = vadd.f32 %v1415, %v1502
    %v1538 = vadd.f32 %v1416, %v1523
    %v1539 = vadd.f32 %v1417, %v1528
    %v1540 = vadd.f32 %v1418, %v1533
    %s1541 = scalar_lea.vmem [#allocation4], 320
    %v1542 = vld [vmem:[%s1541] sm:$0xff]
    %v1543 = vld [vmem:[%s1541 + $0x8] sm:$0xff]
    %v1544 = vld [vmem:[%s1541 + $0x10] sm:$0xff]
    %v1545 = vld [vmem:[%s1541 + $0x18] sm:$0xff]
    %v1546 = vrot.slane %v208, 2
    %v1547 = vsel %vm470, %v471, %v1546
    %v1548 = vsel %vm232, %v1547, 0
    %v1550 = vsel %vm232, %v1546, 0
    %1552 = vmatprep.subr.mxu0 0.0
    %1553 = vmatpush1.msra.mxu0 %v1542
    %1554 = vmatprep.subr.mxu0 0.0
    %1555 = vmatpush1.msra.mxu0 %v1543
    %1556 = vmatprep.subr.mxu0 0.0
    %1557 = vmatpush1.msra.mxu0 %v1544
    %1558 = vmatprep.subr.mxu0 0.0
    %1559 = vmatpush1.msra.mxu0 %v1545
    %1560 = vmatprep.subr.mxu0 0.0
    %1561 = vmatpush1.msra.mxu0 0.0
    %1562 = vmatprep.subr.mxu0 0.0
    %1563 = vmatpush1.msra.mxu0 0.0
    %1564 = vmatprep.subr.mxu0 0.0
    %1565 = vmatpush1.msra.mxu0 0.0
    %1566 = vmatprep.subr.mxu0 0.0
    %1567 = vmatpush1.msra.mxu0 0.0
    %1568 = vmatprep.subr.mxu0 0.0
    %1569 = vmatpush1.msra.mxu0 0.0
    %1570 = vmatprep.subr.mxu0 0.0
    %1571 = vmatpush1.msra.mxu0 0.0
    %1572 = vmatprep.subr.mxu0 0.0
    %1573 = vmatpush1.msra.mxu0 0.0
    %1574 = vmatprep.subr.mxu0 0.0
    %1575 = vmatpush1.msra.mxu0 0.0
    %1576 = vmatprep.subr.mxu0 0.0
    %1577 = vmatpush1.msra.mxu0 0.0
    %1578 = vmatprep.subr.mxu0 0.0
    %1579 = vmatpush1.msra.mxu0 0.0
    %1580 = vmatprep.subr.mxu0 0.0
    %1581 = vmatpush1.msra.mxu0 0.0
    %1582 = vmatprep.subr.mxu0 0.0
    %1583 = vmatpush1.msra.mxu0 0.0
    %1584 = vmatprep.subr.mxu0 0.0
    %1585 = vmatpush1.msra.mxu0 0.0
    %1586 = vmatprep.subr.mxu0 0.0
    %1587 = vmatpush1.msra.mxu0 0.0
    %1588 = vmatprep.subr.mxu0 0.0
    %1589 = vmatpush1.msra.mxu0 0.0
    %1590 = vmatprep.subr.mxu0 0.0
    %1591 = vmatpush1.msra.mxu0 0.0
    %1592 = vmatprep.subr.mxu0 0.0
    %1593 = vmatpush1.msra.mxu0 0.0
    %1594 = vmatprep.subr.mxu0 0.0
    %1595 = vmatpush1.msra.mxu0 0.0
    %1596 = vmatprep.subr.mxu0 0.0
    %1597 = vmatpush1.msra.mxu0 0.0
    %1598 = vmatprep.subr.mxu0 0.0
    %1599 = vmatpush1.msra.mxu0 0.0
    %1600 = vmatprep.subr.mxu0 0.0
    %1601 = vmatpush1.msra.mxu0 0.0
    %1602 = vmatprep.subr.mxu0 0.0
    %1603 = vmatpush1.msra.mxu0 0.0
    %1604 = vmatprep.subr.mxu0 0.0
    %1605 = vmatpush1.msra.mxu0 0.0
    %1606 = vmatprep.subr.mxu0 0.0
    %1607 = vmatpush1.msra.mxu0 0.0
    %1608 = vmatprep.subr.mxu0 0.0
    %1609 = vmatpush1.msra.mxu0 0.0
    %1610 = vmatprep.subr.mxu0 0.0
    %1611 = vmatpush1.msra.mxu0 0.0
    %1612 = vmatprep.subr.mxu0 0.0
    %1613 = vmatpush1.msra.mxu0 0.0
    %1614 = vmatprep.subr.mxu0 0.0
    %1615 = vmatpush1.msra.mxu0 0.0
    %1616 = vmatprep.mubr.f32.mxu0 0.0
    %1617 = vmatmul.mubr.f32.gmra.mrb[0].mxu0 %v482
    %v1618 = vpop.f32.mrb[0].mxu0
    %v1619 = vadd.f32 0.0, %v1618
    %v1620 = vpop.f32.mrb[0].mxu0
    %1621 = vmatprep.mubr.f32.mxu0 0.0
    %1622 = vmatmul.mubr.f32.gmra.mrb[0].mxu0 %v484
    %v1623 = vpop.f32.mrb[0].mxu0
    %v1624 = vadd.f32 0.0, %v1623
    %v1625 = vpop.f32.mrb[0].mxu0
    %1626 = vmatprep.mubr.f32.mxu0 0.0
    %1627 = vmatmul.mubr.f32.gmra.mrb[0].mxu0 %v486
    %v1628 = vpop.f32.mrb[0].mxu0
    %v1629 = vpop.f32.mrb[0].mxu0
    %1630 = vmatprep.mubr.f32.mxu0 0.0
    %1631 = vmatmul.mubr.f32.gmra.mrb[0].mxu0 %v488
    %v1632 = vpop.f32.mrb[0].mxu0
    %v1633 = vpop.f32.mrb[0].mxu0
    %1634 = vmatprep.mubr.f32.mxu0 0.0
    %1635 = vmatmul.mubr.f32.gmra.mrb[0].mxu0 %v480
    %v1636 = vpop.f32.mrb[0].mxu0
    %v1637 = vpop.f32.mrb[0].mxu0
    %1638 = vmatprep.mubr.f32.mxu0 0.0
    %1639 = vmatmul.mubr.f32.gmra.mrb[0].mxu0 %v480
    %v1640 = vpop.f32.mrb[0].mxu0
    %v1641 = vpop.f32.mrb[0].mxu0
    %1642 = vmatprep.mubr.f32.mxu0 0.0
    %1643 = vmatmul.mubr.f32.gmra.mrb[0].mxu0 %v480
    %v1644 = vpop.f32.mrb[0].mxu0
    %v1645 = vadd.f32 0.0, %v1644
    %v1646 = vpop.f32.mrb[0].mxu0
    %1647 = vmatprep.mubr.f32.mxu0 0.0
    %1648 = vmatmul.mubr.f32.gmra.mrb[0].mxu0 %v1548
    %v1649 = vpop.f32.mrb[0].mxu0
    %v1650 = vadd.f32 0.0, %v1649
    %v1651 = vpop.f32.mrb[0].mxu0
    %1652 = vmatprep.mubr.f32.mxu0 0.0
    %1653 = vmatmul.mubr.f32.gmra.mrb[0].mxu0 %v1550
    %v1654 = vpop.f32.mrb[0].mxu0
    %v1655 = vadd.f32 0.0, %v1654
    %v1656 = vpop.f32.mrb[0].mxu0
    %1657 = vdwg.mxu0
    %v1658 = vadd.f32 %v1536, %v1619
    %v1659 = vadd.f32 %v1537, %v1624
    %v1660 = vadd.f32 %v1538, %v1645
    %v1661 = vadd.f32 %v1539, %v1650
    %v1662 = vadd.f32 %v1540, %v1655
    %s1663 = scalar_lea.vmem [#allocation4], 352
    %v1664 = vld [vmem:[%s1663] sm:$0xff]
    %v1665 = vld [vmem:[%s1663 + $0x8] sm:$0xff]
    %v1666 = vld [vmem:[%s1663 + $0x10] sm:$0xff]
    %v1667 = vld [vmem:[%s1663 + $0x18] sm:$0xff]
    %v1668 = vrot.slane %v203, 3
    %v1669 = vsel %vm609, %v619, %v1668
    %v1670 = vsel %vm232, %v1669, 0
    %1672 = vmatprep.subr.mxu0 0.0
    %1673 = vmatpush1.msra.mxu0 %v1664
    %1674 = vmatprep.subr.mxu0 0.0
    %1675 = vmatpush1.msra.mxu0 %v1665
    %1676 = vmatprep.subr.mxu0 0.0
    %1677 = vmatpush1.msra.mxu0 %v1666
    %1678 = vmatprep.subr.mxu0 0.0
    %1679 = vmatpush1.msra.mxu0 %v1667
    %1680 = vmatprep.subr.mxu0 0.0
    %1681 = vmatpush1.msra.mxu0 0.0
    %1682 = vmatprep.subr.mxu0 0.0
    %1683 = vmatpush1.msra.mxu0 0.0
    %1684 = vmatprep.subr.mxu0 0.0
    %1685 = vmatpush1.msra.mxu0 0.0
    %1686 = vmatprep.subr.mxu0 0.0
    %1687 = vmatpush1.msra.mxu0 0.0
    %1688 = vmatprep.subr.mxu0 0.0
    %1689 = vmatpush1.msra.mxu0 0.0
    %1690 = vmatprep.subr.mxu0 0.0
    %1691 = vmatpush1.msra.mxu0 0.0
    %1692 = vmatprep.subr.mxu0 0.0
    %1693 = vmatpush1.msra.mxu0 0.0
    %1694 = vmatprep.subr.mxu0 0.0
    %1695 = vmatpush1.msra.mxu0 0.0
    %1696 = vmatprep.subr.mxu0 0.0
    %1697 = vmatpush1.msra.mxu0 0.0
    %1698 = vmatprep.subr.mxu0 0.0
    %1699 = vmatpush1.msra.mxu0 0.0
    %1700 = vmatprep.subr.mxu0 0.0
    %1701 = vmatpush1.msra.mxu0 0.0
    %1702 = vmatprep.subr.mxu0 0.0
    %1703 = vmatpush1.msra.mxu0 0.0
    %1704 = vmatprep.subr.mxu0 0.0
    %1705 = vmatpush1.msra.mxu0 0.0
    %1706 = vmatprep.subr.mxu0 0.0
    %1707 = vmatpush1.msra.mxu0 0.0
    %1708 = vmatprep.subr.mxu0 0.0
    %1709 = vmatpush1.msra.mxu0 0.0
    %1710 = vmatprep.subr.mxu0 0.0
    %1711 = vmatpush1.msra.mxu0 0.0
    %1712 = vmatprep.subr.mxu0 0.0
    %1713 = vmatpush1.msra.mxu0 0.0
    %1714 = vmatprep.subr.mxu0 0.0
    %1715 = vmatpush1.msra.mxu0 0.0
    %1716 = vmatprep.subr.mxu0 0.0
    %1717 = vmatpush1.msra.mxu0 0.0
    %1718 = vmatprep.subr.mxu0 0.0
    %1719 = vmatpush1.msra.mxu0 0.0
    %1720 = vmatprep.subr.mxu0 0.0
    %1721 = vmatpush1.msra.mxu0 0.0
    %1722 = vmatprep.subr.mxu0 0.0
    %1723 = vmatpush1.msra.mxu0 0.0
    %1724 = vmatprep.subr.mxu0 0.0
    %1725 = vmatpush1.msra.mxu0 0.0
    %1726 = vmatprep.subr.mxu0 0.0
    %1727 = vmatpush1.msra.mxu0 0.0
    %1728 = vmatprep.subr.mxu0 0.0
    %1729 = vmatpush1.msra.mxu0 0.0
    %1730 = vmatprep.subr.mxu0 0.0
    %1731 = vmatpush1.msra.mxu0 0.0
    %1732 = vmatprep.subr.mxu0 0.0
    %1733 = vmatpush1.msra.mxu0 0.0
    %1734 = vmatprep.subr.mxu0 0.0
    %1735 = vmatpush1.msra.mxu0 0.0
    %1736 = vmatprep.mubr.f32.mxu0 0.0
    %1737 = vmatmul.mubr.f32.gmra.mrb[0].mxu0 %v623
    %v1738 = vpop.f32.mrb[0].mxu0
    %v1739 = vadd.f32 0.0, %v1738
    %v1740 = vpop.f32.mrb[0].mxu0
    %1741 = vmatprep.mubr.f32.mxu0 0.0
    %1742 = vmatmul.mubr.f32.gmra.mrb[0].mxu0 %v625
    %v1743 = vpop.f32.mrb[0].mxu0
    %v1744 = vadd.f32 0.0, %v1743
    %v1745 = vpop.f32.mrb[0].mxu0
    %1746 = vmatprep.mubr.f32.mxu0 0.0
    %1747 = vmatmul.mubr.f32.gmra.mrb[0].mxu0 %v627
    %v1748 = vpop.f32.mrb[0].mxu0
    %v1749 = vpop.f32.mrb[0].mxu0
    %1750 = vmatprep.mubr.f32.mxu0 0.0
    %1751 = vmatmul.mubr.f32.gmra.mrb[0].mxu0 %v629
    %v1752 = vpop.f32.mrb[0].mxu0
    %v1753 = vpop.f32.mrb[0].mxu0
    %1754 = vmatprep.mubr.f32.mxu0 0.0
    %1755 = vmatmul.mubr.f32.gmra.mrb[0].mxu0 %v621
    %v1756 = vpop.f32.mrb[0].mxu0
    %v1757 = vpop.f32.mrb[0].mxu0
    %1758 = vmatprep.mubr.f32.mxu0 0.0
    %1759 = vmatmul.mubr.f32.gmra.mrb[0].mxu0 %v621
    %v1760 = vpop.f32.mrb[0].mxu0
    %v1761 = vpop.f32.mrb[0].mxu0
    %1762 = vmatprep.mubr.f32.mxu0 0.0
    %1763 = vmatmul.mubr.f32.gmra.mrb[0].mxu0 %v621
    %v1764 = vpop.f32.mrb[0].mxu0
    %v1765 = vadd.f32 0.0, %v1764
    %v1766 = vpop.f32.mrb[0].mxu0
    %1767 = vmatprep.mubr.f32.mxu0 0.0
    %1768 = vmatmul.mubr.f32.gmra.mrb[0].mxu0 %v631
    %v1769 = vpop.f32.mrb[0].mxu0
    %v1770 = vadd.f32 0.0, %v1769
    %v1771 = vpop.f32.mrb[0].mxu0
    %1772 = vmatprep.mubr.f32.mxu0 0.0
    %1773 = vmatmul.mubr.f32.gmra.mrb[0].mxu0 %v1670
    %v1774 = vpop.f32.mrb[0].mxu0
    %v1775 = vadd.f32 0.0, %v1774
    %v1776 = vpop.f32.mrb[0].mxu0
    %1777 = vdwg.mxu0
    %v1778 = vadd.f32 %v1658, %v1739
    %v1779 = vadd.f32 %v1659, %v1744
    %v1780 = vadd.f32 %v1660, %v1765
    %v1781 = vadd.f32 %v1661, %v1770
    %v1782 = vadd.f32 %v1662, %v1775
    %s1783 = scalar_lea.vmem [#allocation4], 384
    %v1784 = vld [vmem:[%s1783] sm:$0xff]
    %v1785 = vld [vmem:[%s1783 + $0x8] sm:$0xff]
    %v1786 = vld [vmem:[%s1783 + $0x10] sm:$0xff]
    %v1787 = vld [vmem:[%s1783 + $0x18] sm:$0xff]
    %v1788 = vrot.slane %v203, 4
    %v1789 = vsel %vm101, %v758, %v1788
    %v1790 = vsel %vm232, %v1789, 0
    %1792 = vmatprep.subr.mxu0 0.0
    %1793 = vmatpush1.msra.mxu0 %v1784
    %1794 = vmatprep.subr.mxu0 0.0
    %1795 = vmatpush1.msra.mxu0 %v1785
    %1796 = vmatprep.subr.mxu0 0.0
    %1797 = vmatpush1.msra.mxu0 %v1786
    %1798 = vmatprep.subr.mxu0 0.0
    %1799 = vmatpush1.msra.mxu0 %v1787
    %1800 = vmatprep.subr.mxu0 0.0
    %1801 = vmatpush1.msra.mxu0 0.0
    %1802 = vmatprep.subr.mxu0 0.0
    %1803 = vmatpush1.msra.mxu0 0.0
    %1804 = vmatprep.subr.mxu0 0.0
    %1805 = vmatpush1.msra.mxu0 0.0
    %1806 = vmatprep.subr.mxu0 0.0
    %1807 = vmatpush1.msra.mxu0 0.0
    %1808 = vmatprep.subr.mxu0 0.0
    %1809 = vmatpush1.msra.mxu0 0.0
    %1810 = vmatprep.subr.mxu0 0.0
    %1811 = vmatpush1.msra.mxu0 0.0
    %1812 = vmatprep.subr.mxu0 0.0
    %1813 = vmatpush1.msra.mxu0 0.0
    %1814 = vmatprep.subr.mxu0 0.0
    %1815 = vmatpush1.msra.mxu0 0.0
    %1816 = vmatprep.subr.mxu0 0.0
    %1817 = vmatpush1.msra.mxu0 0.0
    %1818 = vmatprep.subr.mxu0 0.0
    %1819 = vmatpush1.msra.mxu0 0.0
    %1820 = vmatprep.subr.mxu0 0.0
    %1821 = vmatpush1.msra.mxu0 0.0
    %1822 = vmatprep.subr.mxu0 0.0
    %1823 = vmatpush1.msra.mxu0 0.0
    %1824 = vmatprep.subr.mxu0 0.0
    %1825 = vmatpush1.msra.mxu0 0.0
    %1826 = vmatprep.subr.mxu0 0.0
    %1827 = vmatpush1.msra.mxu0 0.0
    %1828 = vmatprep.subr.mxu0 0.0
    %1829 = vmatpush1.msra.mxu0 0.0
    %1830 = vmatprep.subr.mxu0 0.0
    %1831 = vmatpush1.msra.mxu0 0.0
    %1832 = vmatprep.subr.mxu0 0.0
    %1833 = vmatpush1.msra.mxu0 0.0
    %1834 = vmatprep.subr.mxu0 0.0
    %1835 = vmatpush1.msra.mxu0 0.0
    %1836 = vmatprep.subr.mxu0 0.0
    %1837 = vmatpush1.msra.mxu0 0.0
    %1838 = vmatprep.subr.mxu0 0.0
    %1839 = vmatpush1.msra.mxu0 0.0
    %1840 = vmatprep.subr.mxu0 0.0
    %1841 = vmatpush1.msra.mxu0 0.0
    %1842 = vmatprep.subr.mxu0 0.0
    %1843 = vmatpush1.msra.mxu0 0.0
    %1844 = vmatprep.subr.mxu0 0.0
    %1845 = vmatpush1.msra.mxu0 0.0
    %1846 = vmatprep.subr.mxu0 0.0
    %1847 = vmatpush1.msra.mxu0 0.0
    %1848 = vmatprep.subr.mxu0 0.0
    %1849 = vmatpush1.msra.mxu0 0.0
    %1850 = vmatprep.subr.mxu0 0.0
    %1851 = vmatpush1.msra.mxu0 0.0
    %1852 = vmatprep.subr.mxu0 0.0
    %1853 = vmatpush1.msra.mxu0 0.0
    %1854 = vmatprep.subr.mxu0 0.0
    %1855 = vmatpush1.msra.mxu0 0.0
    %1856 = vmatprep.mubr.f32.mxu0 0.0
    %1857 = vmatmul.mubr.f32.gmra.mrb[0].mxu0 %v762
    %v1858 = vpop.f32.mrb[0].mxu0
    %v1859 = vadd.f32 0.0, %v1858
    %v1860 = vpop.f32.mrb[0].mxu0
    %1861 = vmatprep.mubr.f32.mxu0 0.0
    %1862 = vmatmul.mubr.f32.gmra.mrb[0].mxu0 %v764
    %v1863 = vpop.f32.mrb[0].mxu0
    %v1864 = vadd.f32 0.0, %v1863
    %v1865 = vpop.f32.mrb[0].mxu0
    %1866 = vmatprep.mubr.f32.mxu0 0.0
    %1867 = vmatmul.mubr.f32.gmra.mrb[0].mxu0 %v766
    %v1868 = vpop.f32.mrb[0].mxu0
    %v1869 = vpop.f32.mrb[0].mxu0
    %1870 = vmatprep.mubr.f32.mxu0 0.0
    %1871 = vmatmul.mubr.f32.gmra.mrb[0].mxu0 %v768
    %v1872 = vpop.f32.mrb[0].mxu0
    %v1873 = vpop.f32.mrb[0].mxu0
    %1874 = vmatprep.mubr.f32.mxu0 0.0
    %1875 = vmatmul.mubr.f32.gmra.mrb[0].mxu0 %v760
    %v1876 = vpop.f32.mrb[0].mxu0
    %v1877 = vpop.f32.mrb[0].mxu0
    %1878 = vmatprep.mubr.f32.mxu0 0.0
    %1879 = vmatmul.mubr.f32.gmra.mrb[0].mxu0 %v760
    %v1880 = vpop.f32.mrb[0].mxu0
    %v1881 = vpop.f32.mrb[0].mxu0
    %1882 = vmatprep.mubr.f32.mxu0 0.0
    %1883 = vmatmul.mubr.f32.gmra.mrb[0].mxu0 %v760
    %v1884 = vpop.f32.mrb[0].mxu0
    %v1885 = vadd.f32 0.0, %v1884
    %v1886 = vpop.f32.mrb[0].mxu0
    %1887 = vmatprep.mubr.f32.mxu0 0.0
    %1888 = vmatmul.mubr.f32.gmra.mrb[0].mxu0 %v770
    %v1889 = vpop.f32.mrb[0].mxu0
    %v1890 = vadd.f32 0.0, %v1889
    %v1891 = vpop.f32.mrb[0].mxu0
    %1892 = vmatprep.mubr.f32.mxu0 0.0
    %1893 = vmatmul.mubr.f32.gmra.mrb[0].mxu0 %v1790
    %v1894 = vpop.f32.mrb[0].mxu0
    %v1895 = vadd.f32 0.0, %v1894
    %v1896 = vpop.f32.mrb[0].mxu0
    %1897 = vdwg.mxu0
    %v1898 = vadd.f32 %v1778, %v1859
    %v1899 = vadd.f32 %v1779, %v1864
    %v1900 = vadd.f32 %v1780, %v1885
    %v1901 = vadd.f32 %v1781, %v1890
    %v1902 = vadd.f32 %v1782, %v1895
    %s1903 = scalar_lea.vmem [#allocation4], 416
    %v1904 = vld [vmem:[%s1903] sm:$0xff]
    %v1905 = vld [vmem:[%s1903 + $0x8] sm:$0xff]
    %v1906 = vld [vmem:[%s1903 + $0x10] sm:$0xff]
    %v1907 = vld [vmem:[%s1903 + $0x18] sm:$0xff]
    %v1908 = vrot.slane %v203, 5
    %v1909 = vsel %vm192, %v897, %v1908
    %v1910 = vsel %vm232, %v1909, 0
    %1912 = vmatprep.subr.mxu0 0.0
    %1913 = vmatpush1.msra.mxu0 %v1904
    %1914 = vmatprep.subr.mxu0 0.0
    %1915 = vmatpush1.msra.mxu0 %v1905
    %1916 = vmatprep.subr.mxu0 0.0
    %1917 = vmatpush1.msra.mxu0 %v1906
    %1918 = vmatprep.subr.mxu0 0.0
    %1919 = vmatpush1.msra.mxu0 %v1907
    %1920 = vmatprep.subr.mxu0 0.0
    %1921 = vmatpush1.msra.mxu0 0.0
    %1922 = vmatprep.subr.mxu0 0.0
    %1923 = vmatpush1.msra.mxu0 0.0
    %1924 = vmatprep.subr.mxu0 0.0
    %1925 = vmatpush1.msra.mxu0 0.0
    %1926 = vmatprep.subr.mxu0 0.0
    %1927 = vmatpush1.msra.mxu0 0.0
    %1928 = vmatprep.subr.mxu0 0.0
    %1929 = vmatpush1.msra.mxu0 0.0
    %1930 = vmatprep.subr.mxu0 0.0
    %1931 = vmatpush1.msra.mxu0 0.0
    %1932 = vmatprep.subr.mxu0 0.0
    %1933 = vmatpush1.msra.mxu0 0.0
    %1934 = vmatprep.subr.mxu0 0.0
    %1935 = vmatpush1.msra.mxu0 0.0
    %1936 = vmatprep.subr.mxu0 0.0
    %1937 = vmatpush1.msra.mxu0 0.0
    %1938 = vmatprep.subr.mxu0 0.0
    %1939 = vmatpush1.msra.mxu0 0.0
    %1940 = vmatprep.subr.mxu0 0.0
    %1941 = vmatpush1.msra.mxu0 0.0
    %1942 = vmatprep.subr.mxu0 0.0
    %1943 = vmatpush1.msra.mxu0 0.0
    %1944 = vmatprep.subr.mxu0 0.0
    %1945 = vmatpush1.msra.mxu0 0.0
    %1946 = vmatprep.subr.mxu0 0.0
    %1947 = vmatpush1.msra.mxu0 0.0
    %1948 = vmatprep.subr.mxu0 0.0
    %1949 = vmatpush1.msra.mxu0 0.0
    %1950 = vmatprep.subr.mxu0 0.0
    %1951 = vmatpush1.msra.mxu0 0.0
    %1952 = vmatprep.subr.mxu0 0.0
    %1953 = vmatpush1.msra.mxu0 0.0
    %1954 = vmatprep.subr.mxu0 0.0
    %1955 = vmatpush1.msra.mxu0 0.0
    %1956 = vmatprep.subr.mxu0 0.0
    %1957 = vmatpush1.msra.mxu0 0.0
    %1958 = vmatprep.subr.mxu0 0.0
    %1959 = vmatpush1.msra.mxu0 0.0
    %1960 = vmatprep.subr.mxu0 0.0
    %1961 = vmatpush1.msra.mxu0 0.0
    %1962 = vmatprep.subr.mxu0 0.0
    %1963 = vmatpush1.msra.mxu0 0.0
    %1964 = vmatprep.subr.mxu0 0.0
    %1965 = vmatpush1.msra.mxu0 0.0
    %1966 = vmatprep.subr.mxu0 0.0
    %1967 = vmatpush1.msra.mxu0 0.0
    %1968 = vmatprep.subr.mxu0 0.0
    %1969 = vmatpush1.msra.mxu0 0.0
    %1970 = vmatprep.subr.mxu0 0.0
    %1971 = vmatpush1.msra.mxu0 0.0
    %1972 = vmatprep.subr.mxu0 0.0
    %1973 = vmatpush1.msra.mxu0 0.0
    %1974 = vmatprep.subr.mxu0 0.0
    %1975 = vmatpush1.msra.mxu0 0.0
    %1976 = vmatprep.mubr.f32.mxu0 0.0
    %1977 = vmatmul.mubr.f32.gmra.mrb[0].mxu0 %v901
    %v1978 = vpop.f32.mrb[0].mxu0
    %v1979 = vadd.f32 0.0, %v1978
    %v1980 = vpop.f32.mrb[0].mxu0
    %1981 = vmatprep.mubr.f32.mxu0 0.0
    %1982 = vmatmul.mubr.f32.gmra.mrb[0].mxu0 %v903
    %v1983 = vpop.f32.mrb[0].mxu0
    %v1984 = vadd.f32 0.0, %v1983
    %v1985 = vpop.f32.mrb[0].mxu0
    %1986 = vmatprep.mubr.f32.mxu0 0.0
    %1987 = vmatmul.mubr.f32.gmra.mrb[0].mxu0 %v905
    %v1988 = vpop.f32.mrb[0].mxu0
    %v1989 = vpop.f32.mrb[0].mxu0
    %1990 = vmatprep.mubr.f32.mxu0 0.0
    %1991 = vmatmul.mubr.f32.gmra.mrb[0].mxu0 %v907
    %v1992 = vpop.f32.mrb[0].mxu0
    %v1993 = vpop.f32.mrb[0].mxu0
    %1994 = vmatprep.mubr.f32.mxu0 0.0
    %1995 = vmatmul.mubr.f32.gmra.mrb[0].mxu0 %v899
    %v1996 = vpop.f32.mrb[0].mxu0
    %v1997 = vpop.f32.mrb[0].mxu0
    %1998 = vmatprep.mubr.f32.mxu0 0.0
    %1999 = vmatmul.mubr.f32.gmra.mrb[0].mxu0 %v899
    %v2000 = vpop.f32.mrb[0].mxu0
    %v2001 = vpop.f32.mrb[0].mxu0
    %2002 = vmatprep.mubr.f32.mxu0 0.0
    %2003 = vmatmul.mubr.f32.gmra.mrb[0].mxu0 %v899
    %v2004 = vpop.f32.mrb[0].mxu0
    %v2005 = vadd.f32 0.0, %v2004
    %v2006 = vpop.f32.mrb[0].mxu0
    %2007 = vmatprep.mubr.f32.mxu0 0.0
    %2008 = vmatmul.mubr.f32.gmra.mrb[0].mxu0 %v909
    %v2009 = vpop.f32.mrb[0].mxu0
    %v2010 = vadd.f32 0.0, %v2009
    %v2011 = vpop.f32.mrb[0].mxu0
    %2012 = vmatprep.mubr.f32.mxu0 0.0
    %2013 = vmatmul.mubr.f32.gmra.mrb[0].mxu0 %v1910
    %v2014 = vpop.f32.mrb[0].mxu0
    %v2015 = vadd.f32 0.0, %v2014
    %v2016 = vpop.f32.mrb[0].mxu0
    %2017 = vdwg.mxu0
    %v2018 = vadd.f32 %v1898, %v1979
    %v2019 = vadd.f32 %v1899, %v1984
    %v2020 = vadd.f32 %v1900, %v2005
    %v2021 = vadd.f32 %v1901, %v2010
    %v2022 = vadd.f32 %v1902, %v2015
    %s2023 = scalar_lea.vmem [#allocation4], 448
    %v2024 = vld [vmem:[%s2023] sm:$0xff]
    %v2025 = vld [vmem:[%s2023 + $0x8] sm:$0xff]
    %v2026 = vld [vmem:[%s2023 + $0x10] sm:$0xff]
    %v2027 = vld [vmem:[%s2023 + $0x18] sm:$0xff]
    %v2028 = vrot.slane %v203, 6
    %v2029 = vsel %vm1027, %v1037, %v2028
    %v2030 = vsel %vm232, %v2029, 0
    %2032 = vmatprep.subr.mxu0 0.0
    %2033 = vmatpush1.msra.mxu0 %v2024
    %2034 = vmatprep.subr.mxu0 0.0
    %2035 = vmatpush1.msra.mxu0 %v2025
    %2036 = vmatprep.subr.mxu0 0.0
    %2037 = vmatpush1.msra.mxu0 %v2026
    %2038 = vmatprep.subr.mxu0 0.0
    %2039 = vmatpush1.msra.mxu0 %v2027
    %2040 = vmatprep.subr.mxu0 0.0
    %2041 = vmatpush1.msra.mxu0 0.0
    %2042 = vmatprep.subr.mxu0 0.0
    %2043 = vmatpush1.msra.mxu0 0.0
    %2044 = vmatprep.subr.mxu0 0.0
    %2045 = vmatpush1.msra.mxu0 0.0
    %2046 = vmatprep.subr.mxu0 0.0
    %2047 = vmatpush1.msra.mxu0 0.0
    %2048 = vmatprep.subr.mxu0 0.0
    %2049 = vmatpush1.msra.mxu0 0.0
    %2050 = vmatprep.subr.mxu0 0.0
    %2051 = vmatpush1.msra.mxu0 0.0
    %2052 = vmatprep.subr.mxu0 0.0
    %2053 = vmatpush1.msra.mxu0 0.0
    %2054 = vmatprep.subr.mxu0 0.0
    %2055 = vmatpush1.msra.mxu0 0.0
    %2056 = vmatprep.subr.mxu0 0.0
    %2057 = vmatpush1.msra.mxu0 0.0
    %2058 = vmatprep.subr.mxu0 0.0
    %2059 = vmatpush1.msra.mxu0 0.0
    %2060 = vmatprep.subr.mxu0 0.0
    %2061 = vmatpush1.msra.mxu0 0.0
    %2062 = vmatprep.subr.mxu0 0.0
    %2063 = vmatpush1.msra.mxu0 0.0
    %2064 = vmatprep.subr.mxu0 0.0
    %2065 = vmatpush1.msra.mxu0 0.0
    %2066 = vmatprep.subr.mxu0 0.0
    %2067 = vmatpush1.msra.mxu0 0.0
    %2068 = vmatprep.subr.mxu0 0.0
    %2069 = vmatpush1.msra.mxu0 0.0
    %2070 = vmatprep.subr.mxu0 0.0
    %2071 = vmatpush1.msra.mxu0 0.0
    %2072 = vmatprep.subr.mxu0 0.0
    %2073 = vmatpush1.msra.mxu0 0.0
    %2074 = vmatprep.subr.mxu0 0.0
    %2075 = vmatpush1.msra.mxu0 0.0
    %2076 = vmatprep.subr.mxu0 0.0
    %2077 = vmatpush1.msra.mxu0 0.0
    %2078 = vmatprep.subr.mxu0 0.0
    %2079 = vmatpush1.msra.mxu0 0.0
    %2080 = vmatprep.subr.mxu0 0.0
    %2081 = vmatpush1.msra.mxu0 0.0
    %2082 = vmatprep.subr.mxu0 0.0
    %2083 = vmatpush1.msra.mxu0 0.0
    %2084 = vmatprep.subr.mxu0 0.0
    %2085 = vmatpush1.msra.mxu0 0.0
    %2086 = vmatprep.subr.mxu0 0.0
    %2087 = vmatpush1.msra.mxu0 0.0
    %2088 = vmatprep.subr.mxu0 0.0
    %2089 = vmatpush1.msra.mxu0 0.0
    %2090 = vmatprep.subr.mxu0 0.0
    %2091 = vmatpush1.msra.mxu0 0.0
    %2092 = vmatprep.subr.mxu0 0.0
    %2093 = vmatpush1.msra.mxu0 0.0
    %2094 = vmatprep.subr.mxu0 0.0
    %2095 = vmatpush1.msra.mxu0 0.0
    %2096 = vmatprep.mubr.f32.mxu0 0.0
    %2097 = vmatmul.mubr.f32.gmra.mrb[0].mxu0 %v1041
    %v2098 = vpop.f32.mrb[0].mxu0
    %v2099 = vadd.f32 0.0, %v2098
    %v2100 = vpop.f32.mrb[0].mxu0
    %2101 = vmatprep.mubr.f32.mxu0 0.0
    %2102 = vmatmul.mubr.f32.gmra.mrb[0].mxu0 %v1043
    %v2103 = vpop.f32.mrb[0].mxu0
    %v2104 = vadd.f32 0.0, %v2103
    %v2105 = vpop.f32.mrb[0].mxu0
    %2106 = vmatprep.mubr.f32.mxu0 0.0
    %2107 = vmatmul.mubr.f32.gmra.mrb[0].mxu0 %v1045
    %v2108 = vpop.f32.mrb[0].mxu0
    %v2109 = vpop.f32.mrb[0].mxu0
    %2110 = vmatprep.mubr.f32.mxu0 0.0
    %2111 = vmatmul.mubr.f32.gmra.mrb[0].mxu0 %v1047
    %v2112 = vpop.f32.mrb[0].mxu0
    %v2113 = vpop.f32.mrb[0].mxu0
    %2114 = vmatprep.mubr.f32.mxu0 0.0
    %2115 = vmatmul.mubr.f32.gmra.mrb[0].mxu0 %v1039
    %v2116 = vpop.f32.mrb[0].mxu0
    %v2117 = vpop.f32.mrb[0].mxu0
    %2118 = vmatprep.mubr.f32.mxu0 0.0
    %2119 = vmatmul.mubr.f32.gmra.mrb[0].mxu0 %v1039
    %v2120 = vpop.f32.mrb[0].mxu0
    %v2121 = vpop.f32.mrb[0].mxu0
    %2122 = vmatprep.mubr.f32.mxu0 0.0
    %2123 = vmatmul.mubr.f32.gmra.mrb[0].mxu0 %v1039
    %v2124 = vpop.f32.mrb[0].mxu0
    %v2125 = vadd.f32 0.0, %v2124
    %v2126 = vpop.f32.mrb[0].mxu0
    %2127 = vmatprep.mubr.f32.mxu0 0.0
    %2128 = vmatmul.mubr.f32.gmra.mrb[0].mxu0 %v1049
    %v2129 = vpop.f32.mrb[0].mxu0
    %v2130 = vadd.f32 0.0, %v2129
    %v2131 = vpop.f32.mrb[0].mxu0
    %2132 = vmatprep.mubr.f32.mxu0 0.0
    %2133 = vmatmul.mubr.f32.gmra.mrb[0].mxu0 %v2030
    %v2134 = vpop.f32.mrb[0].mxu0
    %v2135 = vadd.f32 0.0, %v2134
    %v2136 = vpop.f32.mrb[0].mxu0
    %2137 = vdwg.mxu0
    %v2138 = vadd.f32 %v2018, %v2099
    %v2139 = vadd.f32 %v2019, %v2104
    %v2140 = vadd.f32 %v2020, %v2125
    %v2141 = vadd.f32 %v2021, %v2130
    %v2142 = vadd.f32 %v2022, %v2135
    %s2143 = scalar_lea.vmem [#allocation4], 480
    %v2144 = vld [vmem:[%s2143] sm:$0xff]
    %v2145 = vld [vmem:[%s2143 + $0x8] sm:$0xff]
    %v2146 = vld [vmem:[%s2143 + $0x10] sm:$0xff]
    %v2147 = vld [vmem:[%s2143 + $0x18] sm:$0xff]
    %v2148 = vrot.slane %v203, 7
    %v2149 = vsel %vm200, %v1176, %v2148
    %v2150 = vsel %vm232, %v2149, 0
    %2152 = vmatprep.subr.mxu0 0.0
    %2153 = vmatpush1.msra.mxu0 %v2144
    %2154 = vmatprep.subr.mxu0 0.0
    %2155 = vmatpush1.msra.mxu0 %v2145
    %2156 = vmatprep.subr.mxu0 0.0
    %2157 = vmatpush1.msra.mxu0 %v2146
    %2158 = vmatprep.subr.mxu0 0.0
    %2159 = vmatpush1.msra.mxu0 %v2147
    %2160 = vmatprep.subr.mxu0 0.0
    %2161 = vmatpush1.msra.mxu0 0.0
    %2162 = vmatprep.subr.mxu0 0.0
    %2163 = vmatpush1.msra.mxu0 0.0
    %2164 = vmatprep.subr.mxu0 0.0
    %2165 = vmatpush1.msra.mxu0 0.0
    %2166 = vmatprep.subr.mxu0 0.0
    %2167 = vmatpush1.msra.mxu0 0.0
    %2168 = vmatprep.subr.mxu0 0.0
    %2169 = vmatpush1.msra.mxu0 0.0
    %2170 = vmatprep.subr.mxu0 0.0
    %2171 = vmatpush1.msra.mxu0 0.0
    %2172 = vmatprep.subr.mxu0 0.0
    %2173 = vmatpush1.msra.mxu0 0.0
    %2174 = vmatprep.subr.mxu0 0.0
    %2175 = vmatpush1.msra.mxu0 0.0
    %2176 = vmatprep.subr.mxu0 0.0
    %2177 = vmatpush1.msra.mxu0 0.0
    %2178 = vmatprep.subr.mxu0 0.0
    %2179 = vmatpush1.msra.mxu0 0.0
    %2180 = vmatprep.subr.mxu0 0.0
    %2181 = vmatpush1.msra.mxu0 0.0
    %2182 = vmatprep.subr.mxu0 0.0
    %2183 = vmatpush1.msra.mxu0 0.0
    %2184 = vmatprep.subr.mxu0 0.0
    %2185 = vmatpush1.msra.mxu0 0.0
    %2186 = vmatprep.subr.mxu0 0.0
    %2187 = vmatpush1.msra.mxu0 0.0
    %2188 = vmatprep.subr.mxu0 0.0
    %2189 = vmatpush1.msra.mxu0 0.0
    %2190 = vmatprep.subr.mxu0 0.0
    %2191 = vmatpush1.msra.mxu0 0.0
    %2192 = vmatprep.subr.mxu0 0.0
    %2193 = vmatpush1.msra.mxu0 0.0
    %2194 = vmatprep.subr.mxu0 0.0
    %2195 = vmatpush1.msra.mxu0 0.0
    %2196 = vmatprep.subr.mxu0 0.0
    %2197 = vmatpush1.msra.mxu0 0.0
    %2198 = vmatprep.subr.mxu0 0.0
    %2199 = vmatpush1.msra.mxu0 0.0
    %2200 = vmatprep.subr.mxu0 0.0
    %2201 = vmatpush1.msra.mxu0 0.0
    %2202 = vmatprep.subr.mxu0 0.0
    %2203 = vmatpush1.msra.mxu0 0.0
    %2204 = vmatprep.subr.mxu0 0.0
    %2205 = vmatpush1.msra.mxu0 0.0
    %2206 = vmatprep.subr.mxu0 0.0
    %2207 = vmatpush1.msra.mxu0 0.0
    %2208 = vmatprep.subr.mxu0 0.0
    %2209 = vmatpush1.msra.mxu0 0.0
    %2210 = vmatprep.subr.mxu0 0.0
    %2211 = vmatpush1.msra.mxu0 0.0
    %2212 = vmatprep.subr.mxu0 0.0
    %2213 = vmatpush1.msra.mxu0 0.0
    %2214 = vmatprep.subr.mxu0 0.0
    %2215 = vmatpush1.msra.mxu0 0.0
    %2216 = vmatprep.mubr.f32.mxu0 0.0
    %2217 = vmatmul.mubr.f32.gmra.mrb[0].mxu0 %v1180
    %v2218 = vpop.f32.mrb[0].mxu0
    %v2219 = vadd.f32 0.0, %v2218
    %v2220 = vpop.f32.mrb[0].mxu0
    %2221 = vmatprep.mubr.f32.mxu0 0.0
    %2222 = vmatmul.mubr.f32.gmra.mrb[0].mxu0 %v1182
    %v2223 = vpop.f32.mrb[0].mxu0
    %v2224 = vadd.f32 0.0, %v2223
    %v2225 = vpop.f32.mrb[0].mxu0
    %2226 = vmatprep.mubr.f32.mxu0 0.0
    %2227 = vmatmul.mubr.f32.gmra.mrb[0].mxu0 %v1184
    %v2228 = vpop.f32.mrb[0].mxu0
    %v2229 = vpop.f32.mrb[0].mxu0
    %2230 = vmatprep.mubr.f32.mxu0 0.0
    %2231 = vmatmul.mubr.f32.gmra.mrb[0].mxu0 %v1186
    %v2232 = vpop.f32.mrb[0].mxu0
    %v2233 = vpop.f32.mrb[0].mxu0
    %2234 = vmatprep.mubr.f32.mxu0 0.0
    %2235 = vmatmul.mubr.f32.gmra.mrb[0].mxu0 %v1178
    %v2236 = vpop.f32.mrb[0].mxu0
    %v2237 = vpop.f32.mrb[0].mxu0
    %2238 = vmatprep.mubr.f32.mxu0 0.0
    %2239 = vmatmul.mubr.f32.gmra.mrb[0].mxu0 %v1178
    %v2240 = vpop.f32.mrb[0].mxu0
    %v2241 = vpop.f32.mrb[0].mxu0
    %2242 = vmatprep.mubr.f32.mxu0 0.0
    %2243 = vmatmul.mubr.f32.gmra.mrb[0].mxu0 %v1178
    %v2244 = vpop.f32.mrb[0].mxu0
    %v2245 = vadd.f32 0.0, %v2244
    %v2246 = vpop.f32.mrb[0].mxu0
    %2247 = vmatprep.mubr.f32.mxu0 0.0
    %2248 = vmatmul.mubr.f32.gmra.mrb[0].mxu0 %v1188
    %v2249 = vpop.f32.mrb[0].mxu0
    %v2250 = vadd.f32 0.0, %v2249
    %v2251 = vpop.f32.mrb[0].mxu0
    %2252 = vmatprep.mubr.f32.mxu0 0.0
    %2253 = vmatmul.mubr.f32.gmra.mrb[0].mxu0 %v2150
    %v2254 = vpop.f32.mrb[0].mxu0
    %v2255 = vadd.f32 0.0, %v2254
    %v2256 = vpop.f32.mrb[0].mxu0
    %2257 = vdwg.mxu0
    %v2258 = vadd.f32 %v2138, %v2219
    %v2259 = vadd.f32 %v2139, %v2224
    %v2260 = vadd.f32 %v2140, %v2245
    %v2261 = vadd.f32 %v2141, %v2250
    %v2262 = vadd.f32 %v2142, %v2255
    %s2263 = scalar_lea.vmem [#allocation4], 512
    %v2264 = vld [vmem:[%s2263] sm:$0xff]
    %v2265 = vld [vmem:[%s2263 + $0x8] sm:$0xff]
    %v2266 = vld [vmem:[%s2263 + $0x10] sm:$0xff]
    %v2267 = vld [vmem:[%s2263 + $0x18] sm:$0xff]
    %v2268 = vsel %vm232, %v203, 0
    %2270 = vmatprep.subr.mxu0 0.0
    %2271 = vmatpush1.msra.mxu0 %v2264
    %2272 = vmatprep.subr.mxu0 0.0
    %2273 = vmatpush1.msra.mxu0 %v2265
    %2274 = vmatprep.subr.mxu0 0.0
    %2275 = vmatpush1.msra.mxu0 %v2266
    %2276 = vmatprep.subr.mxu0 0.0
    %2277 = vmatpush1.msra.mxu0 %v2267
    %2278 = vmatprep.subr.mxu0 0.0
    %2279 = vmatpush1.msra.mxu0 0.0
    %2280 = vmatprep.subr.mxu0 0.0
    %2281 = vmatpush1.msra.mxu0 0.0
    %2282 = vmatprep.subr.mxu0 0.0
    %2283 = vmatpush1.msra.mxu0 0.0
    %2284 = vmatprep.subr.mxu0 0.0
    %2285 = vmatpush1.msra.mxu0 0.0
    %2286 = vmatprep.subr.mxu0 0.0
    %2287 = vmatpush1.msra.mxu0 0.0
    %2288 = vmatprep.subr.mxu0 0.0
    %2289 = vmatpush1.msra.mxu0 0.0
    %2290 = vmatprep.subr.mxu0 0.0
    %2291 = vmatpush1.msra.mxu0 0.0
    %2292 = vmatprep.subr.mxu0 0.0
    %2293 = vmatpush1.msra.mxu0 0.0
    %2294 = vmatprep.subr.mxu0 0.0
    %2295 = vmatpush1.msra.mxu0 0.0
    %2296 = vmatprep.subr.mxu0 0.0
    %2297 = vmatpush1.msra.mxu0 0.0
    %2298 = vmatprep.subr.mxu0 0.0
    %2299 = vmatpush1.msra.mxu0 0.0
    %2300 = vmatprep.subr.mxu0 0.0
    %2301 = vmatpush1.msra.mxu0 0.0
    %2302 = vmatprep.subr.mxu0 0.0
    %2303 = vmatpush1.msra.mxu0 0.0
    %2304 = vmatprep.subr.mxu0 0.0
    %2305 = vmatpush1.msra.mxu0 0.0
    %2306 = vmatprep.subr.mxu0 0.0
    %2307 = vmatpush1.msra.mxu0 0.0
    %2308 = vmatprep.subr.mxu0 0.0
    %2309 = vmatpush1.msra.mxu0 0.0
    %2310 = vmatprep.subr.mxu0 0.0
    %2311 = vmatpush1.msra.mxu0 0.0
    %2312 = vmatprep.subr.mxu0 0.0
    %2313 = vmatpush1.msra.mxu0 0.0
    %2314 = vmatprep.subr.mxu0 0.0
    %2315 = vmatpush1.msra.mxu0 0.0
    %2316 = vmatprep.subr.mxu0 0.0
    %2317 = vmatpush1.msra.mxu0 0.0
    %2318 = vmatprep.subr.mxu0 0.0
    %2319 = vmatpush1.msra.mxu0 0.0
    %2320 = vmatprep.subr.mxu0 0.0
    %2321 = vmatpush1.msra.mxu0 0.0
    %2322 = vmatprep.subr.mxu0 0.0
    %2323 = vmatpush1.msra.mxu0 0.0
    %2324 = vmatprep.subr.mxu0 0.0
    %2325 = vmatpush1.msra.mxu0 0.0
    %2326 = vmatprep.subr.mxu0 0.0
    %2327 = vmatpush1.msra.mxu0 0.0
    %2328 = vmatprep.subr.mxu0 0.0
    %2329 = vmatpush1.msra.mxu0 0.0
    %2330 = vmatprep.subr.mxu0 0.0
    %2331 = vmatpush1.msra.mxu0 0.0
    %2332 = vmatprep.subr.mxu0 0.0
    %2333 = vmatpush1.msra.mxu0 0.0
    %2334 = vmatprep.mubr.f32.mxu0 0.0
    %2335 = vmatmul.mubr.f32.gmra.mrb[0].mxu0 %v353
    %v2336 = vpop.f32.mrb[0].mxu0
    %v2337 = vadd.f32 0.0, %v2336
    %v2338 = vpop.f32.mrb[0].mxu0
    %2339 = vmatprep.mubr.f32.mxu0 0.0
    %2340 = vmatmul.mubr.f32.gmra.mrb[0].mxu0 %v355
    %v2341 = vpop.f32.mrb[0].mxu0
    %v2342 = vadd.f32 0.0, %v2341
    %v2343 = vpop.f32.mrb[0].mxu0
    %2344 = vmatprep.mubr.f32.mxu0 0.0
    %2345 = vmatmul.mubr.f32.gmra.mrb[0].mxu0 %v357
    %v2346 = vpop.f32.mrb[0].mxu0
    %v2347 = vpop.f32.mrb[0].mxu0
    %2348 = vmatprep.mubr.f32.mxu0 0.0
    %2349 = vmatmul.mubr.f32.gmra.mrb[0].mxu0 %v351
    %v2350 = vpop.f32.mrb[0].mxu0
    %v2351 = vpop.f32.mrb[0].mxu0
    %2352 = vmatprep.mubr.f32.mxu0 0.0
    %2353 = vmatmul.mubr.f32.gmra.mrb[0].mxu0 %v351
    %v2354 = vpop.f32.mrb[0].mxu0
    %v2355 = vpop.f32.mrb[0].mxu0
    %2356 = vmatprep.mubr.f32.mxu0 0.0
    %2357 = vmatmul.mubr.f32.gmra.mrb[0].mxu0 %v351
    %v2358 = vpop.f32.mrb[0].mxu0
    %v2359 = vpop.f32.mrb[0].mxu0
    %2360 = vmatprep.mubr.f32.mxu0 0.0
    %2361 = vmatmul.mubr.f32.gmra.mrb[0].mxu0 %v351
    %v2362 = vpop.f32.mrb[0].mxu0
    %v2363 = vadd.f32 0.0, %v2362
    %v2364 = vpop.f32.mrb[0].mxu0
    %2365 = vmatprep.mubr.f32.mxu0 0.0
    %2366 = vmatmul.mubr.f32.gmra.mrb[0].mxu0 %v1306
    %v2367 = vpop.f32.mrb[0].mxu0
    %v2368 = vadd.f32 0.0, %v2367
    %v2369 = vpop.f32.mrb[0].mxu0
    %2370 = vmatprep.mubr.f32.mxu0 0.0
    %2371 = vmatmul.mubr.f32.gmra.mrb[0].mxu0 %v2268
    %v2372 = vpop.f32.mrb[0].mxu0
    %v2373 = vadd.f32 0.0, %v2372
    %v2374 = vpop.f32.mrb[0].mxu0
    %2375 = vdwg.mxu0
    %v2376 = vadd.f32 %v2258, %v2337
    %v2377 = vadd.f32 %v2259, %v2342
    %v2378 = vadd.f32 %v2260, %v2363
    %v2379 = vadd.f32 %v2261, %v2368
    %v2380 = vadd.f32 %v2262, %v2373
    %s2381 = scalar_lea.vmem [#allocation4], 544
    %v2382 = vld [vmem:[%s2381] sm:$0xff]
    %v2383 = vld [vmem:[%s2381 + $0x8] sm:$0xff]
    %v2384 = vld [vmem:[%s2381 + $0x10] sm:$0xff]
    %v2385 = vld [vmem:[%s2381 + $0x18] sm:$0xff]
    %v2386 = vrot.slane %v203, 1
    %v2387 = vsel %vm222, %v1424, %v2386
    %v2388 = vsel %vm232, %v2387, 0
    %v2390 = vsel %vm232, %v2386, 0
    %2392 = vmatprep.subr.mxu0 0.0
    %2393 = vmatpush1.msra.mxu0 %v2382
    %2394 = vmatprep.subr.mxu0 0.0
    %2395 = vmatpush1.msra.mxu0 %v2383
    %2396 = vmatprep.subr.mxu0 0.0
    %2397 = vmatpush1.msra.mxu0 %v2384
    %2398 = vmatprep.subr.mxu0 0.0
    %2399 = vmatpush1.msra.mxu0 %v2385
    %2400 = vmatprep.subr.mxu0 0.0
    %2401 = vmatpush1.msra.mxu0 0.0
    %2402 = vmatprep.subr.mxu0 0.0
    %2403 = vmatpush1.msra.mxu0 0.0
    %2404 = vmatprep.subr.mxu0 0.0
    %2405 = vmatpush1.msra.mxu0 0.0
    %2406 = vmatprep.subr.mxu0 0.0
    %2407 = vmatpush1.msra.mxu0 0.0
    %2408 = vmatprep.subr.mxu0 0.0
    %2409 = vmatpush1.msra.mxu0 0.0
    %2410 = vmatprep.subr.mxu0 0.0
    %2411 = vmatpush1.msra.mxu0 0.0
    %2412 = vmatprep.subr.mxu0 0.0
    %2413 = vmatpush1.msra.mxu0 0.0
    %2414 = vmatprep.subr.mxu0 0.0
    %2415 = vmatpush1.msra.mxu0 0.0
    %2416 = vmatprep.subr.mxu0 0.0
    %2417 = vmatpush1.msra.mxu0 0.0
    %2418 = vmatprep.subr.mxu0 0.0
    %2419 = vmatpush1.msra.mxu0 0.0
    %2420 = vmatprep.subr.mxu0 0.0
    %2421 = vmatpush1.msra.mxu0 0.0
    %2422 = vmatprep.subr.mxu0 0.0
    %2423 = vmatpush1.msra.mxu0 0.0
    %2424 = vmatprep.subr.mxu0 0.0
    %2425 = vmatpush1.msra.mxu0 0.0
    %2426 = vmatprep.subr.mxu0 0.0
    %2427 = vmatpush1.msra.mxu0 0.0
    %2428 = vmatprep.subr.mxu0 0.0
    %2429 = vmatpush1.msra.mxu0 0.0
    %2430 = vmatprep.subr.mxu0 0.0
    %2431 = vmatpush1.msra.mxu0 0.0
    %2432 = vmatprep.subr.mxu0 0.0
    %2433 = vmatpush1.msra.mxu0 0.0
    %2434 = vmatprep.subr.mxu0 0.0
    %2435 = vmatpush1.msra.mxu0 0.0
    %2436 = vmatprep.subr.mxu0 0.0
    %2437 = vmatpush1.msra.mxu0 0.0
    %2438 = vmatprep.subr.mxu0 0.0
    %2439 = vmatpush1.msra.mxu0 0.0
    %2440 = vmatprep.subr.mxu0 0.0
    %2441 = vmatpush1.msra.mxu0 0.0
    %2442 = vmatprep.subr.mxu0 0.0
    %2443 = vmatpush1.msra.mxu0 0.0
    %2444 = vmatprep.subr.mxu0 0.0
    %2445 = vmatpush1.msra.mxu0 0.0
    %2446 = vmatprep.subr.mxu0 0.0
    %2447 = vmatpush1.msra.mxu0 0.0
    %2448 = vmatprep.subr.mxu0 0.0
    %2449 = vmatpush1.msra.mxu0 0.0
    %2450 = vmatprep.subr.mxu0 0.0
    %2451 = vmatpush1.msra.mxu0 0.0
    %2452 = vmatprep.subr.mxu0 0.0
    %2453 = vmatpush1.msra.mxu0 0.0
    %2454 = vmatprep.subr.mxu0 0.0
    %2455 = vmatpush1.msra.mxu0 0.0
    %2456 = vmatprep.mubr.f32.mxu0 0.0
    %2457 = vmatmul.mubr.f32.gmra.mrb[0].mxu0 %v237
    %v2458 = vpop.f32.mrb[0].mxu0
    %v2459 = vadd.f32 0.0, %v2458
    %v2460 = vpop.f32.mrb[0].mxu0
    %2461 = vmatprep.mubr.f32.mxu0 0.0
    %2462 = vmatmul.mubr.f32.gmra.mrb[0].mxu0 %v239
    %v2463 = vpop.f32.mrb[0].mxu0
    %v2464 = vadd.f32 0.0, %v2463
    %v2465 = vpop.f32.mrb[0].mxu0
    %2466 = vmatprep.mubr.f32.mxu0 0.0
    %2467 = vmatmul.mubr.f32.gmra.mrb[0].mxu0 %v241
    %v2468 = vpop.f32.mrb[0].mxu0
    %v2469 = vpop.f32.mrb[0].mxu0
    %2470 = vmatprep.mubr.f32.mxu0 0.0
    %2471 = vmatmul.mubr.f32.gmra.mrb[0].mxu0 %v233
    %v2472 = vpop.f32.mrb[0].mxu0
    %v2473 = vpop.f32.mrb[0].mxu0
    %2474 = vmatprep.mubr.f32.mxu0 0.0
    %2475 = vmatmul.mubr.f32.gmra.mrb[0].mxu0 %v233
    %v2476 = vpop.f32.mrb[0].mxu0
    %v2477 = vpop.f32.mrb[0].mxu0
    %2478 = vmatprep.mubr.f32.mxu0 0.0
    %2479 = vmatmul.mubr.f32.gmra.mrb[0].mxu0 %v233
    %v2480 = vpop.f32.mrb[0].mxu0
    %v2481 = vpop.f32.mrb[0].mxu0
    %2482 = vmatprep.mubr.f32.mxu0 0.0
    %2483 = vmatmul.mubr.f32.gmra.mrb[0].mxu0 %v1426
    %v2484 = vpop.f32.mrb[0].mxu0
    %v2485 = vadd.f32 0.0, %v2484
    %v2486 = vpop.f32.mrb[0].mxu0
    %2487 = vmatprep.mubr.f32.mxu0 0.0
    %2488 = vmatmul.mubr.f32.gmra.mrb[0].mxu0 %v2388
    %v2489 = vpop.f32.mrb[0].mxu0
    %v2490 = vadd.f32 0.0, %v2489
    %v2491 = vpop.f32.mrb[0].mxu0
    %2492 = vmatprep.mubr.f32.mxu0 0.0
    %2493 = vmatmul.mubr.f32.gmra.mrb[0].mxu0 %v2390
    %v2494 = vpop.f32.mrb[0].mxu0
    %v2495 = vadd.f32 0.0, %v2494
    %v2496 = vpop.f32.mrb[0].mxu0
    %2497 = vdwg.mxu0
    %v2498 = vadd.f32 %v2376, %v2459
    %v2499 = vadd.f32 %v2377, %v2464
    %v2500 = vadd.f32 %v2378, %v2485
    %v2501 = vadd.f32 %v2379, %v2490
    %v2502 = vadd.f32 %v2380, %v2495
    %s2503 = scalar_lea.vmem [#allocation4], 576
    %v2504 = vld [vmem:[%s2503] sm:$0xff]
    %v2505 = vld [vmem:[%s2503 + $0x8] sm:$0xff]
    %v2506 = vld [vmem:[%s2503 + $0x10] sm:$0xff]
    %v2507 = vld [vmem:[%s2503 + $0x18] sm:$0xff]
    %v2508 = vrot.slane %v203, 2
    %v2509 = vsel %vm470, %v1546, %v2508
    %v2510 = vsel %vm232, %v2509, 0
    %v2512 = vsel %vm232, %v2508, 0
    %2514 = vmatprep.subr.mxu0 0.0
    %2515 = vmatpush1.msra.mxu0 %v2504
    %2516 = vmatprep.subr.mxu0 0.0
    %2517 = vmatpush1.msra.mxu0 %v2505
    %2518 = vmatprep.subr.mxu0 0.0
    %2519 = vmatpush1.msra.mxu0 %v2506
    %2520 = vmatprep.subr.mxu0 0.0
    %2521 = vmatpush1.msra.mxu0 %v2507
    %2522 = vmatprep.subr.mxu0 0.0
    %2523 = vmatpush1.msra.mxu0 0.0
    %2524 = vmatprep.subr.mxu0 0.0
    %2525 = vmatpush1.msra.mxu0 0.0
    %2526 = vmatprep.subr.mxu0 0.0
    %2527 = vmatpush1.msra.mxu0 0.0
    %2528 = vmatprep.subr.mxu0 0.0
    %2529 = vmatpush1.msra.mxu0 0.0
    %2530 = vmatprep.subr.mxu0 0.0
    %2531 = vmatpush1.msra.mxu0 0.0
    %2532 = vmatprep.subr.mxu0 0.0
    %2533 = vmatpush1.msra.mxu0 0.0
    %2534 = vmatprep.subr.mxu0 0.0
    %2535 = vmatpush1.msra.mxu0 0.0
    %2536 = vmatprep.subr.mxu0 0.0
    %2537 = vmatpush1.msra.mxu0 0.0
    %2538 = vmatprep.subr.mxu0 0.0
    %2539 = vmatpush1.msra.mxu0 0.0
    %2540 = vmatprep.subr.mxu0 0.0
    %2541 = vmatpush1.msra.mxu0 0.0
    %2542 = vmatprep.subr.mxu0 0.0
    %2543 = vmatpush1.msra.mxu0 0.0
    %2544 = vmatprep.subr.mxu0 0.0
    %2545 = vmatpush1.msra.mxu0 0.0
    %2546 = vmatprep.subr.mxu0 0.0
    %2547 = vmatpush1.msra.mxu0 0.0
    %2548 = vmatprep.subr.mxu0 0.0
    %2549 = vmatpush1.msra.mxu0 0.0
    %2550 = vmatprep.subr.mxu0 0.0
    %2551 = vmatpush1.msra.mxu0 0.0
    %2552 = vmatprep.subr.mxu0 0.0
    %2553 = vmatpush1.msra.mxu0 0.0
    %2554 = vmatprep.subr.mxu0 0.0
    %2555 = vmatpush1.msra.mxu0 0.0
    %2556 = vmatprep.subr.mxu0 0.0
    %2557 = vmatpush1.msra.mxu0 0.0
    %2558 = vmatprep.subr.mxu0 0.0
    %2559 = vmatpush1.msra.mxu0 0.0
    %2560 = vmatprep.subr.mxu0 0.0
    %2561 = vmatpush1.msra.mxu0 0.0
    %2562 = vmatprep.subr.mxu0 0.0
    %2563 = vmatpush1.msra.mxu0 0.0
    %2564 = vmatprep.subr.mxu0 0.0
    %2565 = vmatpush1.msra.mxu0 0.0
    %2566 = vmatprep.subr.mxu0 0.0
    %2567 = vmatpush1.msra.mxu0 0.0
    %2568 = vmatprep.subr.mxu0 0.0
    %2569 = vmatpush1.msra.mxu0 0.0
    %2570 = vmatprep.subr.mxu0 0.0
    %2571 = vmatpush1.msra.mxu0 0.0
    %2572 = vmatprep.subr.mxu0 0.0
    %2573 = vmatpush1.msra.mxu0 0.0
    %2574 = vmatprep.subr.mxu0 0.0
    %2575 = vmatpush1.msra.mxu0 0.0
    %2576 = vmatprep.subr.mxu0 0.0
    %2577 = vmatpush1.msra.mxu0 0.0
    %2578 = vmatprep.mubr.f32.mxu0 0.0
    %2579 = vmatmul.mubr.f32.gmra.mrb[0].mxu0 %v484
    %v2580 = vpop.f32.mrb[0].mxu0
    %v2581 = vadd.f32 0.0, %v2580
    %v2582 = vpop.f32.mrb[0].mxu0
    %2583 = vmatprep.mubr.f32.mxu0 0.0
    %2584 = vmatmul.mubr.f32.gmra.mrb[0].mxu0 %v486
    %v2585 = vpop.f32.mrb[0].mxu0
    %v2586 = vadd.f32 0.0, %v2585
    %v2587 = vpop.f32.mrb[0].mxu0
    %2588 = vmatprep.mubr.f32.mxu0 0.0
    %2589 = vmatmul.mubr.f32.gmra.mrb[0].mxu0 %v488
    %v2590 = vpop.f32.mrb[0].mxu0
    %v2591 = vpop.f32.mrb[0].mxu0
    %2592 = vmatprep.mubr.f32.mxu0 0.0
    %2593 = vmatmul.mubr.f32.gmra.mrb[0].mxu0 %v480
    %v2594 = vpop.f32.mrb[0].mxu0
    %v2595 = vpop.f32.mrb[0].mxu0
    %2596 = vmatprep.mubr.f32.mxu0 0.0
    %2597 = vmatmul.mubr.f32.gmra.mrb[0].mxu0 %v480
    %v2598 = vpop.f32.mrb[0].mxu0
    %v2599 = vpop.f32.mrb[0].mxu0
    %2600 = vmatprep.mubr.f32.mxu0 0.0
    %2601 = vmatmul.mubr.f32.gmra.mrb[0].mxu0 %v480
    %v2602 = vpop.f32.mrb[0].mxu0
    %v2603 = vpop.f32.mrb[0].mxu0
    %2604 = vmatprep.mubr.f32.mxu0 0.0
    %2605 = vmatmul.mubr.f32.gmra.mrb[0].mxu0 %v1548
    %v2606 = vpop.f32.mrb[0].mxu0
    %v2607 = vadd.f32 0.0, %v2606
    %v2608 = vpop.f32.mrb[0].mxu0
    %2609 = vmatprep.mubr.f32.mxu0 0.0
    %2610 = vmatmul.mubr.f32.gmra.mrb[0].mxu0 %v2510
    %v2611 = vpop.f32.mrb[0].mxu0
    %v2612 = vadd.f32 0.0, %v2611
    %v2613 = vpop.f32.mrb[0].mxu0
    %2614 = vmatprep.mubr.f32.mxu0 0.0
    %2615 = vmatmul.mubr.f32.gmra.mrb[0].mxu0 %v2512
    %v2616 = vpop.f32.mrb[0].mxu0
    %v2617 = vadd.f32 0.0, %v2616
    %v2618 = vpop.f32.mrb[0].mxu0
    %2619 = vdwg.mxu0
    %v2620 = vadd.f32 %v2498, %v2581
    %v2621 = vadd.f32 %v2499, %v2586
    %v2622 = vadd.f32 %v2500, %v2607
    %v2623 = vadd.f32 %v2501, %v2612
    %v2624 = vadd.f32 %v2502, %v2617
    %s2625 = scalar_lea.vmem [#allocation4], 608
    %v2626 = vld [vmem:[%s2625] sm:$0xff]
    %v2627 = vld [vmem:[%s2625 + $0x8] sm:$0xff]
    %v2628 = vld [vmem:[%s2625 + $0x10] sm:$0xff]
    %v2629 = vld [vmem:[%s2625 + $0x18] sm:$0xff]
    %v2631 = vrot.slane %v209, 3
    %v2632 = vsel %vm609, %v1668, %v2631
    %v2633 = vsel %vm232, %v2632, 0
    %2635 = vmatprep.subr.mxu0 0.0
    %2636 = vmatpush1.msra.mxu0 %v2626
    %2637 = vmatprep.subr.mxu0 0.0
    %2638 = vmatpush1.msra.mxu0 %v2627
    %2639 = vmatprep.subr.mxu0 0.0
    %2640 = vmatpush1.msra.mxu0 %v2628
    %2641 = vmatprep.subr.mxu0 0.0
    %2642 = vmatpush1.msra.mxu0 %v2629
    %2643 = vmatprep.subr.mxu0 0.0
    %2644 = vmatpush1.msra.mxu0 0.0
    %2645 = vmatprep.subr.mxu0 0.0
    %2646 = vmatpush1.msra.mxu0 0.0
    %2647 = vmatprep.subr.mxu0 0.0
    %2648 = vmatpush1.msra.mxu0 0.0
    %2649 = vmatprep.subr.mxu0 0.0
    %2650 = vmatpush1.msra.mxu0 0.0
    %2651 = vmatprep.subr.mxu0 0.0
    %2652 = vmatpush1.msra.mxu0 0.0
    %2653 = vmatprep.subr.mxu0 0.0
    %2654 = vmatpush1.msra.mxu0 0.0
    %2655 = vmatprep.subr.mxu0 0.0
    %2656 = vmatpush1.msra.mxu0 0.0
    %2657 = vmatprep.subr.mxu0 0.0
    %2658 = vmatpush1.msra.mxu0 0.0
    %2659 = vmatprep.subr.mxu0 0.0
    %2660 = vmatpush1.msra.mxu0 0.0
    %2661 = vmatprep.subr.mxu0 0.0
    %2662 = vmatpush1.msra.mxu0 0.0
    %2663 = vmatprep.subr.mxu0 0.0
    %2664 = vmatpush1.msra.mxu0 0.0
    %2665 = vmatprep.subr.mxu0 0.0
    %2666 = vmatpush1.msra.mxu0 0.0
    %2667 = vmatprep.subr.mxu0 0.0
    %2668 = vmatpush1.msra.mxu0 0.0
    %2669 = vmatprep.subr.mxu0 0.0
    %2670 = vmatpush1.msra.mxu0 0.0
    %2671 = vmatprep.subr.mxu0 0.0
    %2672 = vmatpush1.msra.mxu0 0.0
    %2673 = vmatprep.subr.mxu0 0.0
    %2674 = vmatpush1.msra.mxu0 0.0
    %2675 = vmatprep.subr.mxu0 0.0
    %2676 = vmatpush1.msra.mxu0 0.0
    %2677 = vmatprep.subr.mxu0 0.0
    %2678 = vmatpush1.msra.mxu0 0.0
    %2679 = vmatprep.subr.mxu0 0.0
    %2680 = vmatpush1.msra.mxu0 0.0
    %2681 = vmatprep.subr.mxu0 0.0
    %2682 = vmatpush1.msra.mxu0 0.0
    %2683 = vmatprep.subr.mxu0 0.0
    %2684 = vmatpush1.msra.mxu0 0.0
    %2685 = vmatprep.subr.mxu0 0.0
    %2686 = vmatpush1.msra.mxu0 0.0
    %2687 = vmatprep.subr.mxu0 0.0
    %2688 = vmatpush1.msra.mxu0 0.0
    %2689 = vmatprep.subr.mxu0 0.0
    %2690 = vmatpush1.msra.mxu0 0.0
    %2691 = vmatprep.subr.mxu0 0.0
    %2692 = vmatpush1.msra.mxu0 0.0
    %2693 = vmatprep.subr.mxu0 0.0
    %2694 = vmatpush1.msra.mxu0 0.0
    %2695 = vmatprep.subr.mxu0 0.0
    %2696 = vmatpush1.msra.mxu0 0.0
    %2697 = vmatprep.subr.mxu0 0.0
    %2698 = vmatpush1.msra.mxu0 0.0
    %2699 = vmatprep.mubr.f32.mxu0 0.0
    %2700 = vmatmul.mubr.f32.gmra.mrb[0].mxu0 %v625
    %v2701 = vpop.f32.mrb[0].mxu0
    %v2702 = vadd.f32 0.0, %v2701
    %v2703 = vpop.f32.mrb[0].mxu0
    %2704 = vmatprep.mubr.f32.mxu0 0.0
    %2705 = vmatmul.mubr.f32.gmra.mrb[0].mxu0 %v627
    %v2706 = vpop.f32.mrb[0].mxu0
    %v2707 = vadd.f32 0.0, %v2706
    %v2708 = vpop.f32.mrb[0].mxu0
    %2709 = vmatprep.mubr.f32.mxu0 0.0
    %2710 = vmatmul.mubr.f32.gmra.mrb[0].mxu0 %v629
    %v2711 = vpop.f32.mrb[0].mxu0
    %v2712 = vpop.f32.mrb[0].mxu0
    %2713 = vmatprep.mubr.f32.mxu0 0.0
    %2714 = vmatmul.mubr.f32.gmra.mrb[0].mxu0 %v621
    %v2715 = vpop.f32.mrb[0].mxu0
    %v2716 = vpop.f32.mrb[0].mxu0
    %2717 = vmatprep.mubr.f32.mxu0 0.0
    %2718 = vmatmul.mubr.f32.gmra.mrb[0].mxu0 %v621
    %v2719 = vpop.f32.mrb[0].mxu0
    %v2720 = vpop.f32.mrb[0].mxu0
    %2721 = vmatprep.mubr.f32.mxu0 0.0
    %2722 = vmatmul.mubr.f32.gmra.mrb[0].mxu0 %v621
    %v2723 = vpop.f32.mrb[0].mxu0
    %v2724 = vpop.f32.mrb[0].mxu0
    %2725 = vmatprep.mubr.f32.mxu0 0.0
    %2726 = vmatmul.mubr.f32.gmra.mrb[0].mxu0 %v631
    %v2727 = vpop.f32.mrb[0].mxu0
    %v2728 = vadd.f32 0.0, %v2727
    %v2729 = vpop.f32.mrb[0].mxu0
    %2730 = vmatprep.mubr.f32.mxu0 0.0
    %2731 = vmatmul.mubr.f32.gmra.mrb[0].mxu0 %v1670
    %v2732 = vpop.f32.mrb[0].mxu0
    %v2733 = vadd.f32 0.0, %v2732
    %v2734 = vpop.f32.mrb[0].mxu0
    %2735 = vmatprep.mubr.f32.mxu0 0.0
    %2736 = vmatmul.mubr.f32.gmra.mrb[0].mxu0 %v2633
    %v2737 = vpop.f32.mrb[0].mxu0
    %v2738 = vadd.f32 0.0, %v2737
    %v2739 = vpop.f32.mrb[0].mxu0
    %2740 = vdwg.mxu0
    %v2741 = vadd.f32 %v2620, %v2702
    %v2742 = vadd.f32 %v2621, %v2707
    %v2743 = vadd.f32 %v2622, %v2728
    %v2744 = vadd.f32 %v2623, %v2733
    %v2745 = vadd.f32 %v2624, %v2738
    %s2746 = scalar_lea.vmem [#allocation4], 640
    %v2747 = vld [vmem:[%s2746] sm:$0xff]
    %v2748 = vld [vmem:[%s2746 + $0x8] sm:$0xff]
    %v2749 = vld [vmem:[%s2746 + $0x10] sm:$0xff]
    %v2750 = vld [vmem:[%s2746 + $0x18] sm:$0xff]
    %v2751 = vrot.slane %v209, 4
    %v2752 = vsel %vm101, %v1788, %v2751
    %v2753 = vsel %vm232, %v2752, 0
    %2755 = vmatprep.subr.mxu0 0.0
    %2756 = vmatpush1.msra.mxu0 %v2747
    %2757 = vmatprep.subr.mxu0 0.0
    %2758 = vmatpush1.msra.mxu0 %v2748
    %2759 = vmatprep.subr.mxu0 0.0
    %2760 = vmatpush1.msra.mxu0 %v2749
    %2761 = vmatprep.subr.mxu0 0.0
    %2762 = vmatpush1.msra.mxu0 %v2750
    %2763 = vmatprep.subr.mxu0 0.0
    %2764 = vmatpush1.msra.mxu0 0.0
    %2765 = vmatprep.subr.mxu0 0.0
    %2766 = vmatpush1.msra.mxu0 0.0
    %2767 = vmatprep.subr.mxu0 0.0
    %2768 = vmatpush1.msra.mxu0 0.0
    %2769 = vmatprep.subr.mxu0 0.0
    %2770 = vmatpush1.msra.mxu0 0.0
    %2771 = vmatprep.subr.mxu0 0.0
    %2772 = vmatpush1.msra.mxu0 0.0
    %2773 = vmatprep.subr.mxu0 0.0
    %2774 = vmatpush1.msra.mxu0 0.0
    %2775 = vmatprep.subr.mxu0 0.0
    %2776 = vmatpush1.msra.mxu0 0.0
    %2777 = vmatprep.subr.mxu0 0.0
    %2778 = vmatpush1.msra.mxu0 0.0
    %2779 = vmatprep.subr.mxu0 0.0
    %2780 = vmatpush1.msra.mxu0 0.0
    %2781 = vmatprep.subr.mxu0 0.0
    %2782 = vmatpush1.msra.mxu0 0.0
    %2783 = vmatprep.subr.mxu0 0.0
    %2784 = vmatpush1.msra.mxu0 0.0
    %2785 = vmatprep.subr.mxu0 0.0
    %2786 = vmatpush1.msra.mxu0 0.0
    %2787 = vmatprep.subr.mxu0 0.0
    %2788 = vmatpush1.msra.mxu0 0.0
    %2789 = vmatprep.subr.mxu0 0.0
    %2790 = vmatpush1.msra.mxu0 0.0
    %2791 = vmatprep.subr.mxu0 0.0
    %2792 = vmatpush1.msra.mxu0 0.0
    %2793 = vmatprep.subr.mxu0 0.0
    %2794 = vmatpush1.msra.mxu0 0.0
    %2795 = vmatprep.subr.mxu0 0.0
    %2796 = vmatpush1.msra.mxu0 0.0
    %2797 = vmatprep.subr.mxu0 0.0
    %2798 = vmatpush1.msra.mxu0 0.0
    %2799 = vmatprep.subr.mxu0 0.0
    %2800 = vmatpush1.msra.mxu0 0.0
    %2801 = vmatprep.subr.mxu0 0.0
    %2802 = vmatpush1.msra.mxu0 0.0
    %2803 = vmatprep.subr.mxu0 0.0
    %2804 = vmatpush1.msra.mxu0 0.0
    %2805 = vmatprep.subr.mxu0 0.0
    %2806 = vmatpush1.msra.mxu0 0.0
    %2807 = vmatprep.subr.mxu0 0.0
    %2808 = vmatpush1.msra.mxu0 0.0
    %2809 = vmatprep.subr.mxu0 0.0
    %2810 = vmatpush1.msra.mxu0 0.0
    %2811 = vmatprep.subr.mxu0 0.0
    %2812 = vmatpush1.msra.mxu0 0.0
    %2813 = vmatprep.subr.mxu0 0.0
    %2814 = vmatpush1.msra.mxu0 0.0
    %2815 = vmatprep.subr.mxu0 0.0
    %2816 = vmatpush1.msra.mxu0 0.0
    %2817 = vmatprep.subr.mxu0 0.0
    %2818 = vmatpush1.msra.mxu0 0.0
    %2819 = vmatprep.mubr.f32.mxu0 0.0
    %2820 = vmatmul.mubr.f32.gmra.mrb[0].mxu0 %v764
    %v2821 = vpop.f32.mrb[0].mxu0
    %v2822 = vadd.f32 0.0, %v2821
    %v2823 = vpop.f32.mrb[0].mxu0
    %2824 = vmatprep.mubr.f32.mxu0 0.0
    %2825 = vmatmul.mubr.f32.gmra.mrb[0].mxu0 %v766
    %v2826 = vpop.f32.mrb[0].mxu0
    %v2827 = vadd.f32 0.0, %v2826
    %v2828 = vpop.f32.mrb[0].mxu0
    %2829 = vmatprep.mubr.f32.mxu0 0.0
    %2830 = vmatmul.mubr.f32.gmra.mrb[0].mxu0 %v768
    %v2831 = vpop.f32.mrb[0].mxu0
    %v2832 = vpop.f32.mrb[0].mxu0
    %2833 = vmatprep.mubr.f32.mxu0 0.0
    %2834 = vmatmul.mubr.f32.gmra.mrb[0].mxu0 %v760
    %v2835 = vpop.f32.mrb[0].mxu0
    %v2836 = vpop.f32.mrb[0].mxu0
    %2837 = vmatprep.mubr.f32.mxu0 0.0
    %2838 = vmatmul.mubr.f32.gmra.mrb[0].mxu0 %v760
    %v2839 = vpop.f32.mrb[0].mxu0
    %v2840 = vpop.f32.mrb[0].mxu0
    %2841 = vmatprep.mubr.f32.mxu0 0.0
    %2842 = vmatmul.mubr.f32.gmra.mrb[0].mxu0 %v760
    %v2843 = vpop.f32.mrb[0].mxu0
    %v2844 = vpop.f32.mrb[0].mxu0
    %2845 = vmatprep.mubr.f32.mxu0 0.0
    %2846 = vmatmul.mubr.f32.gmra.mrb[0].mxu0 %v770
    %v2847 = vpop.f32.mrb[0].mxu0
    %v2848 = vadd.f32 0.0, %v2847
    %v2849 = vpop.f32.mrb[0].mxu0
    %2850 = vmatprep.mubr.f32.mxu0 0.0
    %2851 = vmatmul.mubr.f32.gmra.mrb[0].mxu0 %v1790
    %v2852 = vpop.f32.mrb[0].mxu0
    %v2853 = vadd.f32 0.0, %v2852
    %v2854 = vpop.f32.mrb[0].mxu0
    %2855 = vmatprep.mubr.f32.mxu0 0.0
    %2856 = vmatmul.mubr.f32.gmra.mrb[0].mxu0 %v2753
    %v2857 = vpop.f32.mrb[0].mxu0
    %v2858 = vadd.f32 0.0, %v2857
    %v2859 = vpop.f32.mrb[0].mxu0
    %2860 = vdwg.mxu0
    %v2861 = vadd.f32 %v2741, %v2822
    %v2862 = vadd.f32 %v2742, %v2827
    %v2863 = vadd.f32 %v2743, %v2848
    %v2864 = vadd.f32 %v2744, %v2853
    %v2865 = vadd.f32 %v2745, %v2858
    %s2866 = scalar_lea.vmem [#allocation4], 672
    %v2867 = vld [vmem:[%s2866] sm:$0xff]
    %v2868 = vld [vmem:[%s2866 + $0x8] sm:$0xff]
    %v2869 = vld [vmem:[%s2866 + $0x10] sm:$0xff]
    %v2870 = vld [vmem:[%s2866 + $0x18] sm:$0xff]
    %v2871 = vrot.slane %v209, 5
    %v2872 = vsel %vm192, %v1908, %v2871
    %v2873 = vsel %vm232, %v2872, 0
    %2875 = vmatprep.subr.mxu0 0.0
    %2876 = vmatpush1.msra.mxu0 %v2867
    %2877 = vmatprep.subr.mxu0 0.0
    %2878 = vmatpush1.msra.mxu0 %v2868
    %2879 = vmatprep.subr.mxu0 0.0
    %2880 = vmatpush1.msra.mxu0 %v2869
    %2881 = vmatprep.subr.mxu0 0.0
    %2882 = vmatpush1.msra.mxu0 %v2870
    %2883 = vmatprep.subr.mxu0 0.0
    %2884 = vmatpush1.msra.mxu0 0.0
    %2885 = vmatprep.subr.mxu0 0.0
    %2886 = vmatpush1.msra.mxu0 0.0
    %2887 = vmatprep.subr.mxu0 0.0
    %2888 = vmatpush1.msra.mxu0 0.0
    %2889 = vmatprep.subr.mxu0 0.0
    %2890 = vmatpush1.msra.mxu0 0.0
    %2891 = vmatprep.subr.mxu0 0.0
    %2892 = vmatpush1.msra.mxu0 0.0
    %2893 = vmatprep.subr.mxu0 0.0
    %2894 = vmatpush1.msra.mxu0 0.0
    %2895 = vmatprep.subr.mxu0 0.0
    %2896 = vmatpush1.msra.mxu0 0.0
    %2897 = vmatprep.subr.mxu0 0.0
    %2898 = vmatpush1.msra.mxu0 0.0
    %2899 = vmatprep.subr.mxu0 0.0
    %2900 = vmatpush1.msra.mxu0 0.0
    %2901 = vmatprep.subr.mxu0 0.0
    %2902 = vmatpush1.msra.mxu0 0.0
    %2903 = vmatprep.subr.mxu0 0.0
    %2904 = vmatpush1.msra.mxu0 0.0
    %2905 = vmatprep.subr.mxu0 0.0
    %2906 = vmatpush1.msra.mxu0 0.0
    %2907 = vmatprep.subr.mxu0 0.0
    %2908 = vmatpush1.msra.mxu0 0.0
    %2909 = vmatprep.subr.mxu0 0.0
    %2910 = vmatpush1.msra.mxu0 0.0
    %2911 = vmatprep.subr.mxu0 0.0
    %2912 = vmatpush1.msra.mxu0 0.0
    %2913 = vmatprep.subr.mxu0 0.0
    %2914 = vmatpush1.msra.mxu0 0.0
    %2915 = vmatprep.subr.mxu0 0.0
    %2916 = vmatpush1.msra.mxu0 0.0
    %2917 = vmatprep.subr.mxu0 0.0
    %2918 = vmatpush1.msra.mxu0 0.0
    %2919 = vmatprep.subr.mxu0 0.0
    %2920 = vmatpush1.msra.mxu0 0.0
    %2921 = vmatprep.subr.mxu0 0.0
    %2922 = vmatpush1.msra.mxu0 0.0
    %2923 = vmatprep.subr.mxu0 0.0
    %2924 = vmatpush1.msra.mxu0 0.0
    %2925 = vmatprep.subr.mxu0 0.0
    %2926 = vmatpush1.msra.mxu0 0.0
    %2927 = vmatprep.subr.mxu0 0.0
    %2928 = vmatpush1.msra.mxu0 0.0
    %2929 = vmatprep.subr.mxu0 0.0
    %2930 = vmatpush1.msra.mxu0 0.0
    %2931 = vmatprep.subr.mxu0 0.0
    %2932 = vmatpush1.msra.mxu0 0.0
    %2933 = vmatprep.subr.mxu0 0.0
    %2934 = vmatpush1.msra.mxu0 0.0
    %2935 = vmatprep.subr.mxu0 0.0
    %2936 = vmatpush1.msra.mxu0 0.0
    %2937 = vmatprep.subr.mxu0 0.0
    %2938 = vmatpush1.msra.mxu0 0.0
    %2939 = vmatprep.mubr.f32.mxu0 0.0
    %2940 = vmatmul.mubr.f32.gmra.mrb[0].mxu0 %v903
    %v2941 = vpop.f32.mrb[0].mxu0
    %v2942 = vadd.f32 0.0, %v2941
    %v2943 = vpop.f32.mrb[0].mxu0
    %2944 = vmatprep.mubr.f32.mxu0 0.0
    %2945 = vmatmul.mubr.f32.gmra.mrb[0].mxu0 %v905
    %v2946 = vpop.f32.mrb[0].mxu0
    %v2947 = vadd.f32 0.0, %v2946
    %v2948 = vpop.f32.mrb[0].mxu0
    %2949 = vmatprep.mubr.f32.mxu0 0.0
    %2950 = vmatmul.mubr.f32.gmra.mrb[0].mxu0 %v907
    %v2951 = vpop.f32.mrb[0].mxu0
    %v2952 = vpop.f32.mrb[0].mxu0
    %2953 = vmatprep.mubr.f32.mxu0 0.0
    %2954 = vmatmul.mubr.f32.gmra.mrb[0].mxu0 %v899
    %v2955 = vpop.f32.mrb[0].mxu0
    %v2956 = vpop.f32.mrb[0].mxu0
    %2957 = vmatprep.mubr.f32.mxu0 0.0
    %2958 = vmatmul.mubr.f32.gmra.mrb[0].mxu0 %v899
    %v2959 = vpop.f32.mrb[0].mxu0
    %v2960 = vpop.f32.mrb[0].mxu0
    %2961 = vmatprep.mubr.f32.mxu0 0.0
    %2962 = vmatmul.mubr.f32.gmra.mrb[0].mxu0 %v899
    %v2963 = vpop.f32.mrb[0].mxu0
    %v2964 = vpop.f32.mrb[0].mxu0
    %2965 = vmatprep.mubr.f32.mxu0 0.0
    %2966 = vmatmul.mubr.f32.gmra.mrb[0].mxu0 %v909
    %v2967 = vpop.f32.mrb[0].mxu0
    %v2968 = vadd.f32 0.0, %v2967
    %v2969 = vpop.f32.mrb[0].mxu0
    %2970 = vmatprep.mubr.f32.mxu0 0.0
    %2971 = vmatmul.mubr.f32.gmra.mrb[0].mxu0 %v1910
    %v2972 = vpop.f32.mrb[0].mxu0
    %v2973 = vadd.f32 0.0, %v2972
    %v2974 = vpop.f32.mrb[0].mxu0
    %2975 = vmatprep.mubr.f32.mxu0 0.0
    %2976 = vmatmul.mubr.f32.gmra.mrb[0].mxu0 %v2873
    %v2977 = vpop.f32.mrb[0].mxu0
    %v2978 = vadd.f32 0.0, %v2977
    %v2979 = vpop.f32.mrb[0].mxu0
    %2980 = vdwg.mxu0
    %v2981 = vadd.f32 %v2861, %v2942
    %v2982 = vadd.f32 %v2862, %v2947
    %v2983 = vadd.f32 %v2863, %v2968
    %v2984 = vadd.f32 %v2864, %v2973
    %v2985 = vadd.f32 %v2865, %v2978
    %s2986 = scalar_lea.vmem [#allocation4], 704
    %v2987 = vld [vmem:[%s2986] sm:$0xff]
    %v2988 = vld [vmem:[%s2986 + $0x8] sm:$0xff]
    %v2989 = vld [vmem:[%s2986 + $0x10] sm:$0xff]
    %v2990 = vld [vmem:[%s2986 + $0x18] sm:$0xff]
    %v2991 = vrot.slane %v209, 6
    %v2992 = vsel %vm1027, %v2028, %v2991
    %v2993 = vsel %vm232, %v2992, 0
    %2995 = vmatprep.subr.mxu0 0.0
    %2996 = vmatpush1.msra.mxu0 %v2987
    %2997 = vmatprep.subr.mxu0 0.0
    %2998 = vmatpush1.msra.mxu0 %v2988
    %2999 = vmatprep.subr.mxu0 0.0
    %3000 = vmatpush1.msra.mxu0 %v2989
    %3001 = vmatprep.subr.mxu0 0.0
    %3002 = vmatpush1.msra.mxu0 %v2990
    %3003 = vmatprep.subr.mxu0 0.0
    %3004 = vmatpush1.msra.mxu0 0.0
    %3005 = vmatprep.subr.mxu0 0.0
    %3006 = vmatpush1.msra.mxu0 0.0
    %3007 = vmatprep.subr.mxu0 0.0
    %3008 = vmatpush1.msra.mxu0 0.0
    %3009 = vmatprep.subr.mxu0 0.0
    %3010 = vmatpush1.msra.mxu0 0.0
    %3011 = vmatprep.subr.mxu0 0.0
    %3012 = vmatpush1.msra.mxu0 0.0
    %3013 = vmatprep.subr.mxu0 0.0
    %3014 = vmatpush1.msra.mxu0 0.0
    %3015 = vmatprep.subr.mxu0 0.0
    %3016 = vmatpush1.msra.mxu0 0.0
    %3017 = vmatprep.subr.mxu0 0.0
    %3018 = vmatpush1.msra.mxu0 0.0
    %3019 = vmatprep.subr.mxu0 0.0
    %3020 = vmatpush1.msra.mxu0 0.0
    %3021 = vmatprep.subr.mxu0 0.0
    %3022 = vmatpush1.msra.mxu0 0.0
    %3023 = vmatprep.subr.mxu0 0.0
    %3024 = vmatpush1.msra.mxu0 0.0
    %3025 = vmatprep.subr.mxu0 0.0
    %3026 = vmatpush1.msra.mxu0 0.0
    %3027 = vmatprep.subr.mxu0 0.0
    %3028 = vmatpush1.msra.mxu0 0.0
    %3029 = vmatprep.subr.mxu0 0.0
    %3030 = vmatpush1.msra.mxu0 0.0
    %3031 = vmatprep.subr.mxu0 0.0
    %3032 = vmatpush1.msra.mxu0 0.0
    %3033 = vmatprep.subr.mxu0 0.0
    %3034 = vmatpush1.msra.mxu0 0.0
    %3035 = vmatprep.subr.mxu0 0.0
    %3036 = vmatpush1.msra.mxu0 0.0
    %3037 = vmatprep.subr.mxu0 0.0
    %3038 = vmatpush1.msra.mxu0 0.0
    %3039 = vmatprep.subr.mxu0 0.0
    %3040 = vmatpush1.msra.mxu0 0.0
    %3041 = vmatprep.subr.mxu0 0.0
    %3042 = vmatpush1.msra.mxu0 0.0
    %3043 = vmatprep.subr.mxu0 0.0
    %3044 = vmatpush1.msra.mxu0 0.0
    %3045 = vmatprep.subr.mxu0 0.0
    %3046 = vmatpush1.msra.mxu0 0.0
    %3047 = vmatprep.subr.mxu0 0.0
    %3048 = vmatpush1.msra.mxu0 0.0
    %3049 = vmatprep.subr.mxu0 0.0
    %3050 = vmatpush1.msra.mxu0 0.0
    %3051 = vmatprep.subr.mxu0 0.0
    %3052 = vmatpush1.msra.mxu0 0.0
    %3053 = vmatprep.subr.mxu0 0.0
    %3054 = vmatpush1.msra.mxu0 0.0
    %3055 = vmatprep.subr.mxu0 0.0
    %3056 = vmatpush1.msra.mxu0 0.0
    %3057 = vmatprep.subr.mxu0 0.0
    %3058 = vmatpush1.msra.mxu0 0.0
    %3059 = vmatprep.mubr.f32.mxu0 0.0
    %3060 = vmatmul.mubr.f32.gmra.mrb[0].mxu0 %v1043
    %v3061 = vpop.f32.mrb[0].mxu0
    %v3062 = vadd.f32 0.0, %v3061
    %v3063 = vpop.f32.mrb[0].mxu0
    %3064 = vmatprep.mubr.f32.mxu0 0.0
    %3065 = vmatmul.mubr.f32.gmra.mrb[0].mxu0 %v1045
    %v3066 = vpop.f32.mrb[0].mxu0
    %v3067 = vadd.f32 0.0, %v3066
    %v3068 = vpop.f32.mrb[0].mxu0
    %3069 = vmatprep.mubr.f32.mxu0 0.0
    %3070 = vmatmul.mubr.f32.gmra.mrb[0].mxu0 %v1047
    %v3071 = vpop.f32.mrb[0].mxu0
    %v3072 = vpop.f32.mrb[0].mxu0
    %3073 = vmatprep.mubr.f32.mxu0 0.0
    %3074 = vmatmul.mubr.f32.gmra.mrb[0].mxu0 %v1039
    %v3075 = vpop.f32.mrb[0].mxu0
    %v3076 = vpop.f32.mrb[0].mxu0
    %3077 = vmatprep.mubr.f32.mxu0 0.0
    %3078 = vmatmul.mubr.f32.gmra.mrb[0].mxu0 %v1039
    %v3079 = vpop.f32.mrb[0].mxu0
    %v3080 = vpop.f32.mrb[0].mxu0
    %3081 = vmatprep.mubr.f32.mxu0 0.0
    %3082 = vmatmul.mubr.f32.gmra.mrb[0].mxu0 %v1039
    %v3083 = vpop.f32.mrb[0].mxu0
    %v3084 = vpop.f32.mrb[0].mxu0
    %3085 = vmatprep.mubr.f32.mxu0 0.0
    %3086 = vmatmul.mubr.f32.gmra.mrb[0].mxu0 %v1049
    %v3087 = vpop.f32.mrb[0].mxu0
    %v3088 = vadd.f32 0.0, %v3087
    %v3089 = vpop.f32.mrb[0].mxu0
    %3090 = vmatprep.mubr.f32.mxu0 0.0
    %3091 = vmatmul.mubr.f32.gmra.mrb[0].mxu0 %v2030
    %v3092 = vpop.f32.mrb[0].mxu0
    %v3093 = vadd.f32 0.0, %v3092
    %v3094 = vpop.f32.mrb[0].mxu0
    %3095 = vmatprep.mubr.f32.mxu0 0.0
    %3096 = vmatmul.mubr.f32.gmra.mrb[0].mxu0 %v2993
    %v3097 = vpop.f32.mrb[0].mxu0
    %v3098 = vadd.f32 0.0, %v3097
    %v3099 = vpop.f32.mrb[0].mxu0
    %3100 = vdwg.mxu0
    %v3101 = vadd.f32 %v2981, %v3062
    %v3102 = vadd.f32 %v2982, %v3067
    %v3103 = vadd.f32 %v2983, %v3088
    %v3104 = vadd.f32 %v2984, %v3093
    %v3105 = vadd.f32 %v2985, %v3098
    %s3106 = scalar_lea.vmem [#allocation4], 736
    %v3107 = vld [vmem:[%s3106] sm:$0xff]
    %v3108 = vld [vmem:[%s3106 + $0x8] sm:$0xff]
    %v3109 = vld [vmem:[%s3106 + $0x10] sm:$0xff]
    %v3110 = vld [vmem:[%s3106 + $0x18] sm:$0xff]
    %v3111 = vrot.slane %v209, 7
    %v3112 = vsel %vm200, %v2148, %v3111
    %v3113 = vsel %vm232, %v3112, 0
    %3115 = vmatprep.subr.mxu0 0.0
    %3116 = vmatpush1.msra.mxu0 %v3107
    %3117 = vmatprep.subr.mxu0 0.0
    %3118 = vmatpush1.msra.mxu0 %v3108
    %3119 = vmatprep.subr.mxu0 0.0
    %3120 = vmatpush1.msra.mxu0 %v3109
    %3121 = vmatprep.subr.mxu0 0.0
    %3122 = vmatpush1.msra.mxu0 %v3110
    %3123 = vmatprep.subr.mxu0 0.0
    %3124 = vmatpush1.msra.mxu0 0.0
    %3125 = vmatprep.subr.mxu0 0.0
    %3126 = vmatpush1.msra.mxu0 0.0
    %3127 = vmatprep.subr.mxu0 0.0
    %3128 = vmatpush1.msra.mxu0 0.0
    %3129 = vmatprep.subr.mxu0 0.0
    %3130 = vmatpush1.msra.mxu0 0.0
    %3131 = vmatprep.subr.mxu0 0.0
    %3132 = vmatpush1.msra.mxu0 0.0
    %3133 = vmatprep.subr.mxu0 0.0
    %3134 = vmatpush1.msra.mxu0 0.0
    %3135 = vmatprep.subr.mxu0 0.0
    %3136 = vmatpush1.msra.mxu0 0.0
    %3137 = vmatprep.subr.mxu0 0.0
    %3138 = vmatpush1.msra.mxu0 0.0
    %3139 = vmatprep.subr.mxu0 0.0
    %3140 = vmatpush1.msra.mxu0 0.0
    %3141 = vmatprep.subr.mxu0 0.0
    %3142 = vmatpush1.msra.mxu0 0.0
    %3143 = vmatprep.subr.mxu0 0.0
    %3144 = vmatpush1.msra.mxu0 0.0
    %3145 = vmatprep.subr.mxu0 0.0
    %3146 = vmatpush1.msra.mxu0 0.0
    %3147 = vmatprep.subr.mxu0 0.0
    %3148 = vmatpush1.msra.mxu0 0.0
    %3149 = vmatprep.subr.mxu0 0.0
    %3150 = vmatpush1.msra.mxu0 0.0
    %3151 = vmatprep.subr.mxu0 0.0
    %3152 = vmatpush1.msra.mxu0 0.0
    %3153 = vmatprep.subr.mxu0 0.0
    %3154 = vmatpush1.msra.mxu0 0.0
    %3155 = vmatprep.subr.mxu0 0.0
    %3156 = vmatpush1.msra.mxu0 0.0
    %3157 = vmatprep.subr.mxu0 0.0
    %3158 = vmatpush1.msra.mxu0 0.0
    %3159 = vmatprep.subr.mxu0 0.0
    %3160 = vmatpush1.msra.mxu0 0.0
    %3161 = vmatprep.subr.mxu0 0.0
    %3162 = vmatpush1.msra.mxu0 0.0
    %3163 = vmatprep.subr.mxu0 0.0
    %3164 = vmatpush1.msra.mxu0 0.0
    %3165 = vmatprep.subr.mxu0 0.0
    %3166 = vmatpush1.msra.mxu0 0.0
    %3167 = vmatprep.subr.mxu0 0.0
    %3168 = vmatpush1.msra.mxu0 0.0
    %3169 = vmatprep.subr.mxu0 0.0
    %3170 = vmatpush1.msra.mxu0 0.0
    %3171 = vmatprep.subr.mxu0 0.0
    %3172 = vmatpush1.msra.mxu0 0.0
    %3173 = vmatprep.subr.mxu0 0.0
    %3174 = vmatpush1.msra.mxu0 0.0
    %3175 = vmatprep.subr.mxu0 0.0
    %3176 = vmatpush1.msra.mxu0 0.0
    %3177 = vmatprep.subr.mxu0 0.0
    %3178 = vmatpush1.msra.mxu0 0.0
    %3179 = vmatprep.mubr.f32.mxu0 0.0
    %3180 = vmatmul.mubr.f32.gmra.mrb[0].mxu0 %v1182
    %v3181 = vpop.f32.mrb[0].mxu0
    %v3182 = vadd.f32 0.0, %v3181
    %v3183 = vpop.f32.mrb[0].mxu0
    %3184 = vmatprep.mubr.f32.mxu0 0.0
    %3185 = vmatmul.mubr.f32.gmra.mrb[0].mxu0 %v1184
    %v3186 = vpop.f32.mrb[0].mxu0
    %v3187 = vadd.f32 0.0, %v3186
    %v3188 = vpop.f32.mrb[0].mxu0
    %3189 = vmatprep.mubr.f32.mxu0 0.0
    %3190 = vmatmul.mubr.f32.gmra.mrb[0].mxu0 %v1186
    %v3191 = vpop.f32.mrb[0].mxu0
    %v3192 = vpop.f32.mrb[0].mxu0
    %3193 = vmatprep.mubr.f32.mxu0 0.0
    %3194 = vmatmul.mubr.f32.gmra.mrb[0].mxu0 %v1178
    %v3195 = vpop.f32.mrb[0].mxu0
    %v3196 = vpop.f32.mrb[0].mxu0
    %3197 = vmatprep.mubr.f32.mxu0 0.0
    %3198 = vmatmul.mubr.f32.gmra.mrb[0].mxu0 %v1178
    %v3199 = vpop.f32.mrb[0].mxu0
    %v3200 = vpop.f32.mrb[0].mxu0
    %3201 = vmatprep.mubr.f32.mxu0 0.0
    %3202 = vmatmul.mubr.f32.gmra.mrb[0].mxu0 %v1178
    %v3203 = vpop.f32.mrb[0].mxu0
    %v3204 = vpop.f32.mrb[0].mxu0
    %3205 = vmatprep.mubr.f32.mxu0 0.0
    %3206 = vmatmul.mubr.f32.gmra.mrb[0].mxu0 %v1188
    %v3207 = vpop.f32.mrb[0].mxu0
    %v3208 = vadd.f32 0.0, %v3207
    %v3209 = vpop.f32.mrb[0].mxu0
    %3210 = vmatprep.mubr.f32.mxu0 0.0
    %3211 = vmatmul.mubr.f32.gmra.mrb[0].mxu0 %v2150
    %v3212 = vpop.f32.mrb[0].mxu0
    %v3213 = vadd.f32 0.0, %v3212
    %v3214 = vpop.f32.mrb[0].mxu0
    %3215 = vmatprep.mubr.f32.mxu0 0.0
    %3216 = vmatmul.mubr.f32.gmra.mrb[0].mxu0 %v3113
    %v3217 = vpop.f32.mrb[0].mxu0
    %v3218 = vadd.f32 0.0, %v3217
    %v3219 = vpop.f32.mrb[0].mxu0
    %3220 = vdwg.mxu0
    %v3221 = vadd.f32 %v3101, %v3182
    %v3222 = vadd.f32 %v3102, %v3187
    %v3223 = vadd.f32 %v3103, %v3208
    %v3224 = vadd.f32 %v3104, %v3213
    %v3225 = vadd.f32 %v3105, %v3218
    %s3226 = scalar_lea.vmem [#allocation4], 768
    %v3227 = vld [vmem:[%s3226] sm:$0xff]
    %v3228 = vld [vmem:[%s3226 + $0x8] sm:$0xff]
    %v3229 = vld [vmem:[%s3226 + $0x10] sm:$0xff]
    %v3230 = vld [vmem:[%s3226 + $0x18] sm:$0xff]
    %v3231 = vsel %vm232, %v209, 0
    %3233 = vmatprep.subr.mxu0 0.0
    %3234 = vmatpush1.msra.mxu0 %v3227
    %3235 = vmatprep.subr.mxu0 0.0
    %3236 = vmatpush1.msra.mxu0 %v3228
    %3237 = vmatprep.subr.mxu0 0.0
    %3238 = vmatpush1.msra.mxu0 %v3229
    %3239 = vmatprep.subr.mxu0 0.0
    %3240 = vmatpush1.msra.mxu0 %v3230
    %3241 = vmatprep.subr.mxu0 0.0
    %3242 = vmatpush1.msra.mxu0 0.0
    %3243 = vmatprep.subr.mxu0 0.0
    %3244 = vmatpush1.msra.mxu0 0.0
    %3245 = vmatprep.subr.mxu0 0.0
    %3246 = vmatpush1.msra.mxu0 0.0
    %3247 = vmatprep.subr.mxu0 0.0
    %3248 = vmatpush1.msra.mxu0 0.0
    %3249 = vmatprep.subr.mxu0 0.0
    %3250 = vmatpush1.msra.mxu0 0.0
    %3251 = vmatprep.subr.mxu0 0.0
    %3252 = vmatpush1.msra.mxu0 0.0
    %3253 = vmatprep.subr.mxu0 0.0
    %3254 = vmatpush1.msra.mxu0 0.0
    %3255 = vmatprep.subr.mxu0 0.0
    %3256 = vmatpush1.msra.mxu0 0.0
    %3257 = vmatprep.subr.mxu0 0.0
    %3258 = vmatpush1.msra.mxu0 0.0
    %3259 = vmatprep.subr.mxu0 0.0
    %3260 = vmatpush1.msra.mxu0 0.0
    %3261 = vmatprep.subr.mxu0 0.0
    %3262 = vmatpush1.msra.mxu0 0.0
    %3263 = vmatprep.subr.mxu0 0.0
    %3264 = vmatpush1.msra.mxu0 0.0
    %3265 = vmatprep.subr.mxu0 0.0
    %3266 = vmatpush1.msra.mxu0 0.0
    %3267 = vmatprep.subr.mxu0 0.0
    %3268 = vmatpush1.msra.mxu0 0.0
    %3269 = vmatprep.subr.mxu0 0.0
    %3270 = vmatpush1.msra.mxu0 0.0
    %3271 = vmatprep.subr.mxu0 0.0
    %3272 = vmatpush1.msra.mxu0 0.0
    %3273 = vmatprep.subr.mxu0 0.0
    %3274 = vmatpush1.msra.mxu0 0.0
    %3275 = vmatprep.subr.mxu0 0.0
    %3276 = vmatpush1.msra.mxu0 0.0
    %3277 = vmatprep.subr.mxu0 0.0
    %3278 = vmatpush1.msra.mxu0 0.0
    %3279 = vmatprep.subr.mxu0 0.0
    %3280 = vmatpush1.msra.mxu0 0.0
    %3281 = vmatprep.subr.mxu0 0.0
    %3282 = vmatpush1.msra.mxu0 0.0
    %3283 = vmatprep.subr.mxu0 0.0
    %3284 = vmatpush1.msra.mxu0 0.0
    %3285 = vmatprep.subr.mxu0 0.0
    %3286 = vmatpush1.msra.mxu0 0.0
    %3287 = vmatprep.subr.mxu0 0.0
    %3288 = vmatpush1.msra.mxu0 0.0
    %3289 = vmatprep.subr.mxu0 0.0
    %3290 = vmatpush1.msra.mxu0 0.0
    %3291 = vmatprep.subr.mxu0 0.0
    %3292 = vmatpush1.msra.mxu0 0.0
    %3293 = vmatprep.subr.mxu0 0.0
    %3294 = vmatpush1.msra.mxu0 0.0
    %3295 = vmatprep.subr.mxu0 0.0
    %3296 = vmatpush1.msra.mxu0 0.0
    %3297 = vmatprep.mubr.f32.mxu0 0.0
    %3298 = vmatmul.mubr.f32.gmra.mrb[0].mxu0 %v355
    %v3299 = vpop.f32.mrb[0].mxu0
    %v3300 = vadd.f32 0.0, %v3299
    %v3301 = vpop.f32.mrb[0].mxu0
    %3302 = vmatprep.mubr.f32.mxu0 0.0
    %3303 = vmatmul.mubr.f32.gmra.mrb[0].mxu0 %v357
    %v3304 = vpop.f32.mrb[0].mxu0
    %v3305 = vadd.f32 0.0, %v3304
    %v3306 = vpop.f32.mrb[0].mxu0
    %3307 = vmatprep.mubr.f32.mxu0 0.0
    %3308 = vmatmul.mubr.f32.gmra.mrb[0].mxu0 %v351
    %v3309 = vpop.f32.mrb[0].mxu0
    %v3310 = vpop.f32.mrb[0].mxu0
    %3311 = vmatprep.mubr.f32.mxu0 0.0
    %3312 = vmatmul.mubr.f32.gmra.mrb[0].mxu0 %v351
    %v3313 = vpop.f32.mrb[0].mxu0
    %v3314 = vpop.f32.mrb[0].mxu0
    %3315 = vmatprep.mubr.f32.mxu0 0.0
    %3316 = vmatmul.mubr.f32.gmra.mrb[0].mxu0 %v351
    %v3317 = vpop.f32.mrb[0].mxu0
    %v3318 = vpop.f32.mrb[0].mxu0
    %3319 = vmatprep.mubr.f32.mxu0 0.0
    %3320 = vmatmul.mubr.f32.gmra.mrb[0].mxu0 %v351
    %v3321 = vpop.f32.mrb[0].mxu0
    %v3322 = vpop.f32.mrb[0].mxu0
    %3323 = vmatprep.mubr.f32.mxu0 0.0
    %3324 = vmatmul.mubr.f32.gmra.mrb[0].mxu0 %v1306
    %v3325 = vpop.f32.mrb[0].mxu0
    %v3326 = vadd.f32 0.0, %v3325
    %v3327 = vpop.f32.mrb[0].mxu0
    %3328 = vmatprep.mubr.f32.mxu0 0.0
    %3329 = vmatmul.mubr.f32.gmra.mrb[0].mxu0 %v2268
    %v3330 = vpop.f32.mrb[0].mxu0
    %v3331 = vadd.f32 0.0, %v3330
    %v3332 = vpop.f32.mrb[0].mxu0
    %3333 = vmatprep.mubr.f32.mxu0 0.0
    %3334 = vmatmul.mubr.f32.gmra.mrb[0].mxu0 %v3231
    %v3335 = vpop.f32.mrb[0].mxu0
    %v3336 = vadd.f32 0.0, %v3335
    %v3337 = vpop.f32.mrb[0].mxu0
    %3338 = vdwg.mxu0
    %v3339 = vadd.f32 %v3221, %v3300
    %v3340 = vadd.f32 %v3222, %v3305
    %v3341 = vadd.f32 %v3223, %v3326
    %v3342 = vadd.f32 %v3224, %v3331
    %v3343 = vadd.f32 %v3225, %v3336
    %s3344 = scalar_lea.vmem [#allocation4], 800
    %v3345 = vld [vmem:[%s3344] sm:$0xff]
    %v3346 = vld [vmem:[%s3344 + $0x8] sm:$0xff]
    %v3347 = vld [vmem:[%s3344 + $0x10] sm:$0xff]
    %v3348 = vld [vmem:[%s3344 + $0x18] sm:$0xff]
    %v3349 = vrot.slane %v209, 1
    %v3350 = vsel %vm222, %v2386, %v3349
    %v3351 = vsel %vm232, %v3350, 0
    %v3353 = vsel %vm232, %v3349, 0
    %3355 = vmatprep.subr.mxu0 0.0
    %3356 = vmatpush1.msra.mxu0 %v3345
    %3357 = vmatprep.subr.mxu0 0.0
    %3358 = vmatpush1.msra.mxu0 %v3346
    %3359 = vmatprep.subr.mxu0 0.0
    %3360 = vmatpush1.msra.mxu0 %v3347
    %3361 = vmatprep.subr.mxu0 0.0
    %3362 = vmatpush1.msra.mxu0 %v3348
    %3363 = vmatprep.subr.mxu0 0.0
    %3364 = vmatpush1.msra.mxu0 0.0
    %3365 = vmatprep.subr.mxu0 0.0
    %3366 = vmatpush1.msra.mxu0 0.0
    %3367 = vmatprep.subr.mxu0 0.0
    %3368 = vmatpush1.msra.mxu0 0.0
    %3369 = vmatprep.subr.mxu0 0.0
    %3370 = vmatpush1.msra.mxu0 0.0
    %3371 = vmatprep.subr.mxu0 0.0
    %3372 = vmatpush1.msra.mxu0 0.0
    %3373 = vmatprep.subr.mxu0 0.0
    %3374 = vmatpush1.msra.mxu0 0.0
    %3375 = vmatprep.subr.mxu0 0.0
    %3376 = vmatpush1.msra.mxu0 0.0
    %3377 = vmatprep.subr.mxu0 0.0
    %3378 = vmatpush1.msra.mxu0 0.0
    %3379 = vmatprep.subr.mxu0 0.0
    %3380 = vmatpush1.msra.mxu0 0.0
    %3381 = vmatprep.subr.mxu0 0.0
    %3382 = vmatpush1.msra.mxu0 0.0
    %3383 = vmatprep.subr.mxu0 0.0
    %3384 = vmatpush1.msra.mxu0 0.0
    %3385 = vmatprep.subr.mxu0 0.0
    %3386 = vmatpush1.msra.mxu0 0.0
    %3387 = vmatprep.subr.mxu0 0.0
    %3388 = vmatpush1.msra.mxu0 0.0
    %3389 = vmatprep.subr.mxu0 0.0
    %3390 = vmatpush1.msra.mxu0 0.0
    %3391 = vmatprep.subr.mxu0 0.0
    %3392 = vmatpush1.msra.mxu0 0.0
    %3393 = vmatprep.subr.mxu0 0.0
    %3394 = vmatpush1.msra.mxu0 0.0
    %3395 = vmatprep.subr.mxu0 0.0
    %3396 = vmatpush1.msra.mxu0 0.0
    %3397 = vmatprep.subr.mxu0 0.0
    %3398 = vmatpush1.msra.mxu0 0.0
    %3399 = vmatprep.subr.mxu0 0.0
    %3400 = vmatpush1.msra.mxu0 0.0
    %3401 = vmatprep.subr.mxu0 0.0
    %3402 = vmatpush1.msra.mxu0 0.0
    %3403 = vmatprep.subr.mxu0 0.0
    %3404 = vmatpush1.msra.mxu0 0.0
    %3405 = vmatprep.subr.mxu0 0.0
    %3406 = vmatpush1.msra.mxu0 0.0
    %3407 = vmatprep.subr.mxu0 0.0
    %3408 = vmatpush1.msra.mxu0 0.0
    %3409 = vmatprep.subr.mxu0 0.0
    %3410 = vmatpush1.msra.mxu0 0.0
    %3411 = vmatprep.subr.mxu0 0.0
    %3412 = vmatpush1.msra.mxu0 0.0
    %3413 = vmatprep.subr.mxu0 0.0
    %3414 = vmatpush1.msra.mxu0 0.0
    %3415 = vmatprep.subr.mxu0 0.0
    %3416 = vmatpush1.msra.mxu0 0.0
    %3417 = vmatprep.subr.mxu0 0.0
    %3418 = vmatpush1.msra.mxu0 0.0
    %3419 = vmatprep.mubr.f32.mxu0 0.0
    %3420 = vmatmul.mubr.f32.gmra.mrb[0].mxu0 %v239
    %v3421 = vpop.f32.mrb[0].mxu0
    %v3422 = vadd.f32 0.0, %v3421
    %v3423 = vpop.f32.mrb[0].mxu0
    %3424 = vmatprep.mubr.f32.mxu0 0.0
    %3425 = vmatmul.mubr.f32.gmra.mrb[0].mxu0 %v241
    %v3426 = vpop.f32.mrb[0].mxu0
    %v3427 = vadd.f32 0.0, %v3426
    %v3428 = vpop.f32.mrb[0].mxu0
    %3429 = vmatprep.mubr.f32.mxu0 0.0
    %3430 = vmatmul.mubr.f32.gmra.mrb[0].mxu0 %v233
    %v3431 = vpop.f32.mrb[0].mxu0
    %v3432 = vpop.f32.mrb[0].mxu0
    %3433 = vmatprep.mubr.f32.mxu0 0.0
    %3434 = vmatmul.mubr.f32.gmra.mrb[0].mxu0 %v233
    %v3435 = vpop.f32.mrb[0].mxu0
    %v3436 = vpop.f32.mrb[0].mxu0
    %3437 = vmatprep.mubr.f32.mxu0 0.0
    %3438 = vmatmul.mubr.f32.gmra.mrb[0].mxu0 %v233
    %v3439 = vpop.f32.mrb[0].mxu0
    %v3440 = vpop.f32.mrb[0].mxu0
    %3441 = vmatprep.mubr.f32.mxu0 0.0
    %3442 = vmatmul.mubr.f32.gmra.mrb[0].mxu0 %v1426
    %v3443 = vpop.f32.mrb[0].mxu0
    %v3444 = vpop.f32.mrb[0].mxu0
    %3445 = vmatprep.mubr.f32.mxu0 0.0
    %3446 = vmatmul.mubr.f32.gmra.mrb[0].mxu0 %v2388
    %v3447 = vpop.f32.mrb[0].mxu0
    %v3448 = vadd.f32 0.0, %v3447
    %v3449 = vpop.f32.mrb[0].mxu0
    %3450 = vmatprep.mubr.f32.mxu0 0.0
    %3451 = vmatmul.mubr.f32.gmra.mrb[0].mxu0 %v3351
    %v3452 = vpop.f32.mrb[0].mxu0
    %v3453 = vadd.f32 0.0, %v3452
    %v3454 = vpop.f32.mrb[0].mxu0
    %3455 = vmatprep.mubr.f32.mxu0 0.0
    %3456 = vmatmul.mubr.f32.gmra.mrb[0].mxu0 %v3353
    %v3457 = vpop.f32.mrb[0].mxu0
    %v3458 = vadd.f32 0.0, %v3457
    %v3459 = vpop.f32.mrb[0].mxu0
    %3460 = vdwg.mxu0
    %v3461 = vadd.f32 %v3339, %v3422
    %v3462 = vadd.f32 %v3340, %v3427
    %v3463 = vadd.f32 %v3341, %v3448
    %v3464 = vadd.f32 %v3342, %v3453
    %v3465 = vadd.f32 %v3343, %v3458
    %s3466 = scalar_lea.vmem [#allocation4], 832
    %v3467 = vld [vmem:[%s3466] sm:$0xff]
    %v3468 = vld [vmem:[%s3466 + $0x8] sm:$0xff]
    %v3469 = vld [vmem:[%s3466 + $0x10] sm:$0xff]
    %v3470 = vld [vmem:[%s3466 + $0x18] sm:$0xff]
    %v3471 = vrot.slane %v209, 2
    %v3472 = vsel %vm470, %v2508, %v3471
    %v3473 = vsel %vm232, %v3472, 0
    %v3475 = vsel %vm232, %v3471, 0
    %3477 = vmatprep.subr.mxu0 0.0
    %3478 = vmatpush1.msra.mxu0 %v3467
    %3479 = vmatprep.subr.mxu0 0.0
    %3480 = vmatpush1.msra.mxu0 %v3468
    %3481 = vmatprep.subr.mxu0 0.0
    %3482 = vmatpush1.msra.mxu0 %v3469
    %3483 = vmatprep.subr.mxu0 0.0
    %3484 = vmatpush1.msra.mxu0 %v3470
    %3485 = vmatprep.subr.mxu0 0.0
    %3486 = vmatpush1.msra.mxu0 0.0
    %3487 = vmatprep.subr.mxu0 0.0
    %3488 = vmatpush1.msra.mxu0 0.0
    %3489 = vmatprep.subr.mxu0 0.0
    %3490 = vmatpush1.msra.mxu0 0.0
    %3491 = vmatprep.subr.mxu0 0.0
    %3492 = vmatpush1.msra.mxu0 0.0
    %3493 = vmatprep.subr.mxu0 0.0
    %3494 = vmatpush1.msra.mxu0 0.0
    %3495 = vmatprep.subr.mxu0 0.0
    %3496 = vmatpush1.msra.mxu0 0.0
    %3497 = vmatprep.subr.mxu0 0.0
    %3498 = vmatpush1.msra.mxu0 0.0
    %3499 = vmatprep.subr.mxu0 0.0
    %3500 = vmatpush1.msra.mxu0 0.0
    %3501 = vmatprep.subr.mxu0 0.0
    %3502 = vmatpush1.msra.mxu0 0.0
    %3503 = vmatprep.subr.mxu0 0.0
    %3504 = vmatpush1.msra.mxu0 0.0
    %3505 = vmatprep.subr.mxu0 0.0
    %3506 = vmatpush1.msra.mxu0 0.0
    %3507 = vmatprep.subr.mxu0 0.0
    %3508 = vmatpush1.msra.mxu0 0.0
    %3509 = vmatprep.subr.mxu0 0.0
    %3510 = vmatpush1.msra.mxu0 0.0
    %3511 = vmatprep.subr.mxu0 0.0
    %3512 = vmatpush1.msra.mxu0 0.0
    %3513 = vmatprep.subr.mxu0 0.0
    %3514 = vmatpush1.msra.mxu0 0.0
    %3515 = vmatprep.subr.mxu0 0.0
    %3516 = vmatpush1.msra.mxu0 0.0
    %3517 = vmatprep.subr.mxu0 0.0
    %3518 = vmatpush1.msra.mxu0 0.0
    %3519 = vmatprep.subr.mxu0 0.0
    %3520 = vmatpush1.msra.mxu0 0.0
    %3521 = vmatprep.subr.mxu0 0.0
    %3522 = vmatpush1.msra.mxu0 0.0
    %3523 = vmatprep.subr.mxu0 0.0
    %3524 = vmatpush1.msra.mxu0 0.0
    %3525 = vmatprep.subr.mxu0 0.0
    %3526 = vmatpush1.msra.mxu0 0.0
    %3527 = vmatprep.subr.mxu0 0.0
    %3528 = vmatpush1.msra.mxu0 0.0
    %3529 = vmatprep.subr.mxu0 0.0
    %3530 = vmatpush1.msra.mxu0 0.0
    %3531 = vmatprep.subr.mxu0 0.0
    %3532 = vmatpush1.msra.mxu0 0.0
    %3533 = vmatprep.subr.mxu0 0.0
    %3534 = vmatpush1.msra.mxu0 0.0
    %3535 = vmatprep.subr.mxu0 0.0
    %3536 = vmatpush1.msra.mxu0 0.0
    %3537 = vmatprep.subr.mxu0 0.0
    %3538 = vmatpush1.msra.mxu0 0.0
    %3539 = vmatprep.subr.mxu0 0.0
    %3540 = vmatpush1.msra.mxu0 0.0
    %3541 = vmatprep.mubr.f32.mxu0 0.0
    %3542 = vmatmul.mubr.f32.gmra.mrb[0].mxu0 %v486
    %v3543 = vpop.f32.mrb[0].mxu0
    %v3544 = vadd.f32 0.0, %v3543
    %v3545 = vpop.f32.mrb[0].mxu0
    %3546 = vmatprep.mubr.f32.mxu0 0.0
    %3547 = vmatmul.mubr.f32.gmra.mrb[0].mxu0 %v488
    %v3548 = vpop.f32.mrb[0].mxu0
    %v3549 = vadd.f32 0.0, %v3548
    %v3550 = vpop.f32.mrb[0].mxu0
    %3551 = vmatprep.mubr.f32.mxu0 0.0
    %3552 = vmatmul.mubr.f32.gmra.mrb[0].mxu0 %v480
    %v3553 = vpop.f32.mrb[0].mxu0
    %v3554 = vpop.f32.mrb[0].mxu0
    %3555 = vmatprep.mubr.f32.mxu0 0.0
    %3556 = vmatmul.mubr.f32.gmra.mrb[0].mxu0 %v480
    %v3557 = vpop.f32.mrb[0].mxu0
    %v3558 = vpop.f32.mrb[0].mxu0
    %3559 = vmatprep.mubr.f32.mxu0 0.0
    %3560 = vmatmul.mubr.f32.gmra.mrb[0].mxu0 %v480
    %v3561 = vpop.f32.mrb[0].mxu0
    %v3562 = vpop.f32.mrb[0].mxu0
    %3563 = vmatprep.mubr.f32.mxu0 0.0
    %3564 = vmatmul.mubr.f32.gmra.mrb[0].mxu0 %v1548
    %v3565 = vpop.f32.mrb[0].mxu0
    %v3566 = vpop.f32.mrb[0].mxu0
    %3567 = vmatprep.mubr.f32.mxu0 0.0
    %3568 = vmatmul.mubr.f32.gmra.mrb[0].mxu0 %v2510
    %v3569 = vpop.f32.mrb[0].mxu0
    %v3570 = vadd.f32 0.0, %v3569
    %v3571 = vpop.f32.mrb[0].mxu0
    %3572 = vmatprep.mubr.f32.mxu0 0.0
    %3573 = vmatmul.mubr.f32.gmra.mrb[0].mxu0 %v3473
    %v3574 = vpop.f32.mrb[0].mxu0
    %v3575 = vadd.f32 0.0, %v3574
    %v3576 = vpop.f32.mrb[0].mxu0
    %3577 = vmatprep.mubr.f32.mxu0 0.0
    %3578 = vmatmul.mubr.f32.gmra.mrb[0].mxu0 %v3475
    %v3579 = vpop.f32.mrb[0].mxu0
    %v3580 = vadd.f32 0.0, %v3579
    %v3581 = vpop.f32.mrb[0].mxu0
    %3582 = vdwg.mxu0
    %v3583 = vadd.f32 %v3461, %v3544
    %v3584 = vadd.f32 %v3462, %v3549
    %v3585 = vadd.f32 %v3463, %v3570
    %v3586 = vadd.f32 %v3464, %v3575
    %v3587 = vadd.f32 %v3465, %v3580
    %s3588 = scalar_lea.vmem [#allocation4], 864
    %v3589 = vld [vmem:[%s3588] sm:$0xff]
    %v3590 = vld [vmem:[%s3588 + $0x8] sm:$0xff]
    %v3591 = vld [vmem:[%s3588 + $0x10] sm:$0xff]
    %v3592 = vld [vmem:[%s3588 + $0x18] sm:$0xff]
    %v3593 = vsel %vm609, %v2631, %v610
    %v3594 = vsel %vm232, %v3593, 0
    %3596 = vmatprep.subr.mxu0 0.0
    %3597 = vmatpush1.msra.mxu0 %v3589
    %3598 = vmatprep.subr.mxu0 0.0
    %3599 = vmatpush1.msra.mxu0 %v3590
    %3600 = vmatprep.subr.mxu0 0.0
    %3601 = vmatpush1.msra.mxu0 %v3591
    %3602 = vmatprep.subr.mxu0 0.0
    %3603 = vmatpush1.msra.mxu0 %v3592
    %3604 = vmatprep.subr.mxu0 0.0
    %3605 = vmatpush1.msra.mxu0 0.0
    %3606 = vmatprep.subr.mxu0 0.0
    %3607 = vmatpush1.msra.mxu0 0.0
    %3608 = vmatprep.subr.mxu0 0.0
    %3609 = vmatpush1.msra.mxu0 0.0
    %3610 = vmatprep.subr.mxu0 0.0
    %3611 = vmatpush1.msra.mxu0 0.0
    %3612 = vmatprep.subr.mxu0 0.0
    %3613 = vmatpush1.msra.mxu0 0.0
    %3614 = vmatprep.subr.mxu0 0.0
    %3615 = vmatpush1.msra.mxu0 0.0
    %3616 = vmatprep.subr.mxu0 0.0
    %3617 = vmatpush1.msra.mxu0 0.0
    %3618 = vmatprep.subr.mxu0 0.0
    %3619 = vmatpush1.msra.mxu0 0.0
    %3620 = vmatprep.subr.mxu0 0.0
    %3621 = vmatpush1.msra.mxu0 0.0
    %3622 = vmatprep.subr.mxu0 0.0
    %3623 = vmatpush1.msra.mxu0 0.0
    %3624 = vmatprep.subr.mxu0 0.0
    %3625 = vmatpush1.msra.mxu0 0.0
    %3626 = vmatprep.subr.mxu0 0.0
    %3627 = vmatpush1.msra.mxu0 0.0
    %3628 = vmatprep.subr.mxu0 0.0
    %3629 = vmatpush1.msra.mxu0 0.0
    %3630 = vmatprep.subr.mxu0 0.0
    %3631 = vmatpush1.msra.mxu0 0.0
    %3632 = vmatprep.subr.mxu0 0.0
    %3633 = vmatpush1.msra.mxu0 0.0
    %3634 = vmatprep.subr.mxu0 0.0
    %3635 = vmatpush1.msra.mxu0 0.0
    %3636 = vmatprep.subr.mxu0 0.0
    %3637 = vmatpush1.msra.mxu0 0.0
    %3638 = vmatprep.subr.mxu0 0.0
    %3639 = vmatpush1.msra.mxu0 0.0
    %3640 = vmatprep.subr.mxu0 0.0
    %3641 = vmatpush1.msra.mxu0 0.0
    %3642 = vmatprep.subr.mxu0 0.0
    %3643 = vmatpush1.msra.mxu0 0.0
    %3644 = vmatprep.subr.mxu0 0.0
    %3645 = vmatpush1.msra.mxu0 0.0
    %3646 = vmatprep.subr.mxu0 0.0
    %3647 = vmatpush1.msra.mxu0 0.0
    %3648 = vmatprep.subr.mxu0 0.0
    %3649 = vmatpush1.msra.mxu0 0.0
    %3650 = vmatprep.subr.mxu0 0.0
    %3651 = vmatpush1.msra.mxu0 0.0
    %3652 = vmatprep.subr.mxu0 0.0
    %3653 = vmatpush1.msra.mxu0 0.0
    %3654 = vmatprep.subr.mxu0 0.0
    %3655 = vmatpush1.msra.mxu0 0.0
    %3656 = vmatprep.subr.mxu0 0.0
    %3657 = vmatpush1.msra.mxu0 0.0
    %3658 = vmatprep.subr.mxu0 0.0
    %3659 = vmatpush1.msra.mxu0 0.0
    %3660 = vmatprep.mubr.f32.mxu0 0.0
    %3661 = vmatmul.mubr.f32.gmra.mrb[0].mxu0 %v627
    %v3662 = vpop.f32.mrb[0].mxu0
    %v3663 = vadd.f32 0.0, %v3662
    %v3664 = vpop.f32.mrb[0].mxu0
    %3665 = vmatprep.mubr.f32.mxu0 0.0
    %3666 = vmatmul.mubr.f32.gmra.mrb[0].mxu0 %v629
    %v3667 = vpop.f32.mrb[0].mxu0
    %v3668 = vadd.f32 0.0, %v3667
    %v3669 = vpop.f32.mrb[0].mxu0
    %3670 = vmatprep.mubr.f32.mxu0 0.0
    %3671 = vmatmul.mubr.f32.gmra.mrb[0].mxu0 %v621
    %v3672 = vpop.f32.mrb[0].mxu0
    %v3673 = vpop.f32.mrb[0].mxu0
    %3674 = vmatprep.mubr.f32.mxu0 0.0
    %3675 = vmatmul.mubr.f32.gmra.mrb[0].mxu0 %v621
    %v3676 = vpop.f32.mrb[0].mxu0
    %v3677 = vpop.f32.mrb[0].mxu0
    %3678 = vmatprep.mubr.f32.mxu0 0.0
    %3679 = vmatmul.mubr.f32.gmra.mrb[0].mxu0 %v621
    %v3680 = vpop.f32.mrb[0].mxu0
    %v3681 = vpop.f32.mrb[0].mxu0
    %3682 = vmatprep.mubr.f32.mxu0 0.0
    %3683 = vmatmul.mubr.f32.gmra.mrb[0].mxu0 %v631
    %v3684 = vpop.f32.mrb[0].mxu0
    %v3685 = vpop.f32.mrb[0].mxu0
    %3686 = vmatprep.mubr.f32.mxu0 0.0
    %3687 = vmatmul.mubr.f32.gmra.mrb[0].mxu0 %v1670
    %v3688 = vpop.f32.mrb[0].mxu0
    %v3689 = vadd.f32 0.0, %v3688
    %v3690 = vpop.f32.mrb[0].mxu0
    %3691 = vmatprep.mubr.f32.mxu0 0.0
    %3692 = vmatmul.mubr.f32.gmra.mrb[0].mxu0 %v2633
    %v3693 = vpop.f32.mrb[0].mxu0
    %v3694 = vadd.f32 0.0, %v3693
    %v3695 = vpop.f32.mrb[0].mxu0
    %3696 = vmatprep.mubr.f32.mxu0 0.0
    %3697 = vmatmul.mubr.f32.gmra.mrb[0].mxu0 %v3594
    %v3698 = vpop.f32.mrb[0].mxu0
    %v3699 = vadd.f32 0.0, %v3698
    %v3700 = vpop.f32.mrb[0].mxu0
    %3701 = vdwg.mxu0
    %v3702 = vadd.f32 %v3583, %v3663
    %v3703 = vadd.f32 %v3584, %v3668
    %v3704 = vadd.f32 %v3585, %v3689
    %v3705 = vadd.f32 %v3586, %v3694
    %v3706 = vadd.f32 %v3587, %v3699
    %s3707 = scalar_lea.vmem [#allocation4], 896
    %v3708 = vld [vmem:[%s3707] sm:$0xff]
    %v3709 = vld [vmem:[%s3707 + $0x8] sm:$0xff]
    %v3710 = vld [vmem:[%s3707 + $0x10] sm:$0xff]
    %v3711 = vld [vmem:[%s3707 + $0x18] sm:$0xff]
    %v3712 = vsel %vm101, %v2751, %v749
    %v3713 = vsel %vm232, %v3712, 0
    %3715 = vmatprep.subr.mxu0 0.0
    %3716 = vmatpush1.msra.mxu0 %v3708
    %3717 = vmatprep.subr.mxu0 0.0
    %3718 = vmatpush1.msra.mxu0 %v3709
    %3719 = vmatprep.subr.mxu0 0.0
    %3720 = vmatpush1.msra.mxu0 %v3710
    %3721 = vmatprep.subr.mxu0 0.0
    %3722 = vmatpush1.msra.mxu0 %v3711
    %3723 = vmatprep.subr.mxu0 0.0
    %3724 = vmatpush1.msra.mxu0 0.0
    %3725 = vmatprep.subr.mxu0 0.0
    %3726 = vmatpush1.msra.mxu0 0.0
    %3727 = vmatprep.subr.mxu0 0.0
    %3728 = vmatpush1.msra.mxu0 0.0
    %3729 = vmatprep.subr.mxu0 0.0
    %3730 = vmatpush1.msra.mxu0 0.0
    %3731 = vmatprep.subr.mxu0 0.0
    %3732 = vmatpush1.msra.mxu0 0.0
    %3733 = vmatprep.subr.mxu0 0.0
    %3734 = vmatpush1.msra.mxu0 0.0
    %3735 = vmatprep.subr.mxu0 0.0
    %3736 = vmatpush1.msra.mxu0 0.0
    %3737 = vmatprep.subr.mxu0 0.0
    %3738 = vmatpush1.msra.mxu0 0.0
    %3739 = vmatprep.subr.mxu0 0.0
    %3740 = vmatpush1.msra.mxu0 0.0
    %3741 = vmatprep.subr.mxu0 0.0
    %3742 = vmatpush1.msra.mxu0 0.0
    %3743 = vmatprep.subr.mxu0 0.0
    %3744 = vmatpush1.msra.mxu0 0.0
    %3745 = vmatprep.subr.mxu0 0.0
    %3746 = vmatpush1.msra.mxu0 0.0
    %3747 = vmatprep.subr.mxu0 0.0
    %3748 = vmatpush1.msra.mxu0 0.0
    %3749 = vmatprep.subr.mxu0 0.0
    %3750 = vmatpush1.msra.mxu0 0.0
    %3751 = vmatprep.subr.mxu0 0.0
    %3752 = vmatpush1.msra.mxu0 0.0
    %3753 = vmatprep.subr.mxu0 0.0
    %3754 = vmatpush1.msra.mxu0 0.0
    %3755 = vmatprep.subr.mxu0 0.0
    %3756 = vmatpush1.msra.mxu0 0.0
    %3757 = vmatprep.subr.mxu0 0.0
    %3758 = vmatpush1.msra.mxu0 0.0
    %3759 = vmatprep.subr.mxu0 0.0
    %3760 = vmatpush1.msra.mxu0 0.0
    %3761 = vmatprep.subr.mxu0 0.0
    %3762 = vmatpush1.msra.mxu0 0.0
    %3763 = vmatprep.subr.mxu0 0.0
    %3764 = vmatpush1.msra.mxu0 0.0
    %3765 = vmatprep.subr.mxu0 0.0
    %3766 = vmatpush1.msra.mxu0 0.0
    %3767 = vmatprep.subr.mxu0 0.0
    %3768 = vmatpush1.msra.mxu0 0.0
    %3769 = vmatprep.subr.mxu0 0.0
    %3770 = vmatpush1.msra.mxu0 0.0
    %3771 = vmatprep.subr.mxu0 0.0
    %3772 = vmatpush1.msra.mxu0 0.0
    %3773 = vmatprep.subr.mxu0 0.0
    %3774 = vmatpush1.msra.mxu0 0.0
    %3775 = vmatprep.subr.mxu0 0.0
    %3776 = vmatpush1.msra.mxu0 0.0
    %3777 = vmatprep.subr.mxu0 0.0
    %3778 = vmatpush1.msra.mxu0 0.0
    %3779 = vmatprep.mubr.f32.mxu0 0.0
    %3780 = vmatmul.mubr.f32.gmra.mrb[0].mxu0 %v766
    %v3781 = vpop.f32.mrb[0].mxu0
    %v3782 = vadd.f32 0.0, %v3781
    %v3783 = vpop.f32.mrb[0].mxu0
    %3784 = vmatprep.mubr.f32.mxu0 0.0
    %3785 = vmatmul.mubr.f32.gmra.mrb[0].mxu0 %v768
    %v3786 = vpop.f32.mrb[0].mxu0
    %v3787 = vadd.f32 0.0, %v3786
    %v3788 = vpop.f32.mrb[0].mxu0
    %3789 = vmatprep.mubr.f32.mxu0 0.0
    %3790 = vmatmul.mubr.f32.gmra.mrb[0].mxu0 %v760
    %v3791 = vpop.f32.mrb[0].mxu0
    %v3792 = vpop.f32.mrb[0].mxu0
    %3793 = vmatprep.mubr.f32.mxu0 0.0
    %3794 = vmatmul.mubr.f32.gmra.mrb[0].mxu0 %v760
    %v3795 = vpop.f32.mrb[0].mxu0
    %v3796 = vpop.f32.mrb[0].mxu0
    %3797 = vmatprep.mubr.f32.mxu0 0.0
    %3798 = vmatmul.mubr.f32.gmra.mrb[0].mxu0 %v760
    %v3799 = vpop.f32.mrb[0].mxu0
    %v3800 = vpop.f32.mrb[0].mxu0
    %3801 = vmatprep.mubr.f32.mxu0 0.0
    %3802 = vmatmul.mubr.f32.gmra.mrb[0].mxu0 %v770
    %v3803 = vpop.f32.mrb[0].mxu0
    %v3804 = vpop.f32.mrb[0].mxu0
    %3805 = vmatprep.mubr.f32.mxu0 0.0
    %3806 = vmatmul.mubr.f32.gmra.mrb[0].mxu0 %v1790
    %v3807 = vpop.f32.mrb[0].mxu0
    %v3808 = vadd.f32 0.0, %v3807
    %v3809 = vpop.f32.mrb[0].mxu0
    %3810 = vmatprep.mubr.f32.mxu0 0.0
    %3811 = vmatmul.mubr.f32.gmra.mrb[0].mxu0 %v2753
    %v3812 = vpop.f32.mrb[0].mxu0
    %v3813 = vadd.f32 0.0, %v3812
    %v3814 = vpop.f32.mrb[0].mxu0
    %3815 = vmatprep.mubr.f32.mxu0 0.0
    %3816 = vmatmul.mubr.f32.gmra.mrb[0].mxu0 %v3713
    %v3817 = vpop.f32.mrb[0].mxu0
    %v3818 = vadd.f32 0.0, %v3817
    %v3819 = vpop.f32.mrb[0].mxu0
    %3820 = vdwg.mxu0
    %v3821 = vadd.f32 %v3702, %v3782
    %v3822 = vadd.f32 %v3703, %v3787
    %v3823 = vadd.f32 %v3704, %v3808
    %v3824 = vadd.f32 %v3705, %v3813
    %v3825 = vadd.f32 %v3706, %v3818
    %s3826 = scalar_lea.vmem [#allocation4], 928
    %v3827 = vld [vmem:[%s3826] sm:$0xff]
    %v3828 = vld [vmem:[%s3826 + $0x8] sm:$0xff]
    %v3829 = vld [vmem:[%s3826 + $0x10] sm:$0xff]
    %v3830 = vld [vmem:[%s3826 + $0x18] sm:$0xff]
    %v3831 = vsel %vm192, %v2871, %v888
    %v3832 = vsel %vm232, %v3831, 0
    %3834 = vmatprep.subr.mxu0 0.0
    %3835 = vmatpush1.msra.mxu0 %v3827
    %3836 = vmatprep.subr.mxu0 0.0
    %3837 = vmatpush1.msra.mxu0 %v3828
    %3838 = vmatprep.subr.mxu0 0.0
    %3839 = vmatpush1.msra.mxu0 %v3829
    %3840 = vmatprep.subr.mxu0 0.0
    %3841 = vmatpush1.msra.mxu0 %v3830
    %3842 = vmatprep.subr.mxu0 0.0
    %3843 = vmatpush1.msra.mxu0 0.0
    %3844 = vmatprep.subr.mxu0 0.0
    %3845 = vmatpush1.msra.mxu0 0.0
    %3846 = vmatprep.subr.mxu0 0.0
    %3847 = vmatpush1.msra.mxu0 0.0
    %3848 = vmatprep.subr.mxu0 0.0
    %3849 = vmatpush1.msra.mxu0 0.0
    %3850 = vmatprep.subr.mxu0 0.0
    %3851 = vmatpush1.msra.mxu0 0.0
    %3852 = vmatprep.subr.mxu0 0.0
    %3853 = vmatpush1.msra.mxu0 0.0
    %3854 = vmatprep.subr.mxu0 0.0
    %3855 = vmatpush1.msra.mxu0 0.0
    %3856 = vmatprep.subr.mxu0 0.0
    %3857 = vmatpush1.msra.mxu0 0.0
    %3858 = vmatprep.subr.mxu0 0.0
    %3859 = vmatpush1.msra.mxu0 0.0
    %3860 = vmatprep.subr.mxu0 0.0
    %3861 = vmatpush1.msra.mxu0 0.0
    %3862 = vmatprep.subr.mxu0 0.0
    %3863 = vmatpush1.msra.mxu0 0.0
    %3864 = vmatprep.subr.mxu0 0.0
    %3865 = vmatpush1.msra.mxu0 0.0
    %3866 = vmatprep.subr.mxu0 0.0
    %3867 = vmatpush1.msra.mxu0 0.0
    %3868 = vmatprep.subr.mxu0 0.0
    %3869 = vmatpush1.msra.mxu0 0.0
    %3870 = vmatprep.subr.mxu0 0.0
    %3871 = vmatpush1.msra.mxu0 0.0
    %3872 = vmatprep.subr.mxu0 0.0
    %3873 = vmatpush1.msra.mxu0 0.0
    %3874 = vmatprep.subr.mxu0 0.0
    %3875 = vmatpush1.msra.mxu0 0.0
    %3876 = vmatprep.subr.mxu0 0.0
    %3877 = vmatpush1.msra.mxu0 0.0
    %3878 = vmatprep.subr.mxu0 0.0
    %3879 = vmatpush1.msra.mxu0 0.0
    %3880 = vmatprep.subr.mxu0 0.0
    %3881 = vmatpush1.msra.mxu0 0.0
    %3882 = vmatprep.subr.mxu0 0.0
    %3883 = vmatpush1.msra.mxu0 0.0
    %3884 = vmatprep.subr.mxu0 0.0
    %3885 = vmatpush1.msra.mxu0 0.0
    %3886 = vmatprep.subr.mxu0 0.0
    %3887 = vmatpush1.msra.mxu0 0.0
    %3888 = vmatprep.subr.mxu0 0.0
    %3889 = vmatpush1.msra.mxu0 0.0
    %3890 = vmatprep.subr.mxu0 0.0
    %3891 = vmatpush1.msra.mxu0 0.0
    %3892 = vmatprep.subr.mxu0 0.0
    %3893 = vmatpush1.msra.mxu0 0.0
    %3894 = vmatprep.subr.mxu0 0.0
    %3895 = vmatpush1.msra.mxu0 0.0
    %3896 = vmatprep.subr.mxu0 0.0
    %3897 = vmatpush1.msra.mxu0 0.0
    %3898 = vmatprep.mubr.f32.mxu0 0.0
    %3899 = vmatmul.mubr.f32.gmra.mrb[0].mxu0 %v905
    %v3900 = vpop.f32.mrb[0].mxu0
    %v3901 = vadd.f32 0.0, %v3900
    %v3902 = vpop.f32.mrb[0].mxu0
    %3903 = vmatprep.mubr.f32.mxu0 0.0
    %3904 = vmatmul.mubr.f32.gmra.mrb[0].mxu0 %v907
    %v3905 = vpop.f32.mrb[0].mxu0
    %v3906 = vadd.f32 0.0, %v3905
    %v3907 = vpop.f32.mrb[0].mxu0
    %3908 = vmatprep.mubr.f32.mxu0 0.0
    %3909 = vmatmul.mubr.f32.gmra.mrb[0].mxu0 %v899
    %v3910 = vpop.f32.mrb[0].mxu0
    %v3911 = vpop.f32.mrb[0].mxu0
    %3912 = vmatprep.mubr.f32.mxu0 0.0
    %3913 = vmatmul.mubr.f32.gmra.mrb[0].mxu0 %v899
    %v3914 = vpop.f32.mrb[0].mxu0
    %v3915 = vpop.f32.mrb[0].mxu0
    %3916 = vmatprep.mubr.f32.mxu0 0.0
    %3917 = vmatmul.mubr.f32.gmra.mrb[0].mxu0 %v899
    %v3918 = vpop.f32.mrb[0].mxu0
    %v3919 = vpop.f32.mrb[0].mxu0
    %3920 = vmatprep.mubr.f32.mxu0 0.0
    %3921 = vmatmul.mubr.f32.gmra.mrb[0].mxu0 %v909
    %v3922 = vpop.f32.mrb[0].mxu0
    %v3923 = vpop.f32.mrb[0].mxu0
    %3924 = vmatprep.mubr.f32.mxu0 0.0
    %3925 = vmatmul.mubr.f32.gmra.mrb[0].mxu0 %v1910
    %v3926 = vpop.f32.mrb[0].mxu0
    %v3927 = vadd.f32 0.0, %v3926
    %v3928 = vpop.f32.mrb[0].mxu0
    %3929 = vmatprep.mubr.f32.mxu0 0.0
    %3930 = vmatmul.mubr.f32.gmra.mrb[0].mxu0 %v2873
    %v3931 = vpop.f32.mrb[0].mxu0
    %v3932 = vadd.f32 0.0, %v3931
    %v3933 = vpop.f32.mrb[0].mxu0
    %3934 = vmatprep.mubr.f32.mxu0 0.0
    %3935 = vmatmul.mubr.f32.gmra.mrb[0].mxu0 %v3832
    %v3936 = vpop.f32.mrb[0].mxu0
    %v3937 = vadd.f32 0.0, %v3936
    %v3938 = vpop.f32.mrb[0].mxu0
    %3939 = vdwg.mxu0
    %v3940 = vadd.f32 %v3821, %v3901
    %v3941 = vadd.f32 %v3822, %v3906
    %v3942 = vadd.f32 %v3823, %v3927
    %v3943 = vadd.f32 %v3824, %v3932
    %v3944 = vadd.f32 %v3825, %v3937
    %s3945 = scalar_lea.vmem [#allocation4], 960
    %v3946 = vld [vmem:[%s3945] sm:$0xff]
    %v3947 = vld [vmem:[%s3945 + $0x8] sm:$0xff]
    %v3948 = vld [vmem:[%s3945 + $0x10] sm:$0xff]
    %v3949 = vld [vmem:[%s3945 + $0x18] sm:$0xff]
    %v3950 = vsel %vm1027, %v2991, %v1028
    %v3951 = vsel %vm232, %v3950, 0
    %3953 = vmatprep.subr.mxu0 0.0
    %3954 = vmatpush1.msra.mxu0 %v3946
    %3955 = vmatprep.subr.mxu0 0.0
    %3956 = vmatpush1.msra.mxu0 %v3947
    %3957 = vmatprep.subr.mxu0 0.0
    %3958 = vmatpush1.msra.mxu0 %v3948
    %3959 = vmatprep.subr.mxu0 0.0
    %3960 = vmatpush1.msra.mxu0 %v3949
    %3961 = vmatprep.subr.mxu0 0.0
    %3962 = vmatpush1.msra.mxu0 0.0
    %3963 = vmatprep.subr.mxu0 0.0
    %3964 = vmatpush1.msra.mxu0 0.0
    %3965 = vmatprep.subr.mxu0 0.0
    %3966 = vmatpush1.msra.mxu0 0.0
    %3967 = vmatprep.subr.mxu0 0.0
    %3968 = vmatpush1.msra.mxu0 0.0
    %3969 = vmatprep.subr.mxu0 0.0
    %3970 = vmatpush1.msra.mxu0 0.0
    %3971 = vmatprep.subr.mxu0 0.0
    %3972 = vmatpush1.msra.mxu0 0.0
    %3973 = vmatprep.subr.mxu0 0.0
    %3974 = vmatpush1.msra.mxu0 0.0
    %3975 = vmatprep.subr.mxu0 0.0
    %3976 = vmatpush1.msra.mxu0 0.0
    %3977 = vmatprep.subr.mxu0 0.0
    %3978 = vmatpush1.msra.mxu0 0.0
    %3979 = vmatprep.subr.mxu0 0.0
    %3980 = vmatpush1.msra.mxu0 0.0
    %3981 = vmatprep.subr.mxu0 0.0
    %3982 = vmatpush1.msra.mxu0 0.0
    %3983 = vmatprep.subr.mxu0 0.0
    %3984 = vmatpush1.msra.mxu0 0.0
    %3985 = vmatprep.subr.mxu0 0.0
    %3986 = vmatpush1.msra.mxu0 0.0
    %3987 = vmatprep.subr.mxu0 0.0
    %3988 = vmatpush1.msra.mxu0 0.0
    %3989 = vmatprep.subr.mxu0 0.0
    %3990 = vmatpush1.msra.mxu0 0.0
    %3991 = vmatprep.subr.mxu0 0.0
    %3992 = vmatpush1.msra.mxu0 0.0
    %3993 = vmatprep.subr.mxu0 0.0
    %3994 = vmatpush1.msra.mxu0 0.0
    %3995 = vmatprep.subr.mxu0 0.0
    %3996 = vmatpush1.msra.mxu0 0.0
    %3997 = vmatprep.subr.mxu0 0.0
    %3998 = vmatpush1.msra.mxu0 0.0
    %3999 = vmatprep.subr.mxu0 0.0
    %4000 = vmatpush1.msra.mxu0 0.0
    %4001 = vmatprep.subr.mxu0 0.0
    %4002 = vmatpush1.msra.mxu0 0.0
    %4003 = vmatprep.subr.mxu0 0.0
    %4004 = vmatpush1.msra.mxu0 0.0
    %4005 = vmatprep.subr.mxu0 0.0
    %4006 = vmatpush1.msra.mxu0 0.0
    %4007 = vmatprep.subr.mxu0 0.0
    %4008 = vmatpush1.msra.mxu0 0.0
    %4009 = vmatprep.subr.mxu0 0.0
    %4010 = vmatpush1.msra.mxu0 0.0
    %4011 = vmatprep.subr.mxu0 0.0
    %4012 = vmatpush1.msra.mxu0 0.0
    %4013 = vmatprep.subr.mxu0 0.0
    %4014 = vmatpush1.msra.mxu0 0.0
    %4015 = vmatprep.subr.mxu0 0.0
    %4016 = vmatpush1.msra.mxu0 0.0
    %4017 = vmatprep.mubr.f32.mxu0 0.0
    %4018 = vmatmul.mubr.f32.gmra.mrb[0].mxu0 %v1045
    %v4019 = vpop.f32.mrb[0].mxu0
    %v4020 = vadd.f32 0.0, %v4019
    %v4021 = vpop.f32.mrb[0].mxu0
    %4022 = vmatprep.mubr.f32.mxu0 0.0
    %4023 = vmatmul.mubr.f32.gmra.mrb[0].mxu0 %v1047
    %v4024 = vpop.f32.mrb[0].mxu0
    %v4025 = vadd.f32 0.0, %v4024
    %v4026 = vpop.f32.mrb[0].mxu0
    %4027 = vmatprep.mubr.f32.mxu0 0.0
    %4028 = vmatmul.mubr.f32.gmra.mrb[0].mxu0 %v1039
    %v4029 = vpop.f32.mrb[0].mxu0
    %v4030 = vpop.f32.mrb[0].mxu0
    %4031 = vmatprep.mubr.f32.mxu0 0.0
    %4032 = vmatmul.mubr.f32.gmra.mrb[0].mxu0 %v1039
    %v4033 = vpop.f32.mrb[0].mxu0
    %v4034 = vpop.f32.mrb[0].mxu0
    %4035 = vmatprep.mubr.f32.mxu0 0.0
    %4036 = vmatmul.mubr.f32.gmra.mrb[0].mxu0 %v1039
    %v4037 = vpop.f32.mrb[0].mxu0
    %v4038 = vpop.f32.mrb[0].mxu0
    %4039 = vmatprep.mubr.f32.mxu0 0.0
    %4040 = vmatmul.mubr.f32.gmra.mrb[0].mxu0 %v1049
    %v4041 = vpop.f32.mrb[0].mxu0
    %v4042 = vpop.f32.mrb[0].mxu0
    %4043 = vmatprep.mubr.f32.mxu0 0.0
    %4044 = vmatmul.mubr.f32.gmra.mrb[0].mxu0 %v2030
    %v4045 = vpop.f32.mrb[0].mxu0
    %v4046 = vadd.f32 0.0, %v4045
    %v4047 = vpop.f32.mrb[0].mxu0
    %4048 = vmatprep.mubr.f32.mxu0 0.0
    %4049 = vmatmul.mubr.f32.gmra.mrb[0].mxu0 %v2993
    %v4050 = vpop.f32.mrb[0].mxu0
    %v4051 = vadd.f32 0.0, %v4050
    %v4052 = vpop.f32.mrb[0].mxu0
    %4053 = vmatprep.mubr.f32.mxu0 0.0
    %4054 = vmatmul.mubr.f32.gmra.mrb[0].mxu0 %v3951
    %v4055 = vpop.f32.mrb[0].mxu0
    %v4056 = vadd.f32 0.0, %v4055
    %v4057 = vpop.f32.mrb[0].mxu0
    %4058 = vdwg.mxu0
    %v4059 = vadd.f32 %v3940, %v4020
    %v4060 = vadd.f32 %v3941, %v4025
    %v4061 = vadd.f32 %v3942, %v4046
    %v4062 = vadd.f32 %v3943, %v4051
    %v4063 = vadd.f32 %v3944, %v4056
    %s4064 = scalar_lea.vmem [#allocation4], 992
    %v4065 = vld [vmem:[%s4064] sm:$0xff]
    %v4066 = vld [vmem:[%s4064 + $0x8] sm:$0xff]
    %v4067 = vld [vmem:[%s4064 + $0x10] sm:$0xff]
    %v4068 = vld [vmem:[%s4064 + $0x18] sm:$0xff]
    %v4069 = vsel %vm200, %v3111, %v1167
    %v4070 = vsel %vm232, %v4069, 0
    %4072 = vmatprep.subr.mxu0 0.0
    %4073 = vmatpush1.msra.mxu0 %v4065
    %4074 = vmatprep.subr.mxu0 0.0
    %4075 = vmatpush1.msra.mxu0 %v4066
    %4076 = vmatprep.subr.mxu0 0.0
    %4077 = vmatpush1.msra.mxu0 %v4067
    %4078 = vmatprep.subr.mxu0 0.0
    %4079 = vmatpush1.msra.mxu0 %v4068
    %4080 = vmatprep.subr.mxu0 0.0
    %4081 = vmatpush1.msra.mxu0 0.0
    %4082 = vmatprep.subr.mxu0 0.0
    %4083 = vmatpush1.msra.mxu0 0.0
    %4084 = vmatprep.subr.mxu0 0.0
    %4085 = vmatpush1.msra.mxu0 0.0
    %4086 = vmatprep.subr.mxu0 0.0
    %4087 = vmatpush1.msra.mxu0 0.0
    %4088 = vmatprep.subr.mxu0 0.0
    %4089 = vmatpush1.msra.mxu0 0.0
    %4090 = vmatprep.subr.mxu0 0.0
    %4091 = vmatpush1.msra.mxu0 0.0
    %4092 = vmatprep.subr.mxu0 0.0
    %4093 = vmatpush1.msra.mxu0 0.0
    %4094 = vmatprep.subr.mxu0 0.0
    %4095 = vmatpush1.msra.mxu0 0.0
    %4096 = vmatprep.subr.mxu0 0.0
    %4097 = vmatpush1.msra.mxu0 0.0
    %4098 = vmatprep.subr.mxu0 0.0
    %4099 = vmatpush1.msra.mxu0 0.0
    %4100 = vmatprep.subr.mxu0 0.0
    %4101 = vmatpush1.msra.mxu0 0.0
    %4102 = vmatprep.subr.mxu0 0.0
    %4103 = vmatpush1.msra.mxu0 0.0
    %4104 = vmatprep.subr.mxu0 0.0
    %4105 = vmatpush1.msra.mxu0 0.0
    %4106 = vmatprep.subr.mxu0 0.0
    %4107 = vmatpush1.msra.mxu0 0.0
    %4108 = vmatprep.subr.mxu0 0.0
    %4109 = vmatpush1.msra.mxu0 0.0
    %4110 = vmatprep.subr.mxu0 0.0
    %4111 = vmatpush1.msra.mxu0 0.0
    %4112 = vmatprep.subr.mxu0 0.0
    %4113 = vmatpush1.msra.mxu0 0.0
    %4114 = vmatprep.subr.mxu0 0.0
    %4115 = vmatpush1.msra.mxu0 0.0
    %4116 = vmatprep.subr.mxu0 0.0
    %4117 = vmatpush1.msra.mxu0 0.0
    %4118 = vmatprep.subr.mxu0 0.0
    %4119 = vmatpush1.msra.mxu0 0.0
    %4120 = vmatprep.subr.mxu0 0.0
    %4121 = vmatpush1.msra.mxu0 0.0
    %4122 = vmatprep.subr.mxu0 0.0
    %4123 = vmatpush1.msra.mxu0 0.0
    %4124 = vmatprep.subr.mxu0 0.0
    %4125 = vmatpush1.msra.mxu0 0.0
    %4126 = vmatprep.subr.mxu0 0.0
    %4127 = vmatpush1.msra.mxu0 0.0
    %4128 = vmatprep.subr.mxu0 0.0
    %4129 = vmatpush1.msra.mxu0 0.0
    %4130 = vmatprep.subr.mxu0 0.0
    %4131 = vmatpush1.msra.mxu0 0.0
    %4132 = vmatprep.subr.mxu0 0.0
    %4133 = vmatpush1.msra.mxu0 0.0
    %4134 = vmatprep.subr.mxu0 0.0
    %4135 = vmatpush1.msra.mxu0 0.0
    %4136 = vmatprep.mubr.f32.mxu0 0.0
    %4137 = vmatmul.mubr.f32.gmra.mrb[0].mxu0 %v1184
    %v4138 = vpop.f32.mrb[0].mxu0
    %v4139 = vadd.f32 0.0, %v4138
    %v4140 = vpop.f32.mrb[0].mxu0
    %4141 = vmatprep.mubr.f32.mxu0 0.0
    %4142 = vmatmul.mubr.f32.gmra.mrb[0].mxu0 %v1186
    %v4143 = vpop.f32.mrb[0].mxu0
    %v4144 = vadd.f32 0.0, %v4143
    %v4145 = vpop.f32.mrb[0].mxu0
    %4146 = vmatprep.mubr.f32.mxu0 0.0
    %4147 = vmatmul.mubr.f32.gmra.mrb[0].mxu0 %v1178
    %v4148 = vpop.f32.mrb[0].mxu0
    %v4149 = vpop.f32.mrb[0].mxu0
    %4150 = vmatprep.mubr.f32.mxu0 0.0
    %4151 = vmatmul.mubr.f32.gmra.mrb[0].mxu0 %v1178
    %v4152 = vpop.f32.mrb[0].mxu0
    %v4153 = vpop.f32.mrb[0].mxu0
    %4154 = vmatprep.mubr.f32.mxu0 0.0
    %4155 = vmatmul.mubr.f32.gmra.mrb[0].mxu0 %v1178
    %v4156 = vpop.f32.mrb[0].mxu0
    %v4157 = vpop.f32.mrb[0].mxu0
    %4158 = vmatprep.mubr.f32.mxu0 0.0
    %4159 = vmatmul.mubr.f32.gmra.mrb[0].mxu0 %v1188
    %v4160 = vpop.f32.mrb[0].mxu0
    %v4161 = vpop.f32.mrb[0].mxu0
    %4162 = vmatprep.mubr.f32.mxu0 0.0
    %4163 = vmatmul.mubr.f32.gmra.mrb[0].mxu0 %v2150
    %v4164 = vpop.f32.mrb[0].mxu0
    %v4165 = vadd.f32 0.0, %v4164
    %v4166 = vpop.f32.mrb[0].mxu0
    %4167 = vmatprep.mubr.f32.mxu0 0.0
    %4168 = vmatmul.mubr.f32.gmra.mrb[0].mxu0 %v3113
    %v4169 = vpop.f32.mrb[0].mxu0
    %v4170 = vadd.f32 0.0, %v4169
    %v4171 = vpop.f32.mrb[0].mxu0
    %4172 = vmatprep.mubr.f32.mxu0 0.0
    %4173 = vmatmul.mubr.f32.gmra.mrb[0].mxu0 %v4070
    %v4174 = vpop.f32.mrb[0].mxu0
    %v4175 = vadd.f32 0.0, %v4174
    %v4176 = vpop.f32.mrb[0].mxu0
    %4177 = vdwg.mxu0
    %v4178 = vadd.f32 %v4059, %v4139
    %v4179 = vadd.f32 %v4060, %v4144
    %v4180 = vadd.f32 %v4061, %v4165
    %v4181 = vadd.f32 %v4062, %v4170
    %v4182 = vadd.f32 %v4063, %v4175
    %s4183 = scalar_lea.vmem [#allocation4], 1024
    %v4184 = vld [vmem:[%s4183] sm:$0xff]
    %v4185 = vld [vmem:[%s4183 + $0x8] sm:$0xff]
    %v4186 = vld [vmem:[%s4183 + $0x10] sm:$0xff]
    %v4187 = vld [vmem:[%s4183 + $0x18] sm:$0xff]
    %4188 = vmatprep.subr.mxu0 0.0
    %4189 = vmatpush1.msra.mxu0 %v4184
    %4190 = vmatprep.subr.mxu0 0.0
    %4191 = vmatpush1.msra.mxu0 %v4185
    %4192 = vmatprep.subr.mxu0 0.0
    %4193 = vmatpush1.msra.mxu0 %v4186
    %4194 = vmatprep.subr.mxu0 0.0
    %4195 = vmatpush1.msra.mxu0 %v4187
    %4196 = vmatprep.subr.mxu0 0.0
    %4197 = vmatpush1.msra.mxu0 0.0
    %4198 = vmatprep.subr.mxu0 0.0
    %4199 = vmatpush1.msra.mxu0 0.0
    %4200 = vmatprep.subr.mxu0 0.0
    %4201 = vmatpush1.msra.mxu0 0.0
    %4202 = vmatprep.subr.mxu0 0.0
    %4203 = vmatpush1.msra.mxu0 0.0
    %4204 = vmatprep.subr.mxu0 0.0
    %4205 = vmatpush1.msra.mxu0 0.0
    %4206 = vmatprep.subr.mxu0 0.0
    %4207 = vmatpush1.msra.mxu0 0.0
    %4208 = vmatprep.subr.mxu0 0.0
    %4209 = vmatpush1.msra.mxu0 0.0
    %4210 = vmatprep.subr.mxu0 0.0
    %4211 = vmatpush1.msra.mxu0 0.0
    %4212 = vmatprep.subr.mxu0 0.0
    %4213 = vmatpush1.msra.mxu0 0.0
    %4214 = vmatprep.subr.mxu0 0.0
    %4215 = vmatpush1.msra.mxu0 0.0
    %4216 = vmatprep.subr.mxu0 0.0
    %4217 = vmatpush1.msra.mxu0 0.0
    %4218 = vmatprep.subr.mxu0 0.0
    %4219 = vmatpush1.msra.mxu0 0.0
    %4220 = vmatprep.subr.mxu0 0.0
    %4221 = vmatpush1.msra.mxu0 0.0
    %4222 = vmatprep.subr.mxu0 0.0
    %4223 = vmatpush1.msra.mxu0 0.0
    %4224 = vmatprep.subr.mxu0 0.0
    %4225 = vmatpush1.msra.mxu0 0.0
    %4226 = vmatprep.subr.mxu0 0.0
    %4227 = vmatpush1.msra.mxu0 0.0
    %4228 = vmatprep.subr.mxu0 0.0
    %4229 = vmatpush1.msra.mxu0 0.0
    %4230 = vmatprep.subr.mxu0 0.0
    %4231 = vmatpush1.msra.mxu0 0.0
    %4232 = vmatprep.subr.mxu0 0.0
    %4233 = vmatpush1.msra.mxu0 0.0
    %4234 = vmatprep.subr.mxu0 0.0
    %4235 = vmatpush1.msra.mxu0 0.0
    %4236 = vmatprep.subr.mxu0 0.0
    %4237 = vmatpush1.msra.mxu0 0.0
    %4238 = vmatprep.subr.mxu0 0.0
    %4239 = vmatpush1.msra.mxu0 0.0
    %4240 = vmatprep.subr.mxu0 0.0
    %4241 = vmatpush1.msra.mxu0 0.0
    %4242 = vmatprep.subr.mxu0 0.0
    %4243 = vmatpush1.msra.mxu0 0.0
    %4244 = vmatprep.subr.mxu0 0.0
    %4245 = vmatpush1.msra.mxu0 0.0
    %4246 = vmatprep.subr.mxu0 0.0
    %4247 = vmatpush1.msra.mxu0 0.0
    %4248 = vmatprep.subr.mxu0 0.0
    %4249 = vmatpush1.msra.mxu0 0.0
    %4250 = vmatprep.subr.mxu0 0.0
    %4251 = vmatpush1.msra.mxu0 0.0
    %4252 = vmatprep.mubr.f32.mxu0 0.0
    %4253 = vmatmul.mubr.f32.gmra.mrb[0].mxu0 %v357
    %v4254 = vpop.f32.mrb[0].mxu0
    %v4255 = vadd.f32 0.0, %v4254
    %v4256 = vpop.f32.mrb[0].mxu0
    %4257 = vmatprep.mubr.f32.mxu0 0.0
    %4258 = vmatmul.mubr.f32.gmra.mrb[0].mxu0 %v351
    %v4259 = vpop.f32.mrb[0].mxu0
    %v4260 = vadd.f32 0.0, %v4259
    %v4261 = vpop.f32.mrb[0].mxu0
    %4262 = vmatprep.mubr.f32.mxu0 0.0
    %4263 = vmatmul.mubr.f32.gmra.mrb[0].mxu0 %v351
    %v4264 = vpop.f32.mrb[0].mxu0
    %v4265 = vpop.f32.mrb[0].mxu0
    %4266 = vmatprep.mubr.f32.mxu0 0.0
    %4267 = vmatmul.mubr.f32.gmra.mrb[0].mxu0 %v351
    %v4268 = vpop.f32.mrb[0].mxu0
    %v4269 = vpop.f32.mrb[0].mxu0
    %4270 = vmatprep.mubr.f32.mxu0 0.0
    %4271 = vmatmul.mubr.f32.gmra.mrb[0].mxu0 %v351
    %v4272 = vpop.f32.mrb[0].mxu0
    %v4273 = vpop.f32.mrb[0].mxu0
    %4274 = vmatprep.mubr.f32.mxu0 0.0
    %4275 = vmatmul.mubr.f32.gmra.mrb[0].mxu0 %v1306
    %v4276 = vpop.f32.mrb[0].mxu0
    %v4277 = vpop.f32.mrb[0].mxu0
    %4278 = vmatprep.mubr.f32.mxu0 0.0
    %4279 = vmatmul.mubr.f32.gmra.mrb[0].mxu0 %v2268
    %v4280 = vpop.f32.mrb[0].mxu0
    %v4281 = vadd.f32 0.0, %v4280
    %v4282 = vpop.f32.mrb[0].mxu0
    %4283 = vmatprep.mubr.f32.mxu0 0.0
    %4284 = vmatmul.mubr.f32.gmra.mrb[0].mxu0 %v3231
    %v4285 = vpop.f32.mrb[0].mxu0
    %v4286 = vadd.f32 0.0, %v4285
    %v4287 = vpop.f32.mrb[0].mxu0
    %4288 = vmatprep.mubr.f32.mxu0 0.0
    %4289 = vmatmul.mubr.f32.gmra.mrb[0].mxu0 %v351
    %v4290 = vpop.f32.mrb[0].mxu0
    %v4291 = vadd.f32 0.0, %v4290
    %v4292 = vpop.f32.mrb[0].mxu0
    %4293 = vdwg.mxu0
    %v4294 = vadd.f32 %v4178, %v4255
    %v4295 = vadd.f32 %v4179, %v4260
    %v4296 = vadd.f32 %v4180, %v4281
    %v4297 = vadd.f32 %v4181, %v4286
    %v4298 = vadd.f32 %v4182, %v4291
    %s4299 = scalar_lea.vmem [#allocation4], 1056
    %v4300 = vld [vmem:[%s4299] sm:$0xff]
    %v4301 = vld [vmem:[%s4299 + $0x8] sm:$0xff]
    %v4302 = vld [vmem:[%s4299 + $0x10] sm:$0xff]
    %v4303 = vld [vmem:[%s4299 + $0x18] sm:$0xff]
    %v4304 = vsel %vm222, %v3349, %v223
    %v4305 = vsel %vm232, %v4304, 0
    %4307 = vmatprep.subr.mxu0 0.0
    %4308 = vmatpush1.msra.mxu0 %v4300
    %4309 = vmatprep.subr.mxu0 0.0
    %4310 = vmatpush1.msra.mxu0 %v4301
    %4311 = vmatprep.subr.mxu0 0.0
    %4312 = vmatpush1.msra.mxu0 %v4302
    %4313 = vmatprep.subr.mxu0 0.0
    %4314 = vmatpush1.msra.mxu0 %v4303
    %4315 = vmatprep.subr.mxu0 0.0
    %4316 = vmatpush1.msra.mxu0 0.0
    %4317 = vmatprep.subr.mxu0 0.0
    %4318 = vmatpush1.msra.mxu0 0.0
    %4319 = vmatprep.subr.mxu0 0.0
    %4320 = vmatpush1.msra.mxu0 0.0
    %4321 = vmatprep.subr.mxu0 0.0
    %4322 = vmatpush1.msra.mxu0 0.0
    %4323 = vmatprep.subr.mxu0 0.0
    %4324 = vmatpush1.msra.mxu0 0.0
    %4325 = vmatprep.subr.mxu0 0.0
    %4326 = vmatpush1.msra.mxu0 0.0
    %4327 = vmatprep.subr.mxu0 0.0
    %4328 = vmatpush1.msra.mxu0 0.0
    %4329 = vmatprep.subr.mxu0 0.0
    %4330 = vmatpush1.msra.mxu0 0.0
    %4331 = vmatprep.subr.mxu0 0.0
    %4332 = vmatpush1.msra.mxu0 0.0
    %4333 = vmatprep.subr.mxu0 0.0
    %4334 = vmatpush1.msra.mxu0 0.0
    %4335 = vmatprep.subr.mxu0 0.0
    %4336 = vmatpush1.msra.mxu0 0.0
    %4337 = vmatprep.subr.mxu0 0.0
    %4338 = vmatpush1.msra.mxu0 0.0
    %4339 = vmatprep.subr.mxu0 0.0
    %4340 = vmatpush1.msra.mxu0 0.0
    %4341 = vmatprep.subr.mxu0 0.0
    %4342 = vmatpush1.msra.mxu0 0.0
    %4343 = vmatprep.subr.mxu0 0.0
    %4344 = vmatpush1.msra.mxu0 0.0
    %4345 = vmatprep.subr.mxu0 0.0
    %4346 = vmatpush1.msra.mxu0 0.0
    %4347 = vmatprep.subr.mxu0 0.0
    %4348 = vmatpush1.msra.mxu0 0.0
    %4349 = vmatprep.subr.mxu0 0.0
    %4350 = vmatpush1.msra.mxu0 0.0
    %4351 = vmatprep.subr.mxu0 0.0
    %4352 = vmatpush1.msra.mxu0 0.0
    %4353 = vmatprep.subr.mxu0 0.0
    %4354 = vmatpush1.msra.mxu0 0.0
    %4355 = vmatprep.subr.mxu0 0.0
    %4356 = vmatpush1.msra.mxu0 0.0
    %4357 = vmatprep.subr.mxu0 0.0
    %4358 = vmatpush1.msra.mxu0 0.0
    %4359 = vmatprep.subr.mxu0 0.0
    %4360 = vmatpush1.msra.mxu0 0.0
    %4361 = vmatprep.subr.mxu0 0.0
    %4362 = vmatpush1.msra.mxu0 0.0
    %4363 = vmatprep.subr.mxu0 0.0
    %4364 = vmatpush1.msra.mxu0 0.0
    %4365 = vmatprep.subr.mxu0 0.0
    %4366 = vmatpush1.msra.mxu0 0.0
    %4367 = vmatprep.subr.mxu0 0.0
    %4368 = vmatpush1.msra.mxu0 0.0
    %4369 = vmatprep.subr.mxu0 0.0
    %4370 = vmatpush1.msra.mxu0 0.0
    %4371 = vmatprep.mubr.f32.mxu0 0.0
    %4372 = vmatmul.mubr.f32.gmra.mrb[0].mxu0 %v241
    %v4373 = vpop.f32.mrb[0].mxu0
    %v4374 = vadd.f32 0.0, %v4373
    %v4375 = vpop.f32.mrb[0].mxu0
    %4376 = vmatprep.mubr.f32.mxu0 0.0
    %4377 = vmatmul.mubr.f32.gmra.mrb[0].mxu0 %v233
    %v4378 = vpop.f32.mrb[0].mxu0
    %v4379 = vadd.f32 0.0, %v4378
    %v4380 = vpop.f32.mrb[0].mxu0
    %4381 = vmatprep.mubr.f32.mxu0 0.0
    %4382 = vmatmul.mubr.f32.gmra.mrb[0].mxu0 %v233
    %v4383 = vpop.f32.mrb[0].mxu0
    %v4384 = vpop.f32.mrb[0].mxu0
    %4385 = vmatprep.mubr.f32.mxu0 0.0
    %4386 = vmatmul.mubr.f32.gmra.mrb[0].mxu0 %v233
    %v4387 = vpop.f32.mrb[0].mxu0
    %v4388 = vpop.f32.mrb[0].mxu0
    %4389 = vmatprep.mubr.f32.mxu0 0.0
    %4390 = vmatmul.mubr.f32.gmra.mrb[0].mxu0 %v1426
    %v4391 = vpop.f32.mrb[0].mxu0
    %v4392 = vpop.f32.mrb[0].mxu0
    %4393 = vmatprep.mubr.f32.mxu0 0.0
    %4394 = vmatmul.mubr.f32.gmra.mrb[0].mxu0 %v2388
    %v4395 = vpop.f32.mrb[0].mxu0
    %v4396 = vpop.f32.mrb[0].mxu0
    %4397 = vmatprep.mubr.f32.mxu0 0.0
    %4398 = vmatmul.mubr.f32.gmra.mrb[0].mxu0 %v3351
    %v4399 = vpop.f32.mrb[0].mxu0
    %v4400 = vadd.f32 0.0, %v4399
    %v4401 = vpop.f32.mrb[0].mxu0
    %4402 = vmatprep.mubr.f32.mxu0 0.0
    %4403 = vmatmul.mubr.f32.gmra.mrb[0].mxu0 %v4305
    %v4404 = vpop.f32.mrb[0].mxu0
    %v4405 = vadd.f32 0.0, %v4404
    %v4406 = vpop.f32.mrb[0].mxu0
    %4407 = vmatprep.mubr.f32.mxu0 0.0
    %4408 = vmatmul.mubr.f32.gmra.mrb[0].mxu0 %v243
    %v4409 = vpop.f32.mrb[0].mxu0
    %v4410 = vadd.f32 0.0, %v4409
    %v4411 = vpop.f32.mrb[0].mxu0
    %4412 = vdwg.mxu0
    %v4413 = vadd.f32 %v4294, %v4374
    %v4414 = vadd.f32 %v4295, %v4379
    %v4415 = vadd.f32 %v4296, %v4400
    %v4416 = vadd.f32 %v4297, %v4405
    %v4417 = vadd.f32 %v4298, %v4410
    %s4418 = scalar_lea.vmem [#allocation4], 1088
    %v4419 = vld [vmem:[%s4418] sm:$0xff]
    %v4420 = vld [vmem:[%s4418 + $0x8] sm:$0xff]
    %v4421 = vld [vmem:[%s4418 + $0x10] sm:$0xff]
    %v4422 = vld [vmem:[%s4418 + $0x18] sm:$0xff]
    %v4423 = vsel %vm470, %v3471, %v471
    %v4424 = vsel %vm232, %v4423, 0
    %4426 = vmatprep.subr.mxu0 0.0
    %4427 = vmatpush1.msra.mxu0 %v4419
    %4428 = vmatprep.subr.mxu0 0.0
    %4429 = vmatpush1.msra.mxu0 %v4420
    %4430 = vmatprep.subr.mxu0 0.0
    %4431 = vmatpush1.msra.mxu0 %v4421
    %4432 = vmatprep.subr.mxu0 0.0
    %4433 = vmatpush1.msra.mxu0 %v4422
    %4434 = vmatprep.subr.mxu0 0.0
    %4435 = vmatpush1.msra.mxu0 0.0
    %4436 = vmatprep.subr.mxu0 0.0
    %4437 = vmatpush1.msra.mxu0 0.0
    %4438 = vmatprep.subr.mxu0 0.0
    %4439 = vmatpush1.msra.mxu0 0.0
    %4440 = vmatprep.subr.mxu0 0.0
    %4441 = vmatpush1.msra.mxu0 0.0
    %4442 = vmatprep.subr.mxu0 0.0
    %4443 = vmatpush1.msra.mxu0 0.0
    %4444 = vmatprep.subr.mxu0 0.0
    %4445 = vmatpush1.msra.mxu0 0.0
    %4446 = vmatprep.subr.mxu0 0.0
    %4447 = vmatpush1.msra.mxu0 0.0
    %4448 = vmatprep.subr.mxu0 0.0
    %4449 = vmatpush1.msra.mxu0 0.0
    %4450 = vmatprep.subr.mxu0 0.0
    %4451 = vmatpush1.msra.mxu0 0.0
    %4452 = vmatprep.subr.mxu0 0.0
    %4453 = vmatpush1.msra.mxu0 0.0
    %4454 = vmatprep.subr.mxu0 0.0
    %4455 = vmatpush1.msra.mxu0 0.0
    %4456 = vmatprep.subr.mxu0 0.0
    %4457 = vmatpush1.msra.mxu0 0.0
    %4458 = vmatprep.subr.mxu0 0.0
    %4459 = vmatpush1.msra.mxu0 0.0
    %4460 = vmatprep.subr.mxu0 0.0
    %4461 = vmatpush1.msra.mxu0 0.0
    %4462 = vmatprep.subr.mxu0 0.0
    %4463 = vmatpush1.msra.mxu0 0.0
    %4464 = vmatprep.subr.mxu0 0.0
    %4465 = vmatpush1.msra.mxu0 0.0
    %4466 = vmatprep.subr.mxu0 0.0
    %4467 = vmatpush1.msra.mxu0 0.0
    %4468 = vmatprep.subr.mxu0 0.0
    %4469 = vmatpush1.msra.mxu0 0.0
    %4470 = vmatprep.subr.mxu0 0.0
    %4471 = vmatpush1.msra.mxu0 0.0
    %4472 = vmatprep.subr.mxu0 0.0
    %4473 = vmatpush1.msra.mxu0 0.0
    %4474 = vmatprep.subr.mxu0 0.0
    %4475 = vmatpush1.msra.mxu0 0.0
    %4476 = vmatprep.subr.mxu0 0.0
    %4477 = vmatpush1.msra.mxu0 0.0
    %4478 = vmatprep.subr.mxu0 0.0
    %4479 = vmatpush1.msra.mxu0 0.0
    %4480 = vmatprep.subr.mxu0 0.0
    %4481 = vmatpush1.msra.mxu0 0.0
    %4482 = vmatprep.subr.mxu0 0.0
    %4483 = vmatpush1.msra.mxu0 0.0
    %4484 = vmatprep.subr.mxu0 0.0
    %4485 = vmatpush1.msra.mxu0 0.0
    %4486 = vmatprep.subr.mxu0 0.0
    %4487 = vmatpush1.msra.mxu0 0.0
    %4488 = vmatprep.subr.mxu0 0.0
    %4489 = vmatpush1.msra.mxu0 0.0
    %4490 = vmatprep.mubr.f32.mxu0 0.0
    %4491 = vmatmul.mubr.f32.gmra.mrb[0].mxu0 %v488
    %v4492 = vpop.f32.mrb[0].mxu0
    %v4493 = vadd.f32 0.0, %v4492
    %v4494 = vpop.f32.mrb[0].mxu0
    %4495 = vmatprep.mubr.f32.mxu0 0.0
    %4496 = vmatmul.mubr.f32.gmra.mrb[0].mxu0 %v480
    %v4497 = vpop.f32.mrb[0].mxu0
    %v4498 = vadd.f32 0.0, %v4497
    %v4499 = vpop.f32.mrb[0].mxu0
    %4500 = vmatprep.mubr.f32.mxu0 0.0
    %4501 = vmatmul.mubr.f32.gmra.mrb[0].mxu0 %v480
    %v4502 = vpop.f32.mrb[0].mxu0
    %v4503 = vpop.f32.mrb[0].mxu0
    %4504 = vmatprep.mubr.f32.mxu0 0.0
    %4505 = vmatmul.mubr.f32.gmra.mrb[0].mxu0 %v480
    %v4506 = vpop.f32.mrb[0].mxu0
    %v4507 = vpop.f32.mrb[0].mxu0
    %4508 = vmatprep.mubr.f32.mxu0 0.0
    %4509 = vmatmul.mubr.f32.gmra.mrb[0].mxu0 %v1548
    %v4510 = vpop.f32.mrb[0].mxu0
    %v4511 = vpop.f32.mrb[0].mxu0
    %4512 = vmatprep.mubr.f32.mxu0 0.0
    %4513 = vmatmul.mubr.f32.gmra.mrb[0].mxu0 %v2510
    %v4514 = vpop.f32.mrb[0].mxu0
    %v4515 = vpop.f32.mrb[0].mxu0
    %4516 = vmatprep.mubr.f32.mxu0 0.0
    %4517 = vmatmul.mubr.f32.gmra.mrb[0].mxu0 %v3473
    %v4518 = vpop.f32.mrb[0].mxu0
    %v4519 = vadd.f32 0.0, %v4518
    %v4520 = vpop.f32.mrb[0].mxu0
    %4521 = vmatprep.mubr.f32.mxu0 0.0
    %4522 = vmatmul.mubr.f32.gmra.mrb[0].mxu0 %v4424
    %v4523 = vpop.f32.mrb[0].mxu0
    %v4524 = vadd.f32 0.0, %v4523
    %v4525 = vpop.f32.mrb[0].mxu0
    %4526 = vmatprep.mubr.f32.mxu0 0.0
    %4527 = vmatmul.mubr.f32.gmra.mrb[0].mxu0 %v490
    %v4528 = vpop.f32.mrb[0].mxu0
    %v4529 = vadd.f32 0.0, %v4528
    %v4530 = vpop.f32.mrb[0].mxu0
    %4531 = vdwg.mxu0
    %v4532 = vadd.f32 %v4413, %v4493
    %v4533 = vadd.f32 %v4414, %v4498
    %v4534 = vadd.f32 %v4415, %v4519
    %v4535 = vadd.f32 %v4416, %v4524
    %v4536 = vadd.f32 %v4417, %v4529
    %s4537 = scalar_lea.vmem [#allocation4], 1120
    %v4538 = vld [vmem:[%s4537] sm:$0xff]
    %v4539 = vld [vmem:[%s4537 + $0x8] sm:$0xff]
    %v4540 = vld [vmem:[%s4537 + $0x10] sm:$0xff]
    %v4541 = vld [vmem:[%s4537 + $0x18] sm:$0xff]
    %4542 = vmatprep.subr.mxu0 0.0
    %4543 = vmatpush1.msra.mxu0 %v4538
    %4544 = vmatprep.subr.mxu0 0.0
    %4545 = vmatpush1.msra.mxu0 %v4539
    %4546 = vmatprep.subr.mxu0 0.0
    %4547 = vmatpush1.msra.mxu0 %v4540
    %4548 = vmatprep.subr.mxu0 0.0
    %4549 = vmatpush1.msra.mxu0 %v4541
    %4550 = vmatprep.subr.mxu0 0.0
    %4551 = vmatpush1.msra.mxu0 0.0
    %4552 = vmatprep.subr.mxu0 0.0
    %4553 = vmatpush1.msra.mxu0 0.0
    %4554 = vmatprep.subr.mxu0 0.0
    %4555 = vmatpush1.msra.mxu0 0.0
    %4556 = vmatprep.subr.mxu0 0.0
    %4557 = vmatpush1.msra.mxu0 0.0
    %4558 = vmatprep.subr.mxu0 0.0
    %4559 = vmatpush1.msra.mxu0 0.0
    %4560 = vmatprep.subr.mxu0 0.0
    %4561 = vmatpush1.msra.mxu0 0.0
    %4562 = vmatprep.subr.mxu0 0.0
    %4563 = vmatpush1.msra.mxu0 0.0
    %4564 = vmatprep.subr.mxu0 0.0
    %4565 = vmatpush1.msra.mxu0 0.0
    %4566 = vmatprep.subr.mxu0 0.0
    %4567 = vmatpush1.msra.mxu0 0.0
    %4568 = vmatprep.subr.mxu0 0.0
    %4569 = vmatpush1.msra.mxu0 0.0
    %4570 = vmatprep.subr.mxu0 0.0
    %4571 = vmatpush1.msra.mxu0 0.0
    %4572 = vmatprep.subr.mxu0 0.0
    %4573 = vmatpush1.msra.mxu0 0.0
    %4574 = vmatprep.subr.mxu0 0.0
    %4575 = vmatpush1.msra.mxu0 0.0
    %4576 = vmatprep.subr.mxu0 0.0
    %4577 = vmatpush1.msra.mxu0 0.0
    %4578 = vmatprep.subr.mxu0 0.0
    %4579 = vmatpush1.msra.mxu0 0.0
    %4580 = vmatprep.subr.mxu0 0.0
    %4581 = vmatpush1.msra.mxu0 0.0
    %4582 = vmatprep.subr.mxu0 0.0
    %4583 = vmatpush1.msra.mxu0 0.0
    %4584 = vmatprep.subr.mxu0 0.0
    %4585 = vmatpush1.msra.mxu0 0.0
    %4586 = vmatprep.subr.mxu0 0.0
    %4587 = vmatpush1.msra.mxu0 0.0
    %4588 = vmatprep.subr.mxu0 0.0
    %4589 = vmatpush1.msra.mxu0 0.0
    %4590 = vmatprep.subr.mxu0 0.0
    %4591 = vmatpush1.msra.mxu0 0.0
    %4592 = vmatprep.subr.mxu0 0.0
    %4593 = vmatpush1.msra.mxu0 0.0
    %4594 = vmatprep.subr.mxu0 0.0
    %4595 = vmatpush1.msra.mxu0 0.0
    %4596 = vmatprep.subr.mxu0 0.0
    %4597 = vmatpush1.msra.mxu0 0.0
    %4598 = vmatprep.subr.mxu0 0.0
    %4599 = vmatpush1.msra.mxu0 0.0
    %4600 = vmatprep.subr.mxu0 0.0
    %4601 = vmatpush1.msra.mxu0 0.0
    %4602 = vmatprep.subr.mxu0 0.0
    %4603 = vmatpush1.msra.mxu0 0.0
    %4604 = vmatprep.subr.mxu0 0.0
    %4605 = vmatpush1.msra.mxu0 0.0
    %4606 = vmatprep.mubr.f32.mxu0 0.0
    %4607 = vmatmul.mubr.f32.gmra.mrb[0].mxu0 %v629
    %v4608 = vpop.f32.mrb[0].mxu0
    %v4609 = vadd.f32 0.0, %v4608
    %v4610 = vpop.f32.mrb[0].mxu0
    %4611 = vmatprep.mubr.f32.mxu0 0.0
    %4612 = vmatmul.mubr.f32.gmra.mrb[0].mxu0 %v621
    %v4613 = vpop.f32.mrb[0].mxu0
    %v4614 = vadd.f32 0.0, %v4613
    %v4615 = vpop.f32.mrb[0].mxu0
    %4616 = vmatprep.mubr.f32.mxu0 0.0
    %4617 = vmatmul.mubr.f32.gmra.mrb[0].mxu0 %v621
    %v4618 = vpop.f32.mrb[0].mxu0
    %v4619 = vpop.f32.mrb[0].mxu0
    %4620 = vmatprep.mubr.f32.mxu0 0.0
    %4621 = vmatmul.mubr.f32.gmra.mrb[0].mxu0 %v621
    %v4622 = vpop.f32.mrb[0].mxu0
    %v4623 = vpop.f32.mrb[0].mxu0
    %4624 = vmatprep.mubr.f32.mxu0 0.0
    %4625 = vmatmul.mubr.f32.gmra.mrb[0].mxu0 %v631
    %v4626 = vpop.f32.mrb[0].mxu0
    %v4627 = vpop.f32.mrb[0].mxu0
    %4628 = vmatprep.mubr.f32.mxu0 0.0
    %4629 = vmatmul.mubr.f32.gmra.mrb[0].mxu0 %v1670
    %v4630 = vpop.f32.mrb[0].mxu0
    %v4631 = vpop.f32.mrb[0].mxu0
    %4632 = vmatprep.mubr.f32.mxu0 0.0
    %4633 = vmatmul.mubr.f32.gmra.mrb[0].mxu0 %v2633
    %v4634 = vpop.f32.mrb[0].mxu0
    %v4635 = vadd.f32 0.0, %v4634
    %v4636 = vpop.f32.mrb[0].mxu0
    %4637 = vmatprep.mubr.f32.mxu0 0.0
    %4638 = vmatmul.mubr.f32.gmra.mrb[0].mxu0 %v3594
    %v4639 = vpop.f32.mrb[0].mxu0
    %v4640 = vadd.f32 0.0, %v4639
    %v4641 = vpop.f32.mrb[0].mxu0
    %4642 = vmatprep.mubr.f32.mxu0 0.0
    %4643 = vmatmul.mubr.f32.gmra.mrb[0].mxu0 %v621
    %v4644 = vpop.f32.mrb[0].mxu0
    %v4645 = vadd.f32 0.0, %v4644
    %v4646 = vpop.f32.mrb[0].mxu0
    %4647 = vdwg.mxu0
    %v4648 = vadd.f32 %v4532, %v4609
    %v4649 = vadd.f32 %v4533, %v4614
    %v4650 = vadd.f32 %v4534, %v4635
    %v4651 = vadd.f32 %v4535, %v4640
    %v4652 = vadd.f32 %v4536, %v4645
    %s4653 = scalar_lea.vmem [#allocation4], 1152
    %v4654 = vld [vmem:[%s4653] sm:$0xff]
    %v4655 = vld [vmem:[%s4653 + $0x8] sm:$0xff]
    %v4656 = vld [vmem:[%s4653 + $0x10] sm:$0xff]
    %v4657 = vld [vmem:[%s4653 + $0x18] sm:$0xff]
    %4658 = vmatprep.subr.mxu0 0.0
    %4659 = vmatpush1.msra.mxu0 %v4654
    %4660 = vmatprep.subr.mxu0 0.0
    %4661 = vmatpush1.msra.mxu0 %v4655
    %4662 = vmatprep.subr.mxu0 0.0
    %4663 = vmatpush1.msra.mxu0 %v4656
    %4664 = vmatprep.subr.mxu0 0.0
    %4665 = vmatpush1.msra.mxu0 %v4657
    %4666 = vmatprep.subr.mxu0 0.0
    %4667 = vmatpush1.msra.mxu0 0.0
    %4668 = vmatprep.subr.mxu0 0.0
    %4669 = vmatpush1.msra.mxu0 0.0
    %4670 = vmatprep.subr.mxu0 0.0
    %4671 = vmatpush1.msra.mxu0 0.0
    %4672 = vmatprep.subr.mxu0 0.0
    %4673 = vmatpush1.msra.mxu0 0.0
    %4674 = vmatprep.subr.mxu0 0.0
    %4675 = vmatpush1.msra.mxu0 0.0
    %4676 = vmatprep.subr.mxu0 0.0
    %4677 = vmatpush1.msra.mxu0 0.0
    %4678 = vmatprep.subr.mxu0 0.0
    %4679 = vmatpush1.msra.mxu0 0.0
    %4680 = vmatprep.subr.mxu0 0.0
    %4681 = vmatpush1.msra.mxu0 0.0
    %4682 = vmatprep.subr.mxu0 0.0
    %4683 = vmatpush1.msra.mxu0 0.0
    %4684 = vmatprep.subr.mxu0 0.0
    %4685 = vmatpush1.msra.mxu0 0.0
    %4686 = vmatprep.subr.mxu0 0.0
    %4687 = vmatpush1.msra.mxu0 0.0
    %4688 = vmatprep.subr.mxu0 0.0
    %4689 = vmatpush1.msra.mxu0 0.0
    %4690 = vmatprep.subr.mxu0 0.0
    %4691 = vmatpush1.msra.mxu0 0.0
    %4692 = vmatprep.subr.mxu0 0.0
    %4693 = vmatpush1.msra.mxu0 0.0
    %4694 = vmatprep.subr.mxu0 0.0
    %4695 = vmatpush1.msra.mxu0 0.0
    %4696 = vmatprep.subr.mxu0 0.0
    %4697 = vmatpush1.msra.mxu0 0.0
    %4698 = vmatprep.subr.mxu0 0.0
    %4699 = vmatpush1.msra.mxu0 0.0
    %4700 = vmatprep.subr.mxu0 0.0
    %4701 = vmatpush1.msra.mxu0 0.0
    %4702 = vmatprep.subr.mxu0 0.0
    %4703 = vmatpush1.msra.mxu0 0.0
    %4704 = vmatprep.subr.mxu0 0.0
    %4705 = vmatpush1.msra.mxu0 0.0
    %4706 = vmatprep.subr.mxu0 0.0
    %4707 = vmatpush1.msra.mxu0 0.0
    %4708 = vmatprep.subr.mxu0 0.0
    %4709 = vmatpush1.msra.mxu0 0.0
    %4710 = vmatprep.subr.mxu0 0.0
    %4711 = vmatpush1.msra.mxu0 0.0
    %4712 = vmatprep.subr.mxu0 0.0
    %4713 = vmatpush1.msra.mxu0 0.0
    %4714 = vmatprep.subr.mxu0 0.0
    %4715 = vmatpush1.msra.mxu0 0.0
    %4716 = vmatprep.subr.mxu0 0.0
    %4717 = vmatpush1.msra.mxu0 0.0
    %4718 = vmatprep.subr.mxu0 0.0
    %4719 = vmatpush1.msra.mxu0 0.0
    %4720 = vmatprep.subr.mxu0 0.0
    %4721 = vmatpush1.msra.mxu0 0.0
    %4722 = vmatprep.mubr.f32.mxu0 0.0
    %4723 = vmatmul.mubr.f32.gmra.mrb[0].mxu0 %v768
    %v4724 = vpop.f32.mrb[0].mxu0
    %v4725 = vadd.f32 0.0, %v4724
    %v4726 = vpop.f32.mrb[0].mxu0
    %4727 = vmatprep.mubr.f32.mxu0 0.0
    %4728 = vmatmul.mubr.f32.gmra.mrb[0].mxu0 %v760
    %v4729 = vpop.f32.mrb[0].mxu0
    %v4730 = vadd.f32 0.0, %v4729
    %v4731 = vpop.f32.mrb[0].mxu0
    %4732 = vmatprep.mubr.f32.mxu0 0.0
    %4733 = vmatmul.mubr.f32.gmra.mrb[0].mxu0 %v760
    %v4734 = vpop.f32.mrb[0].mxu0
    %v4735 = vpop.f32.mrb[0].mxu0
    %4736 = vmatprep.mubr.f32.mxu0 0.0
    %4737 = vmatmul.mubr.f32.gmra.mrb[0].mxu0 %v760
    %v4738 = vpop.f32.mrb[0].mxu0
    %v4739 = vpop.f32.mrb[0].mxu0
    %4740 = vmatprep.mubr.f32.mxu0 0.0
    %4741 = vmatmul.mubr.f32.gmra.mrb[0].mxu0 %v770
    %v4742 = vpop.f32.mrb[0].mxu0
    %v4743 = vpop.f32.mrb[0].mxu0
    %4744 = vmatprep.mubr.f32.mxu0 0.0
    %4745 = vmatmul.mubr.f32.gmra.mrb[0].mxu0 %v1790
    %v4746 = vpop.f32.mrb[0].mxu0
    %v4747 = vpop.f32.mrb[0].mxu0
    %4748 = vmatprep.mubr.f32.mxu0 0.0
    %4749 = vmatmul.mubr.f32.gmra.mrb[0].mxu0 %v2753
    %v4750 = vpop.f32.mrb[0].mxu0
    %v4751 = vadd.f32 0.0, %v4750
    %v4752 = vpop.f32.mrb[0].mxu0
    %4753 = vmatprep.mubr.f32.mxu0 0.0
    %4754 = vmatmul.mubr.f32.gmra.mrb[0].mxu0 %v3713
    %v4755 = vpop.f32.mrb[0].mxu0
    %v4756 = vadd.f32 0.0, %v4755
    %v4757 = vpop.f32.mrb[0].mxu0
    %4758 = vmatprep.mubr.f32.mxu0 0.0
    %4759 = vmatmul.mubr.f32.gmra.mrb[0].mxu0 %v760
    %v4760 = vpop.f32.mrb[0].mxu0
    %v4761 = vadd.f32 0.0, %v4760
    %v4762 = vpop.f32.mrb[0].mxu0
    %4763 = vdwg.mxu0
    %v4764 = vadd.f32 %v4648, %v4725
    %v4765 = vadd.f32 %v4649, %v4730
    %v4766 = vadd.f32 %v4650, %v4751
    %v4767 = vadd.f32 %v4651, %v4756
    %v4768 = vadd.f32 %v4652, %v4761
    %s4769 = scalar_lea.vmem [#allocation4], 1184
    %v4770 = vld [vmem:[%s4769] sm:$0xff]
    %v4771 = vld [vmem:[%s4769 + $0x8] sm:$0xff]
    %v4772 = vld [vmem:[%s4769 + $0x10] sm:$0xff]
    %v4773 = vld [vmem:[%s4769 + $0x18] sm:$0xff]
    %4774 = vmatprep.subr.mxu0 0.0
    %4775 = vmatpush1.msra.mxu0 %v4770
    %4776 = vmatprep.subr.mxu0 0.0
    %4777 = vmatpush1.msra.mxu0 %v4771
    %4778 = vmatprep.subr.mxu0 0.0
    %4779 = vmatpush1.msra.mxu0 %v4772
    %4780 = vmatprep.subr.mxu0 0.0
    %4781 = vmatpush1.msra.mxu0 %v4773
    %4782 = vmatprep.subr.mxu0 0.0
    %4783 = vmatpush1.msra.mxu0 0.0
    %4784 = vmatprep.subr.mxu0 0.0
    %4785 = vmatpush1.msra.mxu0 0.0
    %4786 = vmatprep.subr.mxu0 0.0
    %4787 = vmatpush1.msra.mxu0 0.0
    %4788 = vmatprep.subr.mxu0 0.0
    %4789 = vmatpush1.msra.mxu0 0.0
    %4790 = vmatprep.subr.mxu0 0.0
    %4791 = vmatpush1.msra.mxu0 0.0
    %4792 = vmatprep.subr.mxu0 0.0
    %4793 = vmatpush1.msra.mxu0 0.0
    %4794 = vmatprep.subr.mxu0 0.0
    %4795 = vmatpush1.msra.mxu0 0.0
    %4796 = vmatprep.subr.mxu0 0.0
    %4797 = vmatpush1.msra.mxu0 0.0
    %4798 = vmatprep.subr.mxu0 0.0
    %4799 = vmatpush1.msra.mxu0 0.0
    %4800 = vmatprep.subr.mxu0 0.0
    %4801 = vmatpush1.msra.mxu0 0.0
    %4802 = vmatprep.subr.mxu0 0.0
    %4803 = vmatpush1.msra.mxu0 0.0
    %4804 = vmatprep.subr.mxu0 0.0
    %4805 = vmatpush1.msra.mxu0 0.0
    %4806 = vmatprep.subr.mxu0 0.0
    %4807 = vmatpush1.msra.mxu0 0.0
    %4808 = vmatprep.subr.mxu0 0.0
    %4809 = vmatpush1.msra.mxu0 0.0
    %4810 = vmatprep.subr.mxu0 0.0
    %4811 = vmatpush1.msra.mxu0 0.0
    %4812 = vmatprep.subr.mxu0 0.0
    %4813 = vmatpush1.msra.mxu0 0.0
    %4814 = vmatprep.subr.mxu0 0.0
    %4815 = vmatpush1.msra.mxu0 0.0
    %4816 = vmatprep.subr.mxu0 0.0
    %4817 = vmatpush1.msra.mxu0 0.0
    %4818 = vmatprep.subr.mxu0 0.0
    %4819 = vmatpush1.msra.mxu0 0.0
    %4820 = vmatprep.subr.mxu0 0.0
    %4821 = vmatpush1.msra.mxu0 0.0
    %4822 = vmatprep.subr.mxu0 0.0
    %4823 = vmatpush1.msra.mxu0 0.0
    %4824 = vmatprep.subr.mxu0 0.0
    %4825 = vmatpush1.msra.mxu0 0.0
    %4826 = vmatprep.subr.mxu0 0.0
    %4827 = vmatpush1.msra.mxu0 0.0
    %4828 = vmatprep.subr.mxu0 0.0
    %4829 = vmatpush1.msra.mxu0 0.0
    %4830 = vmatprep.subr.mxu0 0.0
    %4831 = vmatpush1.msra.mxu0 0.0
    %4832 = vmatprep.subr.mxu0 0.0
    %4833 = vmatpush1.msra.mxu0 0.0
    %4834 = vmatprep.subr.mxu0 0.0
    %4835 = vmatpush1.msra.mxu0 0.0
    %4836 = vmatprep.subr.mxu0 0.0
    %4837 = vmatpush1.msra.mxu0 0.0
    %4838 = vmatprep.mubr.f32.mxu0 0.0
    %4839 = vmatmul.mubr.f32.gmra.mrb[0].mxu0 %v907
    %v4840 = vpop.f32.mrb[0].mxu0
    %v4841 = vadd.f32 0.0, %v4840
    %v4842 = vpop.f32.mrb[0].mxu0
    %4843 = vmatprep.mubr.f32.mxu0 0.0
    %4844 = vmatmul.mubr.f32.gmra.mrb[0].mxu0 %v899
    %v4845 = vpop.f32.mrb[0].mxu0
    %v4846 = vadd.f32 0.0, %v4845
    %v4847 = vpop.f32.mrb[0].mxu0
    %4848 = vmatprep.mubr.f32.mxu0 0.0
    %4849 = vmatmul.mubr.f32.gmra.mrb[0].mxu0 %v899
    %v4850 = vpop.f32.mrb[0].mxu0
    %v4851 = vpop.f32.mrb[0].mxu0
    %4852 = vmatprep.mubr.f32.mxu0 0.0
    %4853 = vmatmul.mubr.f32.gmra.mrb[0].mxu0 %v899
    %v4854 = vpop.f32.mrb[0].mxu0
    %v4855 = vpop.f32.mrb[0].mxu0
    %4856 = vmatprep.mubr.f32.mxu0 0.0
    %4857 = vmatmul.mubr.f32.gmra.mrb[0].mxu0 %v909
    %v4858 = vpop.f32.mrb[0].mxu0
    %v4859 = vpop.f32.mrb[0].mxu0
    %4860 = vmatprep.mubr.f32.mxu0 0.0
    %4861 = vmatmul.mubr.f32.gmra.mrb[0].mxu0 %v1910
    %v4862 = vpop.f32.mrb[0].mxu0
    %v4863 = vpop.f32.mrb[0].mxu0
    %4864 = vmatprep.mubr.f32.mxu0 0.0
    %4865 = vmatmul.mubr.f32.gmra.mrb[0].mxu0 %v2873
    %v4866 = vpop.f32.mrb[0].mxu0
    %v4867 = vadd.f32 0.0, %v4866
    %v4868 = vpop.f32.mrb[0].mxu0
    %4869 = vmatprep.mubr.f32.mxu0 0.0
    %4870 = vmatmul.mubr.f32.gmra.mrb[0].mxu0 %v3832
    %v4871 = vpop.f32.mrb[0].mxu0
    %v4872 = vadd.f32 0.0, %v4871
    %v4873 = vpop.f32.mrb[0].mxu0
    %4874 = vmatprep.mubr.f32.mxu0 0.0
    %4875 = vmatmul.mubr.f32.gmra.mrb[0].mxu0 %v899
    %v4876 = vpop.f32.mrb[0].mxu0
    %v4877 = vadd.f32 0.0, %v4876
    %v4878 = vpop.f32.mrb[0].mxu0
    %4879 = vdwg.mxu0
    %v4880 = vadd.f32 %v4764, %v4841
    %v4881 = vadd.f32 %v4765, %v4846
    %v4882 = vadd.f32 %v4766, %v4867
    %v4883 = vadd.f32 %v4767, %v4872
    %v4884 = vadd.f32 %v4768, %v4877
    %s4885 = scalar_lea.vmem [#allocation4], 1216
    %v4886 = vld [vmem:[%s4885] sm:$0xff]
    %v4887 = vld [vmem:[%s4885 + $0x8] sm:$0xff]
    %v4888 = vld [vmem:[%s4885 + $0x10] sm:$0xff]
    %v4889 = vld [vmem:[%s4885 + $0x18] sm:$0xff]
    %4890 = vmatprep.subr.mxu0 0.0
    %4891 = vmatpush1.msra.mxu0 %v4886
    %4892 = vmatprep.subr.mxu0 0.0
    %4893 = vmatpush1.msra.mxu0 %v4887
    %4894 = vmatprep.subr.mxu0 0.0
    %4895 = vmatpush1.msra.mxu0 %v4888
    %4896 = vmatprep.subr.mxu0 0.0
    %4897 = vmatpush1.msra.mxu0 %v4889
    %4898 = vmatprep.subr.mxu0 0.0
    %4899 = vmatpush1.msra.mxu0 0.0
    %4900 = vmatprep.subr.mxu0 0.0
    %4901 = vmatpush1.msra.mxu0 0.0
    %4902 = vmatprep.subr.mxu0 0.0
    %4903 = vmatpush1.msra.mxu0 0.0
    %4904 = vmatprep.subr.mxu0 0.0
    %4905 = vmatpush1.msra.mxu0 0.0
    %4906 = vmatprep.subr.mxu0 0.0
    %4907 = vmatpush1.msra.mxu0 0.0
    %4908 = vmatprep.subr.mxu0 0.0
    %4909 = vmatpush1.msra.mxu0 0.0
    %4910 = vmatprep.subr.mxu0 0.0
    %4911 = vmatpush1.msra.mxu0 0.0
    %4912 = vmatprep.subr.mxu0 0.0
    %4913 = vmatpush1.msra.mxu0 0.0
    %4914 = vmatprep.subr.mxu0 0.0
    %4915 = vmatpush1.msra.mxu0 0.0
    %4916 = vmatprep.subr.mxu0 0.0
    %4917 = vmatpush1.msra.mxu0 0.0
    %4918 = vmatprep.subr.mxu0 0.0
    %4919 = vmatpush1.msra.mxu0 0.0
    %4920 = vmatprep.subr.mxu0 0.0
    %4921 = vmatpush1.msra.mxu0 0.0
    %4922 = vmatprep.subr.mxu0 0.0
    %4923 = vmatpush1.msra.mxu0 0.0
    %4924 = vmatprep.subr.mxu0 0.0
    %4925 = vmatpush1.msra.mxu0 0.0
    %4926 = vmatprep.subr.mxu0 0.0
    %4927 = vmatpush1.msra.mxu0 0.0
    %4928 = vmatprep.subr.mxu0 0.0
    %4929 = vmatpush1.msra.mxu0 0.0
    %4930 = vmatprep.subr.mxu0 0.0
    %4931 = vmatpush1.msra.mxu0 0.0
    %4932 = vmatprep.subr.mxu0 0.0
    %4933 = vmatpush1.msra.mxu0 0.0
    %4934 = vmatprep.subr.mxu0 0.0
    %4935 = vmatpush1.msra.mxu0 0.0
    %4936 = vmatprep.subr.mxu0 0.0
    %4937 = vmatpush1.msra.mxu0 0.0
    %4938 = vmatprep.subr.mxu0 0.0
    %4939 = vmatpush1.msra.mxu0 0.0
    %4940 = vmatprep.subr.mxu0 0.0
    %4941 = vmatpush1.msra.mxu0 0.0
    %4942 = vmatprep.subr.mxu0 0.0
    %4943 = vmatpush1.msra.mxu0 0.0
    %4944 = vmatprep.subr.mxu0 0.0
    %4945 = vmatpush1.msra.mxu0 0.0
    %4946 = vmatprep.subr.mxu0 0.0
    %4947 = vmatpush1.msra.mxu0 0.0
    %4948 = vmatprep.subr.mxu0 0.0
    %4949 = vmatpush1.msra.mxu0 0.0
    %4950 = vmatprep.subr.mxu0 0.0
    %4951 = vmatpush1.msra.mxu0 0.0
    %4952 = vmatprep.subr.mxu0 0.0
    %4953 = vmatpush1.msra.mxu0 0.0
    %4954 = vmatprep.mubr.f32.mxu0 0.0
    %4955 = vmatmul.mubr.f32.gmra.mrb[0].mxu0 %v1047
    %v4956 = vpop.f32.mrb[0].mxu0
    %v4957 = vadd.f32 0.0, %v4956
    %v4958 = vpop.f32.mrb[0].mxu0
    %4959 = vmatprep.mubr.f32.mxu0 0.0
    %4960 = vmatmul.mubr.f32.gmra.mrb[0].mxu0 %v1039
    %v4961 = vpop.f32.mrb[0].mxu0
    %v4962 = vadd.f32 0.0, %v4961
    %v4963 = vpop.f32.mrb[0].mxu0
    %4964 = vmatprep.mubr.f32.mxu0 0.0
    %4965 = vmatmul.mubr.f32.gmra.mrb[0].mxu0 %v1039
    %v4966 = vpop.f32.mrb[0].mxu0
    %v4967 = vpop.f32.mrb[0].mxu0
    %4968 = vmatprep.mubr.f32.mxu0 0.0
    %4969 = vmatmul.mubr.f32.gmra.mrb[0].mxu0 %v1039
    %v4970 = vpop.f32.mrb[0].mxu0
    %v4971 = vpop.f32.mrb[0].mxu0
    %4972 = vmatprep.mubr.f32.mxu0 0.0
    %4973 = vmatmul.mubr.f32.gmra.mrb[0].mxu0 %v1049
    %v4974 = vpop.f32.mrb[0].mxu0
    %v4975 = vpop.f32.mrb[0].mxu0
    %4976 = vmatprep.mubr.f32.mxu0 0.0
    %4977 = vmatmul.mubr.f32.gmra.mrb[0].mxu0 %v2030
    %v4978 = vpop.f32.mrb[0].mxu0
    %v4979 = vpop.f32.mrb[0].mxu0
    %4980 = vmatprep.mubr.f32.mxu0 0.0
    %4981 = vmatmul.mubr.f32.gmra.mrb[0].mxu0 %v2993
    %v4982 = vpop.f32.mrb[0].mxu0
    %v4983 = vadd.f32 0.0, %v4982
    %v4984 = vpop.f32.mrb[0].mxu0
    %4985 = vmatprep.mubr.f32.mxu0 0.0
    %4986 = vmatmul.mubr.f32.gmra.mrb[0].mxu0 %v3951
    %v4987 = vpop.f32.mrb[0].mxu0
    %v4988 = vadd.f32 0.0, %v4987
    %v4989 = vpop.f32.mrb[0].mxu0
    %4990 = vmatprep.mubr.f32.mxu0 0.0
    %4991 = vmatmul.mubr.f32.gmra.mrb[0].mxu0 %v1039
    %v4992 = vpop.f32.mrb[0].mxu0
    %v4993 = vadd.f32 0.0, %v4992
    %v4994 = vpop.f32.mrb[0].mxu0
    %4995 = vdwg.mxu0
    %v4996 = vadd.f32 %v4880, %v4957
    %v4997 = vadd.f32 %v4881, %v4962
    %v4998 = vadd.f32 %v4882, %v4983
    %v4999 = vadd.f32 %v4883, %v4988
    %v5000 = vadd.f32 %v4884, %v4993
    %v5004 = vrot.slane %v4998, 6
    %v5005 = vrot.slane %v4999, 6
    %v5006 = vsel %vm1027, %v5004, %v5005
    %v5007 = vrot.slane %v5000, 6
    %v5008 = vsel %vm1027, %v5005, %v5007
    %v5011 = vrot.slane %v83, 7
    %v5012 = vrot.slane %v84, 7
    %v5013 = vsel %vm200, %v5011, %v5012
    %v5014 = vrot.slane %v85, 7
    %v5015 = vrot.slane %v86, 7
    %v5016 = vsel %vm200, %v5014, %v5015
    %v5023 = vsel %vm200, -3.4028235e+38, %v5011
    %v5024 = vsel %vm200, -3.4028235e+38, %v5014
    %v5025 = vsel %vm200, %v5012, -3.4028235e+38
    %v5026 = vsel %vm200, %v5015, -3.4028235e+38
    %v5031 = vrot.slane %v5023, 1
    %v5032 = vrot.slane %v5013, 1
    %v5033 = vsel %vm222, %v5031, %v5032
    %v5034 = vrot.slane %v5025, 1
    %v5035 = vsel %vm222, %v5032, %v5034
    %v5036 = vrot.slane %v5024, 1
    %v5037 = vrot.slane %v5016, 1
    %v5038 = vsel %vm222, %v5036, %v5037
    %v5039 = vrot.slane %v5026, 1
    %v5040 = vsel %vm222, %v5037, %v5039
    %v5045 = vmax.f32 %v5023, %v5033
    %v5046 = vmax.f32 %v5013, %v5035
    %v5047 = vmax.f32 %v5024, %v5038
    %v5048 = vmax.f32 %v5016, %v5040
    %v5049 = vrot.slane %v5023, 2
    %v5050 = vrot.slane %v5013, 2
    %v5051 = vsel %vm470, %v5049, %v5050
    %v5052 = vrot.slane %v5025, 2
    %v5053 = vsel %vm470, %v5050, %v5052
    %v5054 = vrot.slane %v5024, 2
    %v5055 = vrot.slane %v5016, 2
    %v5056 = vsel %vm470, %v5054, %v5055
    %v5057 = vrot.slane %v5026, 2
    %v5058 = vsel %vm470, %v5055, %v5057
    %v5063 = vmax.f32 %v5045, %v5051
    %v5064 = vmax.f32 %v5046, %v5053
    %v5065 = vmax.f32 %v5047, %v5056
    %v5066 = vmax.f32 %v5048, %v5058
    %v5067 = vld [vmem:[#allocation6] sm:$0xf]
    %v5069 = vsel %vm88, %v5063, 0
    %v5072 = vsel %vm88, %v5064, 0
    %v5075 = vsel %vm88, %v5065, 0
    %v5078 = vsel %vm88, %v5066, 0
    %v5081 = vsel %vm101, %v5067, 0
    %5083 = vmatprep.subr.mxu0 0.0
    %5084 = vmatpush1.msra.mxu0 %v5081
    %5085 = vmatprep.subr.mxu0 0.0
    %5086 = vmatpush1.msra.mxu0 0.0
    %5087 = vmatprep.subr.mxu0 0.0
    %5088 = vmatpush1.msra.mxu0 0.0
    %5089 = vmatprep.subr.mxu0 0.0
    %5090 = vmatpush1.msra.mxu0 0.0
    %5091 = vmatprep.subr.mxu0 0.0
    %5092 = vmatpush1.msra.mxu0 0.0
    %5093 = vmatprep.subr.mxu0 0.0
    %5094 = vmatpush1.msra.mxu0 0.0
    %5095 = vmatprep.subr.mxu0 0.0
    %5096 = vmatpush1.msra.mxu0 0.0
    %5097 = vmatprep.subr.mxu0 0.0
    %5098 = vmatpush1.msra.mxu0 0.0
    %5099 = vmatprep.subr.mxu0 0.0
    %5100 = vmatpush1.msra.mxu0 0.0
    %5101 = vmatprep.subr.mxu0 0.0
    %5102 = vmatpush1.msra.mxu0 0.0
    %5103 = vmatprep.subr.mxu0 0.0
    %5104 = vmatpush1.msra.mxu0 0.0
    %5105 = vmatprep.subr.mxu0 0.0
    %5106 = vmatpush1.msra.mxu0 0.0
    %5107 = vmatprep.subr.mxu0 0.0
    %5108 = vmatpush1.msra.mxu0 0.0
    %5109 = vmatprep.subr.mxu0 0.0
    %5110 = vmatpush1.msra.mxu0 0.0
    %5111 = vmatprep.subr.mxu0 0.0
    %5112 = vmatpush1.msra.mxu0 0.0
    %5113 = vmatprep.subr.mxu0 0.0
    %5114 = vmatpush1.msra.mxu0 0.0
    %5115 = vmatprep.subr.mxu0 0.0
    %5116 = vmatpush1.msra.mxu0 0.0
    %5117 = vmatprep.subr.mxu0 0.0
    %5118 = vmatpush1.msra.mxu0 0.0
    %5119 = vmatprep.subr.mxu0 0.0
    %5120 = vmatpush1.msra.mxu0 0.0
    %5121 = vmatprep.subr.mxu0 0.0
    %5122 = vmatpush1.msra.mxu0 0.0
    %5123 = vmatprep.subr.mxu0 0.0
    %5124 = vmatpush1.msra.mxu0 0.0
    %5125 = vmatprep.subr.mxu0 0.0
    %5126 = vmatpush1.msra.mxu0 0.0
    %5127 = vmatprep.subr.mxu0 0.0
    %5128 = vmatpush1.msra.mxu0 0.0
    %5129 = vmatprep.subr.mxu0 0.0
    %5130 = vmatpush1.msra.mxu0 0.0
    %5131 = vmatprep.subr.mxu0 0.0
    %5132 = vmatpush1.msra.mxu0 0.0
    %5133 = vmatprep.subr.mxu0 0.0
    %5134 = vmatpush1.msra.mxu0 0.0
    %5135 = vmatprep.subr.mxu0 0.0
    %5136 = vmatpush1.msra.mxu0 0.0
    %5137 = vmatprep.subr.mxu0 0.0
    %5138 = vmatpush1.msra.mxu0 0.0
    %5139 = vmatprep.subr.mxu0 0.0
    %5140 = vmatpush1.msra.mxu0 0.0
    %5141 = vmatprep.subr.mxu0 0.0
    %5142 = vmatpush1.msra.mxu0 0.0
    %5143 = vmatprep.subr.mxu0 0.0
    %5144 = vmatpush1.msra.mxu0 0.0
    %5145 = vmatprep.subr.mxu0 0.0
    %5146 = vmatpush1.msra.mxu0 0.0
    %5147 = vmatprep.mubr.f32.mxu0 0.0
    %5148 = vmatmul.mubr.f32.gmra.mrb[0].mxu0 %v5069
    %v5149 = vpop.f32.mrb[0].mxu0
    %v5150 = vadd.f32 0.0, %v5149
    %v5151 = vpop.f32.mrb[0].mxu0
    %5152 = vmatprep.mubr.f32.mxu0 0.0
    %5153 = vmatmul.mubr.f32.gmra.mrb[0].mxu0 %v5072
    %v5154 = vpop.f32.mrb[0].mxu0
    %v5155 = vadd.f32 0.0, %v5154
    %v5156 = vpop.f32.mrb[0].mxu0
    %5157 = vmatprep.mubr.f32.mxu0 0.0
    %5158 = vmatmul.mubr.f32.gmra.mrb[0].mxu0 %v5075
    %v5159 = vpop.f32.mrb[0].mxu0
    %v5160 = vadd.f32 0.0, %v5159
    %v5161 = vpop.f32.mrb[0].mxu0
    %5162 = vmatprep.mubr.f32.mxu0 0.0
    %5163 = vmatmul.mubr.f32.gmra.mrb[0].mxu0 %v5078
    %v5164 = vpop.f32.mrb[0].mxu0
    %v5165 = vadd.f32 0.0, %v5164
    %v5166 = vpop.f32.mrb[0].mxu0
    %5167 = vdwg.mxu0
    %5172 = vrot.lane.b32.xlu0 %v5150, 96
    %v5173 = vpop.permute.xlu0 %5172
    %5174 = vrot.lane.b32.xlu0 %v5155, 96
    %v5175 = vpop.permute.xlu0 %5174
    %5176 = vrot.lane.b32.xlu0 %v5160, 96
    %v5177 = vpop.permute.xlu0 %5176
    %5178 = vrot.lane.b32.xlu0 %v5165, 96
    %v5179 = vpop.permute.xlu0 %5178
    %vm5184 = vcmask 785408
    %v5185 = vsel %vm5184, %v4996, %v5173
    %v5186 = vsel %vm5184, %v4997, %v5175
    %v5187 = vsel %vm5184, %v5006, %v5177
    %v5188 = vsel %vm5184, %v5008, %v5179
    %v5189 = vld [vmem:[#allocation7] sm:$0x1]
    %v5191 = vlaneseq
    %v5192 = vshrl.u32 %v5191, 7
    %v5193 = vsub.s32 0, %v5192
    %v5194 = vrot.slane %v5189, %v5193
    %v5196 = vmul.f32 %v5185, %v5194
    %v5197 = vmul.f32 %v5186, %v5194
    %v5198 = vmul.f32 %v5187, %v5194
    %v5199 = vmul.f32 %v5188, %v5194
    %v5200 = vld [vmem:[#allocation9] sm:$0x1]
    %v5202 = vlaneseq
    %v5203 = vshrl.u32 %v5202, 7
    %v5204 = vsub.s32 0, %v5203
    %v5205 = vrot.slane %v5200, %v5204
    %v5207 = vadd.f32 %v5196, %v5205
    %v5208 = vadd.f32 %v5197, %v5205
    %v5209 = vadd.f32 %v5198, %v5205
    %v5210 = vadd.f32 %v5199, %v5205
    %v5211 = vmax.f32 %v5207, 0.0
    %v5212 = vmax.f32 %v5208, 0.0
    %v5213 = vmax.f32 %v5209, 0.0
    %v5214 = vmax.f32 %v5210, 0.0
    %5215 = vst [vmem:[%s6] sm:$0xff] %v5211
    %5216 = vst [vmem:[%s6 + $0x8] sm:$0xff] %v5212
    %5217 = vst [vmem:[%s6 + $0x10] sm:$0xff] %v5213
    %5218 = vst [vmem:[%s6 + $0x18] sm:$0xff] %v5214
    // Predicated region
    $region46: #{inceptiontime_fwd.9} parent=1 // pred_check
      _
    $region47: #{inceptiontime_fwd.9} parent=1 // pred_check_branch
      %5220 = sbr.rel (0) target = $region49
    $region48: #{inceptiontime_fwd.9} parent=1 // pred_region
      _
    $region49: #{inceptiontime_fwd.9} parent=1 // pred_fallthru
      _
    // Predicated region
    $region50: #{inceptiontime_fwd.9} parent=1 // pred_check
      _
    $region51: #{inceptiontime_fwd.9} parent=1 // pred_check_branch
      %5222 = sbr.rel (0) target = $region53
    $region52: #{inceptiontime_fwd.9} parent=1 // pred_region
      _
    $region53: #{inceptiontime_fwd.9} parent=1 // pred_fallthru
      _
    %5223 = vsyncpa [#allocation3], 1
    %5224 = vsyncpa [#allocation5], 1
    %5225 = vsyncpa [#allocation8], 1

</llo_original>
